<compile_context>
chip_gen: v7x
topology: tpu7x:2x2x1
jax: 0.10.0
libtpu: 0.0.40
codegen_flags: <defaults>
</compile_context>

<pallas_src>
import math
import jax
import jax.numpy as jnp
from jax.experimental import pallas as pl
from jax.experimental.pallas import tpu as pltpu

# ---- small, self-consistent Plamo2 config ----
HIDDEN = 32                     # hidden_size
NH = 4                          # mamba_num_heads
HD = 8                          # hidden_size_per_head
I_SSM = NH * HD                 # mamba intermediate size = 32
DS = 16                         # mamba_d_state
K = 4                           # mamba_d_conv
TSR = max(64, HIDDEN // 16)     # time_step_rank = 64
I_MLP = 64                      # intermediate_size (MLP)
EPS = 1e-6                      # rms_norm_eps
L = 8                           # tokens per sequence
SEQS_PER_STEP = 16              # sequences fused per grid step -> matmul M = 128
ROWS = SEQS_PER_STEP * L        # 128 rows per grid step
N_SEQ = 32                      # total sequences -> grid=(2,)
IDS = I_SSM * DS                # 512 — flattened, lane-dense SSM width
OUT_W = 128                     # lane-dense output slab width (full vreg lanes)

assert ROWS >= 128 and ROWS % 8 == 0
assert K - 1 < L
assert 2 * HIDDEN <= OUT_W and OUT_W % 128 == 0
assert IDS % 128 == 0
assert 2 * I_SSM <= 128 and 2 * DS + TSR <= 128 and 2 * I_MLP <= 128


def _rms_norm(x, w, eps):
    var = jnp.mean(x * x, axis=-1, keepdims=True)
    return x * jax.lax.rsqrt(var + eps) * w


def _silu(x):
    return x * jax.nn.sigmoid(x)


def _softplus(x):
    return jnp.maximum(x, 0.0) + jnp.log1p(jnp.exp(-jnp.abs(x)))


def _shift_down(x, s):
    """Rows [0, s) <- 0 ; rows [s, M) <- x[0 : M-s].

    s is always a multiple of 8 here (token-major layout: delays are multiples of
    SEQS_PER_STEP), so both concatenate operands are (8,128)-tile aligned.
    """
    return jnp.concatenate(
        [jnp.zeros((s,) + x.shape[1:], x.dtype), x[: x.shape[0] - s]], axis=0)


# --------------------------------------------------------------------------------
# Kernel: one grid step = SEQS_PER_STEP fresh sequences of L tokens, token-major
# row layout (row = t * SEQS_PER_STEP + seq).
# --------------------------------------------------------------------------------
def plamo2_layer_kernel(
    x_ref,          # (ROWS, HIDDEN) f32, token-major
    vecs_ref,       # (8, IDS) f32      packed small vectors (layout in prepare_params)
    w_small_ref,    # (128, 128) bf16   [in_proj | bcdt_proj | out_proj | mlp_gate_up]
    w_ids_ref,      # (TSR+I_SSM+DS, IDS) bf16  [dt_proj expanded | repeat | tile]
    rtmat_ref,      # (IDS, I_SSM) bf16 group-sum-over-DS 0/1 matrix
    w_down_ref,     # (I_MLP, HIDDEN) bf16
    out_ref,        # (ROWS, OUT_W) f32  [out | residual | zero pad]
):
    f32 = jnp.float32
    bf16 = jnp.bfloat16
    M = x_ref.shape[0]
    S = SEQS_PER_STEP

    # ---- packed small f32 vectors ----
    a_flat = vecs_ref[0:1, :]                                   # (1, IDS)
    dt_bias_exp = vecs_ref[1:2, :]                              # (1, IDS)
    pre_mixer_w = vecs_ref[2:3, 0 * HIDDEN:1 * HIDDEN]
    post_mixer_w = vecs_ref[2:3, 1 * HIDDEN:2 * HIDDEN]
    pre_mlp_w = vecs_ref[2:3, 2 * HIDDEN:3 * HIDDEN]
    post_mlp_w = vecs_ref[2:3, 3 * HIDDEN:4 * HIDDEN]
    d_skip = vecs_ref[3:4, 0:I_SSM]
    b_norm_w = vecs_ref[3:4, I_SSM:I_SSM + DS]
    c_norm_w = vecs_ref[3:4, I_SSM + DS:I_SSM + 2 * DS]
    dt_norm_w = vecs_ref[3:4, I_SSM + 2 * DS:I_SSM + 2 * DS + TSR]

    x = x_ref[...]
    residual = x
    h = _rms_norm(x, pre_mixer_w, EPS)

    # ---------------- Mamba mixer ----------------
    # in_proj: fused [gate | hidden] (HIDDEN, 128) matmul + static lane slices.
    hin = jnp.dot(h.astype(bf16), w_small_ref[0:32, :],
                  preferred_element_type=f32)                   # (M, 128)
    gate = hin[:, 0:I_SSM]
    u_in = hin[:, I_SSM:2 * I_SSM]

    # Causal depthwise conv1d (zero initial state): in token-major layout the d-step
    # delay is a tile-aligned row shift by d*S with zero fill (rows t<d of every
    # sequence get zero history automatically; no masks, no cross-sequence leakage).
    acc = u_in * vecs_ref[4:5, 0:I_SSM]
    for d in range(1, K):
        tap = vecs_ref[4:5, d * I_SSM:(d + 1) * I_SSM]
        acc = acc + _shift_down(u_in, d * S) * tap
    u_conv = _silu(acc)                                         # (M, I_SSM) f32
    ub = u_conv.astype(bf16)

    # bcdt_proj: fused [B | C | dt] matmul + static lane slices, then RMSNorms.
    sbc = jnp.dot(ub, w_small_ref[32:64, :], preferred_element_type=f32)   # (M, 128)
    B = _rms_norm(sbc[:, 0:DS], b_norm_w, EPS)
    C = _rms_norm(sbc[:, DS:2 * DS], c_norm_w, EPS)
    dt = _rms_norm(sbc[:, 2 * DS:2 * DS + TSR], dt_norm_w, EPS)

    # dt_proj already expanded to the flattened lane-dense (IDS) layout.
    delta_rep = _softplus(
        jnp.dot(dt.astype(bf16), w_ids_ref[0:TSR, :], preferred_element_type=f32)
        + dt_bias_exp)                                          # (M, IDS)

    # Lane-dense SSM tensors: repeat/tile via exact 0/1 bf16 matmuls (MXU), f32 accum.
    u_rep = jnp.dot(ub, w_ids_ref[TSR:TSR + I_SSM, :],
                    preferred_element_type=f32)                 # (M, IDS)
    b_tile = jnp.dot(B.astype(bf16), w_ids_ref[TSR + I_SSM:TSR + I_SSM + DS, :],
                     preferred_element_type=f32)                # (M, IDS)
    c_tile = jnp.dot(C.astype(bf16), w_ids_ref[TSR + I_SSM:TSR + I_SSM + DS, :],
                     preferred_element_type=f32)                # (M, IDS)

    dA = jnp.exp(delta_rep * a_flat)                            # (M, IDS)
    dBu = (delta_rep * u_rep) * b_tile                          # (M, IDS)

    # Selective scan: log2(L)-step Hillis-Steele over the token axis. In token-major
    # layout the previous token of every sequence is exactly S rows up, so the shifts
    # are aligned zero-filled row shifts by S, 2S, 4S; the zero fill IS the correct
    # zero-initial-state boundary condition and sequences never mix.
    a_s = dA
    b_s = dBu
    s = S
    while s < M:
        b_s = b_s + a_s * _shift_down(b_s, s)
        a_s = a_s * _shift_down(a_s, s)
        s *= 2
    states = b_s                                                # (M, IDS)

    # y[:, i] = sum_s states[:, i*DS+s] * C[:, s]  (group-sum via MXU) + D skip term
    y = jnp.dot((states * c_tile).astype(bf16), rtmat_ref[...],
                preferred_element_type=f32)                     # (M, I_SSM)
    y = y + d_skip * u_conv
    scan_out = y * _silu(gate)
    mixer_out = jnp.dot(scan_out.astype(bf16), w_small_ref[64:96, :],
                        preferred_element_type=f32)[:, 0:HIDDEN]

    # ---------------- norms + MLP ----------------
    h2 = _rms_norm(mixer_out, post_mixer_w, EPS)
    residual2 = h2 + residual
    h3 = _rms_norm(residual2, pre_mlp_w, EPS)
    gu = jnp.dot(h3.astype(bf16), w_small_ref[96:128, :],
                 preferred_element_type=f32)                    # (M, 128) = [gate | up]
    hm = _silu(gu[:, 0:I_MLP]) * gu[:, I_MLP:2 * I_MLP]
    mo = jnp.dot(hm.astype(bf16), w_down_ref[...], preferred_element_type=f32)
    out_h = _rms_norm(mo, post_mlp_w, EPS)

    # Lane-dense output slab: one unmasked full-vreg store per grid step.
    pad = jnp.zeros((M, OUT_W - 2 * HIDDEN), f32)
    out_ref[...] = jnp.concatenate([out_h, residual2, pad], axis=-1)


# --------------------------------------------------------------------------------
# Wrapper
# --------------------------------------------------------------------------------
def _build_pallas_call(n_steps, n_params):
    return pl.pallas_call(
        plamo2_layer_kernel,
        out_shape=jax.ShapeDtypeStruct((n_steps * ROWS, OUT_W), jnp.float32),
        grid=(n_steps,),
        in_specs=[pl.BlockSpec((ROWS, HIDDEN), lambda b: (b, 0))]
        + [pl.BlockSpec(memory_space=pltpu.MemorySpace.VMEM)] * n_params,
        out_specs=pl.BlockSpec((ROWS, OUT_W), lambda b: (b, 0)),
        compiler_params=pltpu.CompilerParams(
            dimension_semantics=("parallel",)),
    )


@jax.jit
def plamo2_decoder_layer(x, params):
    """x: (n_seq, L, HIDDEN) independent fresh prefill sequences -> (out, residual)."""
    n_seq, seq_len, hidden = x.shape
    assert seq_len == L and hidden == HIDDEN
    assert n_seq % SEQS_PER_STEP == 0
    n_steps = n_seq // SEQS_PER_STEP

    # Token-major row layout per grid block (row = t*SEQS_PER_STEP + seq): makes the
    # in-kernel conv delays / scan shifts tile-aligned and sequence-safe. Pure layout
    # plumbing, done by XLA outside the kernel.
    xk = (x.reshape(n_steps, SEQS_PER_STEP, L, HIDDEN)
           .transpose(0, 2, 1, 3)
           .reshape(n_steps * ROWS, HIDDEN))

    slab = _build_pallas_call(n_steps, len(params))(xk, *params)

    slab = (slab.reshape(n_steps, L, SEQS_PER_STEP, OUT_W)
                .transpose(0, 2, 1, 3)
                .reshape(n_seq, L, OUT_W))
    return slab[..., :hidden], slab[..., hidden:2 * hidden]


# --------------------------------------------------------------------------------
# Raw (checkpoint-layout) parameters and the one-time kernel-layout transform.
# --------------------------------------------------------------------------------
def init_params(key):
    ks = jax.random.split(key, 9)

    def lin(k, shape):
        return jax.random.normal(k, shape, jnp.float32) / math.sqrt(shape[0])

    pre_mixer_w = jnp.ones((1, HIDDEN), jnp.float32)
    in_proj_wt = lin(ks[0], (HIDDEN, 2 * I_SSM))
    conv_w = jax.random.normal(ks[1], (K, I_SSM), jnp.float32) * 0.3
    bcdt_wt = lin(ks[2], (I_SSM, 2 * DS + TSR))
    b_norm_w = jnp.ones((1, DS), jnp.float32)
    c_norm_w = jnp.ones((1, DS), jnp.float32)
    dt_norm_w = jnp.ones((1, TSR), jnp.float32)
    dt_wt = lin(ks[3], (TSR, NH))
    # get_initial_dt_bias (deterministic via PRNGKey)
    dt_min, dt_max = 0.001, 0.1
    u = jax.random.uniform(ks[4], (NH,), jnp.float32)
    dtv = jnp.exp(u * (math.log(dt_max) - math.log(dt_min)) + math.log(dt_min))
    dtv = jnp.maximum(dtv, 1e-4)
    dt_bias = (dtv + jnp.log(-jnp.expm1(-dtv))).reshape(1, NH).astype(jnp.float32)
    A = -jnp.exp(jax.random.normal(ks[5], (I_SSM, DS), jnp.float32) * 0.5)  # A = -exp(param)
    D = jnp.ones((1, I_SSM), jnp.float32)
    out_proj_wt = lin(ks[6], (I_SSM, HIDDEN))
    post_mixer_w = jnp.ones((1, HIDDEN), jnp.float32)
    pre_mlp_w = jnp.ones((1, HIDDEN), jnp.float32)
    gate_up_wt = lin(ks[7], (HIDDEN, 2 * I_MLP))
    down_wt = lin(ks[8], (I_MLP, HIDDEN))
    post_mlp_w = jnp.ones((1, HIDDEN), jnp.float32)
    return (pre_mixer_w, in_proj_wt, conv_w, bcdt_wt, b_norm_w, c_norm_w,
            dt_norm_w, dt_wt, dt_bias, A, D, out_proj_wt, post_mixer_w,
            pre_mlp_w, gate_up_wt, down_wt, post_mlp_w)


def prepare_params(raw):
    """One-time (load-time) transform of checkpoint-layout params into kernel layout."""
    (pre_mixer_w, in_proj_wt, conv_w, bcdt_wt, b_norm_w, c_norm_w, dt_norm_w,
     dt_wt, dt_bias, A, D, out_proj_wt, post_mixer_w, pre_mlp_w, gate_up_wt,
     down_wt, post_mlp_w) = raw
    bf16 = jnp.bfloat16
    f32 = jnp.float32

    # flat SSM layout: column j <-> (channel i = j // DS, state s = j % DS)
    flat = jnp.arange(IDS)
    chan = flat // DS
    st = flat % DS
    head_of_flat = chan // HD

    # ---- packed small f32 vectors: (8, IDS) ----
    vecs = jnp.zeros((8, IDS), f32)
    vecs = vecs.at[0, :].set(A.reshape(IDS))                       # a_flat (channel-major)
    vecs = vecs.at[1, :].set(dt_bias[0, head_of_flat])             # dt_bias expanded
    row2 = jnp.concatenate([pre_mixer_w[0], post_mixer_w[0], pre_mlp_w[0], post_mlp_w[0]])
    vecs = vecs.at[2, :row2.shape[0]].set(row2)
    row3 = jnp.concatenate([D[0], b_norm_w[0], c_norm_w[0], dt_norm_w[0]])
    vecs = vecs.at[3, :row3.shape[0]].set(row3)
    conv_rev = conv_w[::-1, :].reshape(-1)                         # tap d at cols [32d, 32d+32)
    vecs = vecs.at[4, :conv_rev.shape[0]].set(conv_rev)

    # ---- small bf16 weight slab (128, 128): [in_proj | bcdt | out_proj | mlp_gate_up] ----
    # in_proj: per-head [gate(HD) | hidden(HD)] interleave -> two contiguous halves.
    w3 = in_proj_wt.reshape(HIDDEN, NH, 2 * HD)
    wg = w3[:, :, :HD].reshape(HIDDEN, I_SSM)
    wu = w3[:, :, HD:].reshape(HIDDEN, I_SSM)
    w_in = jnp.concatenate([wg, wu], axis=1)                       # (32, 64)
    w_small = jnp.zeros((128, 128), f32)
    w_small = w_small.at[0:32, 0:2 * I_SSM].set(w_in)
    w_small = w_small.at[32:64, 0:2 * DS + TSR].set(bcdt_wt)       # [B | C | dt]
    w_small = w_small.at[64:96, 0:HIDDEN].set(out_proj_wt)
    w_small = w_small.at[96:128, 0:2 * I_MLP].set(gate_up_wt)      # [gate | up]
    w_small = w_small.astype(bf16)

    # ---- IDS-wide bf16 slab (TSR + I_SSM + DS, IDS) = (112, 512) ----
    dt_wt_exp = dt_wt[:, head_of_flat]                             # (TSR, IDS)
    rmat = (jnp.arange(I_SSM)[:, None] == chan[None, :]).astype(f32)   # (I_SSM, IDS)
    tmat = (jnp.arange(DS)[:, None] == st[None, :]).astype(f32)        # (DS, IDS)
    w_ids = jnp.concatenate([dt_wt_exp, rmat, tmat], axis=0).astype(bf16)

    rtmat = rmat.T.astype(bf16)                                    # (IDS, I_SSM)
    w_down = down_wt.astype(bf16)                                  # (I_MLP, HIDDEN)

    return (vecs, w_small, w_ids, rtmat, w_down)


# --------------------------------------------------------------------------------
# Pure-JAX reference (raw checkpoint-layout weights) — validates that the load-time
# layout transforms and the batched/token-major kernel are equivalence-preserving.
# --------------------------------------------------------------------------------
def _ref_layer_single(x, raw):
    (pre_mixer_w, in_proj_wt, conv_w, bcdt_wt, b_norm_w, c_norm_w, dt_norm_w,
     dt_wt, dt_bias, A, D, out_proj_wt, post_mixer_w, pre_mlp_w, gate_up_wt,
     down_wt, post_mlp_w) = raw
    f32 = jnp.float32
    bf16 = jnp.bfloat16

    def bdot(a, w):
        return jnp.dot(a.astype(bf16), w.astype(bf16), preferred_element_type=f32)

    residual = x
    h = _rms_norm(x, pre_mixer_w, EPS)
    proj = bdot(h, in_proj_wt).reshape(L, NH, 2 * HD)
    gate = proj[:, :, :HD].reshape(L, I_SSM)
    u_in = proj[:, :, HD:].reshape(L, I_SSM)

    u_pad = jnp.concatenate([jnp.zeros((K - 1, I_SSM), f32), u_in], axis=0)
    acc = jnp.zeros((L, I_SSM), f32)
    for k in range(K):
        acc = acc + u_pad[k:k + L, :] * conv_w[k:k + 1, :]
    u_conv = _silu(acc)

    ssm = bdot(u_conv, bcdt_wt)
    B = _rms_norm(ssm[:, :DS], b_norm_w, EPS)
    C = _rms_norm(ssm[:, DS:2 * DS], c_norm_w, EPS)
    dt = _rms_norm(ssm[:, 2 * DS:], dt_norm_w, EPS)
    dtp = bdot(dt, dt_wt)                                # (L, NH)
    delta = _softplus(jnp.repeat(dtp, HD, axis=1) + jnp.repeat(dt_bias, HD, axis=1))

    dA = jnp.exp(delta[:, :, None] * A[None, :, :])                  # (L, I, DS)
    dBu = (delta * u_conv)[:, :, None] * B[:, None, :]               # (L, I, DS)

    def step(state, inputs):
        dA_t, dBu_t = inputs
        new = dA_t * state + dBu_t
        return new, new

    _, states = jax.lax.scan(step, jnp.zeros((I_SSM, DS), f32), (dA, dBu))
    y = jnp.sum(states * C[:, None, :], axis=-1) + D * u_conv
    scan_out = y * _silu(gate)
    mixer_out = bdot(scan_out, out_proj_wt)

    h2 = _rms_norm(mixer_out, post_mixer_w, EPS)
    residual2 = h2 + residual
    h3 = _rms_norm(residual2, pre_mlp_w, EPS)
    gu = bdot(h3, gate_up_wt)
    hm = _silu(gu[:, :I_MLP]) * gu[:, I_MLP:]
    mo = bdot(hm, down_wt)
    out = _rms_norm(mo, post_mlp_w, EPS)
    return out, residual2


if __name__ == "__main__":
    key = jax.random.PRNGKey(0)
    kx, kp = jax.random.split(key)
    x = jax.random.normal(kx, (N_SEQ, L, HIDDEN), jnp.float32)
    raw = init_params(kp)
    params = prepare_params(raw)       # once, at parameter-load time

    out, residual = plamo2_decoder_layer(x, params)
    out = jax.block_until_ready(out)
    residual = jax.block_until_ready(residual)

    assert out.shape == (N_SEQ, L, HIDDEN) and residual.shape == (N_SEQ, L, HIDDEN)
    assert bool(jnp.all(jnp.isfinite(out))) and bool(jnp.all(jnp.isfinite(residual)))

    # validate against the raw-layout pure-JAX reference. Tolerance 2e-2 covers the
    # (review-requested) bf16 operand rounding of the 0/1 expand/contract matmuls on
    # top of the reference's own bf16 projection rounding.
    ref_out, ref_res = jax.jit(jax.vmap(_ref_layer_single, in_axes=(0, None)))(x, raw)
    assert bool(jnp.allclose(out, ref_out, rtol=2e-2, atol=2e-2)), \
        float(jnp.max(jnp.abs(out - ref_out)))
    assert bool(jnp.allclose(residual, ref_res, rtol=2e-2, atol=2e-2)), \
        float(jnp.max(jnp.abs(residual - ref_res)))

    print("KERNEL_OK")
</pallas_src>

<mosaic_0001>
module attributes {stable_mosaic.version = 11 : i64} {
  func.func @plamo2_layer_kernel(%arg0: i32, %arg1: memref<128x32xf32, #tpu.memory_space<vmem>>, %arg2: memref<8x512xf32, #tpu.memory_space<vmem>>, %arg3: memref<128x128xbf16, #tpu.memory_space<vmem>>, %arg4: memref<112x512xbf16, #tpu.memory_space<vmem>>, %arg5: memref<512x32xbf16, #tpu.memory_space<vmem>>, %arg6: memref<64x32xbf16, #tpu.memory_space<vmem>>, %arg7: memref<128x128xf32, #tpu.memory_space<vmem>>) attributes {dimension_semantics = [#tpu.dimension_semantics<parallel>], iteration_bounds = array<i64: 2>, scalar_prefetch = 0 : i64, scratch_operands = 0 : i64, tpu.core_type = #tpu.core_type<tc>, window_params = [{transform_indices = @transform_0, window_bounds = array<i64: 128, 32>}, {pipeline_mode = #tpu.pipeline_mode<synchronous>, transform_indices = @transform_1, window_bounds = array<i64: 8, 512>}, {pipeline_mode = #tpu.pipeline_mode<synchronous>, transform_indices = @transform_2, window_bounds = array<i64: 128, 128>}, {pipeline_mode = #tpu.pipeline_mode<synchronous>, transform_indices = @transform_3, window_bounds = array<i64: 112, 512>}, {pipeline_mode = #tpu.pipeline_mode<synchronous>, transform_indices = @transform_4, window_bounds = array<i64: 512, 32>}, {pipeline_mode = #tpu.pipeline_mode<synchronous>, transform_indices = @transform_5, window_bounds = array<i64: 64, 32>}, {transform_indices = @transform_6, window_bounds = array<i64: 128, 128>}]} {
    %c0 = arith.constant 0 : index
    %c0_0 = arith.constant 0 : index
    %0 = vector.load %arg2[%c0, %c0_0] : memref<8x512xf32, #tpu.memory_space<vmem>>, vector<1x512xf32>
    %c1 = arith.constant 1 : index
    %c0_1 = arith.constant 0 : index
    %1 = vector.load %arg2[%c1, %c0_1] : memref<8x512xf32, #tpu.memory_space<vmem>>, vector<1x512xf32>
    %c2 = arith.constant 2 : index
    %c0_2 = arith.constant 0 : index
    %2 = vector.load %arg2[%c2, %c0_2] : memref<8x512xf32, #tpu.memory_space<vmem>>, vector<1x32xf32>
    %c2_3 = arith.constant 2 : index
    %c32 = arith.constant 32 : index
    %3 = vector.load %arg2[%c2_3, %c32] : memref<8x512xf32, #tpu.memory_space<vmem>>, vector<1x32xf32>
    %c2_4 = arith.constant 2 : index
    %c64 = arith.constant 64 : index
    %4 = vector.load %arg2[%c2_4, %c64] : memref<8x512xf32, #tpu.memory_space<vmem>>, vector<1x32xf32>
    %c2_5 = arith.constant 2 : index
    %c96 = arith.constant 96 : index
    %5 = vector.load %arg2[%c2_5, %c96] : memref<8x512xf32, #tpu.memory_space<vmem>>, vector<1x32xf32>
    %c3 = arith.constant 3 : index
    %c0_6 = arith.constant 0 : index
    %6 = vector.load %arg2[%c3, %c0_6] : memref<8x512xf32, #tpu.memory_space<vmem>>, vector<1x32xf32>
    %c3_7 = arith.constant 3 : index
    %c32_8 = arith.constant 32 : index
    %7 = vector.load %arg2[%c3_7, %c32_8] : memref<8x512xf32, #tpu.memory_space<vmem>>, vector<1x16xf32>
    %c3_9 = arith.constant 3 : index
    %c48 = arith.constant 48 : index
    %8 = vector.load %arg2[%c3_9, %c48] : memref<8x512xf32, #tpu.memory_space<vmem>>, vector<1x16xf32>
    %c3_10 = arith.constant 3 : index
    %c64_11 = arith.constant 64 : index
    %9 = vector.load %arg2[%c3_10, %c64_11] : memref<8x512xf32, #tpu.memory_space<vmem>>, vector<1x64xf32>
    %c0_12 = arith.constant 0 : index
    %c0_13 = arith.constant 0 : index
    %10 = vector.load %arg1[%c0_12, %c0_13] : memref<128x32xf32, #tpu.memory_space<vmem>>, vector<128x32xf32>
    %11 = arith.mulf %10, %10 : vector<128x32xf32>
    %cst = arith.constant dense<0.000000e+00> : vector<128xf32>
    %12 = vector.multi_reduction <add>, %11, %cst [1] : vector<128x32xf32> to vector<128xf32>
    %13 = vector.shape_cast %12 : vector<128xf32> to vector<128x1xf32>
    %cst_14 = arith.constant 3.200000e+01 : f32
    %14 = vector.broadcast %cst_14 : f32 to vector<128x1xf32>
    %15 = arith.divf %13, %14 : vector<128x1xf32>
    %cst_15 = arith.constant 9.99999997E-7 : f32
    %16 = vector.broadcast %cst_15 : f32 to vector<128x1xf32>
    %17 = arith.addf %15, %16 : vector<128x1xf32>
    %18 = math.rsqrt %17 : vector<128x1xf32>
    %19 = vector.broadcast %18 : vector<128x1xf32> to vector<128x32xf32>
    %20 = arith.mulf %10, %19 : vector<128x32xf32>
    %21 = vector.broadcast %2 : vector<1x32xf32> to vector<128x32xf32>
    %22 = arith.mulf %20, %21 : vector<128x32xf32>
    %23 = arith.truncf %22 : vector<128x32xf32> to vector<128x32xbf16>
    %c0_16 = arith.constant 0 : index
    %c0_17 = arith.constant 0 : index
    %24 = vector.load %arg3[%c0_16, %c0_17] : memref<128x128xbf16, #tpu.memory_space<vmem>>, vector<32x128xbf16>
    %cst_18 = arith.constant dense<0.000000e+00> : vector<128x128xf32>
    %25 = tpu.matmul %23, %24, %cst_18 {dimension_numbers = #tpu.dot_dimension_numbers<[1], [0], [0], [1], [0, 0, 1, 1], [], []>} : vector<128x32xbf16>, vector<32x128xbf16>, vector<128x128xf32> -> vector<128x128xf32>
    %26 = vector.extract_strided_slice %25 {offsets = [0, 0], sizes = [128, 32], strides = [1, 1]} : vector<128x128xf32> to vector<128x32xf32>
    %27 = vector.extract_strided_slice %25 {offsets = [0, 32], sizes = [128, 32], strides = [1, 1]} : vector<128x128xf32> to vector<128x32xf32>
    %c4 = arith.constant 4 : index
    %c0_19 = arith.constant 0 : index
    %28 = vector.load %arg2[%c4, %c0_19] : memref<8x512xf32, #tpu.memory_space<vmem>>, vector<1x32xf32>
    %29 = vector.broadcast %28 : vector<1x32xf32> to vector<128x32xf32>
    %30 = arith.mulf %27, %29 : vector<128x32xf32>
    %c4_20 = arith.constant 4 : index
    %c32_21 = arith.constant 32 : index
    %31 = vector.load %arg2[%c4_20, %c32_21] : memref<8x512xf32, #tpu.memory_space<vmem>>, vector<1x32xf32>
    %cst_22 = arith.constant 0.000000e+00 : f32
    %32 = vector.broadcast %cst_22 : f32 to vector<16x32xf32>
    %33 = vector.extract_strided_slice %27 {offsets = [0, 0], sizes = [112, 32], strides = [1, 1]} : vector<128x32xf32> to vector<112x32xf32>
    %34 = tpu.concatenate %32, %33 in 0 : vector<16x32xf32>, vector<112x32xf32> -> vector<128x32xf32>
    %35 = vector.broadcast %31 : vector<1x32xf32> to vector<128x32xf32>
    %36 = arith.mulf %34, %35 : vector<128x32xf32>
    %37 = arith.addf %30, %36 : vector<128x32xf32>
    %c4_23 = arith.constant 4 : index
    %c64_24 = arith.constant 64 : index
    %38 = vector.load %arg2[%c4_23, %c64_24] : memref<8x512xf32, #tpu.memory_space<vmem>>, vector<1x32xf32>
    %cst_25 = arith.constant 0.000000e+00 : f32
    %39 = vector.broadcast %cst_25 : f32 to vector<32x32xf32>
    %40 = vector.extract_strided_slice %27 {offsets = [0, 0], sizes = [96, 32], strides = [1, 1]} : vector<128x32xf32> to vector<96x32xf32>
    %41 = tpu.concatenate %39, %40 in 0 : vector<32x32xf32>, vector<96x32xf32> -> vector<128x32xf32>
    %42 = vector.broadcast %38 : vector<1x32xf32> to vector<128x32xf32>
    %43 = arith.mulf %41, %42 : vector<128x32xf32>
    %44 = arith.addf %37, %43 : vector<128x32xf32>
    %c4_26 = arith.constant 4 : index
    %c96_27 = arith.constant 96 : index
    %45 = vector.load %arg2[%c4_26, %c96_27] : memref<8x512xf32, #tpu.memory_space<vmem>>, vector<1x32xf32>
    %cst_28 = arith.constant 0.000000e+00 : f32
    %46 = vector.broadcast %cst_28 : f32 to vector<48x32xf32>
    %47 = vector.extract_strided_slice %27 {offsets = [0, 0], sizes = [80, 32], strides = [1, 1]} : vector<128x32xf32> to vector<80x32xf32>
    %48 = tpu.concatenate %46, %47 in 0 : vector<48x32xf32>, vector<80x32xf32> -> vector<128x32xf32>
    %49 = vector.broadcast %45 : vector<1x32xf32> to vector<128x32xf32>
    %50 = arith.mulf %48, %49 : vector<128x32xf32>
    %51 = arith.addf %44, %50 : vector<128x32xf32>
    %52 = arith.negf %51 : vector<128x32xf32>
    %53 = math.exp %52 : vector<128x32xf32>
    %cst_29 = arith.constant 1.000000e+00 : f32
    %54 = vector.broadcast %cst_29 : f32 to vector<128x32xf32>
    %55 = arith.addf %54, %53 : vector<128x32xf32>
    %56 = arith.divf %54, %55 : vector<128x32xf32>
    %57 = arith.mulf %51, %56 : vector<128x32xf32>
    %58 = arith.truncf %57 : vector<128x32xf32> to vector<128x32xbf16>
    %c32_30 = arith.constant 32 : index
    %c0_31 = arith.constant 0 : index
    %59 = vector.load %arg3[%c32_30, %c0_31] : memref<128x128xbf16, #tpu.memory_space<vmem>>, vector<32x128xbf16>
    %cst_32 = arith.constant dense<0.000000e+00> : vector<128x128xf32>
    %60 = tpu.matmul %58, %59, %cst_32 {dimension_numbers = #tpu.dot_dimension_numbers<[1], [0], [0], [1], [0, 0, 1, 1], [], []>} : vector<128x32xbf16>, vector<32x128xbf16>, vector<128x128xf32> -> vector<128x128xf32>
    %61 = vector.extract_strided_slice %60 {offsets = [0, 0], sizes = [128, 16], strides = [1, 1]} : vector<128x128xf32> to vector<128x16xf32>
    %62 = arith.mulf %61, %61 : vector<128x16xf32>
    %cst_33 = arith.constant dense<0.000000e+00> : vector<128xf32>
    %63 = vector.multi_reduction <add>, %62, %cst_33 [1] : vector<128x16xf32> to vector<128xf32>
    %64 = vector.shape_cast %63 : vector<128xf32> to vector<128x1xf32>
    %cst_34 = arith.constant 1.600000e+01 : f32
    %65 = vector.broadcast %cst_34 : f32 to vector<128x1xf32>
    %66 = arith.divf %64, %65 : vector<128x1xf32>
    %cst_35 = arith.constant 9.99999997E-7 : f32
    %67 = vector.broadcast %cst_35 : f32 to vector<128x1xf32>
    %68 = arith.addf %66, %67 : vector<128x1xf32>
    %69 = math.rsqrt %68 : vector<128x1xf32>
    %70 = vector.broadcast %69 : vector<128x1xf32> to vector<128x16xf32>
    %71 = arith.mulf %61, %70 : vector<128x16xf32>
    %72 = vector.broadcast %7 : vector<1x16xf32> to vector<128x16xf32>
    %73 = arith.mulf %71, %72 : vector<128x16xf32>
    %74 = vector.extract_strided_slice %60 {offsets = [0, 16], sizes = [128, 16], strides = [1, 1]} : vector<128x128xf32> to vector<128x16xf32>
    %75 = arith.mulf %74, %74 : vector<128x16xf32>
    %cst_36 = arith.constant dense<0.000000e+00> : vector<128xf32>
    %76 = vector.multi_reduction <add>, %75, %cst_36 [1] : vector<128x16xf32> to vector<128xf32>
    %77 = vector.shape_cast %76 : vector<128xf32> to vector<128x1xf32>
    %cst_37 = arith.constant 1.600000e+01 : f32
    %78 = vector.broadcast %cst_37 : f32 to vector<128x1xf32>
    %79 = arith.divf %77, %78 : vector<128x1xf32>
    %cst_38 = arith.constant 9.99999997E-7 : f32
    %80 = vector.broadcast %cst_38 : f32 to vector<128x1xf32>
    %81 = arith.addf %79, %80 : vector<128x1xf32>
    %82 = math.rsqrt %81 : vector<128x1xf32>
    %83 = vector.broadcast %82 : vector<128x1xf32> to vector<128x16xf32>
    %84 = arith.mulf %74, %83 : vector<128x16xf32>
    %85 = vector.broadcast %8 : vector<1x16xf32> to vector<128x16xf32>
    %86 = arith.mulf %84, %85 : vector<128x16xf32>
    %87 = vector.extract_strided_slice %60 {offsets = [0, 32], sizes = [128, 64], strides = [1, 1]} : vector<128x128xf32> to vector<128x64xf32>
    %88 = arith.mulf %87, %87 : vector<128x64xf32>
    %cst_39 = arith.constant dense<0.000000e+00> : vector<128xf32>
    %89 = vector.multi_reduction <add>, %88, %cst_39 [1] : vector<128x64xf32> to vector<128xf32>
    %90 = vector.shape_cast %89 : vector<128xf32> to vector<128x1xf32>
    %cst_40 = arith.constant 6.400000e+01 : f32
    %91 = vector.broadcast %cst_40 : f32 to vector<128x1xf32>
    %92 = arith.divf %90, %91 : vector<128x1xf32>
    %cst_41 = arith.constant 9.99999997E-7 : f32
    %93 = vector.broadcast %cst_41 : f32 to vector<128x1xf32>
    %94 = arith.addf %92, %93 : vector<128x1xf32>
    %95 = math.rsqrt %94 : vector<128x1xf32>
    %96 = vector.broadcast %95 : vector<128x1xf32> to vector<128x64xf32>
    %97 = arith.mulf %87, %96 : vector<128x64xf32>
    %98 = vector.broadcast %9 : vector<1x64xf32> to vector<128x64xf32>
    %99 = arith.mulf %97, %98 : vector<128x64xf32>
    %100 = arith.truncf %99 : vector<128x64xf32> to vector<128x64xbf16>
    %c0_42 = arith.constant 0 : index
    %c0_43 = arith.constant 0 : index
    %101 = vector.load %arg4[%c0_42, %c0_43] : memref<112x512xbf16, #tpu.memory_space<vmem>>, vector<64x512xbf16>
    %cst_44 = arith.constant dense<0.000000e+00> : vector<128x512xf32>
    %102 = tpu.matmul %100, %101, %cst_44 {dimension_numbers = #tpu.dot_dimension_numbers<[1], [0], [0], [1], [0, 0, 1, 1], [], []>} : vector<128x64xbf16>, vector<64x512xbf16>, vector<128x512xf32> -> vector<128x512xf32>
    %103 = vector.broadcast %1 : vector<1x512xf32> to vector<128x512xf32>
    %104 = arith.addf %102, %103 : vector<128x512xf32>
    %cst_45 = arith.constant 0.000000e+00 : f32
    %105 = vector.broadcast %cst_45 : f32 to vector<128x512xf32>
    %106 = arith.maximumf %104, %105 : vector<128x512xf32>
    %107 = math.absf %104 : vector<128x512xf32>
    %cst_46 = arith.constant 0.000000e+00 : f32
    %108 = vector.broadcast %cst_46 : f32 to vector<128x512xf32>
    %109 = arith.subf %108, %107 : vector<128x512xf32>
    %110 = math.exp %109 : vector<128x512xf32>
    %111 = math.log1p %110 : vector<128x512xf32>
    %112 = arith.addf %106, %111 : vector<128x512xf32>
    %c64_47 = arith.constant 64 : index
    %c0_48 = arith.constant 0 : index
    %113 = vector.load %arg4[%c64_47, %c0_48] : memref<112x512xbf16, #tpu.memory_space<vmem>>, vector<32x512xbf16>
    %cst_49 = arith.constant dense<0.000000e+00> : vector<128x512xf32>
    %114 = tpu.matmul %58, %113, %cst_49 {dimension_numbers = #tpu.dot_dimension_numbers<[1], [0], [0], [1], [0, 0, 1, 1], [], []>} : vector<128x32xbf16>, vector<32x512xbf16>, vector<128x512xf32> -> vector<128x512xf32>
    %115 = arith.truncf %73 : vector<128x16xf32> to vector<128x16xbf16>
    %c96_50 = arith.constant 96 : index
    %c0_51 = arith.constant 0 : index
    %116 = vector.load %arg4[%c96_50, %c0_51] : memref<112x512xbf16, #tpu.memory_space<vmem>>, vector<16x512xbf16>
    %cst_52 = arith.constant dense<0.000000e+00> : vector<128x512xf32>
    %117 = tpu.matmul %115, %116, %cst_52 {dimension_numbers = #tpu.dot_dimension_numbers<[1], [0], [0], [1], [0, 0, 1, 1], [], []>} : vector<128x16xbf16>, vector<16x512xbf16>, vector<128x512xf32> -> vector<128x512xf32>
    %118 = arith.truncf %86 : vector<128x16xf32> to vector<128x16xbf16>
    %c96_53 = arith.constant 96 : index
    %c0_54 = arith.constant 0 : index
    %119 = vector.load %arg4[%c96_53, %c0_54] : memref<112x512xbf16, #tpu.memory_space<vmem>>, vector<16x512xbf16>
    %cst_55 = arith.constant dense<0.000000e+00> : vector<128x512xf32>
    %120 = tpu.matmul %118, %119, %cst_55 {dimension_numbers = #tpu.dot_dimension_numbers<[1], [0], [0], [1], [0, 0, 1, 1], [], []>} : vector<128x16xbf16>, vector<16x512xbf16>, vector<128x512xf32> -> vector<128x512xf32>
    %121 = vector.broadcast %0 : vector<1x512xf32> to vector<128x512xf32>
    %122 = arith.mulf %112, %121 : vector<128x512xf32>
    %123 = math.exp %122 : vector<128x512xf32>
    %124 = arith.mulf %112, %114 : vector<128x512xf32>
    %125 = arith.mulf %124, %117 : vector<128x512xf32>
    %cst_56 = arith.constant 0.000000e+00 : f32
    %126 = vector.broadcast %cst_56 : f32 to vector<16x512xf32>
    %127 = vector.extract_strided_slice %125 {offsets = [0, 0], sizes = [112, 512], strides = [1, 1]} : vector<128x512xf32> to vector<112x512xf32>
    %128 = tpu.concatenate %126, %127 in 0 : vector<16x512xf32>, vector<112x512xf32> -> vector<128x512xf32>
    %129 = arith.mulf %123, %128 : vector<128x512xf32>
    %130 = arith.addf %125, %129 : vector<128x512xf32>
    %cst_57 = arith.constant 0.000000e+00 : f32
    %131 = vector.broadcast %cst_57 : f32 to vector<16x512xf32>
    %132 = vector.extract_strided_slice %123 {offsets = [0, 0], sizes = [112, 512], strides = [1, 1]} : vector<128x512xf32> to vector<112x512xf32>
    %133 = tpu.concatenate %131, %132 in 0 : vector<16x512xf32>, vector<112x512xf32> -> vector<128x512xf32>
    %134 = arith.mulf %123, %133 : vector<128x512xf32>
    %cst_58 = arith.constant 0.000000e+00 : f32
    %135 = vector.broadcast %cst_58 : f32 to vector<32x512xf32>
    %136 = vector.extract_strided_slice %130 {offsets = [0, 0], sizes = [96, 512], strides = [1, 1]} : vector<128x512xf32> to vector<96x512xf32>
    %137 = tpu.concatenate %135, %136 in 0 : vector<32x512xf32>, vector<96x512xf32> -> vector<128x512xf32>
    %138 = arith.mulf %134, %137 : vector<128x512xf32>
    %139 = arith.addf %130, %138 : vector<128x512xf32>
    %cst_59 = arith.constant 0.000000e+00 : f32
    %140 = vector.broadcast %cst_59 : f32 to vector<32x512xf32>
    %141 = vector.extract_strided_slice %134 {offsets = [0, 0], sizes = [96, 512], strides = [1, 1]} : vector<128x512xf32> to vector<96x512xf32>
    %142 = tpu.concatenate %140, %141 in 0 : vector<32x512xf32>, vector<96x512xf32> -> vector<128x512xf32>
    %143 = arith.mulf %134, %142 : vector<128x512xf32>
    %cst_60 = arith.constant 0.000000e+00 : f32
    %144 = vector.broadcast %cst_60 : f32 to vector<64x512xf32>
    %145 = vector.extract_strided_slice %139 {offsets = [0, 0], sizes = [64, 512], strides = [1, 1]} : vector<128x512xf32> to vector<64x512xf32>
    %146 = tpu.concatenate %144, %145 in 0 : vector<64x512xf32>, vector<64x512xf32> -> vector<128x512xf32>
    %147 = arith.mulf %143, %146 : vector<128x512xf32>
    %148 = arith.addf %139, %147 : vector<128x512xf32>
    %149 = arith.mulf %148, %120 : vector<128x512xf32>
    %150 = arith.truncf %149 : vector<128x512xf32> to vector<128x512xbf16>
    %c0_61 = arith.constant 0 : index
    %c0_62 = arith.constant 0 : index
    %151 = vector.load %arg5[%c0_61, %c0_62] : memref<512x32xbf16, #tpu.memory_space<vmem>>, vector<512x32xbf16>
    %cst_63 = arith.constant dense<0.000000e+00> : vector<128x32xf32>
    %152 = tpu.matmul %150, %151, %cst_63 {dimension_numbers = #tpu.dot_dimension_numbers<[1], [0], [0], [1], [0, 0, 1, 1], [], []>} : vector<128x512xbf16>, vector<512x32xbf16>, vector<128x32xf32> -> vector<128x32xf32>
    %153 = vector.broadcast %6 : vector<1x32xf32> to vector<128x32xf32>
    %154 = arith.mulf %153, %57 : vector<128x32xf32>
    %155 = arith.addf %152, %154 : vector<128x32xf32>
    %156 = arith.negf %26 : vector<128x32xf32>
    %157 = math.exp %156 : vector<128x32xf32>
    %cst_64 = arith.constant 1.000000e+00 : f32
    %158 = vector.broadcast %cst_64 : f32 to vector<128x32xf32>
    %159 = arith.addf %158, %157 : vector<128x32xf32>
    %160 = arith.divf %158, %159 : vector<128x32xf32>
    %161 = arith.mulf %26, %160 : vector<128x32xf32>
    %162 = arith.mulf %155, %161 : vector<128x32xf32>
    %163 = arith.truncf %162 : vector<128x32xf32> to vector<128x32xbf16>
    %c64_65 = arith.constant 64 : index
    %c0_66 = arith.constant 0 : index
    %164 = vector.load %arg3[%c64_65, %c0_66] : memref<128x128xbf16, #tpu.memory_space<vmem>>, vector<32x128xbf16>
    %cst_67 = arith.constant dense<0.000000e+00> : vector<128x128xf32>
    %165 = tpu.matmul %163, %164, %cst_67 {dimension_numbers = #tpu.dot_dimension_numbers<[1], [0], [0], [1], [0, 0, 1, 1], [], []>} : vector<128x32xbf16>, vector<32x128xbf16>, vector<128x128xf32> -> vector<128x128xf32>
    %166 = vector.extract_strided_slice %165 {offsets = [0, 0], sizes = [128, 32], strides = [1, 1]} : vector<128x128xf32> to vector<128x32xf32>
    %167 = arith.mulf %166, %166 : vector<128x32xf32>
    %cst_68 = arith.constant dense<0.000000e+00> : vector<128xf32>
    %168 = vector.multi_reduction <add>, %167, %cst_68 [1] : vector<128x32xf32> to vector<128xf32>
    %169 = vector.shape_cast %168 : vector<128xf32> to vector<128x1xf32>
    %cst_69 = arith.constant 3.200000e+01 : f32
    %170 = vector.broadcast %cst_69 : f32 to vector<128x1xf32>
    %171 = arith.divf %169, %170 : vector<128x1xf32>
    %cst_70 = arith.constant 9.99999997E-7 : f32
    %172 = vector.broadcast %cst_70 : f32 to vector<128x1xf32>
    %173 = arith.addf %171, %172 : vector<128x1xf32>
    %174 = math.rsqrt %173 : vector<128x1xf32>
    %175 = vector.broadcast %174 : vector<128x1xf32> to vector<128x32xf32>
    %176 = arith.mulf %166, %175 : vector<128x32xf32>
    %177 = vector.broadcast %3 : vector<1x32xf32> to vector<128x32xf32>
    %178 = arith.mulf %176, %177 : vector<128x32xf32>
    %179 = arith.addf %178, %10 : vector<128x32xf32>
    %180 = arith.mulf %179, %179 : vector<128x32xf32>
    %cst_71 = arith.constant dense<0.000000e+00> : vector<128xf32>
    %181 = vector.multi_reduction <add>, %180, %cst_71 [1] : vector<128x32xf32> to vector<128xf32>
    %182 = vector.shape_cast %181 : vector<128xf32> to vector<128x1xf32>
    %cst_72 = arith.constant 3.200000e+01 : f32
    %183 = vector.broadcast %cst_72 : f32 to vector<128x1xf32>
    %184 = arith.divf %182, %183 : vector<128x1xf32>
    %cst_73 = arith.constant 9.99999997E-7 : f32
    %185 = vector.broadcast %cst_73 : f32 to vector<128x1xf32>
    %186 = arith.addf %184, %185 : vector<128x1xf32>
    %187 = math.rsqrt %186 : vector<128x1xf32>
    %188 = vector.broadcast %187 : vector<128x1xf32> to vector<128x32xf32>
    %189 = arith.mulf %179, %188 : vector<128x32xf32>
    %190 = vector.broadcast %4 : vector<1x32xf32> to vector<128x32xf32>
    %191 = arith.mulf %189, %190 : vector<128x32xf32>
    %192 = arith.truncf %191 : vector<128x32xf32> to vector<128x32xbf16>
    %c96_74 = arith.constant 96 : index
    %c0_75 = arith.constant 0 : index
    %193 = vector.load %arg3[%c96_74, %c0_75] : memref<128x128xbf16, #tpu.memory_space<vmem>>, vector<32x128xbf16>
    %cst_76 = arith.constant dense<0.000000e+00> : vector<128x128xf32>
    %194 = tpu.matmul %192, %193, %cst_76 {dimension_numbers = #tpu.dot_dimension_numbers<[1], [0], [0], [1], [0, 0, 1, 1], [], []>} : vector<128x32xbf16>, vector<32x128xbf16>, vector<128x128xf32> -> vector<128x128xf32>
    %195 = vector.extract_strided_slice %194 {offsets = [0, 0], sizes = [128, 64], strides = [1, 1]} : vector<128x128xf32> to vector<128x64xf32>
    %196 = arith.negf %195 : vector<128x64xf32>
    %197 = math.exp %196 : vector<128x64xf32>
    %cst_77 = arith.constant 1.000000e+00 : f32
    %198 = vector.broadcast %cst_77 : f32 to vector<128x64xf32>
    %199 = arith.addf %198, %197 : vector<128x64xf32>
    %200 = arith.divf %198, %199 : vector<128x64xf32>
    %201 = arith.mulf %195, %200 : vector<128x64xf32>
    %202 = vector.extract_strided_slice %194 {offsets = [0, 64], sizes = [128, 64], strides = [1, 1]} : vector<128x128xf32> to vector<128x64xf32>
    %203 = arith.mulf %201, %202 : vector<128x64xf32>
    %204 = arith.truncf %203 : vector<128x64xf32> to vector<128x64xbf16>
    %c0_78 = arith.constant 0 : index
    %c0_79 = arith.constant 0 : index
    %205 = vector.load %arg6[%c0_78, %c0_79] : memref<64x32xbf16, #tpu.memory_space<vmem>>, vector<64x32xbf16>
    %cst_80 = arith.constant dense<0.000000e+00> : vector<128x32xf32>
    %206 = tpu.matmul %204, %205, %cst_80 {dimension_numbers = #tpu.dot_dimension_numbers<[1], [0], [0], [1], [0, 0, 1, 1], [], []>} : vector<128x64xbf16>, vector<64x32xbf16>, vector<128x32xf32> -> vector<128x32xf32>
    %207 = arith.mulf %206, %206 : vector<128x32xf32>
    %cst_81 = arith.constant dense<0.000000e+00> : vector<128xf32>
    %208 = vector.multi_reduction <add>, %207, %cst_81 [1] : vector<128x32xf32> to vector<128xf32>
    %209 = vector.shape_cast %208 : vector<128xf32> to vector<128x1xf32>
    %cst_82 = arith.constant 3.200000e+01 : f32
    %210 = vector.broadcast %cst_82 : f32 to vector<128x1xf32>
    %211 = arith.divf %209, %210 : vector<128x1xf32>
    %cst_83 = arith.constant 9.99999997E-7 : f32
    %212 = vector.broadcast %cst_83 : f32 to vector<128x1xf32>
    %213 = arith.addf %211, %212 : vector<128x1xf32>
    %214 = math.rsqrt %213 : vector<128x1xf32>
    %215 = vector.broadcast %214 : vector<128x1xf32> to vector<128x32xf32>
    %216 = arith.mulf %206, %215 : vector<128x32xf32>
    %217 = vector.broadcast %5 : vector<1x32xf32> to vector<128x32xf32>
    %218 = arith.mulf %216, %217 : vector<128x32xf32>
    %cst_84 = arith.constant 0.000000e+00 : f32
    %219 = vector.broadcast %cst_84 : f32 to vector<128x64xf32>
    %220 = tpu.concatenate %218, %179, %219 in 1 : vector<128x32xf32>, vector<128x32xf32>, vector<128x64xf32> -> vector<128x128xf32>
    %c0_85 = arith.constant 0 : index
    %c0_86 = arith.constant 0 : index
    %221 = vector.load %arg7[%c0_85, %c0_86] : memref<128x128xf32, #tpu.memory_space<vmem>>, vector<128x128xf32>
    tpu.vector_store %arg7[%c0_85, %c0_86], %220 {strides = array<i32>} : memref<128x128xf32, #tpu.memory_space<vmem>>, vector<128x128xf32>,
    return
  }
  func.func @transform_0(%arg0: i32) -> (i32, i32) {
    %c0_i32 = arith.constant 0 : i32
    %c0_i32_0 = arith.constant 0 : i32
    return %arg0, %c0_i32 : i32, i32
  }
  func.func @transform_1(%arg0: i32) -> (i32, i32) {
    %c0_i32 = arith.constant 0 : i32
    %c0_i32_0 = arith.constant 0 : i32
    %c0_i32_1 = arith.constant 0 : i32
    return %c0_i32, %c0_i32_0 : i32, i32
  }
  func.func @transform_2(%arg0: i32) -> (i32, i32) {
    %c0_i32 = arith.constant 0 : i32
    %c0_i32_0 = arith.constant 0 : i32
    %c0_i32_1 = arith.constant 0 : i32
    return %c0_i32, %c0_i32_0 : i32, i32
  }
  func.func @transform_3(%arg0: i32) -> (i32, i32) {
    %c0_i32 = arith.constant 0 : i32
    %c0_i32_0 = arith.constant 0 : i32
    %c0_i32_1 = arith.constant 0 : i32
    return %c0_i32, %c0_i32_0 : i32, i32
  }
  func.func @transform_4(%arg0: i32) -> (i32, i32) {
    %c0_i32 = arith.constant 0 : i32
    %c0_i32_0 = arith.constant 0 : i32
    %c0_i32_1 = arith.constant 0 : i32
    return %c0_i32, %c0_i32_0 : i32, i32
  }
  func.func @transform_5(%arg0: i32) -> (i32, i32) {
    %c0_i32 = arith.constant 0 : i32
    %c0_i32_0 = arith.constant 0 : i32
    %c0_i32_1 = arith.constant 0 : i32
    return %c0_i32, %c0_i32_0 : i32, i32
  }
  func.func @transform_6(%arg0: i32) -> (i32, i32) {
    %c0_i32 = arith.constant 0 : i32
    %c0_i32_0 = arith.constant 0 : i32
    return %arg0, %c0_i32 : i32, i32
  }
}

</mosaic_0001>

<llo_original>
// kernel: plamo2_decoder_layer.1
$region0: #{plamo2_decoder_layer.1}
  #allocation0 [shape = 'u32[]', space=smem, size = 0x4, offset = 0x4, fixed_abs, tag = 'smem constant byte address 0x4 - core index']
  #allocation1 [shape = 'u32[144,128]{1,0:T(1,128)}', space=vmem, size = 0x12000, scoped, tag = 'internal scratch']
  %s0 = inlined_call_operand.vmem [shape: f32[256,32], index: 0, kind: input, shape index: {}]
  %s1 = inlined_call_operand.vmem [shape: f32[8,512], index: 1, kind: input, shape index: {}]
  %s2 = inlined_call_operand.vmem [shape: bf16[128,128], index: 2, kind: input, shape index: {}]
  %s3 = inlined_call_operand.vmem [shape: bf16[112,512], index: 3, kind: input, shape index: {}]
  %s4 = inlined_call_operand.vmem [shape: bf16[512,32], index: 4, kind: input, shape index: {}]
  %s5 = inlined_call_operand.vmem [shape: bf16[64,32], index: 5, kind: input, shape index: {}]
  %s6 = inlined_call_operand.vmem [shape: f32[256,128], index: 6, kind: output, shape index: {}]
  %s7 = sld [smem:[#allocation0]]
  $region57: #{plamo2_decoder_layer.1} parent=0
    _
  %s9 = ssub.s32 1, %s7
  %s10 = scalar_select 0, %s9, %s7
  loop: start=0, step=1, limit=4
  $region2: #{plamo2_decoder_layer.1} parent=0 // loop_pre_header
    _
  $region3: #{plamo2_decoder_layer.1} parent=0 // loop_header
    %s12 = sphi 0, %s16
    %p13 = scmp.ge.s32.totalorder %s12, 4
    %s22 = sphi 0, %s24
    %s25 = sphi 0, %s22
    %s26 = sphi 0, %s25
    %s42 = sphi 0, %s26
    %s46 = sphi 0, %s46
    %s48 = sphi 0, %s46
    %s49 = sphi 0, %s48
    %s63 = sphi 0, %s49
    %s67 = sphi 0, %s67
    %s69 = sphi 0, %s67
    %s70 = sphi 0, %s69
    %s84 = sphi 0, %s70
    %s88 = sphi 0, %s88
    %s90 = sphi 0, %s88
    %s91 = sphi 0, %s90
    %s105 = sphi 0, %s91
    %s109 = sphi 0, %s109
    %s111 = sphi 0, %s109
    %s112 = sphi 0, %s111
    %s126 = sphi 0, %s112
    %s130 = sphi 0, %s130
    %s132 = sphi 0, %s130
    %s133 = sphi 0, %s132
    %s147 = sphi 0, %s133
    %s153 = sphi 0, %s155
    %s156 = sphi 0, %s153
    %s157 = sphi 0, %s156
    %s173 = sphi 0, %s157
  $region4: #{plamo2_decoder_layer.1} parent=0 // loop_header_branch
    %15 = sbr.rel (%p13) target = $region8
  $region5: #{plamo2_decoder_layer.1} parent=0 // loop_body
    %s17 = ssub.s32 %s12, 1
    %s18 = ssub.s32 %s12, 2
    %s19 = sadd.s32 %s12, 1
    %s20 = ssub.s32 %s12, %s19
    %p21 = scmp.eq.s32.totalorder %s20, 0
    %s23 = sadd.s32 %s22, 1
    %s24 = scalar_select %p21, %s22, %s23
    %p27 = pneg %p21
    %p28 = scmp.eq.s32.totalorder %s12, 1
    %p29 = por %p27, %p28
    %p30 = scmp.ne.s32.totalorder %s22, %s25
    %p31 = scmp.eq.s32.totalorder %s12, 0
    %p32 = por %p30, %p31
    %p33 = scmp.ne.s32.totalorder %s22, %s25
    %p34 = scmp.eq.s32.totalorder %s17, 1
    %p35 = por %p33, %p34
    %p36 = scmp.ne.s32.totalorder %s25, %s26
    %p37 = scmp.eq.s32.totalorder %s17, 0
    %p38 = por %p36, %p37
    %p39 = scmp.ne.s32.totalorder %s25, %s26
    %p40 = scmp.eq.s32.totalorder %s18, 1
    %p41 = por %p39, %p40
    %p43 = scmp.ne.s32.totalorder %s26, %s42
    %p44 = scmp.eq.s32.totalorder %s18, 0
    %p45 = por %p43, %p44
    %s47 = sadd.s32 %s46, 1
    %p50 = scmp.eq.s32.totalorder %s12, 1
    %p51 = scmp.ne.s32.totalorder %s46, %s48
    %p52 = scmp.eq.s32.totalorder %s12, 0
    %p53 = por %p51, %p52
    %p54 = scmp.ne.s32.totalorder %s46, %s48
    %p55 = scmp.eq.s32.totalorder %s17, 1
    %p56 = por %p54, %p55
    %p57 = scmp.ne.s32.totalorder %s48, %s49
    %p58 = scmp.eq.s32.totalorder %s17, 0
    %p59 = por %p57, %p58
    %p60 = scmp.ne.s32.totalorder %s48, %s49
    %p61 = scmp.eq.s32.totalorder %s18, 1
    %p62 = por %p60, %p61
    %p64 = scmp.ne.s32.totalorder %s49, %s63
    %p65 = scmp.eq.s32.totalorder %s18, 0
    %p66 = por %p64, %p65
    %s68 = sadd.s32 %s67, 1
    %p71 = scmp.eq.s32.totalorder %s12, 1
    %p72 = scmp.ne.s32.totalorder %s67, %s69
    %p73 = scmp.eq.s32.totalorder %s12, 0
    %p74 = por %p72, %p73
    %p75 = scmp.ne.s32.totalorder %s67, %s69
    %p76 = scmp.eq.s32.totalorder %s17, 1
    %p77 = por %p75, %p76
    %p78 = scmp.ne.s32.totalorder %s69, %s70
    %p79 = scmp.eq.s32.totalorder %s17, 0
    %p80 = por %p78, %p79
    %p81 = scmp.ne.s32.totalorder %s69, %s70
    %p82 = scmp.eq.s32.totalorder %s18, 1
    %p83 = por %p81, %p82
    %p85 = scmp.ne.s32.totalorder %s70, %s84
    %p86 = scmp.eq.s32.totalorder %s18, 0
    %p87 = por %p85, %p86
    %s89 = sadd.s32 %s88, 1
    %p92 = scmp.eq.s32.totalorder %s12, 1
    %p93 = scmp.ne.s32.totalorder %s88, %s90
    %p94 = scmp.eq.s32.totalorder %s12, 0
    %p95 = por %p93, %p94
    %p96 = scmp.ne.s32.totalorder %s88, %s90
    %p97 = scmp.eq.s32.totalorder %s17, 1
    %p98 = por %p96, %p97
    %p99 = scmp.ne.s32.totalorder %s90, %s91
    %p100 = scmp.eq.s32.totalorder %s17, 0
    %p101 = por %p99, %p100
    %p102 = scmp.ne.s32.totalorder %s90, %s91
    %p103 = scmp.eq.s32.totalorder %s18, 1
    %p104 = por %p102, %p103
    %p106 = scmp.ne.s32.totalorder %s91, %s105
    %p107 = scmp.eq.s32.totalorder %s18, 0
    %p108 = por %p106, %p107
    %s110 = sadd.s32 %s109, 1
    %p113 = scmp.eq.s32.totalorder %s12, 1
    %p114 = scmp.ne.s32.totalorder %s109, %s111
    %p115 = scmp.eq.s32.totalorder %s12, 0
    %p116 = por %p114, %p115
    %p117 = scmp.ne.s32.totalorder %s109, %s111
    %p118 = scmp.eq.s32.totalorder %s17, 1
    %p119 = por %p117, %p118
    %p120 = scmp.ne.s32.totalorder %s111, %s112
    %p121 = scmp.eq.s32.totalorder %s17, 0
    %p122 = por %p120, %p121
    %p123 = scmp.ne.s32.totalorder %s111, %s112
    %p124 = scmp.eq.s32.totalorder %s18, 1
    %p125 = por %p123, %p124
    %p127 = scmp.ne.s32.totalorder %s112, %s126
    %p128 = scmp.eq.s32.totalorder %s18, 0
    %p129 = por %p127, %p128
    %s131 = sadd.s32 %s130, 1
    %p134 = scmp.eq.s32.totalorder %s12, 1
    %p135 = scmp.ne.s32.totalorder %s130, %s132
    %p136 = scmp.eq.s32.totalorder %s12, 0
    %p137 = por %p135, %p136
    %p138 = scmp.ne.s32.totalorder %s130, %s132
    %p139 = scmp.eq.s32.totalorder %s17, 1
    %p140 = por %p138, %p139
    %p141 = scmp.ne.s32.totalorder %s132, %s133
    %p142 = scmp.eq.s32.totalorder %s17, 0
    %p143 = por %p141, %p142
    %p144 = scmp.ne.s32.totalorder %s132, %s133
    %p145 = scmp.eq.s32.totalorder %s18, 1
    %p146 = por %p144, %p145
    %p148 = scmp.ne.s32.totalorder %s133, %s147
    %p149 = scmp.eq.s32.totalorder %s18, 0
    %p150 = por %p148, %p149
    %s151 = ssub.s32 %s12, %s19
    %p152 = scmp.eq.s32.totalorder %s151, 0
    %s154 = sadd.s32 %s153, 1
    %s155 = scalar_select %p152, %s153, %s154
    %p158 = pneg %p152
    %p159 = scmp.eq.s32.totalorder %s12, 1
    %p160 = por %p158, %p159
    %p161 = scmp.ne.s32.totalorder %s153, %s156
    %p162 = scmp.eq.s32.totalorder %s12, 0
    %p163 = por %p161, %p162
    %p164 = scmp.ne.s32.totalorder %s153, %s156
    %p165 = scmp.eq.s32.totalorder %s17, 1
    %p166 = por %p164, %p165
    %p167 = scmp.ne.s32.totalorder %s156, %s157
    %p168 = scmp.eq.s32.totalorder %s17, 0
    %p169 = por %p167, %p168
    %p170 = scmp.ne.s32.totalorder %s156, %s157
    %p171 = scmp.eq.s32.totalorder %s18, 1
    %p172 = por %p170, %p171
    %p174 = scmp.ne.s32.totalorder %s157, %s173
    %p175 = scmp.eq.s32.totalorder %s18, 0
    %p176 = por %p174, %p175
    %p177 = scmp.le.s32.totalorder 1, %s12
    %p178 = scmp.lt.s32.totalorder %s12, 3
    %p179 = pnand %p177, %p178
    %p180 = pneg %p179
    // Predicated region
    $region9: #{plamo2_decoder_layer.1} parent=5 // pred_check
      _
    $region10: #{plamo2_decoder_layer.1} parent=5 // pred_check_branch
      %182 = sbr.rel (%p179) target = $region12
    $region11: #{plamo2_decoder_layer.1} parent=5 // pred_region
      %s183 = ssub.s32 %s12, 1
      // Predicated region
      $region13: #{plamo2_decoder_layer.1} parent=11 // pred_check
        %p184 = pneg %p59
      $region14: #{plamo2_decoder_layer.1} parent=11 // pred_check_branch
        %186 = sbr.rel (%p184) target = $region16
      $region15: #{plamo2_decoder_layer.1} parent=11 // pred_region
        _
      $region16: #{plamo2_decoder_layer.1} parent=11 // pred_fallthru
        _
      // Predicated region
      $region17: #{plamo2_decoder_layer.1} parent=11 // pred_check
        %p187 = pneg %p80
      $region18: #{plamo2_decoder_layer.1} parent=11 // pred_check_branch
        %189 = sbr.rel (%p187) target = $region20
      $region19: #{plamo2_decoder_layer.1} parent=11 // pred_region
        _
      $region20: #{plamo2_decoder_layer.1} parent=11 // pred_fallthru
        _
      // Predicated region
      $region21: #{plamo2_decoder_layer.1} parent=11 // pred_check
        %p190 = pneg %p101
      $region22: #{plamo2_decoder_layer.1} parent=11 // pred_check_branch
        %192 = sbr.rel (%p190) target = $region24
      $region23: #{plamo2_decoder_layer.1} parent=11 // pred_region
        _
      $region24: #{plamo2_decoder_layer.1} parent=11 // pred_fallthru
        _
      // Predicated region
      $region25: #{plamo2_decoder_layer.1} parent=11 // pred_check
        %p193 = pneg %p122
      $region26: #{plamo2_decoder_layer.1} parent=11 // pred_check_branch
        %195 = sbr.rel (%p193) target = $region28
      $region27: #{plamo2_decoder_layer.1} parent=11 // pred_region
        _
      $region28: #{plamo2_decoder_layer.1} parent=11 // pred_fallthru
        _
      // Predicated region
      $region29: #{plamo2_decoder_layer.1} parent=11 // pred_check
        %p196 = pneg %p143
      $region30: #{plamo2_decoder_layer.1} parent=11 // pred_check_branch
        %198 = sbr.rel (%p196) target = $region32
      $region31: #{plamo2_decoder_layer.1} parent=11 // pred_region
        _
      $region32: #{plamo2_decoder_layer.1} parent=11 // pred_fallthru
        _
    $region12: #{plamo2_decoder_layer.1} parent=5 // pred_fallthru
      _
    %p199 = scmp.lt.s32.totalorder %s12, 2
    // Predicated region
    $region33: #{plamo2_decoder_layer.1} parent=5 // pred_check
      %p200 = pneg %p199
    $region34: #{plamo2_decoder_layer.1} parent=5 // pred_check_branch
      %202 = sbr.rel (%p200) target = $region36
    $region35: #{plamo2_decoder_layer.1} parent=5 // pred_region
      // Predicated region
      $region37: #{plamo2_decoder_layer.1} parent=35 // pred_check
        %p203 = pneg %p32
      $region38: #{plamo2_decoder_layer.1} parent=35 // pred_check_branch
        %205 = sbr.rel (%p203) target = $region40
      $region39: #{plamo2_decoder_layer.1} parent=35 // pred_region
        %s206 = smul.u32 16, %s12
        %p207 = scmp.lt.s32.totalorder %s206, 31
        %s208 = scalar_select %p207, %s206, 31
        %s209 = smul.addr %s208, 8
        %s210 = scalar_lea.vmem %s0, %s209
        %s211 = smul.u32 16, %s12
      $region40: #{plamo2_decoder_layer.1} parent=35 // pred_fallthru
        _
    $region36: #{plamo2_decoder_layer.1} parent=5 // pred_fallthru
      _
    %p212 = scmp.le.s32.totalorder 1, %s12
    %p213 = scmp.lt.s32.totalorder %s12, 3
    %p214 = pnand %p212, %p213
    %p215 = pneg %p214
    // Predicated region
    $region41: #{plamo2_decoder_layer.1} parent=5 // pred_check
      _
    $region42: #{plamo2_decoder_layer.1} parent=5 // pred_check_branch
      %217 = sbr.rel (%p214) target = $region44
    $region43: #{plamo2_decoder_layer.1} parent=5 // pred_region
      %s218 = ssub.s32 %s12, 1
      %s219 = smul.u32 16, %s17
      %p220 = scmp.lt.s32.totalorder %s219, 31
      %s221 = scalar_select %p220, %s219, 31
      %s222 = smul.addr %s221, 8
      %s223 = scalar_lea.vmem %s0, %s222
      %p224 = pneg %p38
      %p225 = pneg %p35
      %p226 = pneg %p59
      %p227 = pneg %p56
      %p228 = pneg %p80
      %p229 = pneg %p77
      %p230 = pneg %p101
      %p231 = pneg %p98
      %p232 = pneg %p122
      %p233 = pneg %p119
      %p234 = pneg %p143
      %p235 = pneg %p140
      %p236 = pneg %p169
      %p237 = pneg %p166
      %s238 = smul.u32 16, %s17
      %p239 = scmp.lt.s32.totalorder %s238, 31
      %s240 = scalar_select %p239, %s238, 31
      %s241 = smul.addr %s240, 8
      %s242 = scalar_lea.vmem %s6, %s241
      %s243 = smul.u32 16, %s17
      %p244 = scmp.lt.s32.totalorder %s243, 31
      %s245 = scalar_select %p244, %s243, 31
      %s246 = smul.addr %s245, 8
      %s247 = scalar_lea.vmem %s0, %s246
      %s248 = smul.u32 16, %s17
      %s249 = smul.u32 16, %s17
      %p250 = scmp.lt.s32.totalorder %s249, 31
      %s251 = scalar_select %p250, %s249, 31
      %s252 = smul.addr %s251, 8
      %s253 = scalar_lea.vmem %s6, %s252
      %s254 = smul.u32 16, %s17
      %v256 = vld [vmem:[%s1] ss:$8 sm:$0xf]
      %s257 = scalar_lea.vmem %s1, 1
      %v258 = vld [vmem:[%s257] ss:$8 sm:$0xf]
      %v259 = vld [vmem:[%s1 + $0x2] ss:$0 sm:$0xff]
      %v260 = vld [vmem:[%s1 + $0x3] ss:$0 sm:$0xff]
      %v261 = vld [vmem:[%s247] sm:$0xff]
      %v262 = vld [vmem:[%s247 + $0x8] sm:$0xff]
      %v263 = vld [vmem:[%s247 + $0x10] sm:$0xff]
      %v264 = vld [vmem:[%s247 + $0x18] sm:$0xff]
      %v265 = vld [vmem:[%s247 + $0x20] sm:$0xff]
      %v266 = vld [vmem:[%s247 + $0x28] sm:$0xff]
      %v267 = vld [vmem:[%s247 + $0x30] sm:$0xff]
      %v268 = vld [vmem:[%s247 + $0x38] sm:$0xff]
      %v269 = vld [vmem:[%s247 + $0x40] sm:$0xff]
      %v270 = vld [vmem:[%s247 + $0x48] sm:$0xff]
      %v271 = vld [vmem:[%s247 + $0x50] sm:$0xff]
      %v272 = vld [vmem:[%s247 + $0x58] sm:$0xff]
      %v273 = vld [vmem:[%s247 + $0x60] sm:$0xff]
      %v274 = vld [vmem:[%s247 + $0x68] sm:$0xff]
      %v275 = vld [vmem:[%s247 + $0x70] sm:$0xff]
      %v276 = vld [vmem:[%s247 + $0x78] sm:$0xff]
      %v277 = vmul.f32 %v261, %v261
      %v278 = vmul.f32 %v262, %v262
      %v279 = vmul.f32 %v263, %v263
      %v280 = vmul.f32 %v264, %v264
      %v281 = vmul.f32 %v265, %v265
      %v282 = vmul.f32 %v266, %v266
      %v283 = vmul.f32 %v267, %v267
      %v284 = vmul.f32 %v268, %v268
      %v285 = vmul.f32 %v269, %v269
      %v286 = vmul.f32 %v270, %v270
      %v287 = vmul.f32 %v271, %v271
      %v288 = vmul.f32 %v272, %v272
      %v289 = vmul.f32 %v273, %v273
      %v290 = vmul.f32 %v274, %v274
      %v291 = vmul.f32 %v275, %v275
      %v292 = vmul.f32 %v276, %v276
      %vm293 = vcmask 261120
      %v294 = vsel %vm293, %v277, 0.0
      %295 = vadd.xlane.f32.xlu0 %v294
      %v296 = vpop.xlane.xlu0 %295
      %v297 = vsel %vm293, %v278, 0.0
      %298 = vadd.xlane.f32.xlu0 %v297
      %v299 = vpop.xlane.xlu0 %298
      %v300 = vsel %vm293, %v279, 0.0
      %301 = vadd.xlane.f32.xlu0 %v300
      %v302 = vpop.xlane.xlu0 %301
      %v303 = vsel %vm293, %v280, 0.0
      %304 = vadd.xlane.f32.xlu0 %v303
      %v305 = vpop.xlane.xlu0 %304
      %v306 = vsel %vm293, %v281, 0.0
      %307 = vadd.xlane.f32.xlu0 %v306
      %v308 = vpop.xlane.xlu0 %307
      %v309 = vsel %vm293, %v282, 0.0
      %310 = vadd.xlane.f32.xlu0 %v309
      %v311 = vpop.xlane.xlu0 %310
      %v312 = vsel %vm293, %v283, 0.0
      %313 = vadd.xlane.f32.xlu0 %v312
      %v314 = vpop.xlane.xlu0 %313
      %v315 = vsel %vm293, %v284, 0.0
      %316 = vadd.xlane.f32.xlu0 %v315
      %v317 = vpop.xlane.xlu0 %316
      %v318 = vsel %vm293, %v285, 0.0
      %319 = vadd.xlane.f32.xlu0 %v318
      %v320 = vpop.xlane.xlu0 %319
      %v321 = vsel %vm293, %v286, 0.0
      %322 = vadd.xlane.f32.xlu0 %v321
      %v323 = vpop.xlane.xlu0 %322
      %v324 = vsel %vm293, %v287, 0.0
      %325 = vadd.xlane.f32.xlu0 %v324
      %v326 = vpop.xlane.xlu0 %325
      %v327 = vsel %vm293, %v288, 0.0
      %328 = vadd.xlane.f32.xlu0 %v327
      %v329 = vpop.xlane.xlu0 %328
      %v330 = vsel %vm293, %v289, 0.0
      %331 = vadd.xlane.f32.xlu0 %v330
      %v332 = vpop.xlane.xlu0 %331
      %v333 = vsel %vm293, %v290, 0.0
      %334 = vadd.xlane.f32.xlu0 %v333
      %v335 = vpop.xlane.xlu0 %334
      %v336 = vsel %vm293, %v291, 0.0
      %337 = vadd.xlane.f32.xlu0 %v336
      %v338 = vpop.xlane.xlu0 %337
      %v339 = vsel %vm293, %v292, 0.0
      %340 = vadd.xlane.f32.xlu0 %v339
      %v341 = vpop.xlane.xlu0 %340
      %v342 = vrcp.pop 32.0
      %v343 = vmul.f32 %v296, %v342
      %v344 = vmul.f32 %v299, %v342
      %v345 = vmul.f32 %v302, %v342
      %v346 = vmul.f32 %v305, %v342
      %v347 = vmul.f32 %v308, %v342
      %v348 = vmul.f32 %v311, %v342
      %v349 = vmul.f32 %v314, %v342
      %v350 = vmul.f32 %v317, %v342
      %v351 = vmul.f32 %v320, %v342
      %v352 = vmul.f32 %v323, %v342
      %v353 = vmul.f32 %v326, %v342
      %v354 = vmul.f32 %v329, %v342
      %v355 = vmul.f32 %v332, %v342
      %v356 = vmul.f32 %v335, %v342
      %v357 = vmul.f32 %v338, %v342
      %v358 = vmul.f32 %v341, %v342
      %v359 = vadd.f32 %v343, 1e-06
      %v360 = vadd.f32 %v344, 1e-06
      %v361 = vadd.f32 %v345, 1e-06
      %v362 = vadd.f32 %v346, 1e-06
      %v363 = vadd.f32 %v347, 1e-06
      %v364 = vadd.f32 %v348, 1e-06
      %v365 = vadd.f32 %v349, 1e-06
      %v366 = vadd.f32 %v350, 1e-06
      %v367 = vadd.f32 %v351, 1e-06
      %v368 = vadd.f32 %v352, 1e-06
      %v369 = vadd.f32 %v353, 1e-06
      %v370 = vadd.f32 %v354, 1e-06
      %v371 = vadd.f32 %v355, 1e-06
      %v372 = vadd.f32 %v356, 1e-06
      %v373 = vadd.f32 %v357, 1e-06
      %v374 = vadd.f32 %v358, 1e-06
      %v375 = vrsqrt.pop %v359
      %v376 = vrsqrt.pop %v360
      %v377 = vrsqrt.pop %v361
      %v378 = vrsqrt.pop %v362
      %v379 = vrsqrt.pop %v363
      %v380 = vrsqrt.pop %v364
      %v381 = vrsqrt.pop %v365
      %v382 = vrsqrt.pop %v366
      %v383 = vrsqrt.pop %v367
      %v384 = vrsqrt.pop %v368
      %v385 = vrsqrt.pop %v369
      %v386 = vrsqrt.pop %v370
      %v387 = vrsqrt.pop %v371
      %v388 = vrsqrt.pop %v372
      %v389 = vrsqrt.pop %v373
      %v390 = vrsqrt.pop %v374
      %v391 = vmul.f32 %v261, %v375
      %v392 = vmul.f32 %v262, %v376
      %v393 = vmul.f32 %v263, %v377
      %v394 = vmul.f32 %v264, %v378
      %v395 = vmul.f32 %v265, %v379
      %v396 = vmul.f32 %v266, %v380
      %v397 = vmul.f32 %v267, %v381
      %v398 = vmul.f32 %v268, %v382
      %v399 = vmul.f32 %v269, %v383
      %v400 = vmul.f32 %v270, %v384
      %v401 = vmul.f32 %v271, %v385
      %v402 = vmul.f32 %v272, %v386
      %v403 = vmul.f32 %v273, %v387
      %v404 = vmul.f32 %v274, %v388
      %v405 = vmul.f32 %v275, %v389
      %v406 = vmul.f32 %v276, %v390
      %v407 = vmul.f32 %v391, %v259
      %v408 = vmul.f32 %v392, %v259
      %v409 = vmul.f32 %v393, %v259
      %v410 = vmul.f32 %v394, %v259
      %v411 = vmul.f32 %v395, %v259
      %v412 = vmul.f32 %v396, %v259
      %v413 = vmul.f32 %v397, %v259
      %v414 = vmul.f32 %v398, %v259
      %v415 = vmul.f32 %v399, %v259
      %v416 = vmul.f32 %v400, %v259
      %v417 = vmul.f32 %v401, %v259
      %v418 = vmul.f32 %v402, %v259
      %v419 = vmul.f32 %v403, %v259
      %v420 = vmul.f32 %v404, %v259
      %v421 = vmul.f32 %v405, %v259
      %v422 = vmul.f32 %v406, %v259
      %v423 = vpack.c.bf16 %v408, %v407
      %v424 = vpack.c.bf16 %v410, %v409
      %v425 = vpack.c.bf16 %v412, %v411
      %v426 = vpack.c.bf16 %v414, %v413
      %v427 = vpack.c.bf16 %v416, %v415
      %v428 = vpack.c.bf16 %v418, %v417
      %v429 = vpack.c.bf16 %v420, %v419
      %v430 = vpack.c.bf16 %v422, %v421
      %v431 = vld [vmem:[%s2] sm:$0xf]
      %v432 = vld [vmem:[%s2 + $0x4] sm:$0xf]
      %v433 = vld [vmem:[%s2 + $0x8] sm:$0xf]
      %v434 = vld [vmem:[%s2 + $0xc] sm:$0xf]
      %v439 = vunpack.c.l.b16 %v431
      %v440 = vunpack.c.l.b16 %v432
      %v441 = vunpack.c.l.b16 %v433
      %v442 = vunpack.c.l.b16 %v434
      %v443 = vpack.c.b16 %v440, %v439
      %v444 = vpack.c.b16 %v442, %v441
      %v448 = vsel %vm293, %v423, 0
      %v451 = vsel %vm293, %v424, 0
      %v454 = vsel %vm293, %v425, 0
      %v457 = vsel %vm293, %v426, 0
      %v460 = vsel %vm293, %v427, 0
      %v463 = vsel %vm293, %v428, 0
      %v466 = vsel %vm293, %v429, 0
      %v469 = vsel %vm293, %v430, 0
      %471 = vmatprep.subr.bf16.mxu0 0
      %472 = vmatpush1.bf16.msra.mxu0 %v443
      %473 = vmatprep.subr.bf16.mxu0 0
      %474 = vmatpush1.bf16.msra.mxu0 %v444
      %475 = vmatprep.subr.bf16.mxu0 0
      %476 = vmatpush1.bf16.msra.mxu0 0
      %477 = vmatprep.subr.bf16.mxu0 0
      %478 = vmatpush1.bf16.msra.mxu0 0
      %479 = vmatprep.subr.bf16.mxu0 0
      %480 = vmatpush1.bf16.msra.mxu0 0
      %481 = vmatprep.subr.bf16.mxu0 0
      %482 = vmatpush1.bf16.msra.mxu0 0
      %483 = vmatprep.subr.bf16.mxu0 0
      %484 = vmatpush1.bf16.msra.mxu0 0
      %485 = vmatprep.subr.bf16.mxu0 0
      %486 = vmatpush1.bf16.msra.mxu0 0
      %487 = vmatprep.subr.bf16.mxu0 0
      %488 = vmatpush1.bf16.msra.mxu0 0
      %489 = vmatprep.subr.bf16.mxu0 0
      %490 = vmatpush1.bf16.msra.mxu0 0
      %491 = vmatprep.subr.bf16.mxu0 0
      %492 = vmatpush1.bf16.msra.mxu0 0
      %493 = vmatprep.subr.bf16.mxu0 0
      %494 = vmatpush1.bf16.msra.mxu0 0
      %495 = vmatprep.subr.bf16.mxu0 0
      %496 = vmatpush1.bf16.msra.mxu0 0
      %497 = vmatprep.subr.bf16.mxu0 0
      %498 = vmatpush1.bf16.msra.mxu0 0
      %499 = vmatprep.subr.bf16.mxu0 0
      %500 = vmatpush1.bf16.msra.mxu0 0
      %501 = vmatprep.subr.bf16.mxu0 0
      %502 = vmatpush1.bf16.msra.mxu0 0
      %503 = vmatprep.mubr.bf16.mxu0 0
      %504 = vmatmul.mubr.bf16.gmra.mrb[0].mxu0 %v448
      %v505 = vpop.f32.mrb[0].mxu0
      %v506 = vadd.f32 0.0, %v505
      %v507 = vpop.f32.mrb[0].mxu0
      %v508 = vpop.f32.mrb[0].mxu0
      %v509 = vadd.f32 0.0, %v508
      %v510 = vpop.f32.mrb[0].mxu0
      %511 = vmatprep.mubr.bf16.mxu0 0
      %512 = vmatmul.mubr.bf16.gmra.mrb[0].mxu0 %v451
      %v513 = vpop.f32.mrb[0].mxu0
      %v514 = vadd.f32 0.0, %v513
      %v515 = vpop.f32.mrb[0].mxu0
      %v516 = vpop.f32.mrb[0].mxu0
      %v517 = vadd.f32 0.0, %v516
      %v518 = vpop.f32.mrb[0].mxu0
      %519 = vmatprep.mubr.bf16.mxu0 0
      %520 = vmatmul.mubr.bf16.gmra.mrb[0].mxu0 %v454
      %v521 = vpop.f32.mrb[0].mxu0
      %v522 = vadd.f32 0.0, %v521
      %v523 = vpop.f32.mrb[0].mxu0
      %v524 = vpop.f32.mrb[0].mxu0
      %v525 = vadd.f32 0.0, %v524
      %v526 = vpop.f32.mrb[0].mxu0
      %527 = vmatprep.mubr.bf16.mxu0 0
      %528 = vmatmul.mubr.bf16.gmra.mrb[0].mxu0 %v457
      %v529 = vpop.f32.mrb[0].mxu0
      %v530 = vadd.f32 0.0, %v529
      %v531 = vpop.f32.mrb[0].mxu0
      %v532 = vpop.f32.mrb[0].mxu0
      %v533 = vadd.f32 0.0, %v532
      %v534 = vpop.f32.mrb[0].mxu0
      %535 = vmatprep.mubr.bf16.mxu0 0
      %536 = vmatmul.mubr.bf16.gmra.mrb[0].mxu0 %v460
      %v537 = vpop.f32.mrb[0].mxu0
      %v538 = vadd.f32 0.0, %v537
      %v539 = vpop.f32.mrb[0].mxu0
      %v540 = vpop.f32.mrb[0].mxu0
      %v541 = vadd.f32 0.0, %v540
      %v542 = vpop.f32.mrb[0].mxu0
      %543 = vmatprep.mubr.bf16.mxu0 0
      %544 = vmatmul.mubr.bf16.gmra.mrb[0].mxu0 %v463
      %v545 = vpop.f32.mrb[0].mxu0
      %v546 = vadd.f32 0.0, %v545
      %v547 = vpop.f32.mrb[0].mxu0
      %v548 = vpop.f32.mrb[0].mxu0
      %v549 = vadd.f32 0.0, %v548
      %v550 = vpop.f32.mrb[0].mxu0
      %551 = vmatprep.mubr.bf16.mxu0 0
      %552 = vmatmul.mubr.bf16.gmra.mrb[0].mxu0 %v466
      %v553 = vpop.f32.mrb[0].mxu0
      %v554 = vadd.f32 0.0, %v553
      %v555 = vpop.f32.mrb[0].mxu0
      %v556 = vpop.f32.mrb[0].mxu0
      %v557 = vadd.f32 0.0, %v556
      %v558 = vpop.f32.mrb[0].mxu0
      %559 = vmatprep.mubr.bf16.mxu0 0
      %560 = vmatmul.mubr.bf16.gmra.mrb[0].mxu0 %v469
      %v561 = vpop.f32.mrb[0].mxu0
      %v562 = vadd.f32 0.0, %v561
      %v563 = vpop.f32.mrb[0].mxu0
      %v564 = vpop.f32.mrb[0].mxu0
      %v565 = vadd.f32 0.0, %v564
      %v566 = vpop.f32.mrb[0].mxu0
      %567 = vdwg.mxu0
      %v568 = vld [vmem:[%s1 + $0x4] ss:$0 sm:$0xff]
      %570 = vrot.lane.b32.xlu0 %v568, 32
      %v571 = vpop.permute.xlu0 %570
      %v573 = vmul.f32 %v506, %v571
      %v574 = vmul.f32 %v509, %v571
      %v575 = vmul.f32 %v514, %v571
      %v576 = vmul.f32 %v517, %v571
      %v577 = vmul.f32 %v522, %v571
      %v578 = vmul.f32 %v525, %v571
      %v579 = vmul.f32 %v530, %v571
      %v580 = vmul.f32 %v533, %v571
      %v581 = vmul.f32 %v538, %v571
      %v582 = vmul.f32 %v541, %v571
      %v583 = vmul.f32 %v546, %v571
      %v584 = vmul.f32 %v549, %v571
      %v585 = vmul.f32 %v554, %v571
      %v586 = vmul.f32 %v557, %v571
      %v587 = vmul.f32 %v562, %v571
      %v588 = vmul.f32 %v565, %v571
      %603 = vrot.lane.b32.xlu0 %v506, 96
      %v604 = vpop.permute.xlu0 %603
      %605 = vrot.lane.b32.xlu0 %v509, 96
      %v606 = vpop.permute.xlu0 %605
      %607 = vrot.lane.b32.xlu0 %v514, 96
      %v608 = vpop.permute.xlu0 %607
      %609 = vrot.lane.b32.xlu0 %v517, 96
      %v610 = vpop.permute.xlu0 %609
      %611 = vrot.lane.b32.xlu0 %v522, 96
      %v612 = vpop.permute.xlu0 %611
      %613 = vrot.lane.b32.xlu0 %v525, 96
      %v614 = vpop.permute.xlu0 %613
      %615 = vrot.lane.b32.xlu0 %v530, 96
      %v616 = vpop.permute.xlu0 %615
      %617 = vrot.lane.b32.xlu0 %v533, 96
      %v618 = vpop.permute.xlu0 %617
      %619 = vrot.lane.b32.xlu0 %v538, 96
      %v620 = vpop.permute.xlu0 %619
      %621 = vrot.lane.b32.xlu0 %v541, 96
      %v622 = vpop.permute.xlu0 %621
      %623 = vrot.lane.b32.xlu0 %v546, 96
      %v624 = vpop.permute.xlu0 %623
      %625 = vrot.lane.b32.xlu0 %v549, 96
      %v626 = vpop.permute.xlu0 %625
      %627 = vrot.lane.b32.xlu0 %v554, 96
      %v628 = vpop.permute.xlu0 %627
      %629 = vrot.lane.b32.xlu0 %v557, 96
      %v630 = vpop.permute.xlu0 %629
      %645 = vrot.lane.b32.xlu0 %v568, 96
      %v646 = vpop.permute.xlu0 %645
      %v648 = vmul.f32 %v646, 0.0
      %v649 = vmul.f32 %v604, %v646
      %v650 = vmul.f32 %v606, %v646
      %v651 = vmul.f32 %v608, %v646
      %v652 = vmul.f32 %v610, %v646
      %v653 = vmul.f32 %v612, %v646
      %v654 = vmul.f32 %v614, %v646
      %v655 = vmul.f32 %v616, %v646
      %v656 = vmul.f32 %v618, %v646
      %v657 = vmul.f32 %v620, %v646
      %v658 = vmul.f32 %v622, %v646
      %v659 = vmul.f32 %v624, %v646
      %v660 = vmul.f32 %v626, %v646
      %v661 = vmul.f32 %v628, %v646
      %v662 = vmul.f32 %v630, %v646
      %678 = vrot.lane.b32.xlu0 %v648, 32
      %v679 = vpop.permute.xlu0 %678
      %680 = vrot.lane.b32.xlu0 %v649, 32
      %v681 = vpop.permute.xlu0 %680
      %682 = vrot.lane.b32.xlu0 %v650, 32
      %v683 = vpop.permute.xlu0 %682
      %684 = vrot.lane.b32.xlu0 %v651, 32
      %v685 = vpop.permute.xlu0 %684
      %686 = vrot.lane.b32.xlu0 %v652, 32
      %v687 = vpop.permute.xlu0 %686
      %688 = vrot.lane.b32.xlu0 %v653, 32
      %v689 = vpop.permute.xlu0 %688
      %690 = vrot.lane.b32.xlu0 %v654, 32
      %v691 = vpop.permute.xlu0 %690
      %692 = vrot.lane.b32.xlu0 %v655, 32
      %v693 = vpop.permute.xlu0 %692
      %694 = vrot.lane.b32.xlu0 %v656, 32
      %v695 = vpop.permute.xlu0 %694
      %696 = vrot.lane.b32.xlu0 %v657, 32
      %v697 = vpop.permute.xlu0 %696
      %698 = vrot.lane.b32.xlu0 %v658, 32
      %v699 = vpop.permute.xlu0 %698
      %700 = vrot.lane.b32.xlu0 %v659, 32
      %v701 = vpop.permute.xlu0 %700
      %702 = vrot.lane.b32.xlu0 %v660, 32
      %v703 = vpop.permute.xlu0 %702
      %704 = vrot.lane.b32.xlu0 %v661, 32
      %v705 = vpop.permute.xlu0 %704
      %706 = vrot.lane.b32.xlu0 %v662, 32
      %v707 = vpop.permute.xlu0 %706
      %v723 = vadd.f32 %v573, %v679
      %v724 = vadd.f32 %v574, %v679
      %v725 = vadd.f32 %v575, %v681
      %v726 = vadd.f32 %v576, %v683
      %v727 = vadd.f32 %v577, %v685
      %v728 = vadd.f32 %v578, %v687
      %v729 = vadd.f32 %v579, %v689
      %v730 = vadd.f32 %v580, %v691
      %v731 = vadd.f32 %v581, %v693
      %v732 = vadd.f32 %v582, %v695
      %v733 = vadd.f32 %v583, %v697
      %v734 = vadd.f32 %v584, %v699
      %v735 = vadd.f32 %v585, %v701
      %v736 = vadd.f32 %v586, %v703
      %v737 = vadd.f32 %v587, %v705
      %v738 = vadd.f32 %v588, %v707
      %739 = vrot.lane.b32.xlu0 %v568, 64
      %v740 = vpop.permute.xlu0 %739
      %v742 = vmul.f32 %v740, 0.0
      %v743 = vmul.f32 %v604, %v740
      %v744 = vmul.f32 %v606, %v740
      %v745 = vmul.f32 %v608, %v740
      %v746 = vmul.f32 %v610, %v740
      %v747 = vmul.f32 %v612, %v740
      %v748 = vmul.f32 %v614, %v740
      %v749 = vmul.f32 %v616, %v740
      %v750 = vmul.f32 %v618, %v740
      %v751 = vmul.f32 %v620, %v740
      %v752 = vmul.f32 %v622, %v740
      %v753 = vmul.f32 %v624, %v740
      %v754 = vmul.f32 %v626, %v740
      %768 = vrot.lane.b32.xlu0 %v742, 32
      %v769 = vpop.permute.xlu0 %768
      %770 = vrot.lane.b32.xlu0 %v743, 32
      %v771 = vpop.permute.xlu0 %770
      %772 = vrot.lane.b32.xlu0 %v744, 32
      %v773 = vpop.permute.xlu0 %772
      %774 = vrot.lane.b32.xlu0 %v745, 32
      %v775 = vpop.permute.xlu0 %774
      %776 = vrot.lane.b32.xlu0 %v746, 32
      %v777 = vpop.permute.xlu0 %776
      %778 = vrot.lane.b32.xlu0 %v747, 32
      %v779 = vpop.permute.xlu0 %778
      %780 = vrot.lane.b32.xlu0 %v748, 32
      %v781 = vpop.permute.xlu0 %780
      %782 = vrot.lane.b32.xlu0 %v749, 32
      %v783 = vpop.permute.xlu0 %782
      %784 = vrot.lane.b32.xlu0 %v750, 32
      %v785 = vpop.permute.xlu0 %784
      %786 = vrot.lane.b32.xlu0 %v751, 32
      %v787 = vpop.permute.xlu0 %786
      %788 = vrot.lane.b32.xlu0 %v752, 32
      %v789 = vpop.permute.xlu0 %788
      %790 = vrot.lane.b32.xlu0 %v753, 32
      %v791 = vpop.permute.xlu0 %790
      %792 = vrot.lane.b32.xlu0 %v754, 32
      %v793 = vpop.permute.xlu0 %792
      %v807 = vadd.f32 %v723, %v769
      %v808 = vadd.f32 %v724, %v769
      %v809 = vadd.f32 %v725, %v769
      %v810 = vadd.f32 %v726, %v769
      %v811 = vadd.f32 %v727, %v771
      %v812 = vadd.f32 %v728, %v773
      %v813 = vadd.f32 %v729, %v775
      %v814 = vadd.f32 %v730, %v777
      %v815 = vadd.f32 %v731, %v779
      %v816 = vadd.f32 %v732, %v781
      %v817 = vadd.f32 %v733, %v783
      %v818 = vadd.f32 %v734, %v785
      %v819 = vadd.f32 %v735, %v787
      %v820 = vadd.f32 %v736, %v789
      %v821 = vadd.f32 %v737, %v791
      %v822 = vadd.f32 %v738, %v793
      %v823 = vmul.f32 %v571, 0.0
      %v824 = vmul.f32 %v604, %v571
      %v825 = vmul.f32 %v606, %v571
      %v826 = vmul.f32 %v608, %v571
      %v827 = vmul.f32 %v610, %v571
      %v828 = vmul.f32 %v612, %v571
      %v829 = vmul.f32 %v614, %v571
      %v830 = vmul.f32 %v616, %v571
      %v831 = vmul.f32 %v618, %v571
      %v832 = vmul.f32 %v620, %v571
      %v833 = vmul.f32 %v622, %v571
      %845 = vrot.lane.b32.xlu0 %v823, 32
      %v846 = vpop.permute.xlu0 %845
      %847 = vrot.lane.b32.xlu0 %v824, 32
      %v848 = vpop.permute.xlu0 %847
      %849 = vrot.lane.b32.xlu0 %v825, 32
      %v850 = vpop.permute.xlu0 %849
      %851 = vrot.lane.b32.xlu0 %v826, 32
      %v852 = vpop.permute.xlu0 %851
      %853 = vrot.lane.b32.xlu0 %v827, 32
      %v854 = vpop.permute.xlu0 %853
      %855 = vrot.lane.b32.xlu0 %v828, 32
      %v856 = vpop.permute.xlu0 %855
      %857 = vrot.lane.b32.xlu0 %v829, 32
      %v858 = vpop.permute.xlu0 %857
      %859 = vrot.lane.b32.xlu0 %v830, 32
      %v860 = vpop.permute.xlu0 %859
      %861 = vrot.lane.b32.xlu0 %v831, 32
      %v862 = vpop.permute.xlu0 %861
      %863 = vrot.lane.b32.xlu0 %v832, 32
      %v864 = vpop.permute.xlu0 %863
      %865 = vrot.lane.b32.xlu0 %v833, 32
      %v866 = vpop.permute.xlu0 %865
      %v878 = vadd.f32 %v807, %v846
      %v879 = vadd.f32 %v808, %v846
      %v880 = vadd.f32 %v809, %v846
      %v881 = vadd.f32 %v810, %v846
      %v882 = vadd.f32 %v811, %v846
      %v883 = vadd.f32 %v812, %v846
      %v884 = vadd.f32 %v813, %v848
      %v885 = vadd.f32 %v814, %v850
      %v886 = vadd.f32 %v815, %v852
      %v887 = vadd.f32 %v816, %v854
      %v888 = vadd.f32 %v817, %v856
      %v889 = vadd.f32 %v818, %v858
      %v890 = vadd.f32 %v819, %v860
      %v891 = vadd.f32 %v820, %v862
      %v892 = vadd.f32 %v821, %v864
      %v893 = vadd.f32 %v822, %v866
      %v894 = vxor.u32 %v878, 2147483648
      %v895 = vxor.u32 %v879, 2147483648
      %v896 = vxor.u32 %v880, 2147483648
      %v897 = vxor.u32 %v881, 2147483648
      %v898 = vxor.u32 %v882, 2147483648
      %v899 = vxor.u32 %v883, 2147483648
      %v900 = vxor.u32 %v884, 2147483648
      %v901 = vxor.u32 %v885, 2147483648
      %v902 = vxor.u32 %v886, 2147483648
      %v903 = vxor.u32 %v887, 2147483648
      %v904 = vxor.u32 %v888, 2147483648
      %v905 = vxor.u32 %v889, 2147483648
      %v906 = vxor.u32 %v890, 2147483648
      %v907 = vxor.u32 %v891, 2147483648
      %v908 = vxor.u32 %v892, 2147483648
      %v909 = vxor.u32 %v893, 2147483648
      %v910 = vmul.f32 %v894, 1.442695
      %v911 = vpow.pop %v910
      %v912 = vmul.f32 %v895, 1.442695
      %v913 = vpow.pop %v912
      %v914 = vmul.f32 %v896, 1.442695
      %v915 = vpow.pop %v914
      %v916 = vmul.f32 %v897, 1.442695
      %v917 = vpow.pop %v916
      %v918 = vmul.f32 %v898, 1.442695
      %v919 = vpow.pop %v918
      %v920 = vmul.f32 %v899, 1.442695
      %v921 = vpow.pop %v920
      %v922 = vmul.f32 %v900, 1.442695
      %v923 = vpow.pop %v922
      %v924 = vmul.f32 %v901, 1.442695
      %v925 = vpow.pop %v924
      %v926 = vmul.f32 %v902, 1.442695
      %v927 = vpow.pop %v926
      %v928 = vmul.f32 %v903, 1.442695
      %v929 = vpow.pop %v928
      %v930 = vmul.f32 %v904, 1.442695
      %v931 = vpow.pop %v930
      %v932 = vmul.f32 %v905, 1.442695
      %v933 = vpow.pop %v932
      %v934 = vmul.f32 %v906, 1.442695
      %v935 = vpow.pop %v934
      %v936 = vmul.f32 %v907, 1.442695
      %v937 = vpow.pop %v936
      %v938 = vmul.f32 %v908, 1.442695
      %v939 = vpow.pop %v938
      %v940 = vmul.f32 %v909, 1.442695
      %v941 = vpow.pop %v940
      %v942 = vadd.f32 %v911, 1.0
      %v943 = vadd.f32 %v913, 1.0
      %v944 = vadd.f32 %v915, 1.0
      %v945 = vadd.f32 %v917, 1.0
      %v946 = vadd.f32 %v919, 1.0
      %v947 = vadd.f32 %v921, 1.0
      %v948 = vadd.f32 %v923, 1.0
      %v949 = vadd.f32 %v925, 1.0
      %v950 = vadd.f32 %v927, 1.0
      %v951 = vadd.f32 %v929, 1.0
      %v952 = vadd.f32 %v931, 1.0
      %v953 = vadd.f32 %v933, 1.0
      %v954 = vadd.f32 %v935, 1.0
      %v955 = vadd.f32 %v937, 1.0
      %v956 = vadd.f32 %v939, 1.0
      %v957 = vadd.f32 %v941, 1.0
      %v958 = vrcp.pop %v942
      %v959 = vmul.f32 1.0, %v958
      %v960 = vrcp.pop %v943
      %v961 = vmul.f32 1.0, %v960
      %v962 = vrcp.pop %v944
      %v963 = vmul.f32 1.0, %v962
      %v964 = vrcp.pop %v945
      %v965 = vmul.f32 1.0, %v964
      %v966 = vrcp.pop %v946
      %v967 = vmul.f32 1.0, %v966
      %v968 = vrcp.pop %v947
      %v969 = vmul.f32 1.0, %v968
      %v970 = vrcp.pop %v948
      %v971 = vmul.f32 1.0, %v970
      %v972 = vrcp.pop %v949
      %v973 = vmul.f32 1.0, %v972
      %v974 = vrcp.pop %v950
      %v975 = vmul.f32 1.0, %v974
      %v976 = vrcp.pop %v951
      %v977 = vmul.f32 1.0, %v976
      %v978 = vrcp.pop %v952
      %v979 = vmul.f32 1.0, %v978
      %v980 = vrcp.pop %v953
      %v981 = vmul.f32 1.0, %v980
      %v982 = vrcp.pop %v954
      %v983 = vmul.f32 1.0, %v982
      %v984 = vrcp.pop %v955
      %v985 = vmul.f32 1.0, %v984
      %v986 = vrcp.pop %v956
      %v987 = vmul.f32 1.0, %v986
      %v988 = vrcp.pop %v957
      %v989 = vmul.f32 1.0, %v988
      %v990 = vmul.f32 %v878, %v959
      %v991 = vmul.f32 %v879, %v961
      %v992 = vmul.f32 %v880, %v963
      %v993 = vmul.f32 %v881, %v965
      %v994 = vmul.f32 %v882, %v967
      %v995 = vmul.f32 %v883, %v969
      %v996 = vmul.f32 %v884, %v971
      %v997 = vmul.f32 %v885, %v973
      %v998 = vmul.f32 %v886, %v975
      %v999 = vmul.f32 %v887, %v977
      %v1000 = vmul.f32 %v888, %v979
      %v1001 = vmul.f32 %v889, %v981
      %v1002 = vmul.f32 %v890, %v983
      %v1003 = vmul.f32 %v891, %v985
      %v1004 = vmul.f32 %v892, %v987
      %v1005 = vmul.f32 %v893, %v989
      %v1006 = vpack.c.bf16 %v991, %v990
      %v1007 = vpack.c.bf16 %v993, %v992
      %v1008 = vpack.c.bf16 %v995, %v994
      %v1009 = vpack.c.bf16 %v997, %v996
      %v1010 = vpack.c.bf16 %v999, %v998
      %v1011 = vpack.c.bf16 %v1001, %v1000
      %v1012 = vpack.c.bf16 %v1003, %v1002
      %v1013 = vpack.c.bf16 %v1005, %v1004
      %v1014 = vld [vmem:[%s2 + $0x10] sm:$0xf]
      %v1015 = vld [vmem:[%s2 + $0x14] sm:$0xf]
      %v1016 = vld [vmem:[%s2 + $0x18] sm:$0xf]
      %v1017 = vld [vmem:[%s2 + $0x1c] sm:$0xf]
      %1026 = vrot.lane.b32.xlu0 %v1006, 96
      %v1027 = vpop.permute.xlu0 %1026
      %1028 = vrot.lane.b32.xlu0 %v1007, 96
      %v1029 = vpop.permute.xlu0 %1028
      %1030 = vrot.lane.b32.xlu0 %v1008, 96
      %v1031 = vpop.permute.xlu0 %1030
      %1032 = vrot.lane.b32.xlu0 %v1009, 96
      %v1033 = vpop.permute.xlu0 %1032
      %1034 = vrot.lane.b32.xlu0 %v1010, 96
      %v1035 = vpop.permute.xlu0 %1034
      %1036 = vrot.lane.b32.xlu0 %v1011, 96
      %v1037 = vpop.permute.xlu0 %1036
      %1038 = vrot.lane.b32.xlu0 %v1012, 96
      %v1039 = vpop.permute.xlu0 %1038
      %1040 = vrot.lane.b32.xlu0 %v1013, 96
      %v1041 = vpop.permute.xlu0 %1040
      %v1046 = vunpack.c.l.b16 %v1014
      %v1047 = vunpack.c.l.b16 %v1015
      %v1048 = vunpack.c.l.b16 %v1016
      %v1049 = vunpack.c.l.b16 %v1017
      %v1050 = vpack.c.b16 %v1047, %v1046
      %v1051 = vpack.c.b16 %v1049, %v1048
      %v1055 = vsel %vm293, %v1027, 0
      %v1058 = vsel %vm293, %v1029, 0
      %v1061 = vsel %vm293, %v1031, 0
      %v1064 = vsel %vm293, %v1033, 0
      %v1067 = vsel %vm293, %v1035, 0
      %v1070 = vsel %vm293, %v1037, 0
      %v1073 = vsel %vm293, %v1039, 0
      %v1076 = vsel %vm293, %v1041, 0
      %1078 = vmatprep.subr.bf16.mxu0 0
      %1079 = vmatpush1.bf16.msra.mxu0 %v1050
      %1080 = vmatprep.subr.bf16.mxu0 0
      %1081 = vmatpush1.bf16.msra.mxu0 %v1051
      %1082 = vmatprep.subr.bf16.mxu0 0
      %1083 = vmatpush1.bf16.msra.mxu0 0
      %1084 = vmatprep.subr.bf16.mxu0 0
      %1085 = vmatpush1.bf16.msra.mxu0 0
      %1086 = vmatprep.subr.bf16.mxu0 0
      %1087 = vmatpush1.bf16.msra.mxu0 0
      %1088 = vmatprep.subr.bf16.mxu0 0
      %1089 = vmatpush1.bf16.msra.mxu0 0
      %1090 = vmatprep.subr.bf16.mxu0 0
      %1091 = vmatpush1.bf16.msra.mxu0 0
      %1092 = vmatprep.subr.bf16.mxu0 0
      %1093 = vmatpush1.bf16.msra.mxu0 0
      %1094 = vmatprep.subr.bf16.mxu0 0
      %1095 = vmatpush1.bf16.msra.mxu0 0
      %1096 = vmatprep.subr.bf16.mxu0 0
      %1097 = vmatpush1.bf16.msra.mxu0 0
      %1098 = vmatprep.subr.bf16.mxu0 0
      %1099 = vmatpush1.bf16.msra.mxu0 0
      %1100 = vmatprep.subr.bf16.mxu0 0
      %1101 = vmatpush1.bf16.msra.mxu0 0
      %1102 = vmatprep.subr.bf16.mxu0 0
      %1103 = vmatpush1.bf16.msra.mxu0 0
      %1104 = vmatprep.subr.bf16.mxu0 0
      %1105 = vmatpush1.bf16.msra.mxu0 0
      %1106 = vmatprep.subr.bf16.mxu0 0
      %1107 = vmatpush1.bf16.msra.mxu0 0
      %1108 = vmatprep.subr.bf16.mxu0 0
      %1109 = vmatpush1.bf16.msra.mxu0 0
      %1110 = vmatprep.mubr.bf16.mxu0 0
      %1111 = vmatmul.mubr.bf16.gmra.mrb[0].mxu0 %v1055
      %v1112 = vpop.f32.mrb[0].mxu0
      %v1113 = vadd.f32 0.0, %v1112
      %v1114 = vpop.f32.mrb[0].mxu0
      %v1115 = vpop.f32.mrb[0].mxu0
      %v1116 = vadd.f32 0.0, %v1115
      %v1117 = vpop.f32.mrb[0].mxu0
      %1118 = vmatprep.mubr.bf16.mxu0 0
      %1119 = vmatmul.mubr.bf16.gmra.mrb[0].mxu0 %v1058
      %v1120 = vpop.f32.mrb[0].mxu0
      %v1121 = vadd.f32 0.0, %v1120
      %v1122 = vpop.f32.mrb[0].mxu0
      %v1123 = vpop.f32.mrb[0].mxu0
      %v1124 = vadd.f32 0.0, %v1123
      %v1125 = vpop.f32.mrb[0].mxu0
      %1126 = vmatprep.mubr.bf16.mxu0 0
      %1127 = vmatmul.mubr.bf16.gmra.mrb[0].mxu0 %v1061
      %v1128 = vpop.f32.mrb[0].mxu0
      %v1129 = vadd.f32 0.0, %v1128
      %v1130 = vpop.f32.mrb[0].mxu0
      %v1131 = vpop.f32.mrb[0].mxu0
      %v1132 = vadd.f32 0.0, %v1131
      %v1133 = vpop.f32.mrb[0].mxu0
      %1134 = vmatprep.mubr.bf16.mxu0 0
      %1135 = vmatmul.mubr.bf16.gmra.mrb[0].mxu0 %v1064
      %v1136 = vpop.f32.mrb[0].mxu0
      %v1137 = vadd.f32 0.0, %v1136
      %v1138 = vpop.f32.mrb[0].mxu0
      %v1139 = vpop.f32.mrb[0].mxu0
      %v1140 = vadd.f32 0.0, %v1139
      %v1141 = vpop.f32.mrb[0].mxu0
      %1142 = vmatprep.mubr.bf16.mxu0 0
      %1143 = vmatmul.mubr.bf16.gmra.mrb[0].mxu0 %v1067
      %v1144 = vpop.f32.mrb[0].mxu0
      %v1145 = vadd.f32 0.0, %v1144
      %v1146 = vpop.f32.mrb[0].mxu0
      %v1147 = vpop.f32.mrb[0].mxu0
      %v1148 = vadd.f32 0.0, %v1147
      %v1149 = vpop.f32.mrb[0].mxu0
      %1150 = vmatprep.mubr.bf16.mxu0 0
      %1151 = vmatmul.mubr.bf16.gmra.mrb[0].mxu0 %v1070
      %v1152 = vpop.f32.mrb[0].mxu0
      %v1153 = vadd.f32 0.0, %v1152
      %v1154 = vpop.f32.mrb[0].mxu0
      %v1155 = vpop.f32.mrb[0].mxu0
      %v1156 = vadd.f32 0.0, %v1155
      %v1157 = vpop.f32.mrb[0].mxu0
      %1158 = vmatprep.mubr.bf16.mxu0 0
      %1159 = vmatmul.mubr.bf16.gmra.mrb[0].mxu0 %v1073
      %v1160 = vpop.f32.mrb[0].mxu0
      %v1161 = vadd.f32 0.0, %v1160
      %v1162 = vpop.f32.mrb[0].mxu0
      %v1163 = vpop.f32.mrb[0].mxu0
      %v1164 = vadd.f32 0.0, %v1163
      %v1165 = vpop.f32.mrb[0].mxu0
      %1166 = vmatprep.mubr.bf16.mxu0 0
      %1167 = vmatmul.mubr.bf16.gmra.mrb[0].mxu0 %v1076
      %v1168 = vpop.f32.mrb[0].mxu0
      %v1169 = vadd.f32 0.0, %v1168
      %v1170 = vpop.f32.mrb[0].mxu0
      %v1171 = vpop.f32.mrb[0].mxu0
      %v1172 = vadd.f32 0.0, %v1171
      %v1173 = vpop.f32.mrb[0].mxu0
      %1174 = vdwg.mxu0
      %v1175 = vmul.f32 %v1113, %v1113
      %v1176 = vmul.f32 %v1116, %v1116
      %v1177 = vmul.f32 %v1121, %v1121
      %v1178 = vmul.f32 %v1124, %v1124
      %v1179 = vmul.f32 %v1129, %v1129
      %v1180 = vmul.f32 %v1132, %v1132
      %v1181 = vmul.f32 %v1137, %v1137
      %v1182 = vmul.f32 %v1140, %v1140
      %v1183 = vmul.f32 %v1145, %v1145
      %v1184 = vmul.f32 %v1148, %v1148
      %v1185 = vmul.f32 %v1153, %v1153
      %v1186 = vmul.f32 %v1156, %v1156
      %v1187 = vmul.f32 %v1161, %v1161
      %v1188 = vmul.f32 %v1164, %v1164
      %v1189 = vmul.f32 %v1169, %v1169
      %v1190 = vmul.f32 %v1172, %v1172
      %vm1191 = vcmask 130048
      %v1192 = vsel %vm1191, %v1175, 0.0
      %1193 = vadd.xlane.f32.xlu0 %v1192
      %v1194 = vpop.xlane.xlu0 %1193
      %v1195 = vsel %vm1191, %v1176, 0.0
      %1196 = vadd.xlane.f32.xlu0 %v1195
      %v1197 = vpop.xlane.xlu0 %1196
      %v1198 = vsel %vm1191, %v1177, 0.0
      %1199 = vadd.xlane.f32.xlu0 %v1198
      %v1200 = vpop.xlane.xlu0 %1199
      %v1201 = vsel %vm1191, %v1178, 0.0
      %1202 = vadd.xlane.f32.xlu0 %v1201
      %v1203 = vpop.xlane.xlu0 %1202
      %v1204 = vsel %vm1191, %v1179, 0.0
      %1205 = vadd.xlane.f32.xlu0 %v1204
      %v1206 = vpop.xlane.xlu0 %1205
      %v1207 = vsel %vm1191, %v1180, 0.0
      %1208 = vadd.xlane.f32.xlu0 %v1207
      %v1209 = vpop.xlane.xlu0 %1208
      %v1210 = vsel %vm1191, %v1181, 0.0
      %1211 = vadd.xlane.f32.xlu0 %v1210
      %v1212 = vpop.xlane.xlu0 %1211
      %v1213 = vsel %vm1191, %v1182, 0.0
      %1214 = vadd.xlane.f32.xlu0 %v1213
      %v1215 = vpop.xlane.xlu0 %1214
      %v1216 = vsel %vm1191, %v1183, 0.0
      %1217 = vadd.xlane.f32.xlu0 %v1216
      %v1218 = vpop.xlane.xlu0 %1217
      %v1219 = vsel %vm1191, %v1184, 0.0
      %1220 = vadd.xlane.f32.xlu0 %v1219
      %v1221 = vpop.xlane.xlu0 %1220
      %v1222 = vsel %vm1191, %v1185, 0.0
      %1223 = vadd.xlane.f32.xlu0 %v1222
      %v1224 = vpop.xlane.xlu0 %1223
      %v1225 = vsel %vm1191, %v1186, 0.0
      %1226 = vadd.xlane.f32.xlu0 %v1225
      %v1227 = vpop.xlane.xlu0 %1226
      %v1228 = vsel %vm1191, %v1187, 0.0
      %1229 = vadd.xlane.f32.xlu0 %v1228
      %v1230 = vpop.xlane.xlu0 %1229
      %v1231 = vsel %vm1191, %v1188, 0.0
      %1232 = vadd.xlane.f32.xlu0 %v1231
      %v1233 = vpop.xlane.xlu0 %1232
      %v1234 = vsel %vm1191, %v1189, 0.0
      %1235 = vadd.xlane.f32.xlu0 %v1234
      %v1236 = vpop.xlane.xlu0 %1235
      %v1237 = vsel %vm1191, %v1190, 0.0
      %1238 = vadd.xlane.f32.xlu0 %v1237
      %v1239 = vpop.xlane.xlu0 %1238
      %v1240 = vrcp.pop 16.0
      %v1241 = vmul.f32 %v1194, %v1240
      %v1242 = vmul.f32 %v1197, %v1240
      %v1243 = vmul.f32 %v1200, %v1240
      %v1244 = vmul.f32 %v1203, %v1240
      %v1245 = vmul.f32 %v1206, %v1240
      %v1246 = vmul.f32 %v1209, %v1240
      %v1247 = vmul.f32 %v1212, %v1240
      %v1248 = vmul.f32 %v1215, %v1240
      %v1249 = vmul.f32 %v1218, %v1240
      %v1250 = vmul.f32 %v1221, %v1240
      %v1251 = vmul.f32 %v1224, %v1240
      %v1252 = vmul.f32 %v1227, %v1240
      %v1253 = vmul.f32 %v1230, %v1240
      %v1254 = vmul.f32 %v1233, %v1240
      %v1255 = vmul.f32 %v1236, %v1240
      %v1256 = vmul.f32 %v1239, %v1240
      %v1257 = vadd.f32 %v1241, 1e-06
      %v1258 = vadd.f32 %v1242, 1e-06
      %v1259 = vadd.f32 %v1243, 1e-06
      %v1260 = vadd.f32 %v1244, 1e-06
      %v1261 = vadd.f32 %v1245, 1e-06
      %v1262 = vadd.f32 %v1246, 1e-06
      %v1263 = vadd.f32 %v1247, 1e-06
      %v1264 = vadd.f32 %v1248, 1e-06
      %v1265 = vadd.f32 %v1249, 1e-06
      %v1266 = vadd.f32 %v1250, 1e-06
      %v1267 = vadd.f32 %v1251, 1e-06
      %v1268 = vadd.f32 %v1252, 1e-06
      %v1269 = vadd.f32 %v1253, 1e-06
      %v1270 = vadd.f32 %v1254, 1e-06
      %v1271 = vadd.f32 %v1255, 1e-06
      %v1272 = vadd.f32 %v1256, 1e-06
      %v1273 = vrsqrt.pop %v1257
      %v1274 = vrsqrt.pop %v1258
      %v1275 = vrsqrt.pop %v1259
      %v1276 = vrsqrt.pop %v1260
      %v1277 = vrsqrt.pop %v1261
      %v1278 = vrsqrt.pop %v1262
      %v1279 = vrsqrt.pop %v1263
      %v1280 = vrsqrt.pop %v1264
      %v1281 = vrsqrt.pop %v1265
      %v1282 = vrsqrt.pop %v1266
      %v1283 = vrsqrt.pop %v1267
      %v1284 = vrsqrt.pop %v1268
      %v1285 = vrsqrt.pop %v1269
      %v1286 = vrsqrt.pop %v1270
      %v1287 = vrsqrt.pop %v1271
      %v1288 = vrsqrt.pop %v1272
      %v1289 = vmul.f32 %v1113, %v1273
      %v1290 = vmul.f32 %v1116, %v1274
      %v1291 = vmul.f32 %v1121, %v1275
      %v1292 = vmul.f32 %v1124, %v1276
      %v1293 = vmul.f32 %v1129, %v1277
      %v1294 = vmul.f32 %v1132, %v1278
      %v1295 = vmul.f32 %v1137, %v1279
      %v1296 = vmul.f32 %v1140, %v1280
      %v1297 = vmul.f32 %v1145, %v1281
      %v1298 = vmul.f32 %v1148, %v1282
      %v1299 = vmul.f32 %v1153, %v1283
      %v1300 = vmul.f32 %v1156, %v1284
      %v1301 = vmul.f32 %v1161, %v1285
      %v1302 = vmul.f32 %v1164, %v1286
      %v1303 = vmul.f32 %v1169, %v1287
      %v1304 = vmul.f32 %v1172, %v1288
      %1306 = vrot.lane.b32.xlu0 %v260, 96
      %v1307 = vpop.permute.xlu0 %1306
      %v1309 = vmul.f32 %v1289, %v1307
      %v1310 = vmul.f32 %v1290, %v1307
      %v1311 = vmul.f32 %v1291, %v1307
      %v1312 = vmul.f32 %v1292, %v1307
      %v1313 = vmul.f32 %v1293, %v1307
      %v1314 = vmul.f32 %v1294, %v1307
      %v1315 = vmul.f32 %v1295, %v1307
      %v1316 = vmul.f32 %v1296, %v1307
      %v1317 = vmul.f32 %v1297, %v1307
      %v1318 = vmul.f32 %v1298, %v1307
      %v1319 = vmul.f32 %v1299, %v1307
      %v1320 = vmul.f32 %v1300, %v1307
      %v1321 = vmul.f32 %v1301, %v1307
      %v1322 = vmul.f32 %v1302, %v1307
      %v1323 = vmul.f32 %v1303, %v1307
      %v1324 = vmul.f32 %v1304, %v1307
      %1341 = vrot.lane.b32.xlu0 %v1175, 112
      %v1342 = vpop.permute.xlu0 %1341
      %1343 = vrot.lane.b32.xlu0 %v1176, 112
      %v1344 = vpop.permute.xlu0 %1343
      %1345 = vrot.lane.b32.xlu0 %v1177, 112
      %v1346 = vpop.permute.xlu0 %1345
      %1347 = vrot.lane.b32.xlu0 %v1178, 112
      %v1348 = vpop.permute.xlu0 %1347
      %1349 = vrot.lane.b32.xlu0 %v1179, 112
      %v1350 = vpop.permute.xlu0 %1349
      %1351 = vrot.lane.b32.xlu0 %v1180, 112
      %v1352 = vpop.permute.xlu0 %1351
      %1353 = vrot.lane.b32.xlu0 %v1181, 112
      %v1354 = vpop.permute.xlu0 %1353
      %1355 = vrot.lane.b32.xlu0 %v1182, 112
      %v1356 = vpop.permute.xlu0 %1355
      %1357 = vrot.lane.b32.xlu0 %v1183, 112
      %v1358 = vpop.permute.xlu0 %1357
      %1359 = vrot.lane.b32.xlu0 %v1184, 112
      %v1360 = vpop.permute.xlu0 %1359
      %1361 = vrot.lane.b32.xlu0 %v1185, 112
      %v1362 = vpop.permute.xlu0 %1361
      %1363 = vrot.lane.b32.xlu0 %v1186, 112
      %v1364 = vpop.permute.xlu0 %1363
      %1365 = vrot.lane.b32.xlu0 %v1187, 112
      %v1366 = vpop.permute.xlu0 %1365
      %1367 = vrot.lane.b32.xlu0 %v1188, 112
      %v1368 = vpop.permute.xlu0 %1367
      %1369 = vrot.lane.b32.xlu0 %v1189, 112
      %v1370 = vpop.permute.xlu0 %1369
      %1371 = vrot.lane.b32.xlu0 %v1190, 112
      %v1372 = vpop.permute.xlu0 %1371
      %v1389 = vsel %vm1191, %v1342, 0.0
      %1390 = vadd.xlane.f32.xlu0 %v1389
      %v1391 = vpop.xlane.xlu0 %1390
      %v1392 = vsel %vm1191, %v1344, 0.0
      %1393 = vadd.xlane.f32.xlu0 %v1392
      %v1394 = vpop.xlane.xlu0 %1393
      %v1395 = vsel %vm1191, %v1346, 0.0
      %1396 = vadd.xlane.f32.xlu0 %v1395
      %v1397 = vpop.xlane.xlu0 %1396
      %v1398 = vsel %vm1191, %v1348, 0.0
      %1399 = vadd.xlane.f32.xlu0 %v1398
      %v1400 = vpop.xlane.xlu0 %1399
      %v1401 = vsel %vm1191, %v1350, 0.0
      %1402 = vadd.xlane.f32.xlu0 %v1401
      %v1403 = vpop.xlane.xlu0 %1402
      %v1404 = vsel %vm1191, %v1352, 0.0
      %1405 = vadd.xlane.f32.xlu0 %v1404
      %v1406 = vpop.xlane.xlu0 %1405
      %v1407 = vsel %vm1191, %v1354, 0.0
      %1408 = vadd.xlane.f32.xlu0 %v1407
      %v1409 = vpop.xlane.xlu0 %1408
      %v1410 = vsel %vm1191, %v1356, 0.0
      %1411 = vadd.xlane.f32.xlu0 %v1410
      %v1412 = vpop.xlane.xlu0 %1411
      %v1413 = vsel %vm1191, %v1358, 0.0
      %1414 = vadd.xlane.f32.xlu0 %v1413
      %v1415 = vpop.xlane.xlu0 %1414
      %v1416 = vsel %vm1191, %v1360, 0.0
      %1417 = vadd.xlane.f32.xlu0 %v1416
      %v1418 = vpop.xlane.xlu0 %1417
      %v1419 = vsel %vm1191, %v1362, 0.0
      %1420 = vadd.xlane.f32.xlu0 %v1419
      %v1421 = vpop.xlane.xlu0 %1420
      %v1422 = vsel %vm1191, %v1364, 0.0
      %1423 = vadd.xlane.f32.xlu0 %v1422
      %v1424 = vpop.xlane.xlu0 %1423
      %v1425 = vsel %vm1191, %v1366, 0.0
      %1426 = vadd.xlane.f32.xlu0 %v1425
      %v1427 = vpop.xlane.xlu0 %1426
      %v1428 = vsel %vm1191, %v1368, 0.0
      %1429 = vadd.xlane.f32.xlu0 %v1428
      %v1430 = vpop.xlane.xlu0 %1429
      %v1431 = vsel %vm1191, %v1370, 0.0
      %1432 = vadd.xlane.f32.xlu0 %v1431
      %v1433 = vpop.xlane.xlu0 %1432
      %v1434 = vsel %vm1191, %v1372, 0.0
      %1435 = vadd.xlane.f32.xlu0 %v1434
      %v1436 = vpop.xlane.xlu0 %1435
      %v1437 = vmul.f32 %v1391, %v1240
      %v1438 = vmul.f32 %v1394, %v1240
      %v1439 = vmul.f32 %v1397, %v1240
      %v1440 = vmul.f32 %v1400, %v1240
      %v1441 = vmul.f32 %v1403, %v1240
      %v1442 = vmul.f32 %v1406, %v1240
      %v1443 = vmul.f32 %v1409, %v1240
      %v1444 = vmul.f32 %v1412, %v1240
      %v1445 = vmul.f32 %v1415, %v1240
      %v1446 = vmul.f32 %v1418, %v1240
      %v1447 = vmul.f32 %v1421, %v1240
      %v1448 = vmul.f32 %v1424, %v1240
      %v1449 = vmul.f32 %v1427, %v1240
      %v1450 = vmul.f32 %v1430, %v1240
      %v1451 = vmul.f32 %v1433, %v1240
      %v1452 = vmul.f32 %v1436, %v1240
      %v1453 = vadd.f32 %v1437, 1e-06
      %v1454 = vadd.f32 %v1438, 1e-06
      %v1455 = vadd.f32 %v1439, 1e-06
      %v1456 = vadd.f32 %v1440, 1e-06
      %v1457 = vadd.f32 %v1441, 1e-06
      %v1458 = vadd.f32 %v1442, 1e-06
      %v1459 = vadd.f32 %v1443, 1e-06
      %v1460 = vadd.f32 %v1444, 1e-06
      %v1461 = vadd.f32 %v1445, 1e-06
      %v1462 = vadd.f32 %v1446, 1e-06
      %v1463 = vadd.f32 %v1447, 1e-06
      %v1464 = vadd.f32 %v1448, 1e-06
      %v1465 = vadd.f32 %v1449, 1e-06
      %v1466 = vadd.f32 %v1450, 1e-06
      %v1467 = vadd.f32 %v1451, 1e-06
      %v1468 = vadd.f32 %v1452, 1e-06
      %v1469 = vrsqrt.pop %v1453
      %v1470 = vrsqrt.pop %v1454
      %v1471 = vrsqrt.pop %v1455
      %v1472 = vrsqrt.pop %v1456
      %v1473 = vrsqrt.pop %v1457
      %v1474 = vrsqrt.pop %v1458
      %v1475 = vrsqrt.pop %v1459
      %v1476 = vrsqrt.pop %v1460
      %v1477 = vrsqrt.pop %v1461
      %v1478 = vrsqrt.pop %v1462
      %v1479 = vrsqrt.pop %v1463
      %v1480 = vrsqrt.pop %v1464
      %v1481 = vrsqrt.pop %v1465
      %v1482 = vrsqrt.pop %v1466
      %v1483 = vrsqrt.pop %v1467
      %v1484 = vrsqrt.pop %v1468
      %v1485 = vmul.f32 %v1113, %v1469
      %v1486 = vmul.f32 %v1116, %v1470
      %v1487 = vmul.f32 %v1121, %v1471
      %v1488 = vmul.f32 %v1124, %v1472
      %v1489 = vmul.f32 %v1129, %v1473
      %v1490 = vmul.f32 %v1132, %v1474
      %v1491 = vmul.f32 %v1137, %v1475
      %v1492 = vmul.f32 %v1140, %v1476
      %v1493 = vmul.f32 %v1145, %v1477
      %v1494 = vmul.f32 %v1148, %v1478
      %v1495 = vmul.f32 %v1153, %v1479
      %v1496 = vmul.f32 %v1156, %v1480
      %v1497 = vmul.f32 %v1161, %v1481
      %v1498 = vmul.f32 %v1164, %v1482
      %v1499 = vmul.f32 %v1169, %v1483
      %v1500 = vmul.f32 %v1172, %v1484
      %v1501 = vmul.f32 %v1485, %v1307
      %v1502 = vmul.f32 %v1486, %v1307
      %v1503 = vmul.f32 %v1487, %v1307
      %v1504 = vmul.f32 %v1488, %v1307
      %v1505 = vmul.f32 %v1489, %v1307
      %v1506 = vmul.f32 %v1490, %v1307
      %v1507 = vmul.f32 %v1491, %v1307
      %v1508 = vmul.f32 %v1492, %v1307
      %v1509 = vmul.f32 %v1493, %v1307
      %v1510 = vmul.f32 %v1494, %v1307
      %v1511 = vmul.f32 %v1495, %v1307
      %v1512 = vmul.f32 %v1496, %v1307
      %v1513 = vmul.f32 %v1497, %v1307
      %v1514 = vmul.f32 %v1498, %v1307
      %v1515 = vmul.f32 %v1499, %v1307
      %v1516 = vmul.f32 %v1500, %v1307
      %1517 = vrot.lane.b32.xlu0 %v1175, 96
      %v1518 = vpop.permute.xlu0 %1517
      %1519 = vrot.lane.b32.xlu0 %v1176, 96
      %v1520 = vpop.permute.xlu0 %1519
      %1521 = vrot.lane.b32.xlu0 %v1177, 96
      %v1522 = vpop.permute.xlu0 %1521
      %1523 = vrot.lane.b32.xlu0 %v1178, 96
      %v1524 = vpop.permute.xlu0 %1523
      %1525 = vrot.lane.b32.xlu0 %v1179, 96
      %v1526 = vpop.permute.xlu0 %1525
      %1527 = vrot.lane.b32.xlu0 %v1180, 96
      %v1528 = vpop.permute.xlu0 %1527
      %1529 = vrot.lane.b32.xlu0 %v1181, 96
      %v1530 = vpop.permute.xlu0 %1529
      %1531 = vrot.lane.b32.xlu0 %v1182, 96
      %v1532 = vpop.permute.xlu0 %1531
      %1533 = vrot.lane.b32.xlu0 %v1183, 96
      %v1534 = vpop.permute.xlu0 %1533
      %1535 = vrot.lane.b32.xlu0 %v1184, 96
      %v1536 = vpop.permute.xlu0 %1535
      %1537 = vrot.lane.b32.xlu0 %v1185, 96
      %v1538 = vpop.permute.xlu0 %1537
      %1539 = vrot.lane.b32.xlu0 %v1186, 96
      %v1540 = vpop.permute.xlu0 %1539
      %1541 = vrot.lane.b32.xlu0 %v1187, 96
      %v1542 = vpop.permute.xlu0 %1541
      %1543 = vrot.lane.b32.xlu0 %v1188, 96
      %v1544 = vpop.permute.xlu0 %1543
      %1545 = vrot.lane.b32.xlu0 %v1189, 96
      %v1546 = vpop.permute.xlu0 %1545
      %1547 = vrot.lane.b32.xlu0 %v1190, 96
      %v1548 = vpop.permute.xlu0 %1547
      %vm1565 = vcmask 523264
      %v1566 = vsel %vm1565, %v1518, 0.0
      %1567 = vadd.xlane.f32.xlu0 %v1566
      %v1568 = vpop.xlane.xlu0 %1567
      %v1569 = vsel %vm1565, %v1520, 0.0
      %1570 = vadd.xlane.f32.xlu0 %v1569
      %v1571 = vpop.xlane.xlu0 %1570
      %v1572 = vsel %vm1565, %v1522, 0.0
      %1573 = vadd.xlane.f32.xlu0 %v1572
      %v1574 = vpop.xlane.xlu0 %1573
      %v1575 = vsel %vm1565, %v1524, 0.0
      %1576 = vadd.xlane.f32.xlu0 %v1575
      %v1577 = vpop.xlane.xlu0 %1576
      %v1578 = vsel %vm1565, %v1526, 0.0
      %1579 = vadd.xlane.f32.xlu0 %v1578
      %v1580 = vpop.xlane.xlu0 %1579
      %v1581 = vsel %vm1565, %v1528, 0.0
      %1582 = vadd.xlane.f32.xlu0 %v1581
      %v1583 = vpop.xlane.xlu0 %1582
      %v1584 = vsel %vm1565, %v1530, 0.0
      %1585 = vadd.xlane.f32.xlu0 %v1584
      %v1586 = vpop.xlane.xlu0 %1585
      %v1587 = vsel %vm1565, %v1532, 0.0
      %1588 = vadd.xlane.f32.xlu0 %v1587
      %v1589 = vpop.xlane.xlu0 %1588
      %v1590 = vsel %vm1565, %v1534, 0.0
      %1591 = vadd.xlane.f32.xlu0 %v1590
      %v1592 = vpop.xlane.xlu0 %1591
      %v1593 = vsel %vm1565, %v1536, 0.0
      %1594 = vadd.xlane.f32.xlu0 %v1593
      %v1595 = vpop.xlane.xlu0 %1594
      %v1596 = vsel %vm1565, %v1538, 0.0
      %1597 = vadd.xlane.f32.xlu0 %v1596
      %v1598 = vpop.xlane.xlu0 %1597
      %v1599 = vsel %vm1565, %v1540, 0.0
      %1600 = vadd.xlane.f32.xlu0 %v1599
      %v1601 = vpop.xlane.xlu0 %1600
      %v1602 = vsel %vm1565, %v1542, 0.0
      %1603 = vadd.xlane.f32.xlu0 %v1602
      %v1604 = vpop.xlane.xlu0 %1603
      %v1605 = vsel %vm1565, %v1544, 0.0
      %1606 = vadd.xlane.f32.xlu0 %v1605
      %v1607 = vpop.xlane.xlu0 %1606
      %v1608 = vsel %vm1565, %v1546, 0.0
      %1609 = vadd.xlane.f32.xlu0 %v1608
      %v1610 = vpop.xlane.xlu0 %1609
      %v1611 = vsel %vm1565, %v1548, 0.0
      %1612 = vadd.xlane.f32.xlu0 %v1611
      %v1613 = vpop.xlane.xlu0 %1612
      %v1614 = vrcp.pop 64.0
      %v1615 = vmul.f32 %v1568, %v1614
      %v1616 = vmul.f32 %v1571, %v1614
      %v1617 = vmul.f32 %v1574, %v1614
      %v1618 = vmul.f32 %v1577, %v1614
      %v1619 = vmul.f32 %v1580, %v1614
      %v1620 = vmul.f32 %v1583, %v1614
      %v1621 = vmul.f32 %v1586, %v1614
      %v1622 = vmul.f32 %v1589, %v1614
      %v1623 = vmul.f32 %v1592, %v1614
      %v1624 = vmul.f32 %v1595, %v1614
      %v1625 = vmul.f32 %v1598, %v1614
      %v1626 = vmul.f32 %v1601, %v1614
      %v1627 = vmul.f32 %v1604, %v1614
      %v1628 = vmul.f32 %v1607, %v1614
      %v1629 = vmul.f32 %v1610, %v1614
      %v1630 = vmul.f32 %v1613, %v1614
      %v1631 = vadd.f32 %v1615, 1e-06
      %v1632 = vadd.f32 %v1616, 1e-06
      %v1633 = vadd.f32 %v1617, 1e-06
      %v1634 = vadd.f32 %v1618, 1e-06
      %v1635 = vadd.f32 %v1619, 1e-06
      %v1636 = vadd.f32 %v1620, 1e-06
      %v1637 = vadd.f32 %v1621, 1e-06
      %v1638 = vadd.f32 %v1622, 1e-06
      %v1639 = vadd.f32 %v1623, 1e-06
      %v1640 = vadd.f32 %v1624, 1e-06
      %v1641 = vadd.f32 %v1625, 1e-06
      %v1642 = vadd.f32 %v1626, 1e-06
      %v1643 = vadd.f32 %v1627, 1e-06
      %v1644 = vadd.f32 %v1628, 1e-06
      %v1645 = vadd.f32 %v1629, 1e-06
      %v1646 = vadd.f32 %v1630, 1e-06
      %v1647 = vrsqrt.pop %v1631
      %v1648 = vrsqrt.pop %v1632
      %v1649 = vrsqrt.pop %v1633
      %v1650 = vrsqrt.pop %v1634
      %v1651 = vrsqrt.pop %v1635
      %v1652 = vrsqrt.pop %v1636
      %v1653 = vrsqrt.pop %v1637
      %v1654 = vrsqrt.pop %v1638
      %v1655 = vrsqrt.pop %v1639
      %v1656 = vrsqrt.pop %v1640
      %v1657 = vrsqrt.pop %v1641
      %v1658 = vrsqrt.pop %v1642
      %v1659 = vrsqrt.pop %v1643
      %v1660 = vrsqrt.pop %v1644
      %v1661 = vrsqrt.pop %v1645
      %v1662 = vrsqrt.pop %v1646
      %v1663 = vmul.f32 %v1113, %v1647
      %v1664 = vmul.f32 %v1116, %v1648
      %v1665 = vmul.f32 %v1121, %v1649
      %v1666 = vmul.f32 %v1124, %v1650
      %v1667 = vmul.f32 %v1129, %v1651
      %v1668 = vmul.f32 %v1132, %v1652
      %v1669 = vmul.f32 %v1137, %v1653
      %v1670 = vmul.f32 %v1140, %v1654
      %v1671 = vmul.f32 %v1145, %v1655
      %v1672 = vmul.f32 %v1148, %v1656
      %v1673 = vmul.f32 %v1153, %v1657
      %v1674 = vmul.f32 %v1156, %v1658
      %v1675 = vmul.f32 %v1161, %v1659
      %v1676 = vmul.f32 %v1164, %v1660
      %v1677 = vmul.f32 %v1169, %v1661
      %v1678 = vmul.f32 %v1172, %v1662
      %v1679 = vmul.f32 %v1663, %v1307
      %v1680 = vmul.f32 %v1664, %v1307
      %v1681 = vmul.f32 %v1665, %v1307
      %v1682 = vmul.f32 %v1666, %v1307
      %v1683 = vmul.f32 %v1667, %v1307
      %v1684 = vmul.f32 %v1668, %v1307
      %v1685 = vmul.f32 %v1669, %v1307
      %v1686 = vmul.f32 %v1670, %v1307
      %v1687 = vmul.f32 %v1671, %v1307
      %v1688 = vmul.f32 %v1672, %v1307
      %v1689 = vmul.f32 %v1673, %v1307
      %v1690 = vmul.f32 %v1674, %v1307
      %v1691 = vmul.f32 %v1675, %v1307
      %v1692 = vmul.f32 %v1676, %v1307
      %v1693 = vmul.f32 %v1677, %v1307
      %v1694 = vmul.f32 %v1678, %v1307
      %v1695 = vpack.c.bf16 %v1680, %v1679
      %v1696 = vpack.c.bf16 %v1682, %v1681
      %v1697 = vpack.c.bf16 %v1684, %v1683
      %v1698 = vpack.c.bf16 %v1686, %v1685
      %v1699 = vpack.c.bf16 %v1688, %v1687
      %v1700 = vpack.c.bf16 %v1690, %v1689
      %v1701 = vpack.c.bf16 %v1692, %v1691
      %v1702 = vpack.c.bf16 %v1694, %v1693
      %v1703 = vld [vmem:[%s3] sm:$0xff]
      %v1704 = vld [vmem:[%s3 + $0x8] sm:$0xff]
      %v1705 = vld [vmem:[%s3 + $0x10] sm:$0xff]
      %v1706 = vld [vmem:[%s3 + $0x18] sm:$0xff]
      %v1707 = vld [vmem:[%s3 + $0x20] sm:$0xff]
      %v1708 = vld [vmem:[%s3 + $0x28] sm:$0xff]
      %v1709 = vld [vmem:[%s3 + $0x30] sm:$0xff]
      %v1710 = vld [vmem:[%s3 + $0x38] sm:$0xff]
      %v1711 = vld [vmem:[%s3 + $0x40] sm:$0xff]
      %v1712 = vld [vmem:[%s3 + $0x48] sm:$0xff]
      %v1713 = vld [vmem:[%s3 + $0x50] sm:$0xff]
      %v1714 = vld [vmem:[%s3 + $0x58] sm:$0xff]
      %v1715 = vld [vmem:[%s3 + $0x60] sm:$0xff]
      %v1716 = vld [vmem:[%s3 + $0x68] sm:$0xff]
      %v1717 = vld [vmem:[%s3 + $0x70] sm:$0xff]
      %v1718 = vld [vmem:[%s3 + $0x78] sm:$0xff]
      %v1720 = vlaneseq
      %v1721 = vshrl.u32 %v1720, 7
      %v1722 = vsub.s32 0, %v1721
      %v1723 = vrot.slane %v258, %v1722
      %v1724 = vlaneseq
      %v1725 = vshrl.u32 %v1724, 7
      %v1726 = vsub.s32 1, %v1725
      %v1727 = vrot.slane %v258, %v1726
      %v1728 = vlaneseq
      %v1729 = vshrl.u32 %v1728, 7
      %v1730 = vsub.s32 2, %v1729
      %v1731 = vrot.slane %v258, %v1730
      %v1732 = vlaneseq
      %v1733 = vshrl.u32 %v1732, 7
      %v1734 = vsub.s32 3, %v1733
      %v1735 = vrot.slane %v258, %v1734
      %1748 = vrot.lane.b32.xlu0 %v1695, 96
      %v1749 = vpop.permute.xlu0 %1748
      %1750 = vrot.lane.b32.xlu0 %v1696, 96
      %v1751 = vpop.permute.xlu0 %1750
      %1752 = vrot.lane.b32.xlu0 %v1697, 96
      %v1753 = vpop.permute.xlu0 %1752
      %1754 = vrot.lane.b32.xlu0 %v1698, 96
      %v1755 = vpop.permute.xlu0 %1754
      %1756 = vrot.lane.b32.xlu0 %v1699, 96
      %v1757 = vpop.permute.xlu0 %1756
      %1758 = vrot.lane.b32.xlu0 %v1700, 96
      %v1759 = vpop.permute.xlu0 %1758
      %1760 = vrot.lane.b32.xlu0 %v1701, 96
      %v1761 = vpop.permute.xlu0 %1760
      %1762 = vrot.lane.b32.xlu0 %v1702, 96
      %v1763 = vpop.permute.xlu0 %1762
      %v1780 = vunpack.c.l.b16 %v1703
      %v1781 = vunpack.c.h.b16 %v1703
      %v1782 = vunpack.c.l.b16 %v1704
      %v1783 = vunpack.c.h.b16 %v1704
      %v1784 = vunpack.c.l.b16 %v1705
      %v1785 = vunpack.c.h.b16 %v1705
      %v1786 = vunpack.c.l.b16 %v1706
      %v1787 = vunpack.c.h.b16 %v1706
      %v1788 = vunpack.c.l.b16 %v1707
      %v1789 = vunpack.c.h.b16 %v1707
      %v1790 = vunpack.c.l.b16 %v1708
      %v1791 = vunpack.c.h.b16 %v1708
      %v1792 = vunpack.c.l.b16 %v1709
      %v1793 = vunpack.c.h.b16 %v1709
      %v1794 = vunpack.c.l.b16 %v1710
      %v1795 = vunpack.c.h.b16 %v1710
      %v1796 = vunpack.c.l.b16 %v1711
      %v1797 = vunpack.c.h.b16 %v1711
      %v1798 = vunpack.c.l.b16 %v1712
      %v1799 = vunpack.c.h.b16 %v1712
      %v1800 = vunpack.c.l.b16 %v1713
      %v1801 = vunpack.c.h.b16 %v1713
      %v1802 = vunpack.c.l.b16 %v1714
      %v1803 = vunpack.c.h.b16 %v1714
      %v1804 = vunpack.c.l.b16 %v1715
      %v1805 = vunpack.c.h.b16 %v1715
      %v1806 = vunpack.c.l.b16 %v1716
      %v1807 = vunpack.c.h.b16 %v1716
      %v1808 = vunpack.c.l.b16 %v1717
      %v1809 = vunpack.c.h.b16 %v1717
      %v1810 = vunpack.c.l.b16 %v1718
      %v1811 = vunpack.c.h.b16 %v1718
      %v1812 = vpack.c.b16 %v1784, %v1780
      %v1813 = vpack.c.b16 %v1785, %v1781
      %v1814 = vpack.c.b16 %v1786, %v1782
      %v1815 = vpack.c.b16 %v1787, %v1783
      %v1816 = vpack.c.b16 %v1792, %v1788
      %v1817 = vpack.c.b16 %v1793, %v1789
      %v1818 = vpack.c.b16 %v1794, %v1790
      %v1819 = vpack.c.b16 %v1795, %v1791
      %v1820 = vpack.c.b16 %v1800, %v1796
      %v1821 = vpack.c.b16 %v1801, %v1797
      %v1822 = vpack.c.b16 %v1802, %v1798
      %v1823 = vpack.c.b16 %v1803, %v1799
      %v1824 = vpack.c.b16 %v1808, %v1804
      %v1825 = vpack.c.b16 %v1809, %v1805
      %v1826 = vpack.c.b16 %v1810, %v1806
      %v1827 = vpack.c.b16 %v1811, %v1807
      %v1845 = vsel %vm1565, %v1749, 0
      %v1848 = vsel %vm1565, %v1751, 0
      %v1851 = vsel %vm1565, %v1753, 0
      %v1854 = vsel %vm1565, %v1755, 0
      %v1857 = vsel %vm1565, %v1757, 0
      %v1860 = vsel %vm1565, %v1759, 0
      %v1863 = vsel %vm1565, %v1761, 0
      %v1866 = vsel %vm1565, %v1763, 0
      %1868 = vmatprep.subr.bf16.mxu0 %v1813
      %1869 = vmatpush1.bf16.msra.mxu0 %v1812
      %1870 = vmatprep.subr.bf16.mxu0 %v1817
      %1871 = vmatpush1.bf16.msra.mxu0 %v1816
      %1872 = vmatprep.subr.bf16.mxu0 %v1821
      %1873 = vmatpush1.bf16.msra.mxu0 %v1820
      %1874 = vmatprep.subr.bf16.mxu0 %v1825
      %1875 = vmatpush1.bf16.msra.mxu0 %v1824
      %1876 = vmatprep.subr.bf16.mxu0 0
      %1877 = vmatpush1.bf16.msra.mxu0 0
      %1878 = vmatprep.subr.bf16.mxu0 0
      %1879 = vmatpush1.bf16.msra.mxu0 0
      %1880 = vmatprep.subr.bf16.mxu0 0
      %1881 = vmatpush1.bf16.msra.mxu0 0
      %1882 = vmatprep.subr.bf16.mxu0 0
      %1883 = vmatpush1.bf16.msra.mxu0 0
      %1884 = vmatprep.subr.bf16.mxu0 0
      %1885 = vmatpush1.bf16.msra.mxu0 0
      %1886 = vmatprep.subr.bf16.mxu0 0
      %1887 = vmatpush1.bf16.msra.mxu0 0
      %1888 = vmatprep.subr.bf16.mxu0 0
      %1889 = vmatpush1.bf16.msra.mxu0 0
      %1890 = vmatprep.subr.bf16.mxu0 0
      %1891 = vmatpush1.bf16.msra.mxu0 0
      %1892 = vmatprep.subr.bf16.mxu0 0
      %1893 = vmatpush1.bf16.msra.mxu0 0
      %1894 = vmatprep.subr.bf16.mxu0 0
      %1895 = vmatpush1.bf16.msra.mxu0 0
      %1896 = vmatprep.subr.bf16.mxu0 0
      %1897 = vmatpush1.bf16.msra.mxu0 0
      %1898 = vmatprep.subr.bf16.mxu0 0
      %1899 = vmatpush1.bf16.msra.mxu0 0
      %1900 = vmatprep.mubr.bf16.mxu0 0
      %1901 = vmatmul.mubr.bf16.gmra.mrb[0].mxu0 %v1845
      %v1902 = vpop.f32.mrb[0].mxu0
      %v1903 = vadd.f32 %v1723, %v1902
      %v1904 = vpop.f32.mrb[0].mxu0
      %v1905 = vadd.f32 %v1727, %v1904
      %v1906 = vpop.f32.mrb[0].mxu0
      %v1907 = vadd.f32 %v1723, %v1906
      %v1908 = vpop.f32.mrb[0].mxu0
      %v1909 = vadd.f32 %v1727, %v1908
      %1910 = vmatprep.mubr.bf16.mxu0 0
      %1911 = vmatmul.mubr.bf16.gmra.mrb[0].mxu0 %v1848
      %v1912 = vpop.f32.mrb[0].mxu0
      %v1913 = vadd.f32 %v1723, %v1912
      %v1914 = vpop.f32.mrb[0].mxu0
      %v1915 = vadd.f32 %v1727, %v1914
      %v1916 = vpop.f32.mrb[0].mxu0
      %v1917 = vadd.f32 %v1723, %v1916
      %v1918 = vpop.f32.mrb[0].mxu0
      %v1919 = vadd.f32 %v1727, %v1918
      %1920 = vmatprep.mubr.bf16.mxu0 0
      %1921 = vmatmul.mubr.bf16.gmra.mrb[0].mxu0 %v1851
      %v1922 = vpop.f32.mrb[0].mxu0
      %v1923 = vadd.f32 %v1723, %v1922
      %v1924 = vpop.f32.mrb[0].mxu0
      %v1925 = vadd.f32 %v1727, %v1924
      %v1926 = vpop.f32.mrb[0].mxu0
      %v1927 = vadd.f32 %v1723, %v1926
      %v1928 = vpop.f32.mrb[0].mxu0
      %v1929 = vadd.f32 %v1727, %v1928
      %1930 = vmatprep.mubr.bf16.mxu0 0
      %1931 = vmatmul.mubr.bf16.gmra.mrb[0].mxu0 %v1854
      %v1932 = vpop.f32.mrb[0].mxu0
      %v1933 = vadd.f32 %v1723, %v1932
      %v1934 = vpop.f32.mrb[0].mxu0
      %v1935 = vadd.f32 %v1727, %v1934
      %v1936 = vpop.f32.mrb[0].mxu0
      %v1937 = vadd.f32 %v1723, %v1936
      %v1938 = vpop.f32.mrb[0].mxu0
      %v1939 = vadd.f32 %v1727, %v1938
      %1940 = vmatprep.mubr.bf16.mxu0 0
      %1941 = vmatmul.mubr.bf16.gmra.mrb[0].mxu0 %v1857
      %v1942 = vpop.f32.mrb[0].mxu0
      %v1943 = vadd.f32 %v1723, %v1942
      %v1944 = vpop.f32.mrb[0].mxu0
      %v1945 = vadd.f32 %v1727, %v1944
      %v1946 = vpop.f32.mrb[0].mxu0
      %v1947 = vadd.f32 %v1723, %v1946
      %v1948 = vpop.f32.mrb[0].mxu0
      %v1949 = vadd.f32 %v1727, %v1948
      %1950 = vmatprep.mubr.bf16.mxu0 0
      %1951 = vmatmul.mubr.bf16.gmra.mrb[0].mxu0 %v1860
      %v1952 = vpop.f32.mrb[0].mxu0
      %v1953 = vadd.f32 %v1723, %v1952
      %v1954 = vpop.f32.mrb[0].mxu0
      %v1955 = vadd.f32 %v1727, %v1954
      %v1956 = vpop.f32.mrb[0].mxu0
      %v1957 = vadd.f32 %v1723, %v1956
      %v1958 = vpop.f32.mrb[0].mxu0
      %v1959 = vadd.f32 %v1727, %v1958
      %1960 = vmatprep.mubr.bf16.mxu0 0
      %1961 = vmatmul.mubr.bf16.gmra.mrb[0].mxu0 %v1863
      %v1962 = vpop.f32.mrb[0].mxu0
      %v1963 = vadd.f32 %v1723, %v1962
      %v1964 = vpop.f32.mrb[0].mxu0
      %v1965 = vadd.f32 %v1727, %v1964
      %v1966 = vpop.f32.mrb[0].mxu0
      %v1967 = vadd.f32 %v1723, %v1966
      %v1968 = vpop.f32.mrb[0].mxu0
      %v1969 = vadd.f32 %v1727, %v1968
      %1970 = vmatprep.mubr.bf16.mxu0 0
      %1971 = vmatmul.mubr.bf16.gmra.mrb[0].mxu0 %v1866
      %v1972 = vpop.f32.mrb[0].mxu0
      %v1973 = vadd.f32 %v1723, %v1972
      %v1974 = vpop.f32.mrb[0].mxu0
      %v1975 = vadd.f32 %v1727, %v1974
      %v1976 = vpop.f32.mrb[0].mxu0
      %v1977 = vadd.f32 %v1723, %v1976
      %v1978 = vpop.f32.mrb[0].mxu0
      %v1979 = vadd.f32 %v1727, %v1978
      %1980 = vdwg.mxu0
      %1981 = vmatprep.subr.bf16.mxu0 %v1815
      %1982 = vmatpush1.bf16.msra.mxu0 %v1814
      %1983 = vmatprep.subr.bf16.mxu0 %v1819
      %1984 = vmatpush1.bf16.msra.mxu0 %v1818
      %1985 = vmatprep.subr.bf16.mxu0 %v1823
      %1986 = vmatpush1.bf16.msra.mxu0 %v1822
      %1987 = vmatprep.subr.bf16.mxu0 %v1827
      %1988 = vmatpush1.bf16.msra.mxu0 %v1826
      %1989 = vmatprep.subr.bf16.mxu0 0
      %1990 = vmatpush1.bf16.msra.mxu0 0
      %1991 = vmatprep.subr.bf16.mxu0 0
      %1992 = vmatpush1.bf16.msra.mxu0 0
      %1993 = vmatprep.subr.bf16.mxu0 0
      %1994 = vmatpush1.bf16.msra.mxu0 0
      %1995 = vmatprep.subr.bf16.mxu0 0
      %1996 = vmatpush1.bf16.msra.mxu0 0
      %1997 = vmatprep.subr.bf16.mxu0 0
      %1998 = vmatpush1.bf16.msra.mxu0 0
      %1999 = vmatprep.subr.bf16.mxu0 0
      %2000 = vmatpush1.bf16.msra.mxu0 0
      %2001 = vmatprep.subr.bf16.mxu0 0
      %2002 = vmatpush1.bf16.msra.mxu0 0
      %2003 = vmatprep.subr.bf16.mxu0 0
      %2004 = vmatpush1.bf16.msra.mxu0 0
      %2005 = vmatprep.subr.bf16.mxu0 0
      %2006 = vmatpush1.bf16.msra.mxu0 0
      %2007 = vmatprep.subr.bf16.mxu0 0
      %2008 = vmatpush1.bf16.msra.mxu0 0
      %2009 = vmatprep.subr.bf16.mxu0 0
      %2010 = vmatpush1.bf16.msra.mxu0 0
      %2011 = vmatprep.subr.bf16.mxu0 0
      %2012 = vmatpush1.bf16.msra.mxu0 0
      %2013 = vmatprep.mubr.bf16.mxu0 0
      %2014 = vmatmul.mubr.bf16.gmra.mrb[0].mxu0 %v1845
      %v2015 = vpop.f32.mrb[0].mxu0
      %v2016 = vadd.f32 %v1731, %v2015
      %v2017 = vpop.f32.mrb[0].mxu0
      %v2018 = vadd.f32 %v1735, %v2017
      %v2019 = vpop.f32.mrb[0].mxu0
      %v2020 = vadd.f32 %v1731, %v2019
      %v2021 = vpop.f32.mrb[0].mxu0
      %v2022 = vadd.f32 %v1735, %v2021
      %2023 = vmatprep.mubr.bf16.mxu0 0
      %2024 = vmatmul.mubr.bf16.gmra.mrb[0].mxu0 %v1848
      %v2025 = vpop.f32.mrb[0].mxu0
      %v2026 = vadd.f32 %v1731, %v2025
      %v2027 = vpop.f32.mrb[0].mxu0
      %v2028 = vadd.f32 %v1735, %v2027
      %v2029 = vpop.f32.mrb[0].mxu0
      %v2030 = vadd.f32 %v1731, %v2029
      %v2031 = vpop.f32.mrb[0].mxu0
      %v2032 = vadd.f32 %v1735, %v2031
      %2033 = vmatprep.mubr.bf16.mxu0 0
      %2034 = vmatmul.mubr.bf16.gmra.mrb[0].mxu0 %v1851
      %v2035 = vpop.f32.mrb[0].mxu0
      %v2036 = vadd.f32 %v1731, %v2035
      %v2037 = vpop.f32.mrb[0].mxu0
      %v2038 = vadd.f32 %v1735, %v2037
      %v2039 = vpop.f32.mrb[0].mxu0
      %v2040 = vadd.f32 %v1731, %v2039
      %v2041 = vpop.f32.mrb[0].mxu0
      %v2042 = vadd.f32 %v1735, %v2041
      %2043 = vmatprep.mubr.bf16.mxu0 0
      %2044 = vmatmul.mubr.bf16.gmra.mrb[0].mxu0 %v1854
      %v2045 = vpop.f32.mrb[0].mxu0
      %v2046 = vadd.f32 %v1731, %v2045
      %v2047 = vpop.f32.mrb[0].mxu0
      %v2048 = vadd.f32 %v1735, %v2047
      %v2049 = vpop.f32.mrb[0].mxu0
      %v2050 = vadd.f32 %v1731, %v2049
      %v2051 = vpop.f32.mrb[0].mxu0
      %v2052 = vadd.f32 %v1735, %v2051
      %2053 = vmatprep.mubr.bf16.mxu0 0
      %2054 = vmatmul.mubr.bf16.gmra.mrb[0].mxu0 %v1857
      %v2055 = vpop.f32.mrb[0].mxu0
      %v2056 = vadd.f32 %v1731, %v2055
      %v2057 = vpop.f32.mrb[0].mxu0
      %v2058 = vadd.f32 %v1735, %v2057
      %v2059 = vpop.f32.mrb[0].mxu0
      %v2060 = vadd.f32 %v1731, %v2059
      %v2061 = vpop.f32.mrb[0].mxu0
      %v2062 = vadd.f32 %v1735, %v2061
      %2063 = vmatprep.mubr.bf16.mxu0 0
      %2064 = vmatmul.mubr.bf16.gmra.mrb[0].mxu0 %v1860
      %v2065 = vpop.f32.mrb[0].mxu0
      %v2066 = vadd.f32 %v1731, %v2065
      %v2067 = vpop.f32.mrb[0].mxu0
      %v2068 = vadd.f32 %v1735, %v2067
      %v2069 = vpop.f32.mrb[0].mxu0
      %v2070 = vadd.f32 %v1731, %v2069
      %v2071 = vpop.f32.mrb[0].mxu0
      %v2072 = vadd.f32 %v1735, %v2071
      %2073 = vmatprep.mubr.bf16.mxu0 0
      %2074 = vmatmul.mubr.bf16.gmra.mrb[0].mxu0 %v1863
      %v2075 = vpop.f32.mrb[0].mxu0
      %v2076 = vadd.f32 %v1731, %v2075
      %v2077 = vpop.f32.mrb[0].mxu0
      %v2078 = vadd.f32 %v1735, %v2077
      %v2079 = vpop.f32.mrb[0].mxu0
      %v2080 = vadd.f32 %v1731, %v2079
      %v2081 = vpop.f32.mrb[0].mxu0
      %v2082 = vadd.f32 %v1735, %v2081
      %2083 = vmatprep.mubr.bf16.mxu0 0
      %2084 = vmatmul.mubr.bf16.gmra.mrb[0].mxu0 %v1866
      %v2085 = vpop.f32.mrb[0].mxu0
      %v2086 = vadd.f32 %v1731, %v2085
      %v2087 = vpop.f32.mrb[0].mxu0
      %v2088 = vadd.f32 %v1735, %v2087
      %v2089 = vpop.f32.mrb[0].mxu0
      %v2090 = vadd.f32 %v1731, %v2089
      %v2091 = vpop.f32.mrb[0].mxu0
      %v2092 = vadd.f32 %v1735, %v2091
      %2093 = vdwg.mxu0
      %v2094 = vmax.f32 %v1903, 0.0
      %v2095 = vmax.f32 %v1905, 0.0
      %v2096 = vmax.f32 %v2016, 0.0
      %v2097 = vmax.f32 %v2018, 0.0
      %v2098 = vmax.f32 %v1907, 0.0
      %v2099 = vmax.f32 %v1909, 0.0
      %v2100 = vmax.f32 %v2020, 0.0
      %v2101 = vmax.f32 %v2022, 0.0
      %v2102 = vmax.f32 %v1913, 0.0
      %v2103 = vmax.f32 %v1915, 0.0
      %v2104 = vmax.f32 %v2026, 0.0
      %v2105 = vmax.f32 %v2028, 0.0
      %v2106 = vmax.f32 %v1917, 0.0
      %v2107 = vmax.f32 %v1919, 0.0
      %v2108 = vmax.f32 %v2030, 0.0
      %v2109 = vmax.f32 %v2032, 0.0
      %v2110 = vmax.f32 %v1923, 0.0
      %v2111 = vmax.f32 %v1925, 0.0
      %v2112 = vmax.f32 %v2036, 0.0
      %v2113 = vmax.f32 %v2038, 0.0
      %v2114 = vmax.f32 %v1927, 0.0
      %v2115 = vmax.f32 %v1929, 0.0
      %v2116 = vmax.f32 %v2040, 0.0
      %v2117 = vmax.f32 %v2042, 0.0
      %v2118 = vmax.f32 %v1933, 0.0
      %v2119 = vmax.f32 %v1935, 0.0
      %v2120 = vmax.f32 %v2046, 0.0
      %v2121 = vmax.f32 %v2048, 0.0
      %v2122 = vmax.f32 %v1937, 0.0
      %v2123 = vmax.f32 %v1939, 0.0
      %v2124 = vmax.f32 %v2050, 0.0
      %v2125 = vmax.f32 %v2052, 0.0
      %v2126 = vmax.f32 %v1943, 0.0
      %v2127 = vmax.f32 %v1945, 0.0
      %v2128 = vmax.f32 %v2056, 0.0
      %v2129 = vmax.f32 %v2058, 0.0
      %v2130 = vmax.f32 %v1947, 0.0
      %v2131 = vmax.f32 %v1949, 0.0
      %v2132 = vmax.f32 %v2060, 0.0
      %v2133 = vmax.f32 %v2062, 0.0
      %v2134 = vmax.f32 %v1953, 0.0
      %v2135 = vmax.f32 %v1955, 0.0
      %v2136 = vmax.f32 %v2066, 0.0
      %v2137 = vmax.f32 %v2068, 0.0
      %v2138 = vmax.f32 %v1957, 0.0
      %v2139 = vmax.f32 %v1959, 0.0
      %v2140 = vmax.f32 %v2070, 0.0
      %v2141 = vmax.f32 %v2072, 0.0
      %v2142 = vmax.f32 %v1963, 0.0
      %v2143 = vmax.f32 %v1965, 0.0
      %v2144 = vmax.f32 %v2076, 0.0
      %v2145 = vmax.f32 %v2078, 0.0
      %v2146 = vmax.f32 %v1967, 0.0
      %v2147 = vmax.f32 %v1969, 0.0
      %v2148 = vmax.f32 %v2080, 0.0
      %v2149 = vmax.f32 %v2082, 0.0
      %v2150 = vmax.f32 %v1973, 0.0
      %v2151 = vmax.f32 %v1975, 0.0
      %v2152 = vmax.f32 %v2086, 0.0
      %v2153 = vmax.f32 %v2088, 0.0
      %v2154 = vmax.f32 %v1977, 0.0
      %v2155 = vmax.f32 %v1979, 0.0
      %v2156 = vmax.f32 %v2090, 0.0
      %v2157 = vmax.f32 %v2092, 0.0
      %v2158 = vand.u32 2147483647, %v1903
      %v2159 = vand.u32 2147483647, %v1905
      %v2160 = vand.u32 2147483647, %v2016
      %v2161 = vand.u32 2147483647, %v2018
      %v2162 = vand.u32 2147483647, %v1907
      %v2163 = vand.u32 2147483647, %v1909
      %v2164 = vand.u32 2147483647, %v2020
      %v2165 = vand.u32 2147483647, %v2022
      %v2166 = vand.u32 2147483647, %v1913
      %v2167 = vand.u32 2147483647, %v1915
      %v2168 = vand.u32 2147483647, %v2026
      %v2169 = vand.u32 2147483647, %v2028
      %v2170 = vand.u32 2147483647, %v1917
      %v2171 = vand.u32 2147483647, %v1919
      %v2172 = vand.u32 2147483647, %v2030
      %v2173 = vand.u32 2147483647, %v2032
      %v2174 = vand.u32 2147483647, %v1923
      %v2175 = vand.u32 2147483647, %v1925
      %v2176 = vand.u32 2147483647, %v2036
      %v2177 = vand.u32 2147483647, %v2038
      %v2178 = vand.u32 2147483647, %v1927
      %v2179 = vand.u32 2147483647, %v1929
      %v2180 = vand.u32 2147483647, %v2040
      %v2181 = vand.u32 2147483647, %v2042
      %v2182 = vand.u32 2147483647, %v1933
      %v2183 = vand.u32 2147483647, %v1935
      %v2184 = vand.u32 2147483647, %v2046
      %v2185 = vand.u32 2147483647, %v2048
      %v2186 = vand.u32 2147483647, %v1937
      %v2187 = vand.u32 2147483647, %v1939
      %v2188 = vand.u32 2147483647, %v2050
      %v2189 = vand.u32 2147483647, %v2052
      %v2190 = vand.u32 2147483647, %v1943
      %v2191 = vand.u32 2147483647, %v1945
      %v2192 = vand.u32 2147483647, %v2056
      %v2193 = vand.u32 2147483647, %v2058
      %v2194 = vand.u32 2147483647, %v1947
      %v2195 = vand.u32 2147483647, %v1949
      %v2196 = vand.u32 2147483647, %v2060
      %v2197 = vand.u32 2147483647, %v2062
      %v2198 = vand.u32 2147483647, %v1953
      %v2199 = vand.u32 2147483647, %v1955
      %v2200 = vand.u32 2147483647, %v2066
      %v2201 = vand.u32 2147483647, %v2068
      %v2202 = vand.u32 2147483647, %v1957
      %v2203 = vand.u32 2147483647, %v1959
      %v2204 = vand.u32 2147483647, %v2070
      %v2205 = vand.u32 2147483647, %v2072
      %v2206 = vand.u32 2147483647, %v1963
      %v2207 = vand.u32 2147483647, %v1965
      %v2208 = vand.u32 2147483647, %v2076
      %v2209 = vand.u32 2147483647, %v2078
      %v2210 = vand.u32 2147483647, %v1967
      %v2211 = vand.u32 2147483647, %v1969
      %v2212 = vand.u32 2147483647, %v2080
      %v2213 = vand.u32 2147483647, %v2082
      %v2214 = vand.u32 2147483647, %v1973
      %v2215 = vand.u32 2147483647, %v1975
      %v2216 = vand.u32 2147483647, %v2086
      %v2217 = vand.u32 2147483647, %v2088
      %v2218 = vand.u32 2147483647, %v1977
      %v2219 = vand.u32 2147483647, %v1979
      %v2220 = vand.u32 2147483647, %v2090
      %v2221 = vand.u32 2147483647, %v2092
      %v2222 = vsub.f32 0.0, %v2158
      %v2223 = vsub.f32 0.0, %v2159
      %v2224 = vsub.f32 0.0, %v2160
      %v2225 = vsub.f32 0.0, %v2161
      %v2226 = vsub.f32 0.0, %v2162
      %v2227 = vsub.f32 0.0, %v2163
      %v2228 = vsub.f32 0.0, %v2164
      %v2229 = vsub.f32 0.0, %v2165
      %v2230 = vsub.f32 0.0, %v2166
      %v2231 = vsub.f32 0.0, %v2167
      %v2232 = vsub.f32 0.0, %v2168
      %v2233 = vsub.f32 0.0, %v2169
      %v2234 = vsub.f32 0.0, %v2170
      %v2235 = vsub.f32 0.0, %v2171
      %v2236 = vsub.f32 0.0, %v2172
      %v2237 = vsub.f32 0.0, %v2173
      %v2238 = vsub.f32 0.0, %v2174
      %v2239 = vsub.f32 0.0, %v2175
      %v2240 = vsub.f32 0.0, %v2176
      %v2241 = vsub.f32 0.0, %v2177
      %v2242 = vsub.f32 0.0, %v2178
      %v2243 = vsub.f32 0.0, %v2179
      %v2244 = vsub.f32 0.0, %v2180
      %v2245 = vsub.f32 0.0, %v2181
      %v2246 = vsub.f32 0.0, %v2182
      %v2247 = vsub.f32 0.0, %v2183
      %v2248 = vsub.f32 0.0, %v2184
      %v2249 = vsub.f32 0.0, %v2185
      %v2250 = vsub.f32 0.0, %v2186
      %v2251 = vsub.f32 0.0, %v2187
      %v2252 = vsub.f32 0.0, %v2188
      %v2253 = vsub.f32 0.0, %v2189
      %v2254 = vsub.f32 0.0, %v2190
      %v2255 = vsub.f32 0.0, %v2191
      %v2256 = vsub.f32 0.0, %v2192
      %v2257 = vsub.f32 0.0, %v2193
      %v2258 = vsub.f32 0.0, %v2194
      %v2259 = vsub.f32 0.0, %v2195
      %v2260 = vsub.f32 0.0, %v2196
      %v2261 = vsub.f32 0.0, %v2197
      %v2262 = vsub.f32 0.0, %v2198
      %v2263 = vsub.f32 0.0, %v2199
      %v2264 = vsub.f32 0.0, %v2200
      %v2265 = vsub.f32 0.0, %v2201
      %v2266 = vsub.f32 0.0, %v2202
      %v2267 = vsub.f32 0.0, %v2203
      %v2268 = vsub.f32 0.0, %v2204
      %v2269 = vsub.f32 0.0, %v2205
      %v2270 = vsub.f32 0.0, %v2206
      %v2271 = vsub.f32 0.0, %v2207
      %v2272 = vsub.f32 0.0, %v2208
      %v2273 = vsub.f32 0.0, %v2209
      %v2274 = vsub.f32 0.0, %v2210
      %v2275 = vsub.f32 0.0, %v2211
      %v2276 = vsub.f32 0.0, %v2212
      %v2277 = vsub.f32 0.0, %v2213
      %v2278 = vsub.f32 0.0, %v2214
      %v2279 = vsub.f32 0.0, %v2215
      %v2280 = vsub.f32 0.0, %v2216
      %v2281 = vsub.f32 0.0, %v2217
      %v2282 = vsub.f32 0.0, %v2218
      %v2283 = vsub.f32 0.0, %v2219
      %v2284 = vsub.f32 0.0, %v2220
      %v2285 = vsub.f32 0.0, %v2221
      %v2286 = vmul.f32 %v2222, 1.442695
      %v2287 = vpow.pop %v2286
      %v2288 = vmul.f32 %v2223, 1.442695
      %v2289 = vpow.pop %v2288
      %v2290 = vmul.f32 %v2224, 1.442695
      %v2291 = vpow.pop %v2290
      %v2292 = vmul.f32 %v2225, 1.442695
      %v2293 = vpow.pop %v2292
      %v2294 = vmul.f32 %v2226, 1.442695
      %v2295 = vpow.pop %v2294
      %v2296 = vmul.f32 %v2227, 1.442695
      %v2297 = vpow.pop %v2296
      %v2298 = vmul.f32 %v2228, 1.442695
      %v2299 = vpow.pop %v2298
      %v2300 = vmul.f32 %v2229, 1.442695
      %v2301 = vpow.pop %v2300
      %v2302 = vmul.f32 %v2230, 1.442695
      %v2303 = vpow.pop %v2302
      %v2304 = vmul.f32 %v2231, 1.442695
      %v2305 = vpow.pop %v2304
      %v2306 = vmul.f32 %v2232, 1.442695
      %v2307 = vpow.pop %v2306
      %v2308 = vmul.f32 %v2233, 1.442695
      %v2309 = vpow.pop %v2308
      %v2310 = vmul.f32 %v2234, 1.442695
      %v2311 = vpow.pop %v2310
      %v2312 = vmul.f32 %v2235, 1.442695
      %v2313 = vpow.pop %v2312
      %v2314 = vmul.f32 %v2236, 1.442695
      %v2315 = vpow.pop %v2314
      %v2316 = vmul.f32 %v2237, 1.442695
      %v2317 = vpow.pop %v2316
      %v2318 = vmul.f32 %v2238, 1.442695
      %v2319 = vpow.pop %v2318
      %v2320 = vmul.f32 %v2239, 1.442695
      %v2321 = vpow.pop %v2320
      %v2322 = vmul.f32 %v2240, 1.442695
      %v2323 = vpow.pop %v2322
      %v2324 = vmul.f32 %v2241, 1.442695
      %v2325 = vpow.pop %v2324
      %v2326 = vmul.f32 %v2242, 1.442695
      %v2327 = vpow.pop %v2326
      %v2328 = vmul.f32 %v2243, 1.442695
      %v2329 = vpow.pop %v2328
      %v2330 = vmul.f32 %v2244, 1.442695
      %v2331 = vpow.pop %v2330
      %v2332 = vmul.f32 %v2245, 1.442695
      %v2333 = vpow.pop %v2332
      %v2334 = vmul.f32 %v2246, 1.442695
      %v2335 = vpow.pop %v2334
      %v2336 = vmul.f32 %v2247, 1.442695
      %v2337 = vpow.pop %v2336
      %v2338 = vmul.f32 %v2248, 1.442695
      %v2339 = vpow.pop %v2338
      %v2340 = vmul.f32 %v2249, 1.442695
      %v2341 = vpow.pop %v2340
      %v2342 = vmul.f32 %v2250, 1.442695
      %v2343 = vpow.pop %v2342
      %v2344 = vmul.f32 %v2251, 1.442695
      %v2345 = vpow.pop %v2344
      %v2346 = vmul.f32 %v2252, 1.442695
      %v2347 = vpow.pop %v2346
      %v2348 = vmul.f32 %v2253, 1.442695
      %v2349 = vpow.pop %v2348
      %v2350 = vmul.f32 %v2254, 1.442695
      %v2351 = vpow.pop %v2350
      %v2352 = vmul.f32 %v2255, 1.442695
      %v2353 = vpow.pop %v2352
      %v2354 = vmul.f32 %v2256, 1.442695
      %v2355 = vpow.pop %v2354
      %v2356 = vmul.f32 %v2257, 1.442695
      %v2357 = vpow.pop %v2356
      %v2358 = vmul.f32 %v2258, 1.442695
      %v2359 = vpow.pop %v2358
      %v2360 = vmul.f32 %v2259, 1.442695
      %v2361 = vpow.pop %v2360
      %v2362 = vmul.f32 %v2260, 1.442695
      %v2363 = vpow.pop %v2362
      %v2364 = vmul.f32 %v2261, 1.442695
      %v2365 = vpow.pop %v2364
      %v2366 = vmul.f32 %v2262, 1.442695
      %v2367 = vpow.pop %v2366
      %v2368 = vmul.f32 %v2263, 1.442695
      %v2369 = vpow.pop %v2368
      %v2370 = vmul.f32 %v2264, 1.442695
      %v2371 = vpow.pop %v2370
      %v2372 = vmul.f32 %v2265, 1.442695
      %v2373 = vpow.pop %v2372
      %v2374 = vmul.f32 %v2266, 1.442695
      %v2375 = vpow.pop %v2374
      %v2376 = vmul.f32 %v2267, 1.442695
      %v2377 = vpow.pop %v2376
      %v2378 = vmul.f32 %v2268, 1.442695
      %v2379 = vpow.pop %v2378
      %v2380 = vmul.f32 %v2269, 1.442695
      %v2381 = vpow.pop %v2380
      %v2382 = vmul.f32 %v2270, 1.442695
      %v2383 = vpow.pop %v2382
      %v2384 = vmul.f32 %v2271, 1.442695
      %v2385 = vpow.pop %v2384
      %v2386 = vmul.f32 %v2272, 1.442695
      %v2387 = vpow.pop %v2386
      %v2388 = vmul.f32 %v2273, 1.442695
      %v2389 = vpow.pop %v2388
      %v2390 = vmul.f32 %v2274, 1.442695
      %v2391 = vpow.pop %v2390
      %v2392 = vmul.f32 %v2275, 1.442695
      %v2393 = vpow.pop %v2392
      %v2394 = vmul.f32 %v2276, 1.442695
      %v2395 = vpow.pop %v2394
      %v2396 = vmul.f32 %v2277, 1.442695
      %v2397 = vpow.pop %v2396
      %v2398 = vmul.f32 %v2278, 1.442695
      %v2399 = vpow.pop %v2398
      %v2400 = vmul.f32 %v2279, 1.442695
      %v2401 = vpow.pop %v2400
      %v2402 = vmul.f32 %v2280, 1.442695
      %v2403 = vpow.pop %v2402
      %v2404 = vmul.f32 %v2281, 1.442695
      %v2405 = vpow.pop %v2404
      %v2406 = vmul.f32 %v2282, 1.442695
      %v2407 = vpow.pop %v2406
      %v2408 = vmul.f32 %v2283, 1.442695
      %v2409 = vpow.pop %v2408
      %v2410 = vmul.f32 %v2284, 1.442695
      %v2411 = vpow.pop %v2410
      %v2412 = vmul.f32 %v2285, 1.442695
      %v2413 = vpow.pop %v2412
      %v2414 = vadd.f32 %v2287, 1.0
      %v2415 = vlog2.pop %v2414
      %v2416 = vmul.f32 %v2415, 0.6931472
      %v2417 = vmul.f32 -0.5, %v2287
      %v2418 = vadd.f32 %v2417, 1.0
      %v2419 = vmul.f32 %v2418, %v2287
      %v2420 = vand.u32 2147483647, %v2287
      %vm2421 = vcmp.lt.f32.partialorder %v2420, 0.0004427343
      %v2422 = vsel %vm2421, %v2419, %v2416
      %v2423 = vadd.f32 %v2289, 1.0
      %v2424 = vlog2.pop %v2423
      %v2425 = vmul.f32 %v2424, 0.6931472
      %v2426 = vmul.f32 -0.5, %v2289
      %v2427 = vadd.f32 %v2426, 1.0
      %v2428 = vmul.f32 %v2427, %v2289
      %v2429 = vand.u32 2147483647, %v2289
      %vm2430 = vcmp.lt.f32.partialorder %v2429, 0.0004427343
      %v2431 = vsel %vm2430, %v2428, %v2425
      %v2432 = vadd.f32 %v2291, 1.0
      %v2433 = vlog2.pop %v2432
      %v2434 = vmul.f32 %v2433, 0.6931472
      %v2435 = vmul.f32 -0.5, %v2291
      %v2436 = vadd.f32 %v2435, 1.0
      %v2437 = vmul.f32 %v2436, %v2291
      %v2438 = vand.u32 2147483647, %v2291
      %vm2439 = vcmp.lt.f32.partialorder %v2438, 0.0004427343
      %v2440 = vsel %vm2439, %v2437, %v2434
      %v2441 = vadd.f32 %v2293, 1.0
      %v2442 = vlog2.pop %v2441
      %v2443 = vmul.f32 %v2442, 0.6931472
      %v2444 = vmul.f32 -0.5, %v2293
      %v2445 = vadd.f32 %v2444, 1.0
      %v2446 = vmul.f32 %v2445, %v2293
      %v2447 = vand.u32 2147483647, %v2293
      %vm2448 = vcmp.lt.f32.partialorder %v2447, 0.0004427343
      %v2449 = vsel %vm2448, %v2446, %v2443
      %v2450 = vadd.f32 %v2295, 1.0
      %v2451 = vlog2.pop %v2450
      %v2452 = vmul.f32 %v2451, 0.6931472
      %v2453 = vmul.f32 -0.5, %v2295
      %v2454 = vadd.f32 %v2453, 1.0
      %v2455 = vmul.f32 %v2454, %v2295
      %v2456 = vand.u32 2147483647, %v2295
      %vm2457 = vcmp.lt.f32.partialorder %v2456, 0.0004427343
      %v2458 = vsel %vm2457, %v2455, %v2452
      %v2459 = vadd.f32 %v2297, 1.0
      %v2460 = vlog2.pop %v2459
      %v2461 = vmul.f32 %v2460, 0.6931472
      %v2462 = vmul.f32 -0.5, %v2297
      %v2463 = vadd.f32 %v2462, 1.0
      %v2464 = vmul.f32 %v2463, %v2297
      %v2465 = vand.u32 2147483647, %v2297
      %vm2466 = vcmp.lt.f32.partialorder %v2465, 0.0004427343
      %v2467 = vsel %vm2466, %v2464, %v2461
      %v2468 = vadd.f32 %v2299, 1.0
      %v2469 = vlog2.pop %v2468
      %v2470 = vmul.f32 %v2469, 0.6931472
      %v2471 = vmul.f32 -0.5, %v2299
      %v2472 = vadd.f32 %v2471, 1.0
      %v2473 = vmul.f32 %v2472, %v2299
      %v2474 = vand.u32 2147483647, %v2299
      %vm2475 = vcmp.lt.f32.partialorder %v2474, 0.0004427343
      %v2476 = vsel %vm2475, %v2473, %v2470
      %v2477 = vadd.f32 %v2301, 1.0
      %v2478 = vlog2.pop %v2477
      %v2479 = vmul.f32 %v2478, 0.6931472
      %v2480 = vmul.f32 -0.5, %v2301
      %v2481 = vadd.f32 %v2480, 1.0
      %v2482 = vmul.f32 %v2481, %v2301
      %v2483 = vand.u32 2147483647, %v2301
      %vm2484 = vcmp.lt.f32.partialorder %v2483, 0.0004427343
      %v2485 = vsel %vm2484, %v2482, %v2479
      %v2486 = vadd.f32 %v2303, 1.0
      %v2487 = vlog2.pop %v2486
      %v2488 = vmul.f32 %v2487, 0.6931472
      %v2489 = vmul.f32 -0.5, %v2303
      %v2490 = vadd.f32 %v2489, 1.0
      %v2491 = vmul.f32 %v2490, %v2303
      %v2492 = vand.u32 2147483647, %v2303
      %vm2493 = vcmp.lt.f32.partialorder %v2492, 0.0004427343
      %v2494 = vsel %vm2493, %v2491, %v2488
      %v2495 = vadd.f32 %v2305, 1.0
      %v2496 = vlog2.pop %v2495
      %v2497 = vmul.f32 %v2496, 0.6931472
      %v2498 = vmul.f32 -0.5, %v2305
      %v2499 = vadd.f32 %v2498, 1.0
      %v2500 = vmul.f32 %v2499, %v2305
      %v2501 = vand.u32 2147483647, %v2305
      %vm2502 = vcmp.lt.f32.partialorder %v2501, 0.0004427343
      %v2503 = vsel %vm2502, %v2500, %v2497
      %v2504 = vadd.f32 %v2307, 1.0
      %v2505 = vlog2.pop %v2504
      %v2506 = vmul.f32 %v2505, 0.6931472
      %v2507 = vmul.f32 -0.5, %v2307
      %v2508 = vadd.f32 %v2507, 1.0
      %v2509 = vmul.f32 %v2508, %v2307
      %v2510 = vand.u32 2147483647, %v2307
      %vm2511 = vcmp.lt.f32.partialorder %v2510, 0.0004427343
      %v2512 = vsel %vm2511, %v2509, %v2506
      %v2513 = vadd.f32 %v2309, 1.0
      %v2514 = vlog2.pop %v2513
      %v2515 = vmul.f32 %v2514, 0.6931472
      %v2516 = vmul.f32 -0.5, %v2309
      %v2517 = vadd.f32 %v2516, 1.0
      %v2518 = vmul.f32 %v2517, %v2309
      %v2519 = vand.u32 2147483647, %v2309
      %vm2520 = vcmp.lt.f32.partialorder %v2519, 0.0004427343
      %v2521 = vsel %vm2520, %v2518, %v2515
      %v2522 = vadd.f32 %v2311, 1.0
      %v2523 = vlog2.pop %v2522
      %v2524 = vmul.f32 %v2523, 0.6931472
      %v2525 = vmul.f32 -0.5, %v2311
      %v2526 = vadd.f32 %v2525, 1.0
      %v2527 = vmul.f32 %v2526, %v2311
      %v2528 = vand.u32 2147483647, %v2311
      %vm2529 = vcmp.lt.f32.partialorder %v2528, 0.0004427343
      %v2530 = vsel %vm2529, %v2527, %v2524
      %v2531 = vadd.f32 %v2313, 1.0
      %v2532 = vlog2.pop %v2531
      %v2533 = vmul.f32 %v2532, 0.6931472
      %v2534 = vmul.f32 -0.5, %v2313
      %v2535 = vadd.f32 %v2534, 1.0
      %v2536 = vmul.f32 %v2535, %v2313
      %v2537 = vand.u32 2147483647, %v2313
      %vm2538 = vcmp.lt.f32.partialorder %v2537, 0.0004427343
      %v2539 = vsel %vm2538, %v2536, %v2533
      %v2540 = vadd.f32 %v2315, 1.0
      %v2541 = vlog2.pop %v2540
      %v2542 = vmul.f32 %v2541, 0.6931472
      %v2543 = vmul.f32 -0.5, %v2315
      %v2544 = vadd.f32 %v2543, 1.0
      %v2545 = vmul.f32 %v2544, %v2315
      %v2546 = vand.u32 2147483647, %v2315
      %vm2547 = vcmp.lt.f32.partialorder %v2546, 0.0004427343
      %v2548 = vsel %vm2547, %v2545, %v2542
      %v2549 = vadd.f32 %v2317, 1.0
      %v2550 = vlog2.pop %v2549
      %v2551 = vmul.f32 %v2550, 0.6931472
      %v2552 = vmul.f32 -0.5, %v2317
      %v2553 = vadd.f32 %v2552, 1.0
      %v2554 = vmul.f32 %v2553, %v2317
      %v2555 = vand.u32 2147483647, %v2317
      %vm2556 = vcmp.lt.f32.partialorder %v2555, 0.0004427343
      %v2557 = vsel %vm2556, %v2554, %v2551
      %v2558 = vadd.f32 %v2319, 1.0
      %v2559 = vlog2.pop %v2558
      %v2560 = vmul.f32 %v2559, 0.6931472
      %v2561 = vmul.f32 -0.5, %v2319
      %v2562 = vadd.f32 %v2561, 1.0
      %v2563 = vmul.f32 %v2562, %v2319
      %v2564 = vand.u32 2147483647, %v2319
      %vm2565 = vcmp.lt.f32.partialorder %v2564, 0.0004427343
      %v2566 = vsel %vm2565, %v2563, %v2560
      %v2567 = vadd.f32 %v2321, 1.0
      %v2568 = vlog2.pop %v2567
      %v2569 = vmul.f32 %v2568, 0.6931472
      %v2570 = vmul.f32 -0.5, %v2321
      %v2571 = vadd.f32 %v2570, 1.0
      %v2572 = vmul.f32 %v2571, %v2321
      %v2573 = vand.u32 2147483647, %v2321
      %vm2574 = vcmp.lt.f32.partialorder %v2573, 0.0004427343
      %v2575 = vsel %vm2574, %v2572, %v2569
      %v2576 = vadd.f32 %v2323, 1.0
      %v2577 = vlog2.pop %v2576
      %v2578 = vmul.f32 %v2577, 0.6931472
      %v2579 = vmul.f32 -0.5, %v2323
      %v2580 = vadd.f32 %v2579, 1.0
      %v2581 = vmul.f32 %v2580, %v2323
      %v2582 = vand.u32 2147483647, %v2323
      %vm2583 = vcmp.lt.f32.partialorder %v2582, 0.0004427343
      %v2584 = vsel %vm2583, %v2581, %v2578
      %v2585 = vadd.f32 %v2325, 1.0
      %v2586 = vlog2.pop %v2585
      %v2587 = vmul.f32 %v2586, 0.6931472
      %v2588 = vmul.f32 -0.5, %v2325
      %v2589 = vadd.f32 %v2588, 1.0
      %v2590 = vmul.f32 %v2589, %v2325
      %v2591 = vand.u32 2147483647, %v2325
      %vm2592 = vcmp.lt.f32.partialorder %v2591, 0.0004427343
      %v2593 = vsel %vm2592, %v2590, %v2587
      %v2594 = vadd.f32 %v2327, 1.0
      %v2595 = vlog2.pop %v2594
      %v2596 = vmul.f32 %v2595, 0.6931472
      %v2597 = vmul.f32 -0.5, %v2327
      %v2598 = vadd.f32 %v2597, 1.0
      %v2599 = vmul.f32 %v2598, %v2327
      %v2600 = vand.u32 2147483647, %v2327
      %vm2601 = vcmp.lt.f32.partialorder %v2600, 0.0004427343
      %v2602 = vsel %vm2601, %v2599, %v2596
      %v2603 = vadd.f32 %v2329, 1.0
      %v2604 = vlog2.pop %v2603
      %v2605 = vmul.f32 %v2604, 0.6931472
      %v2606 = vmul.f32 -0.5, %v2329
      %v2607 = vadd.f32 %v2606, 1.0
      %v2608 = vmul.f32 %v2607, %v2329
      %v2609 = vand.u32 2147483647, %v2329
      %vm2610 = vcmp.lt.f32.partialorder %v2609, 0.0004427343
      %v2611 = vsel %vm2610, %v2608, %v2605
      %v2612 = vadd.f32 %v2331, 1.0
      %v2613 = vlog2.pop %v2612
      %v2614 = vmul.f32 %v2613, 0.6931472
      %v2615 = vmul.f32 -0.5, %v2331
      %v2616 = vadd.f32 %v2615, 1.0
      %v2617 = vmul.f32 %v2616, %v2331
      %v2618 = vand.u32 2147483647, %v2331
      %vm2619 = vcmp.lt.f32.partialorder %v2618, 0.0004427343
      %v2620 = vsel %vm2619, %v2617, %v2614
      %v2621 = vadd.f32 %v2333, 1.0
      %v2622 = vlog2.pop %v2621
      %v2623 = vmul.f32 %v2622, 0.6931472
      %v2624 = vmul.f32 -0.5, %v2333
      %v2625 = vadd.f32 %v2624, 1.0
      %v2626 = vmul.f32 %v2625, %v2333
      %v2627 = vand.u32 2147483647, %v2333
      %vm2628 = vcmp.lt.f32.partialorder %v2627, 0.0004427343
      %v2629 = vsel %vm2628, %v2626, %v2623
      %v2630 = vadd.f32 %v2335, 1.0
      %v2631 = vlog2.pop %v2630
      %v2632 = vmul.f32 %v2631, 0.6931472
      %v2633 = vmul.f32 -0.5, %v2335
      %v2634 = vadd.f32 %v2633, 1.0
      %v2635 = vmul.f32 %v2634, %v2335
      %v2636 = vand.u32 2147483647, %v2335
      %vm2637 = vcmp.lt.f32.partialorder %v2636, 0.0004427343
      %v2638 = vsel %vm2637, %v2635, %v2632
      %v2639 = vadd.f32 %v2337, 1.0
      %v2640 = vlog2.pop %v2639
      %v2641 = vmul.f32 %v2640, 0.6931472
      %v2642 = vmul.f32 -0.5, %v2337
      %v2643 = vadd.f32 %v2642, 1.0
      %v2644 = vmul.f32 %v2643, %v2337
      %v2645 = vand.u32 2147483647, %v2337
      %vm2646 = vcmp.lt.f32.partialorder %v2645, 0.0004427343
      %v2647 = vsel %vm2646, %v2644, %v2641
      %v2648 = vadd.f32 %v2339, 1.0
      %v2649 = vlog2.pop %v2648
      %v2650 = vmul.f32 %v2649, 0.6931472
      %v2651 = vmul.f32 -0.5, %v2339
      %v2652 = vadd.f32 %v2651, 1.0
      %v2653 = vmul.f32 %v2652, %v2339
      %v2654 = vand.u32 2147483647, %v2339
      %vm2655 = vcmp.lt.f32.partialorder %v2654, 0.0004427343
      %v2656 = vsel %vm2655, %v2653, %v2650
      %v2657 = vadd.f32 %v2341, 1.0
      %v2658 = vlog2.pop %v2657
      %v2659 = vmul.f32 %v2658, 0.6931472
      %v2660 = vmul.f32 -0.5, %v2341
      %v2661 = vadd.f32 %v2660, 1.0
      %v2662 = vmul.f32 %v2661, %v2341
      %v2663 = vand.u32 2147483647, %v2341
      %vm2664 = vcmp.lt.f32.partialorder %v2663, 0.0004427343
      %v2665 = vsel %vm2664, %v2662, %v2659
      %v2666 = vadd.f32 %v2343, 1.0
      %v2667 = vlog2.pop %v2666
      %v2668 = vmul.f32 %v2667, 0.6931472
      %v2669 = vmul.f32 -0.5, %v2343
      %v2670 = vadd.f32 %v2669, 1.0
      %v2671 = vmul.f32 %v2670, %v2343
      %v2672 = vand.u32 2147483647, %v2343
      %vm2673 = vcmp.lt.f32.partialorder %v2672, 0.0004427343
      %v2674 = vsel %vm2673, %v2671, %v2668
      %v2675 = vadd.f32 %v2345, 1.0
      %v2676 = vlog2.pop %v2675
      %v2677 = vmul.f32 %v2676, 0.6931472
      %v2678 = vmul.f32 -0.5, %v2345
      %v2679 = vadd.f32 %v2678, 1.0
      %v2680 = vmul.f32 %v2679, %v2345
      %v2681 = vand.u32 2147483647, %v2345
      %vm2682 = vcmp.lt.f32.partialorder %v2681, 0.0004427343
      %v2683 = vsel %vm2682, %v2680, %v2677
      %v2684 = vadd.f32 %v2347, 1.0
      %v2685 = vlog2.pop %v2684
      %v2686 = vmul.f32 %v2685, 0.6931472
      %v2687 = vmul.f32 -0.5, %v2347
      %v2688 = vadd.f32 %v2687, 1.0
      %v2689 = vmul.f32 %v2688, %v2347
      %v2690 = vand.u32 2147483647, %v2347
      %vm2691 = vcmp.lt.f32.partialorder %v2690, 0.0004427343
      %v2692 = vsel %vm2691, %v2689, %v2686
      %v2693 = vadd.f32 %v2349, 1.0
      %v2694 = vlog2.pop %v2693
      %v2695 = vmul.f32 %v2694, 0.6931472
      %v2696 = vmul.f32 -0.5, %v2349
      %v2697 = vadd.f32 %v2696, 1.0
      %v2698 = vmul.f32 %v2697, %v2349
      %v2699 = vand.u32 2147483647, %v2349
      %vm2700 = vcmp.lt.f32.partialorder %v2699, 0.0004427343
      %v2701 = vsel %vm2700, %v2698, %v2695
      %v2702 = vadd.f32 %v2351, 1.0
      %v2703 = vlog2.pop %v2702
      %v2704 = vmul.f32 %v2703, 0.6931472
      %v2705 = vmul.f32 -0.5, %v2351
      %v2706 = vadd.f32 %v2705, 1.0
      %v2707 = vmul.f32 %v2706, %v2351
      %v2708 = vand.u32 2147483647, %v2351
      %vm2709 = vcmp.lt.f32.partialorder %v2708, 0.0004427343
      %v2710 = vsel %vm2709, %v2707, %v2704
      %v2711 = vadd.f32 %v2353, 1.0
      %v2712 = vlog2.pop %v2711
      %v2713 = vmul.f32 %v2712, 0.6931472
      %v2714 = vmul.f32 -0.5, %v2353
      %v2715 = vadd.f32 %v2714, 1.0
      %v2716 = vmul.f32 %v2715, %v2353
      %v2717 = vand.u32 2147483647, %v2353
      %vm2718 = vcmp.lt.f32.partialorder %v2717, 0.0004427343
      %v2719 = vsel %vm2718, %v2716, %v2713
      %v2720 = vadd.f32 %v2355, 1.0
      %v2721 = vlog2.pop %v2720
      %v2722 = vmul.f32 %v2721, 0.6931472
      %v2723 = vmul.f32 -0.5, %v2355
      %v2724 = vadd.f32 %v2723, 1.0
      %v2725 = vmul.f32 %v2724, %v2355
      %v2726 = vand.u32 2147483647, %v2355
      %vm2727 = vcmp.lt.f32.partialorder %v2726, 0.0004427343
      %v2728 = vsel %vm2727, %v2725, %v2722
      %v2729 = vadd.f32 %v2357, 1.0
      %v2730 = vlog2.pop %v2729
      %v2731 = vmul.f32 %v2730, 0.6931472
      %v2732 = vmul.f32 -0.5, %v2357
      %v2733 = vadd.f32 %v2732, 1.0
      %v2734 = vmul.f32 %v2733, %v2357
      %v2735 = vand.u32 2147483647, %v2357
      %vm2736 = vcmp.lt.f32.partialorder %v2735, 0.0004427343
      %v2737 = vsel %vm2736, %v2734, %v2731
      %v2738 = vadd.f32 %v2359, 1.0
      %v2739 = vlog2.pop %v2738
      %v2740 = vmul.f32 %v2739, 0.6931472
      %v2741 = vmul.f32 -0.5, %v2359
      %v2742 = vadd.f32 %v2741, 1.0
      %v2743 = vmul.f32 %v2742, %v2359
      %v2744 = vand.u32 2147483647, %v2359
      %vm2745 = vcmp.lt.f32.partialorder %v2744, 0.0004427343
      %v2746 = vsel %vm2745, %v2743, %v2740
      %v2747 = vadd.f32 %v2361, 1.0
      %v2748 = vlog2.pop %v2747
      %v2749 = vmul.f32 %v2748, 0.6931472
      %v2750 = vmul.f32 -0.5, %v2361
      %v2751 = vadd.f32 %v2750, 1.0
      %v2752 = vmul.f32 %v2751, %v2361
      %v2753 = vand.u32 2147483647, %v2361
      %vm2754 = vcmp.lt.f32.partialorder %v2753, 0.0004427343
      %v2755 = vsel %vm2754, %v2752, %v2749
      %v2756 = vadd.f32 %v2363, 1.0
      %v2757 = vlog2.pop %v2756
      %v2758 = vmul.f32 %v2757, 0.6931472
      %v2759 = vmul.f32 -0.5, %v2363
      %v2760 = vadd.f32 %v2759, 1.0
      %v2761 = vmul.f32 %v2760, %v2363
      %v2762 = vand.u32 2147483647, %v2363
      %vm2763 = vcmp.lt.f32.partialorder %v2762, 0.0004427343
      %v2764 = vsel %vm2763, %v2761, %v2758
      %v2765 = vadd.f32 %v2365, 1.0
      %v2766 = vlog2.pop %v2765
      %v2767 = vmul.f32 %v2766, 0.6931472
      %v2768 = vmul.f32 -0.5, %v2365
      %v2769 = vadd.f32 %v2768, 1.0
      %v2770 = vmul.f32 %v2769, %v2365
      %v2771 = vand.u32 2147483647, %v2365
      %vm2772 = vcmp.lt.f32.partialorder %v2771, 0.0004427343
      %v2773 = vsel %vm2772, %v2770, %v2767
      %v2774 = vadd.f32 %v2367, 1.0
      %v2775 = vlog2.pop %v2774
      %v2776 = vmul.f32 %v2775, 0.6931472
      %v2777 = vmul.f32 -0.5, %v2367
      %v2778 = vadd.f32 %v2777, 1.0
      %v2779 = vmul.f32 %v2778, %v2367
      %v2780 = vand.u32 2147483647, %v2367
      %vm2781 = vcmp.lt.f32.partialorder %v2780, 0.0004427343
      %v2782 = vsel %vm2781, %v2779, %v2776
      %v2783 = vadd.f32 %v2369, 1.0
      %v2784 = vlog2.pop %v2783
      %v2785 = vmul.f32 %v2784, 0.6931472
      %v2786 = vmul.f32 -0.5, %v2369
      %v2787 = vadd.f32 %v2786, 1.0
      %v2788 = vmul.f32 %v2787, %v2369
      %v2789 = vand.u32 2147483647, %v2369
      %vm2790 = vcmp.lt.f32.partialorder %v2789, 0.0004427343
      %v2791 = vsel %vm2790, %v2788, %v2785
      %v2792 = vadd.f32 %v2371, 1.0
      %v2793 = vlog2.pop %v2792
      %v2794 = vmul.f32 %v2793, 0.6931472
      %v2795 = vmul.f32 -0.5, %v2371
      %v2796 = vadd.f32 %v2795, 1.0
      %v2797 = vmul.f32 %v2796, %v2371
      %v2798 = vand.u32 2147483647, %v2371
      %vm2799 = vcmp.lt.f32.partialorder %v2798, 0.0004427343
      %v2800 = vsel %vm2799, %v2797, %v2794
      %v2801 = vadd.f32 %v2373, 1.0
      %v2802 = vlog2.pop %v2801
      %v2803 = vmul.f32 %v2802, 0.6931472
      %v2804 = vmul.f32 -0.5, %v2373
      %v2805 = vadd.f32 %v2804, 1.0
      %v2806 = vmul.f32 %v2805, %v2373
      %v2807 = vand.u32 2147483647, %v2373
      %vm2808 = vcmp.lt.f32.partialorder %v2807, 0.0004427343
      %v2809 = vsel %vm2808, %v2806, %v2803
      %v2810 = vadd.f32 %v2375, 1.0
      %v2811 = vlog2.pop %v2810
      %v2812 = vmul.f32 %v2811, 0.6931472
      %v2813 = vmul.f32 -0.5, %v2375
      %v2814 = vadd.f32 %v2813, 1.0
      %v2815 = vmul.f32 %v2814, %v2375
      %v2816 = vand.u32 2147483647, %v2375
      %vm2817 = vcmp.lt.f32.partialorder %v2816, 0.0004427343
      %v2818 = vsel %vm2817, %v2815, %v2812
      %v2819 = vadd.f32 %v2377, 1.0
      %v2820 = vlog2.pop %v2819
      %v2821 = vmul.f32 %v2820, 0.6931472
      %v2822 = vmul.f32 -0.5, %v2377
      %v2823 = vadd.f32 %v2822, 1.0
      %v2824 = vmul.f32 %v2823, %v2377
      %v2825 = vand.u32 2147483647, %v2377
      %vm2826 = vcmp.lt.f32.partialorder %v2825, 0.0004427343
      %v2827 = vsel %vm2826, %v2824, %v2821
      %v2828 = vadd.f32 %v2379, 1.0
      %v2829 = vlog2.pop %v2828
      %v2830 = vmul.f32 %v2829, 0.6931472
      %v2831 = vmul.f32 -0.5, %v2379
      %v2832 = vadd.f32 %v2831, 1.0
      %v2833 = vmul.f32 %v2832, %v2379
      %v2834 = vand.u32 2147483647, %v2379
      %vm2835 = vcmp.lt.f32.partialorder %v2834, 0.0004427343
      %v2836 = vsel %vm2835, %v2833, %v2830
      %v2837 = vadd.f32 %v2381, 1.0
      %v2838 = vlog2.pop %v2837
      %v2839 = vmul.f32 %v2838, 0.6931472
      %v2840 = vmul.f32 -0.5, %v2381
      %v2841 = vadd.f32 %v2840, 1.0
      %v2842 = vmul.f32 %v2841, %v2381
      %v2843 = vand.u32 2147483647, %v2381
      %vm2844 = vcmp.lt.f32.partialorder %v2843, 0.0004427343
      %v2845 = vsel %vm2844, %v2842, %v2839
      %v2846 = vadd.f32 %v2383, 1.0
      %v2847 = vlog2.pop %v2846
      %v2848 = vmul.f32 %v2847, 0.6931472
      %v2849 = vmul.f32 -0.5, %v2383
      %v2850 = vadd.f32 %v2849, 1.0
      %v2851 = vmul.f32 %v2850, %v2383
      %v2852 = vand.u32 2147483647, %v2383
      %vm2853 = vcmp.lt.f32.partialorder %v2852, 0.0004427343
      %v2854 = vsel %vm2853, %v2851, %v2848
      %v2855 = vadd.f32 %v2385, 1.0
      %v2856 = vlog2.pop %v2855
      %v2857 = vmul.f32 %v2856, 0.6931472
      %v2858 = vmul.f32 -0.5, %v2385
      %v2859 = vadd.f32 %v2858, 1.0
      %v2860 = vmul.f32 %v2859, %v2385
      %v2861 = vand.u32 2147483647, %v2385
      %vm2862 = vcmp.lt.f32.partialorder %v2861, 0.0004427343
      %v2863 = vsel %vm2862, %v2860, %v2857
      %v2864 = vadd.f32 %v2387, 1.0
      %v2865 = vlog2.pop %v2864
      %v2866 = vmul.f32 %v2865, 0.6931472
      %v2867 = vmul.f32 -0.5, %v2387
      %v2868 = vadd.f32 %v2867, 1.0
      %v2869 = vmul.f32 %v2868, %v2387
      %v2870 = vand.u32 2147483647, %v2387
      %vm2871 = vcmp.lt.f32.partialorder %v2870, 0.0004427343
      %v2872 = vsel %vm2871, %v2869, %v2866
      %v2873 = vadd.f32 %v2389, 1.0
      %v2874 = vlog2.pop %v2873
      %v2875 = vmul.f32 %v2874, 0.6931472
      %v2876 = vmul.f32 -0.5, %v2389
      %v2877 = vadd.f32 %v2876, 1.0
      %v2878 = vmul.f32 %v2877, %v2389
      %v2879 = vand.u32 2147483647, %v2389
      %vm2880 = vcmp.lt.f32.partialorder %v2879, 0.0004427343
      %v2881 = vsel %vm2880, %v2878, %v2875
      %v2882 = vadd.f32 %v2391, 1.0
      %v2883 = vlog2.pop %v2882
      %v2884 = vmul.f32 %v2883, 0.6931472
      %v2885 = vmul.f32 -0.5, %v2391
      %v2886 = vadd.f32 %v2885, 1.0
      %v2887 = vmul.f32 %v2886, %v2391
      %v2888 = vand.u32 2147483647, %v2391
      %vm2889 = vcmp.lt.f32.partialorder %v2888, 0.0004427343
      %v2890 = vsel %vm2889, %v2887, %v2884
      %v2891 = vadd.f32 %v2393, 1.0
      %v2892 = vlog2.pop %v2891
      %v2893 = vmul.f32 %v2892, 0.6931472
      %v2894 = vmul.f32 -0.5, %v2393
      %v2895 = vadd.f32 %v2894, 1.0
      %v2896 = vmul.f32 %v2895, %v2393
      %v2897 = vand.u32 2147483647, %v2393
      %vm2898 = vcmp.lt.f32.partialorder %v2897, 0.0004427343
      %v2899 = vsel %vm2898, %v2896, %v2893
      %v2900 = vadd.f32 %v2395, 1.0
      %v2901 = vlog2.pop %v2900
      %v2902 = vmul.f32 %v2901, 0.6931472
      %v2903 = vmul.f32 -0.5, %v2395
      %v2904 = vadd.f32 %v2903, 1.0
      %v2905 = vmul.f32 %v2904, %v2395
      %v2906 = vand.u32 2147483647, %v2395
      %vm2907 = vcmp.lt.f32.partialorder %v2906, 0.0004427343
      %v2908 = vsel %vm2907, %v2905, %v2902
      %v2909 = vadd.f32 %v2397, 1.0
      %v2910 = vlog2.pop %v2909
      %v2911 = vmul.f32 %v2910, 0.6931472
      %v2912 = vmul.f32 -0.5, %v2397
      %v2913 = vadd.f32 %v2912, 1.0
      %v2914 = vmul.f32 %v2913, %v2397
      %v2915 = vand.u32 2147483647, %v2397
      %vm2916 = vcmp.lt.f32.partialorder %v2915, 0.0004427343
      %v2917 = vsel %vm2916, %v2914, %v2911
      %v2918 = vadd.f32 %v2399, 1.0
      %v2919 = vlog2.pop %v2918
      %v2920 = vmul.f32 %v2919, 0.6931472
      %v2921 = vmul.f32 -0.5, %v2399
      %v2922 = vadd.f32 %v2921, 1.0
      %v2923 = vmul.f32 %v2922, %v2399
      %v2924 = vand.u32 2147483647, %v2399
      %vm2925 = vcmp.lt.f32.partialorder %v2924, 0.0004427343
      %v2926 = vsel %vm2925, %v2923, %v2920
      %v2927 = vadd.f32 %v2401, 1.0
      %v2928 = vlog2.pop %v2927
      %v2929 = vmul.f32 %v2928, 0.6931472
      %v2930 = vmul.f32 -0.5, %v2401
      %v2931 = vadd.f32 %v2930, 1.0
      %v2932 = vmul.f32 %v2931, %v2401
      %v2933 = vand.u32 2147483647, %v2401
      %vm2934 = vcmp.lt.f32.partialorder %v2933, 0.0004427343
      %v2935 = vsel %vm2934, %v2932, %v2929
      %v2936 = vadd.f32 %v2403, 1.0
      %v2937 = vlog2.pop %v2936
      %v2938 = vmul.f32 %v2937, 0.6931472
      %v2939 = vmul.f32 -0.5, %v2403
      %v2940 = vadd.f32 %v2939, 1.0
      %v2941 = vmul.f32 %v2940, %v2403
      %v2942 = vand.u32 2147483647, %v2403
      %vm2943 = vcmp.lt.f32.partialorder %v2942, 0.0004427343
      %v2944 = vsel %vm2943, %v2941, %v2938
      %v2945 = vadd.f32 %v2405, 1.0
      %v2946 = vlog2.pop %v2945
      %v2947 = vmul.f32 %v2946, 0.6931472
      %v2948 = vmul.f32 -0.5, %v2405
      %v2949 = vadd.f32 %v2948, 1.0
      %v2950 = vmul.f32 %v2949, %v2405
      %v2951 = vand.u32 2147483647, %v2405
      %vm2952 = vcmp.lt.f32.partialorder %v2951, 0.0004427343
      %v2953 = vsel %vm2952, %v2950, %v2947
      %v2954 = vadd.f32 %v2407, 1.0
      %v2955 = vlog2.pop %v2954
      %v2956 = vmul.f32 %v2955, 0.6931472
      %v2957 = vmul.f32 -0.5, %v2407
      %v2958 = vadd.f32 %v2957, 1.0
      %v2959 = vmul.f32 %v2958, %v2407
      %v2960 = vand.u32 2147483647, %v2407
      %vm2961 = vcmp.lt.f32.partialorder %v2960, 0.0004427343
      %v2962 = vsel %vm2961, %v2959, %v2956
      %v2963 = vadd.f32 %v2409, 1.0
      %v2964 = vlog2.pop %v2963
      %v2965 = vmul.f32 %v2964, 0.6931472
      %v2966 = vmul.f32 -0.5, %v2409
      %v2967 = vadd.f32 %v2966, 1.0
      %v2968 = vmul.f32 %v2967, %v2409
      %v2969 = vand.u32 2147483647, %v2409
      %vm2970 = vcmp.lt.f32.partialorder %v2969, 0.0004427343
      %v2971 = vsel %vm2970, %v2968, %v2965
      %v2972 = vadd.f32 %v2411, 1.0
      %v2973 = vlog2.pop %v2972
      %v2974 = vmul.f32 %v2973, 0.6931472
      %v2975 = vmul.f32 -0.5, %v2411
      %v2976 = vadd.f32 %v2975, 1.0
      %v2977 = vmul.f32 %v2976, %v2411
      %v2978 = vand.u32 2147483647, %v2411
      %vm2979 = vcmp.lt.f32.partialorder %v2978, 0.0004427343
      %v2980 = vsel %vm2979, %v2977, %v2974
      %v2981 = vadd.f32 %v2413, 1.0
      %v2982 = vlog2.pop %v2981
      %v2983 = vmul.f32 %v2982, 0.6931472
      %v2984 = vmul.f32 -0.5, %v2413
      %v2985 = vadd.f32 %v2984, 1.0
      %v2986 = vmul.f32 %v2985, %v2413
      %v2987 = vand.u32 2147483647, %v2413
      %vm2988 = vcmp.lt.f32.partialorder %v2987, 0.0004427343
      %v2989 = vsel %vm2988, %v2986, %v2983
      %v2990 = vadd.f32 %v2094, %v2422
      %v2991 = vadd.f32 %v2095, %v2431
      %v2992 = vadd.f32 %v2096, %v2440
      %v2993 = vadd.f32 %v2097, %v2449
      %v2994 = vadd.f32 %v2098, %v2458
      %v2995 = vadd.f32 %v2099, %v2467
      %v2996 = vadd.f32 %v2100, %v2476
      %v2997 = vadd.f32 %v2101, %v2485
      %v2998 = vadd.f32 %v2102, %v2494
      %v2999 = vadd.f32 %v2103, %v2503
      %v3000 = vadd.f32 %v2104, %v2512
      %v3001 = vadd.f32 %v2105, %v2521
      %v3002 = vadd.f32 %v2106, %v2530
      %v3003 = vadd.f32 %v2107, %v2539
      %v3004 = vadd.f32 %v2108, %v2548
      %v3005 = vadd.f32 %v2109, %v2557
      %v3006 = vadd.f32 %v2110, %v2566
      %v3007 = vadd.f32 %v2111, %v2575
      %v3008 = vadd.f32 %v2112, %v2584
      %v3009 = vadd.f32 %v2113, %v2593
      %v3010 = vadd.f32 %v2114, %v2602
      %v3011 = vadd.f32 %v2115, %v2611
      %v3012 = vadd.f32 %v2116, %v2620
      %v3013 = vadd.f32 %v2117, %v2629
      %v3014 = vadd.f32 %v2118, %v2638
      %v3015 = vadd.f32 %v2119, %v2647
      %v3016 = vadd.f32 %v2120, %v2656
      %v3017 = vadd.f32 %v2121, %v2665
      %v3018 = vadd.f32 %v2122, %v2674
      %v3019 = vadd.f32 %v2123, %v2683
      %v3020 = vadd.f32 %v2124, %v2692
      %v3021 = vadd.f32 %v2125, %v2701
      %v3022 = vadd.f32 %v2126, %v2710
      %v3023 = vadd.f32 %v2127, %v2719
      %v3024 = vadd.f32 %v2128, %v2728
      %v3025 = vadd.f32 %v2129, %v2737
      %v3026 = vadd.f32 %v2130, %v2746
      %v3027 = vadd.f32 %v2131, %v2755
      %v3028 = vadd.f32 %v2132, %v2764
      %v3029 = vadd.f32 %v2133, %v2773
      %v3030 = vadd.f32 %v2134, %v2782
      %v3031 = vadd.f32 %v2135, %v2791
      %v3032 = vadd.f32 %v2136, %v2800
      %v3033 = vadd.f32 %v2137, %v2809
      %v3034 = vadd.f32 %v2138, %v2818
      %v3035 = vadd.f32 %v2139, %v2827
      %v3036 = vadd.f32 %v2140, %v2836
      %v3037 = vadd.f32 %v2141, %v2845
      %v3038 = vadd.f32 %v2142, %v2854
      %v3039 = vadd.f32 %v2143, %v2863
      %v3040 = vadd.f32 %v2144, %v2872
      %v3041 = vadd.f32 %v2145, %v2881
      %v3042 = vadd.f32 %v2146, %v2890
      %v3043 = vadd.f32 %v2147, %v2899
      %v3044 = vadd.f32 %v2148, %v2908
      %v3045 = vadd.f32 %v2149, %v2917
      %v3046 = vadd.f32 %v2150, %v2926
      %v3047 = vadd.f32 %v2151, %v2935
      %v3048 = vadd.f32 %v2152, %v2944
      %v3049 = vadd.f32 %v2153, %v2953
      %v3050 = vadd.f32 %v2154, %v2962
      %v3051 = vadd.f32 %v2155, %v2971
      %v3052 = vadd.f32 %v2156, %v2980
      %v3053 = vadd.f32 %v2157, %v2989
      %v3054 = vld [vmem:[%s3 + $0x80] sm:$0xff]
      %v3055 = vld [vmem:[%s3 + $0x88] sm:$0xff]
      %v3056 = vld [vmem:[%s3 + $0x90] sm:$0xff]
      %v3057 = vld [vmem:[%s3 + $0x98] sm:$0xff]
      %v3058 = vld [vmem:[%s3 + $0xa0] sm:$0xff]
      %v3059 = vld [vmem:[%s3 + $0xa8] sm:$0xff]
      %v3060 = vld [vmem:[%s3 + $0xb0] sm:$0xff]
      %v3061 = vld [vmem:[%s3 + $0xb8] sm:$0xff]
      %v3070 = vunpack.c.l.b16 %v3054
      %v3071 = vunpack.c.h.b16 %v3054
      %v3072 = vunpack.c.l.b16 %v3055
      %v3073 = vunpack.c.h.b16 %v3055
      %v3074 = vunpack.c.l.b16 %v3056
      %v3075 = vunpack.c.h.b16 %v3056
      %v3076 = vunpack.c.l.b16 %v3057
      %v3077 = vunpack.c.h.b16 %v3057
      %v3078 = vunpack.c.l.b16 %v3058
      %v3079 = vunpack.c.h.b16 %v3058
      %v3080 = vunpack.c.l.b16 %v3059
      %v3081 = vunpack.c.h.b16 %v3059
      %v3082 = vunpack.c.l.b16 %v3060
      %v3083 = vunpack.c.h.b16 %v3060
      %v3084 = vunpack.c.l.b16 %v3061
      %v3085 = vunpack.c.h.b16 %v3061
      %v3086 = vpack.c.b16 %v3074, %v3070
      %v3087 = vpack.c.b16 %v3075, %v3071
      %v3088 = vpack.c.b16 %v3076, %v3072
      %v3089 = vpack.c.b16 %v3077, %v3073
      %v3090 = vpack.c.b16 %v3082, %v3078
      %v3091 = vpack.c.b16 %v3083, %v3079
      %v3092 = vpack.c.b16 %v3084, %v3080
      %v3093 = vpack.c.b16 %v3085, %v3081
      %3102 = vmatprep.subr.bf16.mxu0 %v3087
      %3103 = vmatpush1.bf16.msra.mxu0 %v3086
      %3104 = vmatprep.subr.bf16.mxu0 %v3091
      %3105 = vmatpush1.bf16.msra.mxu0 %v3090
      %3106 = vmatprep.subr.bf16.mxu0 0
      %3107 = vmatpush1.bf16.msra.mxu0 0
      %3108 = vmatprep.subr.bf16.mxu0 0
      %3109 = vmatpush1.bf16.msra.mxu0 0
      %3110 = vmatprep.subr.bf16.mxu0 0
      %3111 = vmatpush1.bf16.msra.mxu0 0
      %3112 = vmatprep.subr.bf16.mxu0 0
      %3113 = vmatpush1.bf16.msra.mxu0 0
      %3114 = vmatprep.subr.bf16.mxu0 0
      %3115 = vmatpush1.bf16.msra.mxu0 0
      %3116 = vmatprep.subr.bf16.mxu0 0
      %3117 = vmatpush1.bf16.msra.mxu0 0
      %3118 = vmatprep.subr.bf16.mxu0 0
      %3119 = vmatpush1.bf16.msra.mxu0 0
      %3120 = vmatprep.subr.bf16.mxu0 0
      %3121 = vmatpush1.bf16.msra.mxu0 0
      %3122 = vmatprep.subr.bf16.mxu0 0
      %3123 = vmatpush1.bf16.msra.mxu0 0
      %3124 = vmatprep.subr.bf16.mxu0 0
      %3125 = vmatpush1.bf16.msra.mxu0 0
      %3126 = vmatprep.subr.bf16.mxu0 0
      %3127 = vmatpush1.bf16.msra.mxu0 0
      %3128 = vmatprep.subr.bf16.mxu0 0
      %3129 = vmatpush1.bf16.msra.mxu0 0
      %3130 = vmatprep.subr.bf16.mxu0 0
      %3131 = vmatpush1.bf16.msra.mxu0 0
      %3132 = vmatprep.subr.bf16.mxu0 0
      %3133 = vmatpush1.bf16.msra.mxu0 0
      %3134 = vmatprep.mubr.bf16.mxu0 0
      %3135 = vmatmul.mubr.bf16.gmra.mrb[0].mxu0 %v1055
      %v3136 = vpop.f32.mrb[0].mxu0
      %v3137 = vadd.f32 0.0, %v3136
      %v3138 = vpop.f32.mrb[0].mxu0
      %v3139 = vadd.f32 0.0, %v3138
      %v3140 = vpop.f32.mrb[0].mxu0
      %v3141 = vadd.f32 0.0, %v3140
      %v3142 = vpop.f32.mrb[0].mxu0
      %v3143 = vadd.f32 0.0, %v3142
      %3144 = vmatprep.mubr.bf16.mxu0 0
      %3145 = vmatmul.mubr.bf16.gmra.mrb[0].mxu0 %v1058
      %v3146 = vpop.f32.mrb[0].mxu0
      %v3147 = vadd.f32 0.0, %v3146
      %v3148 = vpop.f32.mrb[0].mxu0
      %v3149 = vadd.f32 0.0, %v3148
      %v3150 = vpop.f32.mrb[0].mxu0
      %v3151 = vadd.f32 0.0, %v3150
      %v3152 = vpop.f32.mrb[0].mxu0
      %v3153 = vadd.f32 0.0, %v3152
      %3154 = vmatprep.mubr.bf16.mxu0 0
      %3155 = vmatmul.mubr.bf16.gmra.mrb[0].mxu0 %v1061
      %v3156 = vpop.f32.mrb[0].mxu0
      %v3157 = vadd.f32 0.0, %v3156
      %v3158 = vpop.f32.mrb[0].mxu0
      %v3159 = vadd.f32 0.0, %v3158
      %v3160 = vpop.f32.mrb[0].mxu0
      %v3161 = vadd.f32 0.0, %v3160
      %v3162 = vpop.f32.mrb[0].mxu0
      %v3163 = vadd.f32 0.0, %v3162
      %3164 = vmatprep.mubr.bf16.mxu0 0
      %3165 = vmatmul.mubr.bf16.gmra.mrb[0].mxu0 %v1064
      %v3166 = vpop.f32.mrb[0].mxu0
      %v3167 = vadd.f32 0.0, %v3166
      %v3168 = vpop.f32.mrb[0].mxu0
      %v3169 = vadd.f32 0.0, %v3168
      %v3170 = vpop.f32.mrb[0].mxu0
      %v3171 = vadd.f32 0.0, %v3170
      %v3172 = vpop.f32.mrb[0].mxu0
      %v3173 = vadd.f32 0.0, %v3172
      %3174 = vmatprep.mubr.bf16.mxu0 0
      %3175 = vmatmul.mubr.bf16.gmra.mrb[0].mxu0 %v1067
      %v3176 = vpop.f32.mrb[0].mxu0
      %v3177 = vadd.f32 0.0, %v3176
      %v3178 = vpop.f32.mrb[0].mxu0
      %v3179 = vadd.f32 0.0, %v3178
      %v3180 = vpop.f32.mrb[0].mxu0
      %v3181 = vadd.f32 0.0, %v3180
      %v3182 = vpop.f32.mrb[0].mxu0
      %v3183 = vadd.f32 0.0, %v3182
      %3184 = vmatprep.mubr.bf16.mxu0 0
      %3185 = vmatmul.mubr.bf16.gmra.mrb[0].mxu0 %v1070
      %v3186 = vpop.f32.mrb[0].mxu0
      %v3187 = vadd.f32 0.0, %v3186
      %v3188 = vpop.f32.mrb[0].mxu0
      %v3189 = vadd.f32 0.0, %v3188
      %v3190 = vpop.f32.mrb[0].mxu0
      %v3191 = vadd.f32 0.0, %v3190
      %v3192 = vpop.f32.mrb[0].mxu0
      %v3193 = vadd.f32 0.0, %v3192
      %3194 = vmatprep.mubr.bf16.mxu0 0
      %3195 = vmatmul.mubr.bf16.gmra.mrb[0].mxu0 %v1073
      %v3196 = vpop.f32.mrb[0].mxu0
      %v3197 = vadd.f32 0.0, %v3196
      %v3198 = vpop.f32.mrb[0].mxu0
      %v3199 = vadd.f32 0.0, %v3198
      %v3200 = vpop.f32.mrb[0].mxu0
      %v3201 = vadd.f32 0.0, %v3200
      %v3202 = vpop.f32.mrb[0].mxu0
      %v3203 = vadd.f32 0.0, %v3202
      %3204 = vmatprep.mubr.bf16.mxu0 0
      %3205 = vmatmul.mubr.bf16.gmra.mrb[0].mxu0 %v1076
      %v3206 = vpop.f32.mrb[0].mxu0
      %v3207 = vadd.f32 0.0, %v3206
      %v3208 = vpop.f32.mrb[0].mxu0
      %v3209 = vadd.f32 0.0, %v3208
      %v3210 = vpop.f32.mrb[0].mxu0
      %v3211 = vadd.f32 0.0, %v3210
      %v3212 = vpop.f32.mrb[0].mxu0
      %v3213 = vadd.f32 0.0, %v3212
      %3214 = vdwg.mxu0
      %3215 = vmatprep.subr.bf16.mxu0 %v3089
      %3216 = vmatpush1.bf16.msra.mxu0 %v3088
      %3217 = vmatprep.subr.bf16.mxu0 %v3093
      %3218 = vmatpush1.bf16.msra.mxu0 %v3092
      %3219 = vmatprep.subr.bf16.mxu0 0
      %3220 = vmatpush1.bf16.msra.mxu0 0
      %3221 = vmatprep.subr.bf16.mxu0 0
      %3222 = vmatpush1.bf16.msra.mxu0 0
      %3223 = vmatprep.subr.bf16.mxu0 0
      %3224 = vmatpush1.bf16.msra.mxu0 0
      %3225 = vmatprep.subr.bf16.mxu0 0
      %3226 = vmatpush1.bf16.msra.mxu0 0
      %3227 = vmatprep.subr.bf16.mxu0 0
      %3228 = vmatpush1.bf16.msra.mxu0 0
      %3229 = vmatprep.subr.bf16.mxu0 0
      %3230 = vmatpush1.bf16.msra.mxu0 0
      %3231 = vmatprep.subr.bf16.mxu0 0
      %3232 = vmatpush1.bf16.msra.mxu0 0
      %3233 = vmatprep.subr.bf16.mxu0 0
      %3234 = vmatpush1.bf16.msra.mxu0 0
      %3235 = vmatprep.subr.bf16.mxu0 0
      %3236 = vmatpush1.bf16.msra.mxu0 0
      %3237 = vmatprep.subr.bf16.mxu0 0
      %3238 = vmatpush1.bf16.msra.mxu0 0
      %3239 = vmatprep.subr.bf16.mxu0 0
      %3240 = vmatpush1.bf16.msra.mxu0 0
      %3241 = vmatprep.subr.bf16.mxu0 0
      %3242 = vmatpush1.bf16.msra.mxu0 0
      %3243 = vmatprep.subr.bf16.mxu0 0
      %3244 = vmatpush1.bf16.msra.mxu0 0
      %3245 = vmatprep.subr.bf16.mxu0 0
      %3246 = vmatpush1.bf16.msra.mxu0 0
      %3247 = vmatprep.mubr.bf16.mxu0 0
      %3248 = vmatmul.mubr.bf16.gmra.mrb[0].mxu0 %v1055
      %v3249 = vpop.f32.mrb[0].mxu0
      %v3250 = vadd.f32 0.0, %v3249
      %v3251 = vpop.f32.mrb[0].mxu0
      %v3252 = vadd.f32 0.0, %v3251
      %v3253 = vpop.f32.mrb[0].mxu0
      %v3254 = vadd.f32 0.0, %v3253
      %v3255 = vpop.f32.mrb[0].mxu0
      %v3256 = vadd.f32 0.0, %v3255
      %3257 = vmatprep.mubr.bf16.mxu0 0
      %3258 = vmatmul.mubr.bf16.gmra.mrb[0].mxu0 %v1058
      %v3259 = vpop.f32.mrb[0].mxu0
      %v3260 = vadd.f32 0.0, %v3259
      %v3261 = vpop.f32.mrb[0].mxu0
      %v3262 = vadd.f32 0.0, %v3261
      %v3263 = vpop.f32.mrb[0].mxu0
      %v3264 = vadd.f32 0.0, %v3263
      %v3265 = vpop.f32.mrb[0].mxu0
      %v3266 = vadd.f32 0.0, %v3265
      %3267 = vmatprep.mubr.bf16.mxu0 0
      %3268 = vmatmul.mubr.bf16.gmra.mrb[0].mxu0 %v1061
      %v3269 = vpop.f32.mrb[0].mxu0
      %v3270 = vadd.f32 0.0, %v3269
      %v3271 = vpop.f32.mrb[0].mxu0
      %v3272 = vadd.f32 0.0, %v3271
      %v3273 = vpop.f32.mrb[0].mxu0
      %v3274 = vadd.f32 0.0, %v3273
      %v3275 = vpop.f32.mrb[0].mxu0
      %v3276 = vadd.f32 0.0, %v3275
      %3277 = vmatprep.mubr.bf16.mxu0 0
      %3278 = vmatmul.mubr.bf16.gmra.mrb[0].mxu0 %v1064
      %v3279 = vpop.f32.mrb[0].mxu0
      %v3280 = vadd.f32 0.0, %v3279
      %v3281 = vpop.f32.mrb[0].mxu0
      %v3282 = vadd.f32 0.0, %v3281
      %v3283 = vpop.f32.mrb[0].mxu0
      %v3284 = vadd.f32 0.0, %v3283
      %v3285 = vpop.f32.mrb[0].mxu0
      %v3286 = vadd.f32 0.0, %v3285
      %3287 = vmatprep.mubr.bf16.mxu0 0
      %3288 = vmatmul.mubr.bf16.gmra.mrb[0].mxu0 %v1067
      %v3289 = vpop.f32.mrb[0].mxu0
      %v3290 = vadd.f32 0.0, %v3289
      %v3291 = vpop.f32.mrb[0].mxu0
      %v3292 = vadd.f32 0.0, %v3291
      %v3293 = vpop.f32.mrb[0].mxu0
      %v3294 = vadd.f32 0.0, %v3293
      %v3295 = vpop.f32.mrb[0].mxu0
      %v3296 = vadd.f32 0.0, %v3295
      %3297 = vmatprep.mubr.bf16.mxu0 0
      %3298 = vmatmul.mubr.bf16.gmra.mrb[0].mxu0 %v1070
      %v3299 = vpop.f32.mrb[0].mxu0
      %v3300 = vadd.f32 0.0, %v3299
      %v3301 = vpop.f32.mrb[0].mxu0
      %v3302 = vadd.f32 0.0, %v3301
      %v3303 = vpop.f32.mrb[0].mxu0
      %v3304 = vadd.f32 0.0, %v3303
      %v3305 = vpop.f32.mrb[0].mxu0
      %v3306 = vadd.f32 0.0, %v3305
      %3307 = vmatprep.mubr.bf16.mxu0 0
      %3308 = vmatmul.mubr.bf16.gmra.mrb[0].mxu0 %v1073
      %v3309 = vpop.f32.mrb[0].mxu0
      %v3310 = vadd.f32 0.0, %v3309
      %v3311 = vpop.f32.mrb[0].mxu0
      %v3312 = vadd.f32 0.0, %v3311
      %v3313 = vpop.f32.mrb[0].mxu0
      %v3314 = vadd.f32 0.0, %v3313
      %v3315 = vpop.f32.mrb[0].mxu0
      %v3316 = vadd.f32 0.0, %v3315
      %3317 = vmatprep.mubr.bf16.mxu0 0
      %3318 = vmatmul.mubr.bf16.gmra.mrb[0].mxu0 %v1076
      %v3319 = vpop.f32.mrb[0].mxu0
      %v3320 = vadd.f32 0.0, %v3319
      %v3321 = vpop.f32.mrb[0].mxu0
      %v3322 = vadd.f32 0.0, %v3321
      %v3323 = vpop.f32.mrb[0].mxu0
      %v3324 = vadd.f32 0.0, %v3323
      %v3325 = vpop.f32.mrb[0].mxu0
      %v3326 = vadd.f32 0.0, %v3325
      %3327 = vdwg.mxu0
      %v3328 = vpack.c.bf16 %v1310, %v1309
      %v3329 = vpack.c.bf16 %v1312, %v1311
      %v3330 = vpack.c.bf16 %v1314, %v1313
      %v3331 = vpack.c.bf16 %v1316, %v1315
      %v3332 = vpack.c.bf16 %v1318, %v1317
      %v3333 = vpack.c.bf16 %v1320, %v1319
      %v3334 = vpack.c.bf16 %v1322, %v1321
      %v3335 = vpack.c.bf16 %v1324, %v1323
      %v3336 = vld [vmem:[%s3 + $0xc0] sm:$0xff]
      %v3337 = vld [vmem:[%s3 + $0xc8] sm:$0xff]
      %v3338 = vld [vmem:[%s3 + $0xd0] sm:$0xff]
      %v3339 = vld [vmem:[%s3 + $0xd8] sm:$0xff]
      %v3344 = vunpack.c.l.b16 %v3336
      %v3345 = vunpack.c.h.b16 %v3336
      %v3346 = vunpack.c.l.b16 %v3337
      %v3347 = vunpack.c.h.b16 %v3337
      %v3348 = vunpack.c.l.b16 %v3338
      %v3349 = vunpack.c.h.b16 %v3338
      %v3350 = vunpack.c.l.b16 %v3339
      %v3351 = vunpack.c.h.b16 %v3339
      %v3352 = vpack.c.b16 %v3348, %v3344
      %v3353 = vpack.c.b16 %v3349, %v3345
      %v3354 = vpack.c.b16 %v3350, %v3346
      %v3355 = vpack.c.b16 %v3351, %v3347
      %v3361 = vsel %vm1191, %v3328, 0
      %v3364 = vsel %vm1191, %v3329, 0
      %v3367 = vsel %vm1191, %v3330, 0
      %v3370 = vsel %vm1191, %v3331, 0
      %v3373 = vsel %vm1191, %v3332, 0
      %v3376 = vsel %vm1191, %v3333, 0
      %v3379 = vsel %vm1191, %v3334, 0
      %v3382 = vsel %vm1191, %v3335, 0
      %3384 = vmatprep.subr.bf16.mxu0 %v3353
      %3385 = vmatpush1.bf16.msra.mxu0 %v3352
      %3386 = vmatprep.subr.bf16.mxu0 0
      %3387 = vmatpush1.bf16.msra.mxu0 0
      %3388 = vmatprep.subr.bf16.mxu0 0
      %3389 = vmatpush1.bf16.msra.mxu0 0
      %3390 = vmatprep.subr.bf16.mxu0 0
      %3391 = vmatpush1.bf16.msra.mxu0 0
      %3392 = vmatprep.subr.bf16.mxu0 0
      %3393 = vmatpush1.bf16.msra.mxu0 0
      %3394 = vmatprep.subr.bf16.mxu0 0
      %3395 = vmatpush1.bf16.msra.mxu0 0
      %3396 = vmatprep.subr.bf16.mxu0 0
      %3397 = vmatpush1.bf16.msra.mxu0 0
      %3398 = vmatprep.subr.bf16.mxu0 0
      %3399 = vmatpush1.bf16.msra.mxu0 0
      %3400 = vmatprep.subr.bf16.mxu0 0
      %3401 = vmatpush1.bf16.msra.mxu0 0
      %3402 = vmatprep.subr.bf16.mxu0 0
      %3403 = vmatpush1.bf16.msra.mxu0 0
      %3404 = vmatprep.subr.bf16.mxu0 0
      %3405 = vmatpush1.bf16.msra.mxu0 0
      %3406 = vmatprep.subr.bf16.mxu0 0
      %3407 = vmatpush1.bf16.msra.mxu0 0
      %3408 = vmatprep.subr.bf16.mxu0 0
      %3409 = vmatpush1.bf16.msra.mxu0 0
      %3410 = vmatprep.subr.bf16.mxu0 0
      %3411 = vmatpush1.bf16.msra.mxu0 0
      %3412 = vmatprep.subr.bf16.mxu0 0
      %3413 = vmatpush1.bf16.msra.mxu0 0
      %3414 = vmatprep.subr.bf16.mxu0 0
      %3415 = vmatpush1.bf16.msra.mxu0 0
      %3416 = vmatprep.mubr.bf16.mxu0 0
      %3417 = vmatmul.mubr.bf16.gmra.mrb[0].mxu0 %v3361
      %v3418 = vpop.f32.mrb[0].mxu0
      %v3419 = vadd.f32 0.0, %v3418
      %v3420 = vpop.f32.mrb[0].mxu0
      %v3421 = vadd.f32 0.0, %v3420
      %v3422 = vpop.f32.mrb[0].mxu0
      %v3423 = vadd.f32 0.0, %v3422
      %v3424 = vpop.f32.mrb[0].mxu0
      %v3425 = vadd.f32 0.0, %v3424
      %3426 = vmatprep.mubr.bf16.mxu0 0
      %3427 = vmatmul.mubr.bf16.gmra.mrb[0].mxu0 %v3364
      %v3428 = vpop.f32.mrb[0].mxu0
      %v3429 = vadd.f32 0.0, %v3428
      %v3430 = vpop.f32.mrb[0].mxu0
      %v3431 = vadd.f32 0.0, %v3430
      %v3432 = vpop.f32.mrb[0].mxu0
      %v3433 = vadd.f32 0.0, %v3432
      %v3434 = vpop.f32.mrb[0].mxu0
      %v3435 = vadd.f32 0.0, %v3434
      %3436 = vmatprep.mubr.bf16.mxu0 0
      %3437 = vmatmul.mubr.bf16.gmra.mrb[0].mxu0 %v3367
      %v3438 = vpop.f32.mrb[0].mxu0
      %v3439 = vadd.f32 0.0, %v3438
      %v3440 = vpop.f32.mrb[0].mxu0
      %v3441 = vadd.f32 0.0, %v3440
      %v3442 = vpop.f32.mrb[0].mxu0
      %v3443 = vadd.f32 0.0, %v3442
      %v3444 = vpop.f32.mrb[0].mxu0
      %v3445 = vadd.f32 0.0, %v3444
      %3446 = vmatprep.mubr.bf16.mxu0 0
      %3447 = vmatmul.mubr.bf16.gmra.mrb[0].mxu0 %v3370
      %v3448 = vpop.f32.mrb[0].mxu0
      %v3449 = vadd.f32 0.0, %v3448
      %v3450 = vpop.f32.mrb[0].mxu0
      %v3451 = vadd.f32 0.0, %v3450
      %v3452 = vpop.f32.mrb[0].mxu0
      %v3453 = vadd.f32 0.0, %v3452
      %v3454 = vpop.f32.mrb[0].mxu0
      %v3455 = vadd.f32 0.0, %v3454
      %3456 = vmatprep.mubr.bf16.mxu0 0
      %3457 = vmatmul.mubr.bf16.gmra.mrb[0].mxu0 %v3373
      %v3458 = vpop.f32.mrb[0].mxu0
      %v3459 = vadd.f32 0.0, %v3458
      %v3460 = vpop.f32.mrb[0].mxu0
      %v3461 = vadd.f32 0.0, %v3460
      %v3462 = vpop.f32.mrb[0].mxu0
      %v3463 = vadd.f32 0.0, %v3462
      %v3464 = vpop.f32.mrb[0].mxu0
      %v3465 = vadd.f32 0.0, %v3464
      %3466 = vmatprep.mubr.bf16.mxu0 0
      %3467 = vmatmul.mubr.bf16.gmra.mrb[0].mxu0 %v3376
      %v3468 = vpop.f32.mrb[0].mxu0
      %v3469 = vadd.f32 0.0, %v3468
      %v3470 = vpop.f32.mrb[0].mxu0
      %v3471 = vadd.f32 0.0, %v3470
      %v3472 = vpop.f32.mrb[0].mxu0
      %v3473 = vadd.f32 0.0, %v3472
      %v3474 = vpop.f32.mrb[0].mxu0
      %v3475 = vadd.f32 0.0, %v3474
      %3476 = vmatprep.mubr.bf16.mxu0 0
      %3477 = vmatmul.mubr.bf16.gmra.mrb[0].mxu0 %v3379
      %v3478 = vpop.f32.mrb[0].mxu0
      %v3479 = vadd.f32 0.0, %v3478
      %v3480 = vpop.f32.mrb[0].mxu0
      %v3481 = vadd.f32 0.0, %v3480
      %v3482 = vpop.f32.mrb[0].mxu0
      %v3483 = vadd.f32 0.0, %v3482
      %v3484 = vpop.f32.mrb[0].mxu0
      %v3485 = vadd.f32 0.0, %v3484
      %3486 = vmatprep.mubr.bf16.mxu0 0
      %3487 = vmatmul.mubr.bf16.gmra.mrb[0].mxu0 %v3382
      %v3488 = vpop.f32.mrb[0].mxu0
      %v3489 = vadd.f32 0.0, %v3488
      %v3490 = vpop.f32.mrb[0].mxu0
      %v3491 = vadd.f32 0.0, %v3490
      %v3492 = vpop.f32.mrb[0].mxu0
      %v3493 = vadd.f32 0.0, %v3492
      %v3494 = vpop.f32.mrb[0].mxu0
      %v3495 = vadd.f32 0.0, %v3494
      %3496 = vdwg.mxu0
      %3497 = vmatprep.subr.bf16.mxu0 %v3355
      %3498 = vmatpush1.bf16.msra.mxu0 %v3354
      %3499 = vmatprep.subr.bf16.mxu0 0
      %3500 = vmatpush1.bf16.msra.mxu0 0
      %3501 = vmatprep.subr.bf16.mxu0 0
      %3502 = vmatpush1.bf16.msra.mxu0 0
      %3503 = vmatprep.subr.bf16.mxu0 0
      %3504 = vmatpush1.bf16.msra.mxu0 0
      %3505 = vmatprep.subr.bf16.mxu0 0
      %3506 = vmatpush1.bf16.msra.mxu0 0
      %3507 = vmatprep.subr.bf16.mxu0 0
      %3508 = vmatpush1.bf16.msra.mxu0 0
      %3509 = vmatprep.subr.bf16.mxu0 0
      %3510 = vmatpush1.bf16.msra.mxu0 0
      %3511 = vmatprep.subr.bf16.mxu0 0
      %3512 = vmatpush1.bf16.msra.mxu0 0
      %3513 = vmatprep.subr.bf16.mxu0 0
      %3514 = vmatpush1.bf16.msra.mxu0 0
      %3515 = vmatprep.subr.bf16.mxu0 0
      %3516 = vmatpush1.bf16.msra.mxu0 0
      %3517 = vmatprep.subr.bf16.mxu0 0
      %3518 = vmatpush1.bf16.msra.mxu0 0
      %3519 = vmatprep.subr.bf16.mxu0 0
      %3520 = vmatpush1.bf16.msra.mxu0 0
      %3521 = vmatprep.subr.bf16.mxu0 0
      %3522 = vmatpush1.bf16.msra.mxu0 0
      %3523 = vmatprep.subr.bf16.mxu0 0
      %3524 = vmatpush1.bf16.msra.mxu0 0
      %3525 = vmatprep.subr.bf16.mxu0 0
      %3526 = vmatpush1.bf16.msra.mxu0 0
      %3527 = vmatprep.subr.bf16.mxu0 0
      %3528 = vmatpush1.bf16.msra.mxu0 0
      %3529 = vmatprep.mubr.bf16.mxu0 0
      %3530 = vmatmul.mubr.bf16.gmra.mrb[0].mxu0 %v3361
      %v3531 = vpop.f32.mrb[0].mxu0
      %v3532 = vadd.f32 0.0, %v3531
      %v3533 = vpop.f32.mrb[0].mxu0
      %v3534 = vadd.f32 0.0, %v3533
      %v3535 = vpop.f32.mrb[0].mxu0
      %v3536 = vadd.f32 0.0, %v3535
      %v3537 = vpop.f32.mrb[0].mxu0
      %v3538 = vadd.f32 0.0, %v3537
      %3539 = vmatprep.mubr.bf16.mxu0 0
      %3540 = vmatmul.mubr.bf16.gmra.mrb[0].mxu0 %v3364
      %v3541 = vpop.f32.mrb[0].mxu0
      %v3542 = vadd.f32 0.0, %v3541
      %v3543 = vpop.f32.mrb[0].mxu0
      %v3544 = vadd.f32 0.0, %v3543
      %v3545 = vpop.f32.mrb[0].mxu0
      %v3546 = vadd.f32 0.0, %v3545
      %v3547 = vpop.f32.mrb[0].mxu0
      %v3548 = vadd.f32 0.0, %v3547
      %3549 = vmatprep.mubr.bf16.mxu0 0
      %3550 = vmatmul.mubr.bf16.gmra.mrb[0].mxu0 %v3367
      %v3551 = vpop.f32.mrb[0].mxu0
      %v3552 = vadd.f32 0.0, %v3551
      %v3553 = vpop.f32.mrb[0].mxu0
      %v3554 = vadd.f32 0.0, %v3553
      %v3555 = vpop.f32.mrb[0].mxu0
      %v3556 = vadd.f32 0.0, %v3555
      %v3557 = vpop.f32.mrb[0].mxu0
      %v3558 = vadd.f32 0.0, %v3557
      %3559 = vmatprep.mubr.bf16.mxu0 0
      %3560 = vmatmul.mubr.bf16.gmra.mrb[0].mxu0 %v3370
      %v3561 = vpop.f32.mrb[0].mxu0
      %v3562 = vadd.f32 0.0, %v3561
      %v3563 = vpop.f32.mrb[0].mxu0
      %v3564 = vadd.f32 0.0, %v3563
      %v3565 = vpop.f32.mrb[0].mxu0
      %v3566 = vadd.f32 0.0, %v3565
      %v3567 = vpop.f32.mrb[0].mxu0
      %v3568 = vadd.f32 0.0, %v3567
      %3569 = vmatprep.mubr.bf16.mxu0 0
      %3570 = vmatmul.mubr.bf16.gmra.mrb[0].mxu0 %v3373
      %v3571 = vpop.f32.mrb[0].mxu0
      %v3572 = vadd.f32 0.0, %v3571
      %v3573 = vpop.f32.mrb[0].mxu0
      %v3574 = vadd.f32 0.0, %v3573
      %v3575 = vpop.f32.mrb[0].mxu0
      %v3576 = vadd.f32 0.0, %v3575
      %v3577 = vpop.f32.mrb[0].mxu0
      %v3578 = vadd.f32 0.0, %v3577
      %3579 = vmatprep.mubr.bf16.mxu0 0
      %3580 = vmatmul.mubr.bf16.gmra.mrb[0].mxu0 %v3376
      %v3581 = vpop.f32.mrb[0].mxu0
      %v3582 = vadd.f32 0.0, %v3581
      %v3583 = vpop.f32.mrb[0].mxu0
      %v3584 = vadd.f32 0.0, %v3583
      %v3585 = vpop.f32.mrb[0].mxu0
      %v3586 = vadd.f32 0.0, %v3585
      %v3587 = vpop.f32.mrb[0].mxu0
      %v3588 = vadd.f32 0.0, %v3587
      %3589 = vmatprep.mubr.bf16.mxu0 0
      %3590 = vmatmul.mubr.bf16.gmra.mrb[0].mxu0 %v3379
      %v3591 = vpop.f32.mrb[0].mxu0
      %v3592 = vadd.f32 0.0, %v3591
      %v3593 = vpop.f32.mrb[0].mxu0
      %v3594 = vadd.f32 0.0, %v3593
      %v3595 = vpop.f32.mrb[0].mxu0
      %v3596 = vadd.f32 0.0, %v3595
      %v3597 = vpop.f32.mrb[0].mxu0
      %v3598 = vadd.f32 0.0, %v3597
      %3599 = vmatprep.mubr.bf16.mxu0 0
      %3600 = vmatmul.mubr.bf16.gmra.mrb[0].mxu0 %v3382
      %v3601 = vpop.f32.mrb[0].mxu0
      %v3602 = vadd.f32 0.0, %v3601
      %v3603 = vpop.f32.mrb[0].mxu0
      %v3604 = vadd.f32 0.0, %v3603
      %v3605 = vpop.f32.mrb[0].mxu0
      %v3606 = vadd.f32 0.0, %v3605
      %v3607 = vpop.f32.mrb[0].mxu0
      %v3608 = vadd.f32 0.0, %v3607
      %3609 = vdwg.mxu0
      %v3610 = vpack.c.bf16 %v1502, %v1501
      %v3611 = vpack.c.bf16 %v1504, %v1503
      %v3612 = vpack.c.bf16 %v1506, %v1505
      %v3613 = vpack.c.bf16 %v1508, %v1507
      %v3614 = vpack.c.bf16 %v1510, %v1509
      %v3615 = vpack.c.bf16 %v1512, %v1511
      %v3616 = vpack.c.bf16 %v1514, %v1513
      %v3617 = vpack.c.bf16 %v1516, %v1515
      %3626 = vrot.lane.b32.xlu0 %v3610, 112
      %v3627 = vpop.permute.xlu0 %3626
      %3628 = vrot.lane.b32.xlu0 %v3611, 112
      %v3629 = vpop.permute.xlu0 %3628
      %3630 = vrot.lane.b32.xlu0 %v3612, 112
      %v3631 = vpop.permute.xlu0 %3630
      %3632 = vrot.lane.b32.xlu0 %v3613, 112
      %v3633 = vpop.permute.xlu0 %3632
      %3634 = vrot.lane.b32.xlu0 %v3614, 112
      %v3635 = vpop.permute.xlu0 %3634
      %3636 = vrot.lane.b32.xlu0 %v3615, 112
      %v3637 = vpop.permute.xlu0 %3636
      %3638 = vrot.lane.b32.xlu0 %v3616, 112
      %v3639 = vpop.permute.xlu0 %3638
      %3640 = vrot.lane.b32.xlu0 %v3617, 112
      %v3641 = vpop.permute.xlu0 %3640
      %v3643 = vsel %vm1191, %v3627, 0
      %v3646 = vsel %vm1191, %v3629, 0
      %v3649 = vsel %vm1191, %v3631, 0
      %v3652 = vsel %vm1191, %v3633, 0
      %v3655 = vsel %vm1191, %v3635, 0
      %v3658 = vsel %vm1191, %v3637, 0
      %v3661 = vsel %vm1191, %v3639, 0
      %v3664 = vsel %vm1191, %v3641, 0
      %3666 = vmatprep.subr.bf16.mxu0 %v3353
      %3667 = vmatpush1.bf16.msra.mxu0 %v3352
      %3668 = vmatprep.subr.bf16.mxu0 0
      %3669 = vmatpush1.bf16.msra.mxu0 0
      %3670 = vmatprep.subr.bf16.mxu0 0
      %3671 = vmatpush1.bf16.msra.mxu0 0
      %3672 = vmatprep.subr.bf16.mxu0 0
      %3673 = vmatpush1.bf16.msra.mxu0 0
      %3674 = vmatprep.subr.bf16.mxu0 0
      %3675 = vmatpush1.bf16.msra.mxu0 0
      %3676 = vmatprep.subr.bf16.mxu0 0
      %3677 = vmatpush1.bf16.msra.mxu0 0
      %3678 = vmatprep.subr.bf16.mxu0 0
      %3679 = vmatpush1.bf16.msra.mxu0 0
      %3680 = vmatprep.subr.bf16.mxu0 0
      %3681 = vmatpush1.bf16.msra.mxu0 0
      %3682 = vmatprep.subr.bf16.mxu0 0
      %3683 = vmatpush1.bf16.msra.mxu0 0
      %3684 = vmatprep.subr.bf16.mxu0 0
      %3685 = vmatpush1.bf16.msra.mxu0 0
      %3686 = vmatprep.subr.bf16.mxu0 0
      %3687 = vmatpush1.bf16.msra.mxu0 0
      %3688 = vmatprep.subr.bf16.mxu0 0
      %3689 = vmatpush1.bf16.msra.mxu0 0
      %3690 = vmatprep.subr.bf16.mxu0 0
      %3691 = vmatpush1.bf16.msra.mxu0 0
      %3692 = vmatprep.subr.bf16.mxu0 0
      %3693 = vmatpush1.bf16.msra.mxu0 0
      %3694 = vmatprep.subr.bf16.mxu0 0
      %3695 = vmatpush1.bf16.msra.mxu0 0
      %3696 = vmatprep.subr.bf16.mxu0 0
      %3697 = vmatpush1.bf16.msra.mxu0 0
      %3698 = vmatprep.mubr.bf16.mxu0 0
      %3699 = vmatmul.mubr.bf16.gmra.mrb[0].mxu0 %v3643
      %v3700 = vpop.f32.mrb[0].mxu0
      %v3701 = vadd.f32 0.0, %v3700
      %v3702 = vpop.f32.mrb[0].mxu0
      %v3703 = vadd.f32 0.0, %v3702
      %v3704 = vpop.f32.mrb[0].mxu0
      %v3705 = vadd.f32 0.0, %v3704
      %v3706 = vpop.f32.mrb[0].mxu0
      %v3707 = vadd.f32 0.0, %v3706
      %3708 = vmatprep.mubr.bf16.mxu0 0
      %3709 = vmatmul.mubr.bf16.gmra.mrb[0].mxu0 %v3646
      %v3710 = vpop.f32.mrb[0].mxu0
      %v3711 = vadd.f32 0.0, %v3710
      %v3712 = vpop.f32.mrb[0].mxu0
      %v3713 = vadd.f32 0.0, %v3712
      %v3714 = vpop.f32.mrb[0].mxu0
      %v3715 = vadd.f32 0.0, %v3714
      %v3716 = vpop.f32.mrb[0].mxu0
      %v3717 = vadd.f32 0.0, %v3716
      %3718 = vmatprep.mubr.bf16.mxu0 0
      %3719 = vmatmul.mubr.bf16.gmra.mrb[0].mxu0 %v3649
      %v3720 = vpop.f32.mrb[0].mxu0
      %v3721 = vadd.f32 0.0, %v3720
      %v3722 = vpop.f32.mrb[0].mxu0
      %v3723 = vadd.f32 0.0, %v3722
      %v3724 = vpop.f32.mrb[0].mxu0
      %v3725 = vadd.f32 0.0, %v3724
      %v3726 = vpop.f32.mrb[0].mxu0
      %v3727 = vadd.f32 0.0, %v3726
      %3728 = vmatprep.mubr.bf16.mxu0 0
      %3729 = vmatmul.mubr.bf16.gmra.mrb[0].mxu0 %v3652
      %v3730 = vpop.f32.mrb[0].mxu0
      %v3731 = vadd.f32 0.0, %v3730
      %v3732 = vpop.f32.mrb[0].mxu0
      %v3733 = vadd.f32 0.0, %v3732
      %v3734 = vpop.f32.mrb[0].mxu0
      %v3735 = vadd.f32 0.0, %v3734
      %v3736 = vpop.f32.mrb[0].mxu0
      %v3737 = vadd.f32 0.0, %v3736
      %3738 = vmatprep.mubr.bf16.mxu0 0
      %3739 = vmatmul.mubr.bf16.gmra.mrb[0].mxu0 %v3655
      %v3740 = vpop.f32.mrb[0].mxu0
      %v3741 = vadd.f32 0.0, %v3740
      %v3742 = vpop.f32.mrb[0].mxu0
      %v3743 = vadd.f32 0.0, %v3742
      %v3744 = vpop.f32.mrb[0].mxu0
      %v3745 = vadd.f32 0.0, %v3744
      %v3746 = vpop.f32.mrb[0].mxu0
      %v3747 = vadd.f32 0.0, %v3746
      %3748 = vmatprep.mubr.bf16.mxu0 0
      %3749 = vmatmul.mubr.bf16.gmra.mrb[0].mxu0 %v3658
      %v3750 = vpop.f32.mrb[0].mxu0
      %v3751 = vadd.f32 0.0, %v3750
      %v3752 = vpop.f32.mrb[0].mxu0
      %v3753 = vadd.f32 0.0, %v3752
      %v3754 = vpop.f32.mrb[0].mxu0
      %v3755 = vadd.f32 0.0, %v3754
      %v3756 = vpop.f32.mrb[0].mxu0
      %v3757 = vadd.f32 0.0, %v3756
      %3758 = vmatprep.mubr.bf16.mxu0 0
      %3759 = vmatmul.mubr.bf16.gmra.mrb[0].mxu0 %v3661
      %v3760 = vpop.f32.mrb[0].mxu0
      %v3761 = vadd.f32 0.0, %v3760
      %v3762 = vpop.f32.mrb[0].mxu0
      %v3763 = vadd.f32 0.0, %v3762
      %v3764 = vpop.f32.mrb[0].mxu0
      %v3765 = vadd.f32 0.0, %v3764
      %v3766 = vpop.f32.mrb[0].mxu0
      %v3767 = vadd.f32 0.0, %v3766
      %3768 = vmatprep.mubr.bf16.mxu0 0
      %3769 = vmatmul.mubr.bf16.gmra.mrb[0].mxu0 %v3664
      %v3770 = vpop.f32.mrb[0].mxu0
      %v3771 = vadd.f32 0.0, %v3770
      %v3772 = vpop.f32.mrb[0].mxu0
      %v3773 = vadd.f32 0.0, %v3772
      %v3774 = vpop.f32.mrb[0].mxu0
      %v3775 = vadd.f32 0.0, %v3774
      %v3776 = vpop.f32.mrb[0].mxu0
      %v3777 = vadd.f32 0.0, %v3776
      %3778 = vdwg.mxu0
      %3779 = vmatprep.subr.bf16.mxu0 %v3355
      %3780 = vmatpush1.bf16.msra.mxu0 %v3354
      %3781 = vmatprep.subr.bf16.mxu0 0
      %3782 = vmatpush1.bf16.msra.mxu0 0
      %3783 = vmatprep.subr.bf16.mxu0 0
      %3784 = vmatpush1.bf16.msra.mxu0 0
      %3785 = vmatprep.subr.bf16.mxu0 0
      %3786 = vmatpush1.bf16.msra.mxu0 0
      %3787 = vmatprep.subr.bf16.mxu0 0
      %3788 = vmatpush1.bf16.msra.mxu0 0
      %3789 = vmatprep.subr.bf16.mxu0 0
      %3790 = vmatpush1.bf16.msra.mxu0 0
      %3791 = vmatprep.subr.bf16.mxu0 0
      %3792 = vmatpush1.bf16.msra.mxu0 0
      %3793 = vmatprep.subr.bf16.mxu0 0
      %3794 = vmatpush1.bf16.msra.mxu0 0
      %3795 = vmatprep.subr.bf16.mxu0 0
      %3796 = vmatpush1.bf16.msra.mxu0 0
      %3797 = vmatprep.subr.bf16.mxu0 0
      %3798 = vmatpush1.bf16.msra.mxu0 0
      %3799 = vmatprep.subr.bf16.mxu0 0
      %3800 = vmatpush1.bf16.msra.mxu0 0
      %3801 = vmatprep.subr.bf16.mxu0 0
      %3802 = vmatpush1.bf16.msra.mxu0 0
      %3803 = vmatprep.subr.bf16.mxu0 0
      %3804 = vmatpush1.bf16.msra.mxu0 0
      %3805 = vmatprep.subr.bf16.mxu0 0
      %3806 = vmatpush1.bf16.msra.mxu0 0
      %3807 = vmatprep.subr.bf16.mxu0 0
      %3808 = vmatpush1.bf16.msra.mxu0 0
      %3809 = vmatprep.subr.bf16.mxu0 0
      %3810 = vmatpush1.bf16.msra.mxu0 0
      %3811 = vmatprep.mubr.bf16.mxu0 0
      %3812 = vmatmul.mubr.bf16.gmra.mrb[0].mxu0 %v3643
      %v3813 = vpop.f32.mrb[0].mxu0
      %v3814 = vadd.f32 0.0, %v3813
      %v3815 = vpop.f32.mrb[0].mxu0
      %v3816 = vadd.f32 0.0, %v3815
      %v3817 = vpop.f32.mrb[0].mxu0
      %v3818 = vadd.f32 0.0, %v3817
      %v3819 = vpop.f32.mrb[0].mxu0
      %v3820 = vadd.f32 0.0, %v3819
      %3821 = vmatprep.mubr.bf16.mxu0 0
      %3822 = vmatmul.mubr.bf16.gmra.mrb[0].mxu0 %v3646
      %v3823 = vpop.f32.mrb[0].mxu0
      %v3824 = vadd.f32 0.0, %v3823
      %v3825 = vpop.f32.mrb[0].mxu0
      %v3826 = vadd.f32 0.0, %v3825
      %v3827 = vpop.f32.mrb[0].mxu0
      %v3828 = vadd.f32 0.0, %v3827
      %v3829 = vpop.f32.mrb[0].mxu0
      %v3830 = vadd.f32 0.0, %v3829
      %3831 = vmatprep.mubr.bf16.mxu0 0
      %3832 = vmatmul.mubr.bf16.gmra.mrb[0].mxu0 %v3649
      %v3833 = vpop.f32.mrb[0].mxu0
      %v3834 = vadd.f32 0.0, %v3833
      %v3835 = vpop.f32.mrb[0].mxu0
      %v3836 = vadd.f32 0.0, %v3835
      %v3837 = vpop.f32.mrb[0].mxu0
      %v3838 = vadd.f32 0.0, %v3837
      %v3839 = vpop.f32.mrb[0].mxu0
      %v3840 = vadd.f32 0.0, %v3839
      %3841 = vmatprep.mubr.bf16.mxu0 0
      %3842 = vmatmul.mubr.bf16.gmra.mrb[0].mxu0 %v3652
      %v3843 = vpop.f32.mrb[0].mxu0
      %v3844 = vadd.f32 0.0, %v3843
      %v3845 = vpop.f32.mrb[0].mxu0
      %v3846 = vadd.f32 0.0, %v3845
      %v3847 = vpop.f32.mrb[0].mxu0
      %v3848 = vadd.f32 0.0, %v3847
      %v3849 = vpop.f32.mrb[0].mxu0
      %v3850 = vadd.f32 0.0, %v3849
      %3851 = vmatprep.mubr.bf16.mxu0 0
      %3852 = vmatmul.mubr.bf16.gmra.mrb[0].mxu0 %v3655
      %v3853 = vpop.f32.mrb[0].mxu0
      %v3854 = vadd.f32 0.0, %v3853
      %v3855 = vpop.f32.mrb[0].mxu0
      %v3856 = vadd.f32 0.0, %v3855
      %v3857 = vpop.f32.mrb[0].mxu0
      %v3858 = vadd.f32 0.0, %v3857
      %v3859 = vpop.f32.mrb[0].mxu0
      %v3860 = vadd.f32 0.0, %v3859
      %3861 = vmatprep.mubr.bf16.mxu0 0
      %3862 = vmatmul.mubr.bf16.gmra.mrb[0].mxu0 %v3658
      %v3863 = vpop.f32.mrb[0].mxu0
      %v3864 = vadd.f32 0.0, %v3863
      %v3865 = vpop.f32.mrb[0].mxu0
      %v3866 = vadd.f32 0.0, %v3865
      %v3867 = vpop.f32.mrb[0].mxu0
      %v3868 = vadd.f32 0.0, %v3867
      %v3869 = vpop.f32.mrb[0].mxu0
      %v3870 = vadd.f32 0.0, %v3869
      %3871 = vmatprep.mubr.bf16.mxu0 0
      %3872 = vmatmul.mubr.bf16.gmra.mrb[0].mxu0 %v3661
      %v3873 = vpop.f32.mrb[0].mxu0
      %v3874 = vadd.f32 0.0, %v3873
      %v3875 = vpop.f32.mrb[0].mxu0
      %v3876 = vadd.f32 0.0, %v3875
      %v3877 = vpop.f32.mrb[0].mxu0
      %v3878 = vadd.f32 0.0, %v3877
      %v3879 = vpop.f32.mrb[0].mxu0
      %v3880 = vadd.f32 0.0, %v3879
      %3881 = vmatprep.mubr.bf16.mxu0 0
      %3882 = vmatmul.mubr.bf16.gmra.mrb[0].mxu0 %v3664
      %v3883 = vpop.f32.mrb[0].mxu0
      %v3884 = vadd.f32 0.0, %v3883
      %v3885 = vpop.f32.mrb[0].mxu0
      %v3886 = vadd.f32 0.0, %v3885
      %v3887 = vpop.f32.mrb[0].mxu0
      %v3888 = vadd.f32 0.0, %v3887
      %v3889 = vpop.f32.mrb[0].mxu0
      %v3890 = vadd.f32 0.0, %v3889
      %3891 = vdwg.mxu0
      %v3893 = vlaneseq
      %v3894 = vshrl.u32 %v3893, 7
      %v3895 = vsub.s32 0, %v3894
      %v3896 = vrot.slane %v256, %v3895
      %v3897 = vlaneseq
      %v3898 = vshrl.u32 %v3897, 7
      %v3899 = vsub.s32 1, %v3898
      %v3900 = vrot.slane %v256, %v3899
      %v3901 = vlaneseq
      %v3902 = vshrl.u32 %v3901, 7
      %v3903 = vsub.s32 2, %v3902
      %v3904 = vrot.slane %v256, %v3903
      %v3905 = vlaneseq
      %v3906 = vshrl.u32 %v3905, 7
      %v3907 = vsub.s32 3, %v3906
      %v3908 = vrot.slane %v256, %v3907
      %v3913 = vmul.f32 %v2990, %v3896
      %v3914 = vmul.f32 %v2991, %v3900
      %v3915 = vmul.f32 %v2992, %v3904
      %v3916 = vmul.f32 %v2993, %v3908
      %v3917 = vmul.f32 %v2994, %v3896
      %v3918 = vmul.f32 %v2995, %v3900
      %v3919 = vmul.f32 %v2996, %v3904
      %v3920 = vmul.f32 %v2997, %v3908
      %v3921 = vmul.f32 %v2998, %v3896
      %v3922 = vmul.f32 %v2999, %v3900
      %v3923 = vmul.f32 %v3000, %v3904
      %v3924 = vmul.f32 %v3001, %v3908
      %v3925 = vmul.f32 %v3002, %v3896
      %v3926 = vmul.f32 %v3003, %v3900
      %v3927 = vmul.f32 %v3004, %v3904
      %v3928 = vmul.f32 %v3005, %v3908
      %v3929 = vmul.f32 %v3006, %v3896
      %v3930 = vmul.f32 %v3007, %v3900
      %v3931 = vmul.f32 %v3008, %v3904
      %v3932 = vmul.f32 %v3009, %v3908
      %v3933 = vmul.f32 %v3010, %v3896
      %v3934 = vmul.f32 %v3011, %v3900
      %v3935 = vmul.f32 %v3012, %v3904
      %v3936 = vmul.f32 %v3013, %v3908
      %v3937 = vmul.f32 %v3014, %v3896
      %v3938 = vmul.f32 %v3015, %v3900
      %v3939 = vmul.f32 %v3016, %v3904
      %v3940 = vmul.f32 %v3017, %v3908
      %v3941 = vmul.f32 %v3018, %v3896
      %v3942 = vmul.f32 %v3019, %v3900
      %v3943 = vmul.f32 %v3020, %v3904
      %v3944 = vmul.f32 %v3021, %v3908
      %v3945 = vmul.f32 %v3022, %v3896
      %v3946 = vmul.f32 %v3023, %v3900
      %v3947 = vmul.f32 %v3024, %v3904
      %v3948 = vmul.f32 %v3025, %v3908
      %v3949 = vmul.f32 %v3026, %v3896
      %v3950 = vmul.f32 %v3027, %v3900
      %v3951 = vmul.f32 %v3028, %v3904
      %v3952 = vmul.f32 %v3029, %v3908
      %v3953 = vmul.f32 %v3030, %v3896
      %v3954 = vmul.f32 %v3031, %v3900
      %v3955 = vmul.f32 %v3032, %v3904
      %v3956 = vmul.f32 %v3033, %v3908
      %v3957 = vmul.f32 %v3034, %v3896
      %v3958 = vmul.f32 %v3035, %v3900
      %v3959 = vmul.f32 %v3036, %v3904
      %v3960 = vmul.f32 %v3037, %v3908
      %v3961 = vmul.f32 %v3038, %v3896
      %v3962 = vmul.f32 %v3039, %v3900
      %v3963 = vmul.f32 %v3040, %v3904
      %v3964 = vmul.f32 %v3041, %v3908
      %v3965 = vmul.f32 %v3042, %v3896
      %v3966 = vmul.f32 %v3043, %v3900
      %v3967 = vmul.f32 %v3044, %v3904
      %v3968 = vmul.f32 %v3045, %v3908
      %v3969 = vmul.f32 %v3046, %v3896
      %v3970 = vmul.f32 %v3047, %v3900
      %v3971 = vmul.f32 %v3048, %v3904
      %v3972 = vmul.f32 %v3049, %v3908
      %v3973 = vmul.f32 %v3050, %v3896
      %v3974 = vmul.f32 %v3051, %v3900
      %v3975 = vmul.f32 %v3052, %v3904
      %v3976 = vmul.f32 %v3053, %v3908
      %v3977 = vmul.f32 %v3913, 1.442695
      %v3978 = vpow.pop %v3977
      %v3979 = vmul.f32 %v3914, 1.442695
      %v3980 = vpow.pop %v3979
      %v3981 = vmul.f32 %v3915, 1.442695
      %v3982 = vpow.pop %v3981
      %v3983 = vmul.f32 %v3916, 1.442695
      %v3984 = vpow.pop %v3983
      %v3985 = vmul.f32 %v3917, 1.442695
      %v3986 = vpow.pop %v3985
      %v3987 = vmul.f32 %v3918, 1.442695
      %v3988 = vpow.pop %v3987
      %v3989 = vmul.f32 %v3919, 1.442695
      %v3990 = vpow.pop %v3989
      %v3991 = vmul.f32 %v3920, 1.442695
      %v3992 = vpow.pop %v3991
      %v3993 = vmul.f32 %v3921, 1.442695
      %v3994 = vpow.pop %v3993
      %v3995 = vmul.f32 %v3922, 1.442695
      %v3996 = vpow.pop %v3995
      %v3997 = vmul.f32 %v3923, 1.442695
      %v3998 = vpow.pop %v3997
      %v3999 = vmul.f32 %v3924, 1.442695
      %v4000 = vpow.pop %v3999
      %v4001 = vmul.f32 %v3925, 1.442695
      %v4002 = vpow.pop %v4001
      %v4003 = vmul.f32 %v3926, 1.442695
      %v4004 = vpow.pop %v4003
      %v4005 = vmul.f32 %v3927, 1.442695
      %v4006 = vpow.pop %v4005
      %v4007 = vmul.f32 %v3928, 1.442695
      %v4008 = vpow.pop %v4007
      %v4009 = vmul.f32 %v3929, 1.442695
      %v4010 = vpow.pop %v4009
      %v4011 = vmul.f32 %v3930, 1.442695
      %v4012 = vpow.pop %v4011
      %v4013 = vmul.f32 %v3931, 1.442695
      %v4014 = vpow.pop %v4013
      %v4015 = vmul.f32 %v3932, 1.442695
      %v4016 = vpow.pop %v4015
      %v4017 = vmul.f32 %v3933, 1.442695
      %v4018 = vpow.pop %v4017
      %v4019 = vmul.f32 %v3934, 1.442695
      %v4020 = vpow.pop %v4019
      %v4021 = vmul.f32 %v3935, 1.442695
      %v4022 = vpow.pop %v4021
      %v4023 = vmul.f32 %v3936, 1.442695
      %v4024 = vpow.pop %v4023
      %v4025 = vmul.f32 %v3937, 1.442695
      %v4026 = vpow.pop %v4025
      %v4027 = vmul.f32 %v3938, 1.442695
      %v4028 = vpow.pop %v4027
      %v4029 = vmul.f32 %v3939, 1.442695
      %v4030 = vpow.pop %v4029
      %v4031 = vmul.f32 %v3940, 1.442695
      %v4032 = vpow.pop %v4031
      %v4033 = vmul.f32 %v3941, 1.442695
      %v4034 = vpow.pop %v4033
      %v4035 = vmul.f32 %v3942, 1.442695
      %v4036 = vpow.pop %v4035
      %v4037 = vmul.f32 %v3943, 1.442695
      %v4038 = vpow.pop %v4037
      %v4039 = vmul.f32 %v3944, 1.442695
      %v4040 = vpow.pop %v4039
      %v4041 = vmul.f32 %v3945, 1.442695
      %v4042 = vpow.pop %v4041
      %v4043 = vmul.f32 %v3946, 1.442695
      %v4044 = vpow.pop %v4043
      %v4045 = vmul.f32 %v3947, 1.442695
      %v4046 = vpow.pop %v4045
      %v4047 = vmul.f32 %v3948, 1.442695
      %v4048 = vpow.pop %v4047
      %v4049 = vmul.f32 %v3949, 1.442695
      %v4050 = vpow.pop %v4049
      %v4051 = vmul.f32 %v3950, 1.442695
      %v4052 = vpow.pop %v4051
      %v4053 = vmul.f32 %v3951, 1.442695
      %v4054 = vpow.pop %v4053
      %v4055 = vmul.f32 %v3952, 1.442695
      %v4056 = vpow.pop %v4055
      %v4057 = vmul.f32 %v3953, 1.442695
      %v4058 = vpow.pop %v4057
      %v4059 = vmul.f32 %v3954, 1.442695
      %v4060 = vpow.pop %v4059
      %v4061 = vmul.f32 %v3955, 1.442695
      %v4062 = vpow.pop %v4061
      %v4063 = vmul.f32 %v3956, 1.442695
      %v4064 = vpow.pop %v4063
      %v4065 = vmul.f32 %v3957, 1.442695
      %v4066 = vpow.pop %v4065
      %v4067 = vmul.f32 %v3958, 1.442695
      %v4068 = vpow.pop %v4067
      %v4069 = vmul.f32 %v3959, 1.442695
      %v4070 = vpow.pop %v4069
      %v4071 = vmul.f32 %v3960, 1.442695
      %v4072 = vpow.pop %v4071
      %v4073 = vmul.f32 %v3961, 1.442695
      %v4074 = vpow.pop %v4073
      %v4075 = vmul.f32 %v3962, 1.442695
      %v4076 = vpow.pop %v4075
      %v4077 = vmul.f32 %v3963, 1.442695
      %v4078 = vpow.pop %v4077
      %v4079 = vmul.f32 %v3964, 1.442695
      %v4080 = vpow.pop %v4079
      %v4081 = vmul.f32 %v3965, 1.442695
      %v4082 = vpow.pop %v4081
      %v4083 = vmul.f32 %v3966, 1.442695
      %v4084 = vpow.pop %v4083
      %v4085 = vmul.f32 %v3967, 1.442695
      %v4086 = vpow.pop %v4085
      %v4087 = vmul.f32 %v3968, 1.442695
      %v4088 = vpow.pop %v4087
      %v4089 = vmul.f32 %v3969, 1.442695
      %v4090 = vpow.pop %v4089
      %v4091 = vmul.f32 %v3970, 1.442695
      %v4092 = vpow.pop %v4091
      %v4093 = vmul.f32 %v3971, 1.442695
      %v4094 = vpow.pop %v4093
      %v4095 = vmul.f32 %v3972, 1.442695
      %v4096 = vpow.pop %v4095
      %v4097 = vmul.f32 %v3973, 1.442695
      %v4098 = vpow.pop %v4097
      %v4099 = vmul.f32 %v3974, 1.442695
      %v4100 = vpow.pop %v4099
      %v4101 = vmul.f32 %v3975, 1.442695
      %v4102 = vpow.pop %v4101
      %v4103 = vmul.f32 %v3976, 1.442695
      %v4104 = vpow.pop %v4103
      %v4105 = vmul.f32 %v2990, %v3137
      %v4106 = vmul.f32 %v2991, %v3139
      %v4107 = vmul.f32 %v2992, %v3250
      %v4108 = vmul.f32 %v2993, %v3252
      %v4109 = vmul.f32 %v2994, %v3141
      %v4110 = vmul.f32 %v2995, %v3143
      %v4111 = vmul.f32 %v2996, %v3254
      %v4112 = vmul.f32 %v2997, %v3256
      %v4113 = vmul.f32 %v2998, %v3147
      %v4114 = vmul.f32 %v2999, %v3149
      %v4115 = vmul.f32 %v3000, %v3260
      %v4116 = vmul.f32 %v3001, %v3262
      %v4117 = vmul.f32 %v3002, %v3151
      %v4118 = vmul.f32 %v3003, %v3153
      %v4119 = vmul.f32 %v3004, %v3264
      %v4120 = vmul.f32 %v3005, %v3266
      %v4121 = vmul.f32 %v3006, %v3157
      %v4122 = vmul.f32 %v3007, %v3159
      %v4123 = vmul.f32 %v3008, %v3270
      %v4124 = vmul.f32 %v3009, %v3272
      %v4125 = vmul.f32 %v3010, %v3161
      %v4126 = vmul.f32 %v3011, %v3163
      %v4127 = vmul.f32 %v3012, %v3274
      %v4128 = vmul.f32 %v3013, %v3276
      %v4129 = vmul.f32 %v3014, %v3167
      %v4130 = vmul.f32 %v3015, %v3169
      %v4131 = vmul.f32 %v3016, %v3280
      %v4132 = vmul.f32 %v3017, %v3282
      %v4133 = vmul.f32 %v3018, %v3171
      %v4134 = vmul.f32 %v3019, %v3173
      %v4135 = vmul.f32 %v3020, %v3284
      %v4136 = vmul.f32 %v3021, %v3286
      %v4137 = vmul.f32 %v3022, %v3177
      %v4138 = vmul.f32 %v3023, %v3179
      %v4139 = vmul.f32 %v3024, %v3290
      %v4140 = vmul.f32 %v3025, %v3292
      %v4141 = vmul.f32 %v3026, %v3181
      %v4142 = vmul.f32 %v3027, %v3183
      %v4143 = vmul.f32 %v3028, %v3294
      %v4144 = vmul.f32 %v3029, %v3296
      %v4145 = vmul.f32 %v3030, %v3187
      %v4146 = vmul.f32 %v3031, %v3189
      %v4147 = vmul.f32 %v3032, %v3300
      %v4148 = vmul.f32 %v3033, %v3302
      %v4149 = vmul.f32 %v3034, %v3191
      %v4150 = vmul.f32 %v3035, %v3193
      %v4151 = vmul.f32 %v3036, %v3304
      %v4152 = vmul.f32 %v3037, %v3306
      %v4153 = vmul.f32 %v3038, %v3197
      %v4154 = vmul.f32 %v3039, %v3199
      %v4155 = vmul.f32 %v3040, %v3310
      %v4156 = vmul.f32 %v3041, %v3312
      %v4157 = vmul.f32 %v3042, %v3201
      %v4158 = vmul.f32 %v3043, %v3203
      %v4159 = vmul.f32 %v3044, %v3314
      %v4160 = vmul.f32 %v3045, %v3316
      %v4161 = vmul.f32 %v3046, %v3207
      %v4162 = vmul.f32 %v3047, %v3209
      %v4163 = vmul.f32 %v3048, %v3320
      %v4164 = vmul.f32 %v3049, %v3322
      %v4165 = vmul.f32 %v3050, %v3211
      %v4166 = vmul.f32 %v3051, %v3213
      %v4167 = vmul.f32 %v3052, %v3324
      %v4168 = vmul.f32 %v3053, %v3326
      %v4169 = vmul.f32 %v4105, %v3419
      %v4170 = vmul.f32 %v4106, %v3421
      %v4171 = vmul.f32 %v4107, %v3532
      %v4172 = vmul.f32 %v4108, %v3534
      %v4173 = vmul.f32 %v4109, %v3423
      %v4174 = vmul.f32 %v4110, %v3425
      %v4175 = vmul.f32 %v4111, %v3536
      %v4176 = vmul.f32 %v4112, %v3538
      %v4177 = vmul.f32 %v4113, %v3429
      %v4178 = vmul.f32 %v4114, %v3431
      %v4179 = vmul.f32 %v4115, %v3542
      %v4180 = vmul.f32 %v4116, %v3544
      %v4181 = vmul.f32 %v4117, %v3433
      %v4182 = vmul.f32 %v4118, %v3435
      %v4183 = vmul.f32 %v4119, %v3546
      %v4184 = vmul.f32 %v4120, %v3548
      %v4185 = vmul.f32 %v4121, %v3439
      %v4186 = vmul.f32 %v4122, %v3441
      %v4187 = vmul.f32 %v4123, %v3552
      %v4188 = vmul.f32 %v4124, %v3554
      %v4189 = vmul.f32 %v4125, %v3443
      %v4190 = vmul.f32 %v4126, %v3445
      %v4191 = vmul.f32 %v4127, %v3556
      %v4192 = vmul.f32 %v4128, %v3558
      %v4193 = vmul.f32 %v4129, %v3449
      %v4194 = vmul.f32 %v4130, %v3451
      %v4195 = vmul.f32 %v4131, %v3562
      %v4196 = vmul.f32 %v4132, %v3564
      %v4197 = vmul.f32 %v4133, %v3453
      %v4198 = vmul.f32 %v4134, %v3455
      %v4199 = vmul.f32 %v4135, %v3566
      %v4200 = vmul.f32 %v4136, %v3568
      %v4201 = vmul.f32 %v4137, %v3459
      %v4202 = vmul.f32 %v4138, %v3461
      %v4203 = vmul.f32 %v4139, %v3572
      %v4204 = vmul.f32 %v4140, %v3574
      %v4205 = vmul.f32 %v4141, %v3463
      %v4206 = vmul.f32 %v4142, %v3465
      %v4207 = vmul.f32 %v4143, %v3576
      %v4208 = vmul.f32 %v4144, %v3578
      %v4209 = vmul.f32 %v4145, %v3469
      %v4210 = vmul.f32 %v4146, %v3471
      %v4211 = vmul.f32 %v4147, %v3582
      %v4212 = vmul.f32 %v4148, %v3584
      %v4213 = vmul.f32 %v4149, %v3473
      %v4214 = vmul.f32 %v4150, %v3475
      %v4215 = vmul.f32 %v4151, %v3586
      %v4216 = vmul.f32 %v4152, %v3588
      %v4217 = vmul.f32 %v4153, %v3479
      %v4218 = vmul.f32 %v4154, %v3481
      %v4219 = vmul.f32 %v4155, %v3592
      %v4220 = vmul.f32 %v4156, %v3594
      %v4221 = vmul.f32 %v4157, %v3483
      %v4222 = vmul.f32 %v4158, %v3485
      %v4223 = vmul.f32 %v4159, %v3596
      %v4224 = vmul.f32 %v4160, %v3598
      %v4225 = vmul.f32 %v4161, %v3489
      %v4226 = vmul.f32 %v4162, %v3491
      %v4227 = vmul.f32 %v4163, %v3602
      %v4228 = vmul.f32 %v4164, %v3604
      %v4229 = vmul.f32 %v4165, %v3493
      %v4230 = vmul.f32 %v4166, %v3495
      %v4231 = vmul.f32 %v4167, %v3606
      %v4232 = vmul.f32 %v4168, %v3608
      %v4233 = vmul.f32 %v3978, 0.0
      %v4234 = vmul.f32 %v3980, 0.0
      %v4235 = vmul.f32 %v3982, 0.0
      %v4236 = vmul.f32 %v3984, 0.0
      %v4237 = vmul.f32 %v3986, 0.0
      %v4238 = vmul.f32 %v3988, 0.0
      %v4239 = vmul.f32 %v3990, 0.0
      %v4240 = vmul.f32 %v3992, 0.0
      %v4241 = vmul.f32 %v3994, %v4169
      %v4242 = vmul.f32 %v3996, %v4170
      %v4243 = vmul.f32 %v3998, %v4171
      %v4244 = vmul.f32 %v4000, %v4172
      %v4245 = vmul.f32 %v4002, %v4173
      %v4246 = vmul.f32 %v4004, %v4174
      %v4247 = vmul.f32 %v4006, %v4175
      %v4248 = vmul.f32 %v4008, %v4176
      %v4249 = vmul.f32 %v4010, %v4177
      %v4250 = vmul.f32 %v4012, %v4178
      %v4251 = vmul.f32 %v4014, %v4179
      %v4252 = vmul.f32 %v4016, %v4180
      %v4253 = vmul.f32 %v4018, %v4181
      %v4254 = vmul.f32 %v4020, %v4182
      %v4255 = vmul.f32 %v4022, %v4183
      %v4256 = vmul.f32 %v4024, %v4184
      %v4257 = vmul.f32 %v4026, %v4185
      %v4258 = vmul.f32 %v4028, %v4186
      %v4259 = vmul.f32 %v4030, %v4187
      %v4260 = vmul.f32 %v4032, %v4188
      %v4261 = vmul.f32 %v4034, %v4189
      %v4262 = vmul.f32 %v4036, %v4190
      %v4263 = vmul.f32 %v4038, %v4191
      %v4264 = vmul.f32 %v4040, %v4192
      %v4265 = vmul.f32 %v4042, %v4193
      %v4266 = vmul.f32 %v4044, %v4194
      %v4267 = vmul.f32 %v4046, %v4195
      %v4268 = vmul.f32 %v4048, %v4196
      %v4269 = vmul.f32 %v4050, %v4197
      %v4270 = vmul.f32 %v4052, %v4198
      %v4271 = vmul.f32 %v4054, %v4199
      %v4272 = vmul.f32 %v4056, %v4200
      %v4273 = vmul.f32 %v4058, %v4201
      %v4274 = vmul.f32 %v4060, %v4202
      %v4275 = vmul.f32 %v4062, %v4203
      %v4276 = vmul.f32 %v4064, %v4204
      %v4277 = vmul.f32 %v4066, %v4205
      %v4278 = vmul.f32 %v4068, %v4206
      %v4279 = vmul.f32 %v4070, %v4207
      %v4280 = vmul.f32 %v4072, %v4208
      %v4281 = vmul.f32 %v4074, %v4209
      %v4282 = vmul.f32 %v4076, %v4210
      %v4283 = vmul.f32 %v4078, %v4211
      %v4284 = vmul.f32 %v4080, %v4212
      %v4285 = vmul.f32 %v4082, %v4213
      %v4286 = vmul.f32 %v4084, %v4214
      %v4287 = vmul.f32 %v4086, %v4215
      %v4288 = vmul.f32 %v4088, %v4216
      %v4289 = vmul.f32 %v4090, %v4217
      %v4290 = vmul.f32 %v4092, %v4218
      %v4291 = vmul.f32 %v4094, %v4219
      %v4292 = vmul.f32 %v4096, %v4220
      %v4293 = vmul.f32 %v4098, %v4221
      %v4294 = vmul.f32 %v4100, %v4222
      %v4295 = vmul.f32 %v4102, %v4223
      %v4296 = vmul.f32 %v4104, %v4224
      %v4297 = vadd.f32 %v4169, %v4233
      %v4298 = vadd.f32 %v4170, %v4234
      %v4299 = vadd.f32 %v4171, %v4235
      %v4300 = vadd.f32 %v4172, %v4236
      %v4301 = vadd.f32 %v4173, %v4237
      %v4302 = vadd.f32 %v4174, %v4238
      %v4303 = vadd.f32 %v4175, %v4239
      %v4304 = vadd.f32 %v4176, %v4240
      %v4305 = vadd.f32 %v4177, %v4241
      %v4306 = vadd.f32 %v4178, %v4242
      %v4307 = vadd.f32 %v4179, %v4243
      %v4308 = vadd.f32 %v4180, %v4244
      %v4309 = vadd.f32 %v4181, %v4245
      %v4310 = vadd.f32 %v4182, %v4246
      %v4311 = vadd.f32 %v4183, %v4247
      %v4312 = vadd.f32 %v4184, %v4248
      %v4313 = vadd.f32 %v4185, %v4249
      %v4314 = vadd.f32 %v4186, %v4250
      %v4315 = vadd.f32 %v4187, %v4251
      %v4316 = vadd.f32 %v4188, %v4252
      %v4317 = vadd.f32 %v4189, %v4253
      %v4318 = vadd.f32 %v4190, %v4254
      %v4319 = vadd.f32 %v4191, %v4255
      %v4320 = vadd.f32 %v4192, %v4256
      %v4321 = vadd.f32 %v4193, %v4257
      %v4322 = vadd.f32 %v4194, %v4258
      %v4323 = vadd.f32 %v4195, %v4259
      %v4324 = vadd.f32 %v4196, %v4260
      %v4325 = vadd.f32 %v4197, %v4261
      %v4326 = vadd.f32 %v4198, %v4262
      %v4327 = vadd.f32 %v4199, %v4263
      %v4328 = vadd.f32 %v4200, %v4264
      %v4329 = vadd.f32 %v4201, %v4265
      %v4330 = vadd.f32 %v4202, %v4266
      %v4331 = vadd.f32 %v4203, %v4267
      %v4332 = vadd.f32 %v4204, %v4268
      %v4333 = vadd.f32 %v4205, %v4269
      %v4334 = vadd.f32 %v4206, %v4270
      %v4335 = vadd.f32 %v4207, %v4271
      %v4336 = vadd.f32 %v4208, %v4272
      %v4337 = vadd.f32 %v4209, %v4273
      %v4338 = vadd.f32 %v4210, %v4274
      %v4339 = vadd.f32 %v4211, %v4275
      %v4340 = vadd.f32 %v4212, %v4276
      %v4341 = vadd.f32 %v4213, %v4277
      %v4342 = vadd.f32 %v4214, %v4278
      %v4343 = vadd.f32 %v4215, %v4279
      %v4344 = vadd.f32 %v4216, %v4280
      %v4345 = vadd.f32 %v4217, %v4281
      %v4346 = vadd.f32 %v4218, %v4282
      %v4347 = vadd.f32 %v4219, %v4283
      %v4348 = vadd.f32 %v4220, %v4284
      %v4349 = vadd.f32 %v4221, %v4285
      %v4350 = vadd.f32 %v4222, %v4286
      %v4351 = vadd.f32 %v4223, %v4287
      %v4352 = vadd.f32 %v4224, %v4288
      %v4353 = vadd.f32 %v4225, %v4289
      %v4354 = vadd.f32 %v4226, %v4290
      %v4355 = vadd.f32 %v4227, %v4291
      %v4356 = vadd.f32 %v4228, %v4292
      %v4357 = vadd.f32 %v4229, %v4293
      %v4358 = vadd.f32 %v4230, %v4294
      %v4359 = vadd.f32 %v4231, %v4295
      %v4360 = vadd.f32 %v4232, %v4296
      %v4361 = vmul.f32 %v3994, %v3978
      %v4362 = vmul.f32 %v3996, %v3980
      %v4363 = vmul.f32 %v3998, %v3982
      %v4364 = vmul.f32 %v4000, %v3984
      %v4365 = vmul.f32 %v4002, %v3986
      %v4366 = vmul.f32 %v4004, %v3988
      %v4367 = vmul.f32 %v4006, %v3990
      %v4368 = vmul.f32 %v4008, %v3992
      %v4369 = vmul.f32 %v4010, %v3994
      %v4370 = vmul.f32 %v4012, %v3996
      %v4371 = vmul.f32 %v4014, %v3998
      %v4372 = vmul.f32 %v4016, %v4000
      %v4373 = vmul.f32 %v4018, %v4002
      %v4374 = vmul.f32 %v4020, %v4004
      %v4375 = vmul.f32 %v4022, %v4006
      %v4376 = vmul.f32 %v4024, %v4008
      %v4377 = vmul.f32 %v4026, %v4010
      %v4378 = vmul.f32 %v4028, %v4012
      %v4379 = vmul.f32 %v4030, %v4014
      %v4380 = vmul.f32 %v4032, %v4016
      %v4381 = vmul.f32 %v4034, %v4018
      %v4382 = vmul.f32 %v4036, %v4020
      %v4383 = vmul.f32 %v4038, %v4022
      %v4384 = vmul.f32 %v4040, %v4024
      %v4385 = vmul.f32 %v4042, %v4026
      %v4386 = vmul.f32 %v4044, %v4028
      %v4387 = vmul.f32 %v4046, %v4030
      %v4388 = vmul.f32 %v4048, %v4032
      %v4389 = vmul.f32 %v4050, %v4034
      %v4390 = vmul.f32 %v4052, %v4036
      %v4391 = vmul.f32 %v4054, %v4038
      %v4392 = vmul.f32 %v4056, %v4040
      %v4393 = vmul.f32 %v4058, %v4042
      %v4394 = vmul.f32 %v4060, %v4044
      %v4395 = vmul.f32 %v4062, %v4046
      %v4396 = vmul.f32 %v4064, %v4048
      %v4397 = vmul.f32 %v4066, %v4050
      %v4398 = vmul.f32 %v4068, %v4052
      %v4399 = vmul.f32 %v4070, %v4054
      %v4400 = vmul.f32 %v4072, %v4056
      %v4401 = vmul.f32 %v4074, %v4058
      %v4402 = vmul.f32 %v4076, %v4060
      %v4403 = vmul.f32 %v4078, %v4062
      %v4404 = vmul.f32 %v4080, %v4064
      %v4405 = vmul.f32 %v4082, %v4066
      %v4406 = vmul.f32 %v4084, %v4068
      %v4407 = vmul.f32 %v4086, %v4070
      %v4408 = vmul.f32 %v4088, %v4072
      %v4409 = vmul.f32 %v4090, %v4074
      %v4410 = vmul.f32 %v4092, %v4076
      %v4411 = vmul.f32 %v4094, %v4078
      %v4412 = vmul.f32 %v4096, %v4080
      %v4413 = vmul.f32 %v4098, %v4082
      %v4414 = vmul.f32 %v4100, %v4084
      %v4415 = vmul.f32 %v4102, %v4086
      %v4416 = vmul.f32 %v4104, %v4088
      %v4417 = vmul.f32 %v4233, 0.0
      %v4418 = vmul.f32 %v4234, 0.0
      %v4419 = vmul.f32 %v4235, 0.0
      %v4420 = vmul.f32 %v4236, 0.0
      %v4421 = vmul.f32 %v4237, 0.0
      %v4422 = vmul.f32 %v4238, 0.0
      %v4423 = vmul.f32 %v4239, 0.0
      %v4424 = vmul.f32 %v4240, 0.0
      %v4425 = vmul.f32 %v4361, 0.0
      %v4426 = vmul.f32 %v4362, 0.0
      %v4427 = vmul.f32 %v4363, 0.0
      %v4428 = vmul.f32 %v4364, 0.0
      %v4429 = vmul.f32 %v4365, 0.0
      %v4430 = vmul.f32 %v4366, 0.0
      %v4431 = vmul.f32 %v4367, 0.0
      %v4432 = vmul.f32 %v4368, 0.0
      %v4433 = vmul.f32 %v4369, %v4297
      %v4434 = vmul.f32 %v4370, %v4298
      %v4435 = vmul.f32 %v4371, %v4299
      %v4436 = vmul.f32 %v4372, %v4300
      %v4437 = vmul.f32 %v4373, %v4301
      %v4438 = vmul.f32 %v4374, %v4302
      %v4439 = vmul.f32 %v4375, %v4303
      %v4440 = vmul.f32 %v4376, %v4304
      %v4441 = vmul.f32 %v4377, %v4305
      %v4442 = vmul.f32 %v4378, %v4306
      %v4443 = vmul.f32 %v4379, %v4307
      %v4444 = vmul.f32 %v4380, %v4308
      %v4445 = vmul.f32 %v4381, %v4309
      %v4446 = vmul.f32 %v4382, %v4310
      %v4447 = vmul.f32 %v4383, %v4311
      %v4448 = vmul.f32 %v4384, %v4312
      %v4449 = vmul.f32 %v4385, %v4313
      %v4450 = vmul.f32 %v4386, %v4314
      %v4451 = vmul.f32 %v4387, %v4315
      %v4452 = vmul.f32 %v4388, %v4316
      %v4453 = vmul.f32 %v4389, %v4317
      %v4454 = vmul.f32 %v4390, %v4318
      %v4455 = vmul.f32 %v4391, %v4319
      %v4456 = vmul.f32 %v4392, %v4320
      %v4457 = vmul.f32 %v4393, %v4321
      %v4458 = vmul.f32 %v4394, %v4322
      %v4459 = vmul.f32 %v4395, %v4323
      %v4460 = vmul.f32 %v4396, %v4324
      %v4461 = vmul.f32 %v4397, %v4325
      %v4462 = vmul.f32 %v4398, %v4326
      %v4463 = vmul.f32 %v4399, %v4327
      %v4464 = vmul.f32 %v4400, %v4328
      %v4465 = vmul.f32 %v4401, %v4329
      %v4466 = vmul.f32 %v4402, %v4330
      %v4467 = vmul.f32 %v4403, %v4331
      %v4468 = vmul.f32 %v4404, %v4332
      %v4469 = vmul.f32 %v4405, %v4333
      %v4470 = vmul.f32 %v4406, %v4334
      %v4471 = vmul.f32 %v4407, %v4335
      %v4472 = vmul.f32 %v4408, %v4336
      %v4473 = vmul.f32 %v4409, %v4337
      %v4474 = vmul.f32 %v4410, %v4338
      %v4475 = vmul.f32 %v4411, %v4339
      %v4476 = vmul.f32 %v4412, %v4340
      %v4477 = vmul.f32 %v4413, %v4341
      %v4478 = vmul.f32 %v4414, %v4342
      %v4479 = vmul.f32 %v4415, %v4343
      %v4480 = vmul.f32 %v4416, %v4344
      %v4481 = vadd.f32 %v4297, %v4417
      %v4482 = vadd.f32 %v4298, %v4418
      %v4483 = vadd.f32 %v4299, %v4419
      %v4484 = vadd.f32 %v4300, %v4420
      %v4485 = vadd.f32 %v4301, %v4421
      %v4486 = vadd.f32 %v4302, %v4422
      %v4487 = vadd.f32 %v4303, %v4423
      %v4488 = vadd.f32 %v4304, %v4424
      %v4489 = vadd.f32 %v4305, %v4425
      %v4490 = vadd.f32 %v4306, %v4426
      %v4491 = vadd.f32 %v4307, %v4427
      %v4492 = vadd.f32 %v4308, %v4428
      %v4493 = vadd.f32 %v4309, %v4429
      %v4494 = vadd.f32 %v4310, %v4430
      %v4495 = vadd.f32 %v4311, %v4431
      %v4496 = vadd.f32 %v4312, %v4432
      %v4497 = vadd.f32 %v4313, %v4433
      %v4498 = vadd.f32 %v4314, %v4434
      %v4499 = vadd.f32 %v4315, %v4435
      %v4500 = vadd.f32 %v4316, %v4436
      %v4501 = vadd.f32 %v4317, %v4437
      %v4502 = vadd.f32 %v4318, %v4438
      %v4503 = vadd.f32 %v4319, %v4439
      %v4504 = vadd.f32 %v4320, %v4440
      %v4505 = vadd.f32 %v4321, %v4441
      %v4506 = vadd.f32 %v4322, %v4442
      %v4507 = vadd.f32 %v4323, %v4443
      %v4508 = vadd.f32 %v4324, %v4444
      %v4509 = vadd.f32 %v4325, %v4445
      %v4510 = vadd.f32 %v4326, %v4446
      %v4511 = vadd.f32 %v4327, %v4447
      %v4512 = vadd.f32 %v4328, %v4448
      %v4513 = vadd.f32 %v4329, %v4449
      %v4514 = vadd.f32 %v4330, %v4450
      %v4515 = vadd.f32 %v4331, %v4451
      %v4516 = vadd.f32 %v4332, %v4452
      %v4517 = vadd.f32 %v4333, %v4453
      %v4518 = vadd.f32 %v4334, %v4454
      %v4519 = vadd.f32 %v4335, %v4455
      %v4520 = vadd.f32 %v4336, %v4456
      %v4521 = vadd.f32 %v4337, %v4457
      %v4522 = vadd.f32 %v4338, %v4458
      %v4523 = vadd.f32 %v4339, %v4459
      %v4524 = vadd.f32 %v4340, %v4460
      %v4525 = vadd.f32 %v4341, %v4461
      %v4526 = vadd.f32 %v4342, %v4462
      %v4527 = vadd.f32 %v4343, %v4463
      %v4528 = vadd.f32 %v4344, %v4464
      %v4529 = vadd.f32 %v4345, %v4465
      %v4530 = vadd.f32 %v4346, %v4466
      %v4531 = vadd.f32 %v4347, %v4467
      %v4532 = vadd.f32 %v4348, %v4468
      %v4533 = vadd.f32 %v4349, %v4469
      %v4534 = vadd.f32 %v4350, %v4470
      %v4535 = vadd.f32 %v4351, %v4471
      %v4536 = vadd.f32 %v4352, %v4472
      %v4537 = vadd.f32 %v4353, %v4473
      %v4538 = vadd.f32 %v4354, %v4474
      %v4539 = vadd.f32 %v4355, %v4475
      %v4540 = vadd.f32 %v4356, %v4476
      %v4541 = vadd.f32 %v4357, %v4477
      %v4542 = vadd.f32 %v4358, %v4478
      %v4543 = vadd.f32 %v4359, %v4479
      %v4544 = vadd.f32 %v4360, %v4480
      %v4545 = vmul.f32 %v4369, %v4233
      %v4546 = vmul.f32 %v4370, %v4234
      %v4547 = vmul.f32 %v4371, %v4235
      %v4548 = vmul.f32 %v4372, %v4236
      %v4549 = vmul.f32 %v4373, %v4237
      %v4550 = vmul.f32 %v4374, %v4238
      %v4551 = vmul.f32 %v4375, %v4239
      %v4552 = vmul.f32 %v4376, %v4240
      %v4553 = vmul.f32 %v4377, %v4361
      %v4554 = vmul.f32 %v4378, %v4362
      %v4555 = vmul.f32 %v4379, %v4363
      %v4556 = vmul.f32 %v4380, %v4364
      %v4557 = vmul.f32 %v4381, %v4365
      %v4558 = vmul.f32 %v4382, %v4366
      %v4559 = vmul.f32 %v4383, %v4367
      %v4560 = vmul.f32 %v4384, %v4368
      %v4561 = vmul.f32 %v4385, %v4369
      %v4562 = vmul.f32 %v4386, %v4370
      %v4563 = vmul.f32 %v4387, %v4371
      %v4564 = vmul.f32 %v4388, %v4372
      %v4565 = vmul.f32 %v4389, %v4373
      %v4566 = vmul.f32 %v4390, %v4374
      %v4567 = vmul.f32 %v4391, %v4375
      %v4568 = vmul.f32 %v4392, %v4376
      %v4569 = vmul.f32 %v4393, %v4377
      %v4570 = vmul.f32 %v4394, %v4378
      %v4571 = vmul.f32 %v4395, %v4379
      %v4572 = vmul.f32 %v4396, %v4380
      %v4573 = vmul.f32 %v4397, %v4381
      %v4574 = vmul.f32 %v4398, %v4382
      %v4575 = vmul.f32 %v4399, %v4383
      %v4576 = vmul.f32 %v4400, %v4384
      %v4577 = vmul.f32 %v4401, %v4385
      %v4578 = vmul.f32 %v4402, %v4386
      %v4579 = vmul.f32 %v4403, %v4387
      %v4580 = vmul.f32 %v4404, %v4388
      %v4581 = vmul.f32 %v4405, %v4389
      %v4582 = vmul.f32 %v4406, %v4390
      %v4583 = vmul.f32 %v4407, %v4391
      %v4584 = vmul.f32 %v4408, %v4392
      %v4585 = vmul.f32 %v4409, %v4393
      %v4586 = vmul.f32 %v4410, %v4394
      %v4587 = vmul.f32 %v4411, %v4395
      %v4588 = vmul.f32 %v4412, %v4396
      %v4589 = vmul.f32 %v4413, %v4397
      %v4590 = vmul.f32 %v4414, %v4398
      %v4591 = vmul.f32 %v4415, %v4399
      %v4592 = vmul.f32 %v4416, %v4400
      %v4593 = vmul.f32 %v4417, 0.0
      %v4594 = vmul.f32 %v4418, 0.0
      %v4595 = vmul.f32 %v4419, 0.0
      %v4596 = vmul.f32 %v4420, 0.0
      %v4597 = vmul.f32 %v4421, 0.0
      %v4598 = vmul.f32 %v4422, 0.0
      %v4599 = vmul.f32 %v4423, 0.0
      %v4600 = vmul.f32 %v4424, 0.0
      %v4601 = vmul.f32 %v4425, 0.0
      %v4602 = vmul.f32 %v4426, 0.0
      %v4603 = vmul.f32 %v4427, 0.0
      %v4604 = vmul.f32 %v4428, 0.0
      %v4605 = vmul.f32 %v4429, 0.0
      %v4606 = vmul.f32 %v4430, 0.0
      %v4607 = vmul.f32 %v4431, 0.0
      %v4608 = vmul.f32 %v4432, 0.0
      %v4609 = vmul.f32 %v4545, 0.0
      %v4610 = vmul.f32 %v4546, 0.0
      %v4611 = vmul.f32 %v4547, 0.0
      %v4612 = vmul.f32 %v4548, 0.0
      %v4613 = vmul.f32 %v4549, 0.0
      %v4614 = vmul.f32 %v4550, 0.0
      %v4615 = vmul.f32 %v4551, 0.0
      %v4616 = vmul.f32 %v4552, 0.0
      %v4617 = vmul.f32 %v4553, 0.0
      %v4618 = vmul.f32 %v4554, 0.0
      %v4619 = vmul.f32 %v4555, 0.0
      %v4620 = vmul.f32 %v4556, 0.0
      %v4621 = vmul.f32 %v4557, 0.0
      %v4622 = vmul.f32 %v4558, 0.0
      %v4623 = vmul.f32 %v4559, 0.0
      %v4624 = vmul.f32 %v4560, 0.0
      %v4625 = vmul.f32 %v4561, %v4481
      %v4626 = vmul.f32 %v4562, %v4482
      %v4627 = vmul.f32 %v4563, %v4483
      %v4628 = vmul.f32 %v4564, %v4484
      %v4629 = vmul.f32 %v4565, %v4485
      %v4630 = vmul.f32 %v4566, %v4486
      %v4631 = vmul.f32 %v4567, %v4487
      %v4632 = vmul.f32 %v4568, %v4488
      %v4633 = vmul.f32 %v4569, %v4489
      %v4634 = vmul.f32 %v4570, %v4490
      %v4635 = vmul.f32 %v4571, %v4491
      %v4636 = vmul.f32 %v4572, %v4492
      %v4637 = vmul.f32 %v4573, %v4493
      %v4638 = vmul.f32 %v4574, %v4494
      %v4639 = vmul.f32 %v4575, %v4495
      %v4640 = vmul.f32 %v4576, %v4496
      %v4641 = vmul.f32 %v4577, %v4497
      %v4642 = vmul.f32 %v4578, %v4498
      %v4643 = vmul.f32 %v4579, %v4499
      %v4644 = vmul.f32 %v4580, %v4500
      %v4645 = vmul.f32 %v4581, %v4501
      %v4646 = vmul.f32 %v4582, %v4502
      %v4647 = vmul.f32 %v4583, %v4503
      %v4648 = vmul.f32 %v4584, %v4504
      %v4649 = vmul.f32 %v4585, %v4505
      %v4650 = vmul.f32 %v4586, %v4506
      %v4651 = vmul.f32 %v4587, %v4507
      %v4652 = vmul.f32 %v4588, %v4508
      %v4653 = vmul.f32 %v4589, %v4509
      %v4654 = vmul.f32 %v4590, %v4510
      %v4655 = vmul.f32 %v4591, %v4511
      %v4656 = vmul.f32 %v4592, %v4512
      %v4657 = vadd.f32 %v4481, %v4593
      %v4658 = vadd.f32 %v4482, %v4594
      %v4659 = vadd.f32 %v4483, %v4595
      %v4660 = vadd.f32 %v4484, %v4596
      %v4661 = vadd.f32 %v4485, %v4597
      %v4662 = vadd.f32 %v4486, %v4598
      %v4663 = vadd.f32 %v4487, %v4599
      %v4664 = vadd.f32 %v4488, %v4600
      %v4665 = vadd.f32 %v4489, %v4601
      %v4666 = vadd.f32 %v4490, %v4602
      %v4667 = vadd.f32 %v4491, %v4603
      %v4668 = vadd.f32 %v4492, %v4604
      %v4669 = vadd.f32 %v4493, %v4605
      %v4670 = vadd.f32 %v4494, %v4606
      %v4671 = vadd.f32 %v4495, %v4607
      %v4672 = vadd.f32 %v4496, %v4608
      %v4673 = vadd.f32 %v4497, %v4609
      %v4674 = vadd.f32 %v4498, %v4610
      %v4675 = vadd.f32 %v4499, %v4611
      %v4676 = vadd.f32 %v4500, %v4612
      %v4677 = vadd.f32 %v4501, %v4613
      %v4678 = vadd.f32 %v4502, %v4614
      %v4679 = vadd.f32 %v4503, %v4615
      %v4680 = vadd.f32 %v4504, %v4616
      %v4681 = vadd.f32 %v4505, %v4617
      %v4682 = vadd.f32 %v4506, %v4618
      %v4683 = vadd.f32 %v4507, %v4619
      %v4684 = vadd.f32 %v4508, %v4620
      %v4685 = vadd.f32 %v4509, %v4621
      %v4686 = vadd.f32 %v4510, %v4622
      %v4687 = vadd.f32 %v4511, %v4623
      %v4688 = vadd.f32 %v4512, %v4624
      %v4689 = vadd.f32 %v4513, %v4625
      %v4690 = vadd.f32 %v4514, %v4626
      %v4691 = vadd.f32 %v4515, %v4627
      %v4692 = vadd.f32 %v4516, %v4628
      %v4693 = vadd.f32 %v4517, %v4629
      %v4694 = vadd.f32 %v4518, %v4630
      %v4695 = vadd.f32 %v4519, %v4631
      %v4696 = vadd.f32 %v4520, %v4632
      %v4697 = vadd.f32 %v4521, %v4633
      %v4698 = vadd.f32 %v4522, %v4634
      %v4699 = vadd.f32 %v4523, %v4635
      %v4700 = vadd.f32 %v4524, %v4636
      %v4701 = vadd.f32 %v4525, %v4637
      %v4702 = vadd.f32 %v4526, %v4638
      %v4703 = vadd.f32 %v4527, %v4639
      %v4704 = vadd.f32 %v4528, %v4640
      %v4705 = vadd.f32 %v4529, %v4641
      %v4706 = vadd.f32 %v4530, %v4642
      %v4707 = vadd.f32 %v4531, %v4643
      %v4708 = vadd.f32 %v4532, %v4644
      %v4709 = vadd.f32 %v4533, %v4645
      %v4710 = vadd.f32 %v4534, %v4646
      %v4711 = vadd.f32 %v4535, %v4647
      %v4712 = vadd.f32 %v4536, %v4648
      %v4713 = vadd.f32 %v4537, %v4649
      %v4714 = vadd.f32 %v4538, %v4650
      %v4715 = vadd.f32 %v4539, %v4651
      %v4716 = vadd.f32 %v4540, %v4652
      %v4717 = vadd.f32 %v4541, %v4653
      %v4718 = vadd.f32 %v4542, %v4654
      %v4719 = vadd.f32 %v4543, %v4655
      %v4720 = vadd.f32 %v4544, %v4656
      %v4721 = vmul.f32 %v4657, %v3701
      %v4722 = vmul.f32 %v4658, %v3703
      %v4723 = vmul.f32 %v4659, %v3814
      %v4724 = vmul.f32 %v4660, %v3816
      %v4725 = vmul.f32 %v4661, %v3705
      %v4726 = vmul.f32 %v4662, %v3707
      %v4727 = vmul.f32 %v4663, %v3818
      %v4728 = vmul.f32 %v4664, %v3820
      %v4729 = vmul.f32 %v4665, %v3711
      %v4730 = vmul.f32 %v4666, %v3713
      %v4731 = vmul.f32 %v4667, %v3824
      %v4732 = vmul.f32 %v4668, %v3826
      %v4733 = vmul.f32 %v4669, %v3715
      %v4734 = vmul.f32 %v4670, %v3717
      %v4735 = vmul.f32 %v4671, %v3828
      %v4736 = vmul.f32 %v4672, %v3830
      %v4737 = vmul.f32 %v4673, %v3721
      %v4738 = vmul.f32 %v4674, %v3723
      %v4739 = vmul.f32 %v4675, %v3834
      %v4740 = vmul.f32 %v4676, %v3836
      %v4741 = vmul.f32 %v4677, %v3725
      %v4742 = vmul.f32 %v4678, %v3727
      %v4743 = vmul.f32 %v4679, %v3838
      %v4744 = vmul.f32 %v4680, %v3840
      %v4745 = vmul.f32 %v4681, %v3731
      %v4746 = vmul.f32 %v4682, %v3733
      %v4747 = vmul.f32 %v4683, %v3844
      %v4748 = vmul.f32 %v4684, %v3846
      %v4749 = vmul.f32 %v4685, %v3735
      %v4750 = vmul.f32 %v4686, %v3737
      %v4751 = vmul.f32 %v4687, %v3848
      %v4752 = vmul.f32 %v4688, %v3850
      %v4753 = vmul.f32 %v4689, %v3741
      %v4754 = vmul.f32 %v4690, %v3743
      %v4755 = vmul.f32 %v4691, %v3854
      %v4756 = vmul.f32 %v4692, %v3856
      %v4757 = vmul.f32 %v4693, %v3745
      %v4758 = vmul.f32 %v4694, %v3747
      %v4759 = vmul.f32 %v4695, %v3858
      %v4760 = vmul.f32 %v4696, %v3860
      %v4761 = vmul.f32 %v4697, %v3751
      %v4762 = vmul.f32 %v4698, %v3753
      %v4763 = vmul.f32 %v4699, %v3864
      %v4764 = vmul.f32 %v4700, %v3866
      %v4765 = vmul.f32 %v4701, %v3755
      %v4766 = vmul.f32 %v4702, %v3757
      %v4767 = vmul.f32 %v4703, %v3868
      %v4768 = vmul.f32 %v4704, %v3870
      %v4769 = vmul.f32 %v4705, %v3761
      %v4770 = vmul.f32 %v4706, %v3763
      %v4771 = vmul.f32 %v4707, %v3874
      %v4772 = vmul.f32 %v4708, %v3876
      %v4773 = vmul.f32 %v4709, %v3765
      %v4774 = vmul.f32 %v4710, %v3767
      %v4775 = vmul.f32 %v4711, %v3878
      %v4776 = vmul.f32 %v4712, %v3880
      %v4777 = vmul.f32 %v4713, %v3771
      %v4778 = vmul.f32 %v4714, %v3773
      %v4779 = vmul.f32 %v4715, %v3884
      %v4780 = vmul.f32 %v4716, %v3886
      %v4781 = vmul.f32 %v4717, %v3775
      %v4782 = vmul.f32 %v4718, %v3777
      %v4783 = vmul.f32 %v4719, %v3888
      %v4784 = vmul.f32 %v4720, %v3890
      %v4785 = vpack.c.bf16 %v4725, %v4721
      %v4786 = vpack.c.bf16 %v4726, %v4722
      %v4787 = vpack.c.bf16 %v4727, %v4723
      %v4788 = vpack.c.bf16 %v4728, %v4724
      %v4789 = vpack.c.bf16 %v4733, %v4729
      %v4790 = vpack.c.bf16 %v4734, %v4730
      %v4791 = vpack.c.bf16 %v4735, %v4731
      %v4792 = vpack.c.bf16 %v4736, %v4732
      %v4793 = vpack.c.bf16 %v4741, %v4737
      %v4794 = vpack.c.bf16 %v4742, %v4738
      %v4795 = vpack.c.bf16 %v4743, %v4739
      %v4796 = vpack.c.bf16 %v4744, %v4740
      %v4797 = vpack.c.bf16 %v4749, %v4745
      %v4798 = vpack.c.bf16 %v4750, %v4746
      %v4799 = vpack.c.bf16 %v4751, %v4747
      %v4800 = vpack.c.bf16 %v4752, %v4748
      %v4801 = vpack.c.bf16 %v4757, %v4753
      %v4802 = vpack.c.bf16 %v4758, %v4754
      %v4803 = vpack.c.bf16 %v4759, %v4755
      %v4804 = vpack.c.bf16 %v4760, %v4756
      %v4805 = vpack.c.bf16 %v4765, %v4761
      %v4806 = vpack.c.bf16 %v4766, %v4762
      %v4807 = vpack.c.bf16 %v4767, %v4763
      %v4808 = vpack.c.bf16 %v4768, %v4764
      %v4809 = vpack.c.bf16 %v4773, %v4769
      %v4810 = vpack.c.bf16 %v4774, %v4770
      %v4811 = vpack.c.bf16 %v4775, %v4771
      %v4812 = vpack.c.bf16 %v4776, %v4772
      %v4813 = vpack.c.bf16 %v4781, %v4777
      %v4814 = vpack.c.bf16 %v4782, %v4778
      %v4815 = vpack.c.bf16 %v4783, %v4779
      %v4816 = vpack.c.bf16 %v4784, %v4780
      %v4817 = vld [vmem:[%s4] sm:$0xf]
      %v4818 = vld [vmem:[%s4 + $0x4] sm:$0xf]
      %v4819 = vld [vmem:[%s4 + $0x8] sm:$0xf]
      %v4820 = vld [vmem:[%s4 + $0xc] sm:$0xf]
      %v4821 = vld [vmem:[%s4 + $0x10] sm:$0xf]
      %v4822 = vld [vmem:[%s4 + $0x14] sm:$0xf]
      %v4823 = vld [vmem:[%s4 + $0x18] sm:$0xf]
      %v4824 = vld [vmem:[%s4 + $0x1c] sm:$0xf]
      %v4825 = vld [vmem:[%s4 + $0x20] sm:$0xf]
      %v4826 = vld [vmem:[%s4 + $0x24] sm:$0xf]
      %v4827 = vld [vmem:[%s4 + $0x28] sm:$0xf]
      %v4828 = vld [vmem:[%s4 + $0x2c] sm:$0xf]
      %v4829 = vld [vmem:[%s4 + $0x30] sm:$0xf]
      %v4830 = vld [vmem:[%s4 + $0x34] sm:$0xf]
      %v4831 = vld [vmem:[%s4 + $0x38] sm:$0xf]
      %v4832 = vld [vmem:[%s4 + $0x3c] sm:$0xf]
      %v4833 = vld [vmem:[%s4 + $0x40] sm:$0xf]
      %v4834 = vld [vmem:[%s4 + $0x44] sm:$0xf]
      %v4835 = vld [vmem:[%s4 + $0x48] sm:$0xf]
      %v4836 = vld [vmem:[%s4 + $0x4c] sm:$0xf]
      %v4837 = vld [vmem:[%s4 + $0x50] sm:$0xf]
      %v4838 = vld [vmem:[%s4 + $0x54] sm:$0xf]
      %v4839 = vld [vmem:[%s4 + $0x58] sm:$0xf]
      %v4840 = vld [vmem:[%s4 + $0x5c] sm:$0xf]
      %v4841 = vld [vmem:[%s4 + $0x60] sm:$0xf]
      %v4842 = vld [vmem:[%s4 + $0x64] sm:$0xf]
      %v4843 = vld [vmem:[%s4 + $0x68] sm:$0xf]
      %v4844 = vld [vmem:[%s4 + $0x6c] sm:$0xf]
      %v4845 = vld [vmem:[%s4 + $0x70] sm:$0xf]
      %v4846 = vld [vmem:[%s4 + $0x74] sm:$0xf]
      %v4847 = vld [vmem:[%s4 + $0x78] sm:$0xf]
      %v4848 = vld [vmem:[%s4 + $0x7c] sm:$0xf]
      %v4849 = vld [vmem:[%s4 + $0x80] sm:$0xf]
      %v4850 = vld [vmem:[%s4 + $0x84] sm:$0xf]
      %v4851 = vld [vmem:[%s4 + $0x88] sm:$0xf]
      %v4852 = vld [vmem:[%s4 + $0x8c] sm:$0xf]
      %v4853 = vld [vmem:[%s4 + $0x90] sm:$0xf]
      %v4854 = vld [vmem:[%s4 + $0x94] sm:$0xf]
      %v4855 = vld [vmem:[%s4 + $0x98] sm:$0xf]
      %v4856 = vld [vmem:[%s4 + $0x9c] sm:$0xf]
      %v4857 = vld [vmem:[%s4 + $0xa0] sm:$0xf]
      %v4858 = vld [vmem:[%s4 + $0xa4] sm:$0xf]
      %v4859 = vld [vmem:[%s4 + $0xa8] sm:$0xf]
      %v4860 = vld [vmem:[%s4 + $0xac] sm:$0xf]
      %v4861 = vld [vmem:[%s4 + $0xb0] sm:$0xf]
      %v4862 = vld [vmem:[%s4 + $0xb4] sm:$0xf]
      %v4863 = vld [vmem:[%s4 + $0xb8] sm:$0xf]
      %v4864 = vld [vmem:[%s4 + $0xbc] sm:$0xf]
      %v4865 = vld [vmem:[%s4 + $0xc0] sm:$0xf]
      %v4866 = vld [vmem:[%s4 + $0xc4] sm:$0xf]
      %v4867 = vld [vmem:[%s4 + $0xc8] sm:$0xf]
      %v4868 = vld [vmem:[%s4 + $0xcc] sm:$0xf]
      %v4869 = vld [vmem:[%s4 + $0xd0] sm:$0xf]
      %v4870 = vld [vmem:[%s4 + $0xd4] sm:$0xf]
      %v4871 = vld [vmem:[%s4 + $0xd8] sm:$0xf]
      %v4872 = vld [vmem:[%s4 + $0xdc] sm:$0xf]
      %v4873 = vld [vmem:[%s4 + $0xe0] sm:$0xf]
      %v4874 = vld [vmem:[%s4 + $0xe4] sm:$0xf]
      %v4875 = vld [vmem:[%s4 + $0xe8] sm:$0xf]
      %v4876 = vld [vmem:[%s4 + $0xec] sm:$0xf]
      %v4877 = vld [vmem:[%s4 + $0xf0] sm:$0xf]
      %v4878 = vld [vmem:[%s4 + $0xf4] sm:$0xf]
      %v4879 = vld [vmem:[%s4 + $0xf8] sm:$0xf]
      %v4880 = vld [vmem:[%s4 + $0xfc] sm:$0xf]
      %4897 = vrot.lane.b32.xlu0 %v990, 96
      %v4898 = vpop.permute.xlu0 %4897
      %4899 = vrot.lane.b32.xlu0 %v991, 96
      %v4900 = vpop.permute.xlu0 %4899
      %4901 = vrot.lane.b32.xlu0 %v992, 96
      %v4902 = vpop.permute.xlu0 %4901
      %4903 = vrot.lane.b32.xlu0 %v993, 96
      %v4904 = vpop.permute.xlu0 %4903
      %4905 = vrot.lane.b32.xlu0 %v994, 96
      %v4906 = vpop.permute.xlu0 %4905
      %4907 = vrot.lane.b32.xlu0 %v995, 96
      %v4908 = vpop.permute.xlu0 %4907
      %4909 = vrot.lane.b32.xlu0 %v996, 96
      %v4910 = vpop.permute.xlu0 %4909
      %4911 = vrot.lane.b32.xlu0 %v997, 96
      %v4912 = vpop.permute.xlu0 %4911
      %4913 = vrot.lane.b32.xlu0 %v998, 96
      %v4914 = vpop.permute.xlu0 %4913
      %4915 = vrot.lane.b32.xlu0 %v999, 96
      %v4916 = vpop.permute.xlu0 %4915
      %4917 = vrot.lane.b32.xlu0 %v1000, 96
      %v4918 = vpop.permute.xlu0 %4917
      %4919 = vrot.lane.b32.xlu0 %v1001, 96
      %v4920 = vpop.permute.xlu0 %4919
      %4921 = vrot.lane.b32.xlu0 %v1002, 96
      %v4922 = vpop.permute.xlu0 %4921
      %4923 = vrot.lane.b32.xlu0 %v1003, 96
      %v4924 = vpop.permute.xlu0 %4923
      %4925 = vrot.lane.b32.xlu0 %v1004, 96
      %v4926 = vpop.permute.xlu0 %4925
      %4927 = vrot.lane.b32.xlu0 %v1005, 96
      %v4928 = vpop.permute.xlu0 %4927
      %v4945 = vmul.f32 %v260, %v4898
      %v4946 = vmul.f32 %v260, %v4900
      %v4947 = vmul.f32 %v260, %v4902
      %v4948 = vmul.f32 %v260, %v4904
      %v4949 = vmul.f32 %v260, %v4906
      %v4950 = vmul.f32 %v260, %v4908
      %v4951 = vmul.f32 %v260, %v4910
      %v4952 = vmul.f32 %v260, %v4912
      %v4953 = vmul.f32 %v260, %v4914
      %v4954 = vmul.f32 %v260, %v4916
      %v4955 = vmul.f32 %v260, %v4918
      %v4956 = vmul.f32 %v260, %v4920
      %v4957 = vmul.f32 %v260, %v4922
      %v4958 = vmul.f32 %v260, %v4924
      %v4959 = vmul.f32 %v260, %v4926
      %v4960 = vmul.f32 %v260, %v4928
      %v5025 = vunpack.c.l.b16 %v4817
      %v5026 = vunpack.c.l.b16 %v4818
      %v5027 = vunpack.c.l.b16 %v4819
      %v5028 = vunpack.c.l.b16 %v4820
      %v5029 = vunpack.c.l.b16 %v4821
      %v5030 = vunpack.c.l.b16 %v4822
      %v5031 = vunpack.c.l.b16 %v4823
      %v5032 = vunpack.c.l.b16 %v4824
      %v5033 = vunpack.c.l.b16 %v4825
      %v5034 = vunpack.c.l.b16 %v4826
      %v5035 = vunpack.c.l.b16 %v4827
      %v5036 = vunpack.c.l.b16 %v4828
      %v5037 = vunpack.c.l.b16 %v4829
      %v5038 = vunpack.c.l.b16 %v4830
      %v5039 = vunpack.c.l.b16 %v4831
      %v5040 = vunpack.c.l.b16 %v4832
      %v5041 = vunpack.c.l.b16 %v4833
      %v5042 = vunpack.c.l.b16 %v4834
      %v5043 = vunpack.c.l.b16 %v4835
      %v5044 = vunpack.c.l.b16 %v4836
      %v5045 = vunpack.c.l.b16 %v4837
      %v5046 = vunpack.c.l.b16 %v4838
      %v5047 = vunpack.c.l.b16 %v4839
      %v5048 = vunpack.c.l.b16 %v4840
      %v5049 = vunpack.c.l.b16 %v4841
      %v5050 = vunpack.c.l.b16 %v4842
      %v5051 = vunpack.c.l.b16 %v4843
      %v5052 = vunpack.c.l.b16 %v4844
      %v5053 = vunpack.c.l.b16 %v4845
      %v5054 = vunpack.c.l.b16 %v4846
      %v5055 = vunpack.c.l.b16 %v4847
      %v5056 = vunpack.c.l.b16 %v4848
      %v5057 = vunpack.c.l.b16 %v4849
      %v5058 = vunpack.c.l.b16 %v4850
      %v5059 = vunpack.c.l.b16 %v4851
      %v5060 = vunpack.c.l.b16 %v4852
      %v5061 = vunpack.c.l.b16 %v4853
      %v5062 = vunpack.c.l.b16 %v4854
      %v5063 = vunpack.c.l.b16 %v4855
      %v5064 = vunpack.c.l.b16 %v4856
      %v5065 = vunpack.c.l.b16 %v4857
      %v5066 = vunpack.c.l.b16 %v4858
      %v5067 = vunpack.c.l.b16 %v4859
      %v5068 = vunpack.c.l.b16 %v4860
      %v5069 = vunpack.c.l.b16 %v4861
      %v5070 = vunpack.c.l.b16 %v4862
      %v5071 = vunpack.c.l.b16 %v4863
      %v5072 = vunpack.c.l.b16 %v4864
      %v5073 = vunpack.c.l.b16 %v4865
      %v5074 = vunpack.c.l.b16 %v4866
      %v5075 = vunpack.c.l.b16 %v4867
      %v5076 = vunpack.c.l.b16 %v4868
      %v5077 = vunpack.c.l.b16 %v4869
      %v5078 = vunpack.c.l.b16 %v4870
      %v5079 = vunpack.c.l.b16 %v4871
      %v5080 = vunpack.c.l.b16 %v4872
      %v5081 = vunpack.c.l.b16 %v4873
      %v5082 = vunpack.c.l.b16 %v4874
      %v5083 = vunpack.c.l.b16 %v4875
      %v5084 = vunpack.c.l.b16 %v4876
      %v5085 = vunpack.c.l.b16 %v4877
      %v5086 = vunpack.c.l.b16 %v4878
      %v5087 = vunpack.c.l.b16 %v4879
      %v5088 = vunpack.c.l.b16 %v4880
      %v5089 = vpack.c.b16 %v5026, %v5025
      %v5090 = vpack.c.b16 %v5028, %v5027
      %v5091 = vpack.c.b16 %v5030, %v5029
      %v5092 = vpack.c.b16 %v5032, %v5031
      %v5093 = vpack.c.b16 %v5034, %v5033
      %v5094 = vpack.c.b16 %v5036, %v5035
      %v5095 = vpack.c.b16 %v5038, %v5037
      %v5096 = vpack.c.b16 %v5040, %v5039
      %v5097 = vpack.c.b16 %v5042, %v5041
      %v5098 = vpack.c.b16 %v5044, %v5043
      %v5099 = vpack.c.b16 %v5046, %v5045
      %v5100 = vpack.c.b16 %v5048, %v5047
      %v5101 = vpack.c.b16 %v5050, %v5049
      %v5102 = vpack.c.b16 %v5052, %v5051
      %v5103 = vpack.c.b16 %v5054, %v5053
      %v5104 = vpack.c.b16 %v5056, %v5055
      %v5105 = vpack.c.b16 %v5058, %v5057
      %v5106 = vpack.c.b16 %v5060, %v5059
      %v5107 = vpack.c.b16 %v5062, %v5061
      %v5108 = vpack.c.b16 %v5064, %v5063
      %v5109 = vpack.c.b16 %v5066, %v5065
      %v5110 = vpack.c.b16 %v5068, %v5067
      %v5111 = vpack.c.b16 %v5070, %v5069
      %v5112 = vpack.c.b16 %v5072, %v5071
      %v5113 = vpack.c.b16 %v5074, %v5073
      %v5114 = vpack.c.b16 %v5076, %v5075
      %v5115 = vpack.c.b16 %v5078, %v5077
      %v5116 = vpack.c.b16 %v5080, %v5079
      %v5117 = vpack.c.b16 %v5082, %v5081
      %v5118 = vpack.c.b16 %v5084, %v5083
      %v5119 = vpack.c.b16 %v5086, %v5085
      %v5120 = vpack.c.b16 %v5088, %v5087
      %5153 = vmatprep.subr.bf16.mxu0 0
      %5154 = vmatpush1.bf16.msra.mxu0 %v5089
      %5155 = vmatprep.subr.bf16.mxu0 0
      %5156 = vmatpush1.bf16.msra.mxu0 %v5090
      %5157 = vmatprep.subr.bf16.mxu0 0
      %5158 = vmatpush1.bf16.msra.mxu0 %v5091
      %5159 = vmatprep.subr.bf16.mxu0 0
      %5160 = vmatpush1.bf16.msra.mxu0 %v5092
      %5161 = vmatprep.subr.bf16.mxu0 0
      %5162 = vmatpush1.bf16.msra.mxu0 %v5093
      %5163 = vmatprep.subr.bf16.mxu0 0
      %5164 = vmatpush1.bf16.msra.mxu0 %v5094
      %5165 = vmatprep.subr.bf16.mxu0 0
      %5166 = vmatpush1.bf16.msra.mxu0 %v5095
      %5167 = vmatprep.subr.bf16.mxu0 0
      %5168 = vmatpush1.bf16.msra.mxu0 %v5096
      %5169 = vmatprep.subr.bf16.mxu0 0
      %5170 = vmatpush1.bf16.msra.mxu0 %v5097
      %5171 = vmatprep.subr.bf16.mxu0 0
      %5172 = vmatpush1.bf16.msra.mxu0 %v5098
      %5173 = vmatprep.subr.bf16.mxu0 0
      %5174 = vmatpush1.bf16.msra.mxu0 %v5099
      %5175 = vmatprep.subr.bf16.mxu0 0
      %5176 = vmatpush1.bf16.msra.mxu0 %v5100
      %5177 = vmatprep.subr.bf16.mxu0 0
      %5178 = vmatpush1.bf16.msra.mxu0 %v5101
      %5179 = vmatprep.subr.bf16.mxu0 0
      %5180 = vmatpush1.bf16.msra.mxu0 %v5102
      %5181 = vmatprep.subr.bf16.mxu0 0
      %5182 = vmatpush1.bf16.msra.mxu0 %v5103
      %5183 = vmatprep.subr.bf16.mxu0 0
      %5184 = vmatpush1.bf16.msra.mxu0 %v5104
      %5185 = vmatprep.mubr.bf16.mxu0 %v4786
      %5186 = vmatmul.mubr.bf16.gmra.mrb[0].mxu0 %v4785
      %v5187 = vpop.f32.mrb[0].mxu0
      %v5188 = vadd.f32 %v4945, %v5187
      %v5189 = vpop.f32.mrb[0].mxu0
      %v5190 = vpop.f32.mrb[0].mxu0
      %v5191 = vadd.f32 %v4946, %v5190
      %v5192 = vpop.f32.mrb[0].mxu0
      %5193 = vmatprep.mubr.bf16.mxu0 %v4790
      %5194 = vmatmul.mubr.bf16.gmra.mrb[0].mxu0 %v4789
      %v5195 = vpop.f32.mrb[0].mxu0
      %v5196 = vadd.f32 %v4947, %v5195
      %v5197 = vpop.f32.mrb[0].mxu0
      %v5198 = vpop.f32.mrb[0].mxu0
      %v5199 = vadd.f32 %v4948, %v5198
      %v5200 = vpop.f32.mrb[0].mxu0
      %5201 = vmatprep.mubr.bf16.mxu0 %v4794
      %5202 = vmatmul.mubr.bf16.gmra.mrb[0].mxu0 %v4793
      %v5203 = vpop.f32.mrb[0].mxu0
      %v5204 = vadd.f32 %v4949, %v5203
      %v5205 = vpop.f32.mrb[0].mxu0
      %v5206 = vpop.f32.mrb[0].mxu0
      %v5207 = vadd.f32 %v4950, %v5206
      %v5208 = vpop.f32.mrb[0].mxu0
      %5209 = vmatprep.mubr.bf16.mxu0 %v4798
      %5210 = vmatmul.mubr.bf16.gmra.mrb[0].mxu0 %v4797
      %v5211 = vpop.f32.mrb[0].mxu0
      %v5212 = vadd.f32 %v4951, %v5211
      %v5213 = vpop.f32.mrb[0].mxu0
      %v5214 = vpop.f32.mrb[0].mxu0
      %v5215 = vadd.f32 %v4952, %v5214
      %v5216 = vpop.f32.mrb[0].mxu0
      %5217 = vmatprep.mubr.bf16.mxu0 %v4802
      %5218 = vmatmul.mubr.bf16.gmra.mrb[0].mxu0 %v4801
      %v5219 = vpop.f32.mrb[0].mxu0
      %v5220 = vadd.f32 %v4953, %v5219
      %v5221 = vpop.f32.mrb[0].mxu0
      %v5222 = vpop.f32.mrb[0].mxu0
      %v5223 = vadd.f32 %v4954, %v5222
      %v5224 = vpop.f32.mrb[0].mxu0
      %5225 = vmatprep.mubr.bf16.mxu0 %v4806
      %5226 = vmatmul.mubr.bf16.gmra.mrb[0].mxu0 %v4805
      %v5227 = vpop.f32.mrb[0].mxu0
      %v5228 = vadd.f32 %v4955, %v5227
      %v5229 = vpop.f32.mrb[0].mxu0
      %v5230 = vpop.f32.mrb[0].mxu0
      %v5231 = vadd.f32 %v4956, %v5230
      %v5232 = vpop.f32.mrb[0].mxu0
      %5233 = vmatprep.mubr.bf16.mxu0 %v4810
      %5234 = vmatmul.mubr.bf16.gmra.mrb[0].mxu0 %v4809
      %v5235 = vpop.f32.mrb[0].mxu0
      %v5236 = vadd.f32 %v4957, %v5235
      %v5237 = vpop.f32.mrb[0].mxu0
      %v5238 = vpop.f32.mrb[0].mxu0
      %v5239 = vadd.f32 %v4958, %v5238
      %v5240 = vpop.f32.mrb[0].mxu0
      %5241 = vmatprep.mubr.bf16.mxu0 %v4814
      %5242 = vmatmul.mubr.bf16.gmra.mrb[0].mxu0 %v4813
      %v5243 = vpop.f32.mrb[0].mxu0
      %v5244 = vadd.f32 %v4959, %v5243
      %v5245 = vpop.f32.mrb[0].mxu0
      %v5246 = vpop.f32.mrb[0].mxu0
      %v5247 = vadd.f32 %v4960, %v5246
      %v5248 = vpop.f32.mrb[0].mxu0
      %5249 = vdwg.mxu0
      %5250 = vmatprep.subr.bf16.mxu0 0
      %5251 = vmatpush1.bf16.msra.mxu0 %v5105
      %5252 = vmatprep.subr.bf16.mxu0 0
      %5253 = vmatpush1.bf16.msra.mxu0 %v5106
      %5254 = vmatprep.subr.bf16.mxu0 0
      %5255 = vmatpush1.bf16.msra.mxu0 %v5107
      %5256 = vmatprep.subr.bf16.mxu0 0
      %5257 = vmatpush1.bf16.msra.mxu0 %v5108
      %5258 = vmatprep.subr.bf16.mxu0 0
      %5259 = vmatpush1.bf16.msra.mxu0 %v5109
      %5260 = vmatprep.subr.bf16.mxu0 0
      %5261 = vmatpush1.bf16.msra.mxu0 %v5110
      %5262 = vmatprep.subr.bf16.mxu0 0
      %5263 = vmatpush1.bf16.msra.mxu0 %v5111
      %5264 = vmatprep.subr.bf16.mxu0 0
      %5265 = vmatpush1.bf16.msra.mxu0 %v5112
      %5266 = vmatprep.subr.bf16.mxu0 0
      %5267 = vmatpush1.bf16.msra.mxu0 %v5113
      %5268 = vmatprep.subr.bf16.mxu0 0
      %5269 = vmatpush1.bf16.msra.mxu0 %v5114
      %5270 = vmatprep.subr.bf16.mxu0 0
      %5271 = vmatpush1.bf16.msra.mxu0 %v5115
      %5272 = vmatprep.subr.bf16.mxu0 0
      %5273 = vmatpush1.bf16.msra.mxu0 %v5116
      %5274 = vmatprep.subr.bf16.mxu0 0
      %5275 = vmatpush1.bf16.msra.mxu0 %v5117
      %5276 = vmatprep.subr.bf16.mxu0 0
      %5277 = vmatpush1.bf16.msra.mxu0 %v5118
      %5278 = vmatprep.subr.bf16.mxu0 0
      %5279 = vmatpush1.bf16.msra.mxu0 %v5119
      %5280 = vmatprep.subr.bf16.mxu0 0
      %5281 = vmatpush1.bf16.msra.mxu0 %v5120
      %5282 = vmatprep.mubr.bf16.mxu0 %v4788
      %5283 = vmatmul.mubr.bf16.gmra.mrb[0].mxu0 %v4787
      %v5284 = vpop.f32.mrb[0].mxu0
      %v5285 = vadd.f32 %v5188, %v5284
      %v5286 = vpop.f32.mrb[0].mxu0
      %v5287 = vpop.f32.mrb[0].mxu0
      %v5288 = vadd.f32 %v5191, %v5287
      %v5289 = vpop.f32.mrb[0].mxu0
      %5290 = vmatprep.mubr.bf16.mxu0 %v4792
      %5291 = vmatmul.mubr.bf16.gmra.mrb[0].mxu0 %v4791
      %v5292 = vpop.f32.mrb[0].mxu0
      %v5293 = vadd.f32 %v5196, %v5292
      %v5294 = vpop.f32.mrb[0].mxu0
      %v5295 = vpop.f32.mrb[0].mxu0
      %v5296 = vadd.f32 %v5199, %v5295
      %v5297 = vpop.f32.mrb[0].mxu0
      %5298 = vmatprep.mubr.bf16.mxu0 %v4796
      %5299 = vmatmul.mubr.bf16.gmra.mrb[0].mxu0 %v4795
      %v5300 = vpop.f32.mrb[0].mxu0
      %v5301 = vadd.f32 %v5204, %v5300
      %v5302 = vpop.f32.mrb[0].mxu0
      %v5303 = vpop.f32.mrb[0].mxu0
      %v5304 = vadd.f32 %v5207, %v5303
      %v5305 = vpop.f32.mrb[0].mxu0
      %5306 = vmatprep.mubr.bf16.mxu0 %v4800
      %5307 = vmatmul.mubr.bf16.gmra.mrb[0].mxu0 %v4799
      %v5308 = vpop.f32.mrb[0].mxu0
      %v5309 = vadd.f32 %v5212, %v5308
      %v5310 = vpop.f32.mrb[0].mxu0
      %v5311 = vpop.f32.mrb[0].mxu0
      %v5312 = vadd.f32 %v5215, %v5311
      %v5313 = vpop.f32.mrb[0].mxu0
      %5314 = vmatprep.mubr.bf16.mxu0 %v4804
      %5315 = vmatmul.mubr.bf16.gmra.mrb[0].mxu0 %v4803
      %v5316 = vpop.f32.mrb[0].mxu0
      %v5317 = vadd.f32 %v5220, %v5316
      %v5318 = vpop.f32.mrb[0].mxu0
      %v5319 = vpop.f32.mrb[0].mxu0
      %v5320 = vadd.f32 %v5223, %v5319
      %v5321 = vpop.f32.mrb[0].mxu0
      %5322 = vmatprep.mubr.bf16.mxu0 %v4808
      %5323 = vmatmul.mubr.bf16.gmra.mrb[0].mxu0 %v4807
      %v5324 = vpop.f32.mrb[0].mxu0
      %v5325 = vadd.f32 %v5228, %v5324
      %v5326 = vpop.f32.mrb[0].mxu0
      %v5327 = vpop.f32.mrb[0].mxu0
      %v5328 = vadd.f32 %v5231, %v5327
      %v5329 = vpop.f32.mrb[0].mxu0
      %5330 = vmatprep.mubr.bf16.mxu0 %v4812
      %5331 = vmatmul.mubr.bf16.gmra.mrb[0].mxu0 %v4811
      %v5332 = vpop.f32.mrb[0].mxu0
      %v5333 = vadd.f32 %v5236, %v5332
      %v5334 = vpop.f32.mrb[0].mxu0
      %v5335 = vpop.f32.mrb[0].mxu0
      %v5336 = vadd.f32 %v5239, %v5335
      %v5337 = vpop.f32.mrb[0].mxu0
      %5338 = vmatprep.mubr.bf16.mxu0 %v4816
      %5339 = vmatmul.mubr.bf16.gmra.mrb[0].mxu0 %v4815
      %v5340 = vpop.f32.mrb[0].mxu0
      %v5341 = vadd.f32 %v5244, %v5340
      %v5342 = vpop.f32.mrb[0].mxu0
      %v5343 = vpop.f32.mrb[0].mxu0
      %v5344 = vadd.f32 %v5247, %v5343
      %v5345 = vpop.f32.mrb[0].mxu0
      %5346 = vdwg.mxu0
      %v5347 = vxor.u32 %v506, 2147483648
      %v5348 = vxor.u32 %v509, 2147483648
      %v5349 = vxor.u32 %v514, 2147483648
      %v5350 = vxor.u32 %v517, 2147483648
      %v5351 = vxor.u32 %v522, 2147483648
      %v5352 = vxor.u32 %v525, 2147483648
      %v5353 = vxor.u32 %v530, 2147483648
      %v5354 = vxor.u32 %v533, 2147483648
      %v5355 = vxor.u32 %v538, 2147483648
      %v5356 = vxor.u32 %v541, 2147483648
      %v5357 = vxor.u32 %v546, 2147483648
      %v5358 = vxor.u32 %v549, 2147483648
      %v5359 = vxor.u32 %v554, 2147483648
      %v5360 = vxor.u32 %v557, 2147483648
      %v5361 = vxor.u32 %v562, 2147483648
      %v5362 = vxor.u32 %v565, 2147483648
      %v5363 = vmul.f32 %v5347, 1.442695
      %v5364 = vpow.pop %v5363
      %v5365 = vmul.f32 %v5348, 1.442695
      %v5366 = vpow.pop %v5365
      %v5367 = vmul.f32 %v5349, 1.442695
      %v5368 = vpow.pop %v5367
      %v5369 = vmul.f32 %v5350, 1.442695
      %v5370 = vpow.pop %v5369
      %v5371 = vmul.f32 %v5351, 1.442695
      %v5372 = vpow.pop %v5371
      %v5373 = vmul.f32 %v5352, 1.442695
      %v5374 = vpow.pop %v5373
      %v5375 = vmul.f32 %v5353, 1.442695
      %v5376 = vpow.pop %v5375
      %v5377 = vmul.f32 %v5354, 1.442695
      %v5378 = vpow.pop %v5377
      %v5379 = vmul.f32 %v5355, 1.442695
      %v5380 = vpow.pop %v5379
      %v5381 = vmul.f32 %v5356, 1.442695
      %v5382 = vpow.pop %v5381
      %v5383 = vmul.f32 %v5357, 1.442695
      %v5384 = vpow.pop %v5383
      %v5385 = vmul.f32 %v5358, 1.442695
      %v5386 = vpow.pop %v5385
      %v5387 = vmul.f32 %v5359, 1.442695
      %v5388 = vpow.pop %v5387
      %v5389 = vmul.f32 %v5360, 1.442695
      %v5390 = vpow.pop %v5389
      %v5391 = vmul.f32 %v5361, 1.442695
      %v5392 = vpow.pop %v5391
      %v5393 = vmul.f32 %v5362, 1.442695
      %v5394 = vpow.pop %v5393
      %v5395 = vadd.f32 %v5364, 1.0
      %v5396 = vadd.f32 %v5366, 1.0
      %v5397 = vadd.f32 %v5368, 1.0
      %v5398 = vadd.f32 %v5370, 1.0
      %v5399 = vadd.f32 %v5372, 1.0
      %v5400 = vadd.f32 %v5374, 1.0
      %v5401 = vadd.f32 %v5376, 1.0
      %v5402 = vadd.f32 %v5378, 1.0
      %v5403 = vadd.f32 %v5380, 1.0
      %v5404 = vadd.f32 %v5382, 1.0
      %v5405 = vadd.f32 %v5384, 1.0
      %v5406 = vadd.f32 %v5386, 1.0
      %v5407 = vadd.f32 %v5388, 1.0
      %v5408 = vadd.f32 %v5390, 1.0
      %v5409 = vadd.f32 %v5392, 1.0
      %v5410 = vadd.f32 %v5394, 1.0
      %v5411 = vrcp.pop %v5395
      %v5412 = vmul.f32 1.0, %v5411
      %v5413 = vrcp.pop %v5396
      %v5414 = vmul.f32 1.0, %v5413
      %v5415 = vrcp.pop %v5397
      %v5416 = vmul.f32 1.0, %v5415
      %v5417 = vrcp.pop %v5398
      %v5418 = vmul.f32 1.0, %v5417
      %v5419 = vrcp.pop %v5399
      %v5420 = vmul.f32 1.0, %v5419
      %v5421 = vrcp.pop %v5400
      %v5422 = vmul.f32 1.0, %v5421
      %v5423 = vrcp.pop %v5401
      %v5424 = vmul.f32 1.0, %v5423
      %v5425 = vrcp.pop %v5402
      %v5426 = vmul.f32 1.0, %v5425
      %v5427 = vrcp.pop %v5403
      %v5428 = vmul.f32 1.0, %v5427
      %v5429 = vrcp.pop %v5404
      %v5430 = vmul.f32 1.0, %v5429
      %v5431 = vrcp.pop %v5405
      %v5432 = vmul.f32 1.0, %v5431
      %v5433 = vrcp.pop %v5406
      %v5434 = vmul.f32 1.0, %v5433
      %v5435 = vrcp.pop %v5407
      %v5436 = vmul.f32 1.0, %v5435
      %v5437 = vrcp.pop %v5408
      %v5438 = vmul.f32 1.0, %v5437
      %v5439 = vrcp.pop %v5409
      %v5440 = vmul.f32 1.0, %v5439
      %v5441 = vrcp.pop %v5410
      %v5442 = vmul.f32 1.0, %v5441
      %v5443 = vmul.f32 %v506, %v5412
      %v5444 = vmul.f32 %v509, %v5414
      %v5445 = vmul.f32 %v514, %v5416
      %v5446 = vmul.f32 %v517, %v5418
      %v5447 = vmul.f32 %v522, %v5420
      %v5448 = vmul.f32 %v525, %v5422
      %v5449 = vmul.f32 %v530, %v5424
      %v5450 = vmul.f32 %v533, %v5426
      %v5451 = vmul.f32 %v538, %v5428
      %v5452 = vmul.f32 %v541, %v5430
      %v5453 = vmul.f32 %v546, %v5432
      %v5454 = vmul.f32 %v549, %v5434
      %v5455 = vmul.f32 %v554, %v5436
      %v5456 = vmul.f32 %v557, %v5438
      %v5457 = vmul.f32 %v562, %v5440
      %v5458 = vmul.f32 %v565, %v5442
      %v5459 = vmul.f32 %v5285, %v5443
      %v5460 = vmul.f32 %v5288, %v5444
      %v5461 = vmul.f32 %v5293, %v5445
      %v5462 = vmul.f32 %v5296, %v5446
      %v5463 = vmul.f32 %v5301, %v5447
      %v5464 = vmul.f32 %v5304, %v5448
      %v5465 = vmul.f32 %v5309, %v5449
      %v5466 = vmul.f32 %v5312, %v5450
      %v5467 = vmul.f32 %v5317, %v5451
      %v5468 = vmul.f32 %v5320, %v5452
      %v5469 = vmul.f32 %v5325, %v5453
      %v5470 = vmul.f32 %v5328, %v5454
      %v5471 = vmul.f32 %v5333, %v5455
      %v5472 = vmul.f32 %v5336, %v5456
      %v5473 = vmul.f32 %v5341, %v5457
      %v5474 = vmul.f32 %v5344, %v5458
      %v5475 = vpack.c.bf16 %v5460, %v5459
      %v5476 = vpack.c.bf16 %v5462, %v5461
      %v5477 = vpack.c.bf16 %v5464, %v5463
      %v5478 = vpack.c.bf16 %v5466, %v5465
      %v5479 = vpack.c.bf16 %v5468, %v5467
      %v5480 = vpack.c.bf16 %v5470, %v5469
      %v5481 = vpack.c.bf16 %v5472, %v5471
      %v5482 = vpack.c.bf16 %v5474, %v5473
      %v5483 = vld [vmem:[%s2 + $0x20] sm:$0xf]
      %v5484 = vld [vmem:[%s2 + $0x24] sm:$0xf]
      %v5485 = vld [vmem:[%s2 + $0x28] sm:$0xf]
      %v5486 = vld [vmem:[%s2 + $0x2c] sm:$0xf]
      %v5491 = vunpack.c.l.b16 %v5483
      %v5492 = vunpack.c.l.b16 %v5484
      %v5493 = vunpack.c.l.b16 %v5485
      %v5494 = vunpack.c.l.b16 %v5486
      %v5495 = vpack.c.b16 %v5492, %v5491
      %v5496 = vpack.c.b16 %v5494, %v5493
      %v5500 = vsel %vm293, %v5475, 0
      %v5503 = vsel %vm293, %v5476, 0
      %v5506 = vsel %vm293, %v5477, 0
      %v5509 = vsel %vm293, %v5478, 0
      %v5512 = vsel %vm293, %v5479, 0
      %v5515 = vsel %vm293, %v5480, 0
      %v5518 = vsel %vm293, %v5481, 0
      %v5521 = vsel %vm293, %v5482, 0
      %5523 = vmatprep.subr.bf16.mxu0 0
      %5524 = vmatpush1.bf16.msra.mxu0 %v5495
      %5525 = vmatprep.subr.bf16.mxu0 0
      %5526 = vmatpush1.bf16.msra.mxu0 %v5496
      %5527 = vmatprep.subr.bf16.mxu0 0
      %5528 = vmatpush1.bf16.msra.mxu0 0
      %5529 = vmatprep.subr.bf16.mxu0 0
      %5530 = vmatpush1.bf16.msra.mxu0 0
      %5531 = vmatprep.subr.bf16.mxu0 0
      %5532 = vmatpush1.bf16.msra.mxu0 0
      %5533 = vmatprep.subr.bf16.mxu0 0
      %5534 = vmatpush1.bf16.msra.mxu0 0
      %5535 = vmatprep.subr.bf16.mxu0 0
      %5536 = vmatpush1.bf16.msra.mxu0 0
      %5537 = vmatprep.subr.bf16.mxu0 0
      %5538 = vmatpush1.bf16.msra.mxu0 0
      %5539 = vmatprep.subr.bf16.mxu0 0
      %5540 = vmatpush1.bf16.msra.mxu0 0
      %5541 = vmatprep.subr.bf16.mxu0 0
      %5542 = vmatpush1.bf16.msra.mxu0 0
      %5543 = vmatprep.subr.bf16.mxu0 0
      %5544 = vmatpush1.bf16.msra.mxu0 0
      %5545 = vmatprep.subr.bf16.mxu0 0
      %5546 = vmatpush1.bf16.msra.mxu0 0
      %5547 = vmatprep.subr.bf16.mxu0 0
      %5548 = vmatpush1.bf16.msra.mxu0 0
      %5549 = vmatprep.subr.bf16.mxu0 0
      %5550 = vmatpush1.bf16.msra.mxu0 0
      %5551 = vmatprep.subr.bf16.mxu0 0
      %5552 = vmatpush1.bf16.msra.mxu0 0
      %5553 = vmatprep.subr.bf16.mxu0 0
      %5554 = vmatpush1.bf16.msra.mxu0 0
      %5555 = vmatprep.mubr.bf16.mxu0 0
      %5556 = vmatmul.mubr.bf16.gmra.mrb[0].mxu0 %v5500
      %v5557 = vpop.f32.mrb[0].mxu0
      %v5558 = vadd.f32 0.0, %v5557
      %v5559 = vpop.f32.mrb[0].mxu0
      %v5560 = vpop.f32.mrb[0].mxu0
      %v5561 = vadd.f32 0.0, %v5560
      %v5562 = vpop.f32.mrb[0].mxu0
      %5563 = vmatprep.mubr.bf16.mxu0 0
      %5564 = vmatmul.mubr.bf16.gmra.mrb[0].mxu0 %v5503
      %v5565 = vpop.f32.mrb[0].mxu0
      %v5566 = vadd.f32 0.0, %v5565
      %v5567 = vpop.f32.mrb[0].mxu0
      %v5568 = vpop.f32.mrb[0].mxu0
      %v5569 = vadd.f32 0.0, %v5568
      %v5570 = vpop.f32.mrb[0].mxu0
      %5571 = vmatprep.mubr.bf16.mxu0 0
      %5572 = vmatmul.mubr.bf16.gmra.mrb[0].mxu0 %v5506
      %v5573 = vpop.f32.mrb[0].mxu0
      %v5574 = vadd.f32 0.0, %v5573
      %v5575 = vpop.f32.mrb[0].mxu0
      %v5576 = vpop.f32.mrb[0].mxu0
      %v5577 = vadd.f32 0.0, %v5576
      %v5578 = vpop.f32.mrb[0].mxu0
      %5579 = vmatprep.mubr.bf16.mxu0 0
      %5580 = vmatmul.mubr.bf16.gmra.mrb[0].mxu0 %v5509
      %v5581 = vpop.f32.mrb[0].mxu0
      %v5582 = vadd.f32 0.0, %v5581
      %v5583 = vpop.f32.mrb[0].mxu0
      %v5584 = vpop.f32.mrb[0].mxu0
      %v5585 = vadd.f32 0.0, %v5584
      %v5586 = vpop.f32.mrb[0].mxu0
      %5587 = vmatprep.mubr.bf16.mxu0 0
      %5588 = vmatmul.mubr.bf16.gmra.mrb[0].mxu0 %v5512
      %v5589 = vpop.f32.mrb[0].mxu0
      %v5590 = vadd.f32 0.0, %v5589
      %v5591 = vpop.f32.mrb[0].mxu0
      %v5592 = vpop.f32.mrb[0].mxu0
      %v5593 = vadd.f32 0.0, %v5592
      %v5594 = vpop.f32.mrb[0].mxu0
      %5595 = vmatprep.mubr.bf16.mxu0 0
      %5596 = vmatmul.mubr.bf16.gmra.mrb[0].mxu0 %v5515
      %v5597 = vpop.f32.mrb[0].mxu0
      %v5598 = vadd.f32 0.0, %v5597
      %v5599 = vpop.f32.mrb[0].mxu0
      %v5600 = vpop.f32.mrb[0].mxu0
      %v5601 = vadd.f32 0.0, %v5600
      %v5602 = vpop.f32.mrb[0].mxu0
      %5603 = vmatprep.mubr.bf16.mxu0 0
      %5604 = vmatmul.mubr.bf16.gmra.mrb[0].mxu0 %v5518
      %v5605 = vpop.f32.mrb[0].mxu0
      %v5606 = vadd.f32 0.0, %v5605
      %v5607 = vpop.f32.mrb[0].mxu0
      %v5608 = vpop.f32.mrb[0].mxu0
      %v5609 = vadd.f32 0.0, %v5608
      %v5610 = vpop.f32.mrb[0].mxu0
      %5611 = vmatprep.mubr.bf16.mxu0 0
      %5612 = vmatmul.mubr.bf16.gmra.mrb[0].mxu0 %v5521
      %v5613 = vpop.f32.mrb[0].mxu0
      %v5614 = vadd.f32 0.0, %v5613
      %v5615 = vpop.f32.mrb[0].mxu0
      %v5616 = vpop.f32.mrb[0].mxu0
      %v5617 = vadd.f32 0.0, %v5616
      %v5618 = vpop.f32.mrb[0].mxu0
      %5619 = vdwg.mxu0
      %v5620 = vmul.f32 %v5558, %v5558
      %v5621 = vmul.f32 %v5561, %v5561
      %v5622 = vmul.f32 %v5566, %v5566
      %v5623 = vmul.f32 %v5569, %v5569
      %v5624 = vmul.f32 %v5574, %v5574
      %v5625 = vmul.f32 %v5577, %v5577
      %v5626 = vmul.f32 %v5582, %v5582
      %v5627 = vmul.f32 %v5585, %v5585
      %v5628 = vmul.f32 %v5590, %v5590
      %v5629 = vmul.f32 %v5593, %v5593
      %v5630 = vmul.f32 %v5598, %v5598
      %v5631 = vmul.f32 %v5601, %v5601
      %v5632 = vmul.f32 %v5606, %v5606
      %v5633 = vmul.f32 %v5609, %v5609
      %v5634 = vmul.f32 %v5614, %v5614
      %v5635 = vmul.f32 %v5617, %v5617
      %v5636 = vsel %vm293, %v5620, 0.0
      %5637 = vadd.xlane.f32.xlu0 %v5636
      %v5638 = vpop.xlane.xlu0 %5637
      %v5639 = vsel %vm293, %v5621, 0.0
      %5640 = vadd.xlane.f32.xlu0 %v5639
      %v5641 = vpop.xlane.xlu0 %5640
      %v5642 = vsel %vm293, %v5622, 0.0
      %5643 = vadd.xlane.f32.xlu0 %v5642
      %v5644 = vpop.xlane.xlu0 %5643
      %v5645 = vsel %vm293, %v5623, 0.0
      %5646 = vadd.xlane.f32.xlu0 %v5645
      %v5647 = vpop.xlane.xlu0 %5646
      %v5648 = vsel %vm293, %v5624, 0.0
      %5649 = vadd.xlane.f32.xlu0 %v5648
      %v5650 = vpop.xlane.xlu0 %5649
      %v5651 = vsel %vm293, %v5625, 0.0
      %5652 = vadd.xlane.f32.xlu0 %v5651
      %v5653 = vpop.xlane.xlu0 %5652
      %v5654 = vsel %vm293, %v5626, 0.0
      %5655 = vadd.xlane.f32.xlu0 %v5654
      %v5656 = vpop.xlane.xlu0 %5655
      %v5657 = vsel %vm293, %v5627, 0.0
      %5658 = vadd.xlane.f32.xlu0 %v5657
      %v5659 = vpop.xlane.xlu0 %5658
      %v5660 = vsel %vm293, %v5628, 0.0
      %5661 = vadd.xlane.f32.xlu0 %v5660
      %v5662 = vpop.xlane.xlu0 %5661
      %v5663 = vsel %vm293, %v5629, 0.0
      %5664 = vadd.xlane.f32.xlu0 %v5663
      %v5665 = vpop.xlane.xlu0 %5664
      %v5666 = vsel %vm293, %v5630, 0.0
      %5667 = vadd.xlane.f32.xlu0 %v5666
      %v5668 = vpop.xlane.xlu0 %5667
      %v5669 = vsel %vm293, %v5631, 0.0
      %5670 = vadd.xlane.f32.xlu0 %v5669
      %v5671 = vpop.xlane.xlu0 %5670
      %v5672 = vsel %vm293, %v5632, 0.0
      %5673 = vadd.xlane.f32.xlu0 %v5672
      %v5674 = vpop.xlane.xlu0 %5673
      %v5675 = vsel %vm293, %v5633, 0.0
      %5676 = vadd.xlane.f32.xlu0 %v5675
      %v5677 = vpop.xlane.xlu0 %5676
      %v5678 = vsel %vm293, %v5634, 0.0
      %5679 = vadd.xlane.f32.xlu0 %v5678
      %v5680 = vpop.xlane.xlu0 %5679
      %v5681 = vsel %vm293, %v5635, 0.0
      %5682 = vadd.xlane.f32.xlu0 %v5681
      %v5683 = vpop.xlane.xlu0 %5682
      %v5684 = vmul.f32 %v5638, %v342
      %v5685 = vmul.f32 %v5641, %v342
      %v5686 = vmul.f32 %v5644, %v342
      %v5687 = vmul.f32 %v5647, %v342
      %v5688 = vmul.f32 %v5650, %v342
      %v5689 = vmul.f32 %v5653, %v342
      %v5690 = vmul.f32 %v5656, %v342
      %v5691 = vmul.f32 %v5659, %v342
      %v5692 = vmul.f32 %v5662, %v342
      %v5693 = vmul.f32 %v5665, %v342
      %v5694 = vmul.f32 %v5668, %v342
      %v5695 = vmul.f32 %v5671, %v342
      %v5696 = vmul.f32 %v5674, %v342
      %v5697 = vmul.f32 %v5677, %v342
      %v5698 = vmul.f32 %v5680, %v342
      %v5699 = vmul.f32 %v5683, %v342
      %v5700 = vadd.f32 %v5684, 1e-06
      %v5701 = vadd.f32 %v5685, 1e-06
      %v5702 = vadd.f32 %v5686, 1e-06
      %v5703 = vadd.f32 %v5687, 1e-06
      %v5704 = vadd.f32 %v5688, 1e-06
      %v5705 = vadd.f32 %v5689, 1e-06
      %v5706 = vadd.f32 %v5690, 1e-06
      %v5707 = vadd.f32 %v5691, 1e-06
      %v5708 = vadd.f32 %v5692, 1e-06
      %v5709 = vadd.f32 %v5693, 1e-06
      %v5710 = vadd.f32 %v5694, 1e-06
      %v5711 = vadd.f32 %v5695, 1e-06
      %v5712 = vadd.f32 %v5696, 1e-06
      %v5713 = vadd.f32 %v5697, 1e-06
      %v5714 = vadd.f32 %v5698, 1e-06
      %v5715 = vadd.f32 %v5699, 1e-06
      %v5716 = vrsqrt.pop %v5700
      %v5717 = vrsqrt.pop %v5701
      %v5718 = vrsqrt.pop %v5702
      %v5719 = vrsqrt.pop %v5703
      %v5720 = vrsqrt.pop %v5704
      %v5721 = vrsqrt.pop %v5705
      %v5722 = vrsqrt.pop %v5706
      %v5723 = vrsqrt.pop %v5707
      %v5724 = vrsqrt.pop %v5708
      %v5725 = vrsqrt.pop %v5709
      %v5726 = vrsqrt.pop %v5710
      %v5727 = vrsqrt.pop %v5711
      %v5728 = vrsqrt.pop %v5712
      %v5729 = vrsqrt.pop %v5713
      %v5730 = vrsqrt.pop %v5714
      %v5731 = vrsqrt.pop %v5715
      %v5732 = vmul.f32 %v5558, %v5716
      %v5733 = vmul.f32 %v5561, %v5717
      %v5734 = vmul.f32 %v5566, %v5718
      %v5735 = vmul.f32 %v5569, %v5719
      %v5736 = vmul.f32 %v5574, %v5720
      %v5737 = vmul.f32 %v5577, %v5721
      %v5738 = vmul.f32 %v5582, %v5722
      %v5739 = vmul.f32 %v5585, %v5723
      %v5740 = vmul.f32 %v5590, %v5724
      %v5741 = vmul.f32 %v5593, %v5725
      %v5742 = vmul.f32 %v5598, %v5726
      %v5743 = vmul.f32 %v5601, %v5727
      %v5744 = vmul.f32 %v5606, %v5728
      %v5745 = vmul.f32 %v5609, %v5729
      %v5746 = vmul.f32 %v5614, %v5730
      %v5747 = vmul.f32 %v5617, %v5731
      %5749 = vrot.lane.b32.xlu0 %v259, 96
      %v5750 = vpop.permute.xlu0 %5749
      %v5752 = vmul.f32 %v5732, %v5750
      %v5753 = vmul.f32 %v5733, %v5750
      %v5754 = vmul.f32 %v5734, %v5750
      %v5755 = vmul.f32 %v5735, %v5750
      %v5756 = vmul.f32 %v5736, %v5750
      %v5757 = vmul.f32 %v5737, %v5750
      %v5758 = vmul.f32 %v5738, %v5750
      %v5759 = vmul.f32 %v5739, %v5750
      %v5760 = vmul.f32 %v5740, %v5750
      %v5761 = vmul.f32 %v5741, %v5750
      %v5762 = vmul.f32 %v5742, %v5750
      %v5763 = vmul.f32 %v5743, %v5750
      %v5764 = vmul.f32 %v5744, %v5750
      %v5765 = vmul.f32 %v5745, %v5750
      %v5766 = vmul.f32 %v5746, %v5750
      %v5767 = vmul.f32 %v5747, %v5750
      %v5768 = vadd.f32 %v5752, %v261
      %v5769 = vadd.f32 %v5753, %v262
      %v5770 = vadd.f32 %v5754, %v263
      %v5771 = vadd.f32 %v5755, %v264
      %v5772 = vadd.f32 %v5756, %v265
      %v5773 = vadd.f32 %v5757, %v266
      %v5774 = vadd.f32 %v5758, %v267
      %v5775 = vadd.f32 %v5759, %v268
      %v5776 = vadd.f32 %v5760, %v269
      %v5777 = vadd.f32 %v5761, %v270
      %v5778 = vadd.f32 %v5762, %v271
      %v5779 = vadd.f32 %v5763, %v272
      %v5780 = vadd.f32 %v5764, %v273
      %v5781 = vadd.f32 %v5765, %v274
      %v5782 = vadd.f32 %v5766, %v275
      %v5783 = vadd.f32 %v5767, %v276
      %v5784 = vmul.f32 %v5768, %v5768
      %v5785 = vmul.f32 %v5769, %v5769
      %v5786 = vmul.f32 %v5770, %v5770
      %v5787 = vmul.f32 %v5771, %v5771
      %v5788 = vmul.f32 %v5772, %v5772
      %v5789 = vmul.f32 %v5773, %v5773
      %v5790 = vmul.f32 %v5774, %v5774
      %v5791 = vmul.f32 %v5775, %v5775
      %v5792 = vmul.f32 %v5776, %v5776
      %v5793 = vmul.f32 %v5777, %v5777
      %v5794 = vmul.f32 %v5778, %v5778
      %v5795 = vmul.f32 %v5779, %v5779
      %v5796 = vmul.f32 %v5780, %v5780
      %v5797 = vmul.f32 %v5781, %v5781
      %v5798 = vmul.f32 %v5782, %v5782
      %v5799 = vmul.f32 %v5783, %v5783
      %v5800 = vsel %vm293, %v5784, 0.0
      %5801 = vadd.xlane.f32.xlu0 %v5800
      %v5802 = vpop.xlane.xlu0 %5801
      %v5803 = vsel %vm293, %v5785, 0.0
      %5804 = vadd.xlane.f32.xlu0 %v5803
      %v5805 = vpop.xlane.xlu0 %5804
      %v5806 = vsel %vm293, %v5786, 0.0
      %5807 = vadd.xlane.f32.xlu0 %v5806
      %v5808 = vpop.xlane.xlu0 %5807
      %v5809 = vsel %vm293, %v5787, 0.0
      %5810 = vadd.xlane.f32.xlu0 %v5809
      %v5811 = vpop.xlane.xlu0 %5810
      %v5812 = vsel %vm293, %v5788, 0.0
      %5813 = vadd.xlane.f32.xlu0 %v5812
      %v5814 = vpop.xlane.xlu0 %5813
      %v5815 = vsel %vm293, %v5789, 0.0
      %5816 = vadd.xlane.f32.xlu0 %v5815
      %v5817 = vpop.xlane.xlu0 %5816
      %v5818 = vsel %vm293, %v5790, 0.0
      %5819 = vadd.xlane.f32.xlu0 %v5818
      %v5820 = vpop.xlane.xlu0 %5819
      %v5821 = vsel %vm293, %v5791, 0.0
      %5822 = vadd.xlane.f32.xlu0 %v5821
      %v5823 = vpop.xlane.xlu0 %5822
      %v5824 = vsel %vm293, %v5792, 0.0
      %5825 = vadd.xlane.f32.xlu0 %v5824
      %v5826 = vpop.xlane.xlu0 %5825
      %v5827 = vsel %vm293, %v5793, 0.0
      %5828 = vadd.xlane.f32.xlu0 %v5827
      %v5829 = vpop.xlane.xlu0 %5828
      %v5830 = vsel %vm293, %v5794, 0.0
      %5831 = vadd.xlane.f32.xlu0 %v5830
      %v5832 = vpop.xlane.xlu0 %5831
      %v5833 = vsel %vm293, %v5795, 0.0
      %5834 = vadd.xlane.f32.xlu0 %v5833
      %v5835 = vpop.xlane.xlu0 %5834
      %v5836 = vsel %vm293, %v5796, 0.0
      %5837 = vadd.xlane.f32.xlu0 %v5836
      %v5838 = vpop.xlane.xlu0 %5837
      %v5839 = vsel %vm293, %v5797, 0.0
      %5840 = vadd.xlane.f32.xlu0 %v5839
      %v5841 = vpop.xlane.xlu0 %5840
      %v5842 = vsel %vm293, %v5798, 0.0
      %5843 = vadd.xlane.f32.xlu0 %v5842
      %v5844 = vpop.xlane.xlu0 %5843
      %v5845 = vsel %vm293, %v5799, 0.0
      %5846 = vadd.xlane.f32.xlu0 %v5845
      %v5847 = vpop.xlane.xlu0 %5846
      %v5848 = vmul.f32 %v5802, %v342
      %v5849 = vmul.f32 %v5805, %v342
      %v5850 = vmul.f32 %v5808, %v342
      %v5851 = vmul.f32 %v5811, %v342
      %v5852 = vmul.f32 %v5814, %v342
      %v5853 = vmul.f32 %v5817, %v342
      %v5854 = vmul.f32 %v5820, %v342
      %v5855 = vmul.f32 %v5823, %v342
      %v5856 = vmul.f32 %v5826, %v342
      %v5857 = vmul.f32 %v5829, %v342
      %v5858 = vmul.f32 %v5832, %v342
      %v5859 = vmul.f32 %v5835, %v342
      %v5860 = vmul.f32 %v5838, %v342
      %v5861 = vmul.f32 %v5841, %v342
      %v5862 = vmul.f32 %v5844, %v342
      %v5863 = vmul.f32 %v5847, %v342
      %v5864 = vadd.f32 %v5848, 1e-06
      %v5865 = vadd.f32 %v5849, 1e-06
      %v5866 = vadd.f32 %v5850, 1e-06
      %v5867 = vadd.f32 %v5851, 1e-06
      %v5868 = vadd.f32 %v5852, 1e-06
      %v5869 = vadd.f32 %v5853, 1e-06
      %v5870 = vadd.f32 %v5854, 1e-06
      %v5871 = vadd.f32 %v5855, 1e-06
      %v5872 = vadd.f32 %v5856, 1e-06
      %v5873 = vadd.f32 %v5857, 1e-06
      %v5874 = vadd.f32 %v5858, 1e-06
      %v5875 = vadd.f32 %v5859, 1e-06
      %v5876 = vadd.f32 %v5860, 1e-06
      %v5877 = vadd.f32 %v5861, 1e-06
      %v5878 = vadd.f32 %v5862, 1e-06
      %v5879 = vadd.f32 %v5863, 1e-06
      %v5880 = vrsqrt.pop %v5864
      %v5881 = vrsqrt.pop %v5865
      %v5882 = vrsqrt.pop %v5866
      %v5883 = vrsqrt.pop %v5867
      %v5884 = vrsqrt.pop %v5868
      %v5885 = vrsqrt.pop %v5869
      %v5886 = vrsqrt.pop %v5870
      %v5887 = vrsqrt.pop %v5871
      %v5888 = vrsqrt.pop %v5872
      %v5889 = vrsqrt.pop %v5873
      %v5890 = vrsqrt.pop %v5874
      %v5891 = vrsqrt.pop %v5875
      %v5892 = vrsqrt.pop %v5876
      %v5893 = vrsqrt.pop %v5877
      %v5894 = vrsqrt.pop %v5878
      %v5895 = vrsqrt.pop %v5879
      %v5896 = vmul.f32 %v5768, %v5880
      %v5897 = vmul.f32 %v5769, %v5881
      %v5898 = vmul.f32 %v5770, %v5882
      %v5899 = vmul.f32 %v5771, %v5883
      %v5900 = vmul.f32 %v5772, %v5884
      %v5901 = vmul.f32 %v5773, %v5885
      %v5902 = vmul.f32 %v5774, %v5886
      %v5903 = vmul.f32 %v5775, %v5887
      %v5904 = vmul.f32 %v5776, %v5888
      %v5905 = vmul.f32 %v5777, %v5889
      %v5906 = vmul.f32 %v5778, %v5890
      %v5907 = vmul.f32 %v5779, %v5891
      %v5908 = vmul.f32 %v5780, %v5892
      %v5909 = vmul.f32 %v5781, %v5893
      %v5910 = vmul.f32 %v5782, %v5894
      %v5911 = vmul.f32 %v5783, %v5895
      %5912 = vrot.lane.b32.xlu0 %v259, 64
      %v5913 = vpop.permute.xlu0 %5912
      %v5915 = vmul.f32 %v5896, %v5913
      %v5916 = vmul.f32 %v5897, %v5913
      %v5917 = vmul.f32 %v5898, %v5913
      %v5918 = vmul.f32 %v5899, %v5913
      %v5919 = vmul.f32 %v5900, %v5913
      %v5920 = vmul.f32 %v5901, %v5913
      %v5921 = vmul.f32 %v5902, %v5913
      %v5922 = vmul.f32 %v5903, %v5913
      %v5923 = vmul.f32 %v5904, %v5913
      %v5924 = vmul.f32 %v5905, %v5913
      %v5925 = vmul.f32 %v5906, %v5913
      %v5926 = vmul.f32 %v5907, %v5913
      %v5927 = vmul.f32 %v5908, %v5913
      %v5928 = vmul.f32 %v5909, %v5913
      %v5929 = vmul.f32 %v5910, %v5913
      %v5930 = vmul.f32 %v5911, %v5913
      %v5931 = vpack.c.bf16 %v5916, %v5915
      %v5932 = vpack.c.bf16 %v5918, %v5917
      %v5933 = vpack.c.bf16 %v5920, %v5919
      %v5934 = vpack.c.bf16 %v5922, %v5921
      %v5935 = vpack.c.bf16 %v5924, %v5923
      %v5936 = vpack.c.bf16 %v5926, %v5925
      %v5937 = vpack.c.bf16 %v5928, %v5927
      %v5938 = vpack.c.bf16 %v5930, %v5929
      %v5939 = vld [vmem:[%s2 + $0x30] sm:$0xf]
      %v5940 = vld [vmem:[%s2 + $0x34] sm:$0xf]
      %v5941 = vld [vmem:[%s2 + $0x38] sm:$0xf]
      %v5942 = vld [vmem:[%s2 + $0x3c] sm:$0xf]
      %v5947 = vunpack.c.l.b16 %v5939
      %v5948 = vunpack.c.l.b16 %v5940
      %v5949 = vunpack.c.l.b16 %v5941
      %v5950 = vunpack.c.l.b16 %v5942
      %v5951 = vpack.c.b16 %v5948, %v5947
      %v5952 = vpack.c.b16 %v5950, %v5949
      %v5956 = vsel %vm293, %v5931, 0
      %v5959 = vsel %vm293, %v5932, 0
      %v5962 = vsel %vm293, %v5933, 0
      %v5965 = vsel %vm293, %v5934, 0
      %v5968 = vsel %vm293, %v5935, 0
      %v5971 = vsel %vm293, %v5936, 0
      %v5974 = vsel %vm293, %v5937, 0
      %v5977 = vsel %vm293, %v5938, 0
      %5979 = vmatprep.subr.bf16.mxu0 0
      %5980 = vmatpush1.bf16.msra.mxu0 %v5951
      %5981 = vmatprep.subr.bf16.mxu0 0
      %5982 = vmatpush1.bf16.msra.mxu0 %v5952
      %5983 = vmatprep.subr.bf16.mxu0 0
      %5984 = vmatpush1.bf16.msra.mxu0 0
      %5985 = vmatprep.subr.bf16.mxu0 0
      %5986 = vmatpush1.bf16.msra.mxu0 0
      %5987 = vmatprep.subr.bf16.mxu0 0
      %5988 = vmatpush1.bf16.msra.mxu0 0
      %5989 = vmatprep.subr.bf16.mxu0 0
      %5990 = vmatpush1.bf16.msra.mxu0 0
      %5991 = vmatprep.subr.bf16.mxu0 0
      %5992 = vmatpush1.bf16.msra.mxu0 0
      %5993 = vmatprep.subr.bf16.mxu0 0
      %5994 = vmatpush1.bf16.msra.mxu0 0
      %5995 = vmatprep.subr.bf16.mxu0 0
      %5996 = vmatpush1.bf16.msra.mxu0 0
      %5997 = vmatprep.subr.bf16.mxu0 0
      %5998 = vmatpush1.bf16.msra.mxu0 0
      %5999 = vmatprep.subr.bf16.mxu0 0
      %6000 = vmatpush1.bf16.msra.mxu0 0
      %6001 = vmatprep.subr.bf16.mxu0 0
      %6002 = vmatpush1.bf16.msra.mxu0 0
      %6003 = vmatprep.subr.bf16.mxu0 0
      %6004 = vmatpush1.bf16.msra.mxu0 0
      %6005 = vmatprep.subr.bf16.mxu0 0
      %6006 = vmatpush1.bf16.msra.mxu0 0
      %6007 = vmatprep.subr.bf16.mxu0 0
      %6008 = vmatpush1.bf16.msra.mxu0 0
      %6009 = vmatprep.subr.bf16.mxu0 0
      %6010 = vmatpush1.bf16.msra.mxu0 0
      %6011 = vmatprep.mubr.bf16.mxu0 0
      %6012 = vmatmul.mubr.bf16.gmra.mrb[0].mxu0 %v5956
      %v6013 = vpop.f32.mrb[0].mxu0
      %v6014 = vadd.f32 0.0, %v6013
      %v6015 = vpop.f32.mrb[0].mxu0
      %v6016 = vpop.f32.mrb[0].mxu0
      %v6017 = vadd.f32 0.0, %v6016
      %v6018 = vpop.f32.mrb[0].mxu0
      %6019 = vmatprep.mubr.bf16.mxu0 0
      %6020 = vmatmul.mubr.bf16.gmra.mrb[0].mxu0 %v5959
      %v6021 = vpop.f32.mrb[0].mxu0
      %v6022 = vadd.f32 0.0, %v6021
      %v6023 = vpop.f32.mrb[0].mxu0
      %v6024 = vpop.f32.mrb[0].mxu0
      %v6025 = vadd.f32 0.0, %v6024
      %v6026 = vpop.f32.mrb[0].mxu0
      %6027 = vmatprep.mubr.bf16.mxu0 0
      %6028 = vmatmul.mubr.bf16.gmra.mrb[0].mxu0 %v5962
      %v6029 = vpop.f32.mrb[0].mxu0
      %v6030 = vadd.f32 0.0, %v6029
      %v6031 = vpop.f32.mrb[0].mxu0
      %v6032 = vpop.f32.mrb[0].mxu0
      %v6033 = vadd.f32 0.0, %v6032
      %v6034 = vpop.f32.mrb[0].mxu0
      %6035 = vmatprep.mubr.bf16.mxu0 0
      %6036 = vmatmul.mubr.bf16.gmra.mrb[0].mxu0 %v5965
      %v6037 = vpop.f32.mrb[0].mxu0
      %v6038 = vadd.f32 0.0, %v6037
      %v6039 = vpop.f32.mrb[0].mxu0
      %v6040 = vpop.f32.mrb[0].mxu0
      %v6041 = vadd.f32 0.0, %v6040
      %v6042 = vpop.f32.mrb[0].mxu0
      %6043 = vmatprep.mubr.bf16.mxu0 0
      %6044 = vmatmul.mubr.bf16.gmra.mrb[0].mxu0 %v5968
      %v6045 = vpop.f32.mrb[0].mxu0
      %v6046 = vadd.f32 0.0, %v6045
      %v6047 = vpop.f32.mrb[0].mxu0
      %v6048 = vpop.f32.mrb[0].mxu0
      %v6049 = vadd.f32 0.0, %v6048
      %v6050 = vpop.f32.mrb[0].mxu0
      %6051 = vmatprep.mubr.bf16.mxu0 0
      %6052 = vmatmul.mubr.bf16.gmra.mrb[0].mxu0 %v5971
      %v6053 = vpop.f32.mrb[0].mxu0
      %v6054 = vadd.f32 0.0, %v6053
      %v6055 = vpop.f32.mrb[0].mxu0
      %v6056 = vpop.f32.mrb[0].mxu0
      %v6057 = vadd.f32 0.0, %v6056
      %v6058 = vpop.f32.mrb[0].mxu0
      %6059 = vmatprep.mubr.bf16.mxu0 0
      %6060 = vmatmul.mubr.bf16.gmra.mrb[0].mxu0 %v5974
      %v6061 = vpop.f32.mrb[0].mxu0
      %v6062 = vadd.f32 0.0, %v6061
      %v6063 = vpop.f32.mrb[0].mxu0
      %v6064 = vpop.f32.mrb[0].mxu0
      %v6065 = vadd.f32 0.0, %v6064
      %v6066 = vpop.f32.mrb[0].mxu0
      %6067 = vmatprep.mubr.bf16.mxu0 0
      %6068 = vmatmul.mubr.bf16.gmra.mrb[0].mxu0 %v5977
      %v6069 = vpop.f32.mrb[0].mxu0
      %v6070 = vadd.f32 0.0, %v6069
      %v6071 = vpop.f32.mrb[0].mxu0
      %v6072 = vpop.f32.mrb[0].mxu0
      %v6073 = vadd.f32 0.0, %v6072
      %v6074 = vpop.f32.mrb[0].mxu0
      %6075 = vdwg.mxu0
      %v6076 = vxor.u32 %v6014, 2147483648
      %v6077 = vxor.u32 %v6017, 2147483648
      %v6078 = vxor.u32 %v6022, 2147483648
      %v6079 = vxor.u32 %v6025, 2147483648
      %v6080 = vxor.u32 %v6030, 2147483648
      %v6081 = vxor.u32 %v6033, 2147483648
      %v6082 = vxor.u32 %v6038, 2147483648
      %v6083 = vxor.u32 %v6041, 2147483648
      %v6084 = vxor.u32 %v6046, 2147483648
      %v6085 = vxor.u32 %v6049, 2147483648
      %v6086 = vxor.u32 %v6054, 2147483648
      %v6087 = vxor.u32 %v6057, 2147483648
      %v6088 = vxor.u32 %v6062, 2147483648
      %v6089 = vxor.u32 %v6065, 2147483648
      %v6090 = vxor.u32 %v6070, 2147483648
      %v6091 = vxor.u32 %v6073, 2147483648
      %v6092 = vmul.f32 %v6076, 1.442695
      %v6093 = vpow.pop %v6092
      %v6094 = vmul.f32 %v6077, 1.442695
      %v6095 = vpow.pop %v6094
      %v6096 = vmul.f32 %v6078, 1.442695
      %v6097 = vpow.pop %v6096
      %v6098 = vmul.f32 %v6079, 1.442695
      %v6099 = vpow.pop %v6098
      %v6100 = vmul.f32 %v6080, 1.442695
      %v6101 = vpow.pop %v6100
      %v6102 = vmul.f32 %v6081, 1.442695
      %v6103 = vpow.pop %v6102
      %v6104 = vmul.f32 %v6082, 1.442695
      %v6105 = vpow.pop %v6104
      %v6106 = vmul.f32 %v6083, 1.442695
      %v6107 = vpow.pop %v6106
      %v6108 = vmul.f32 %v6084, 1.442695
      %v6109 = vpow.pop %v6108
      %v6110 = vmul.f32 %v6085, 1.442695
      %v6111 = vpow.pop %v6110
      %v6112 = vmul.f32 %v6086, 1.442695
      %v6113 = vpow.pop %v6112
      %v6114 = vmul.f32 %v6087, 1.442695
      %v6115 = vpow.pop %v6114
      %v6116 = vmul.f32 %v6088, 1.442695
      %v6117 = vpow.pop %v6116
      %v6118 = vmul.f32 %v6089, 1.442695
      %v6119 = vpow.pop %v6118
      %v6120 = vmul.f32 %v6090, 1.442695
      %v6121 = vpow.pop %v6120
      %v6122 = vmul.f32 %v6091, 1.442695
      %v6123 = vpow.pop %v6122
      %v6124 = vadd.f32 %v6093, 1.0
      %v6125 = vadd.f32 %v6095, 1.0
      %v6126 = vadd.f32 %v6097, 1.0
      %v6127 = vadd.f32 %v6099, 1.0
      %v6128 = vadd.f32 %v6101, 1.0
      %v6129 = vadd.f32 %v6103, 1.0
      %v6130 = vadd.f32 %v6105, 1.0
      %v6131 = vadd.f32 %v6107, 1.0
      %v6132 = vadd.f32 %v6109, 1.0
      %v6133 = vadd.f32 %v6111, 1.0
      %v6134 = vadd.f32 %v6113, 1.0
      %v6135 = vadd.f32 %v6115, 1.0
      %v6136 = vadd.f32 %v6117, 1.0
      %v6137 = vadd.f32 %v6119, 1.0
      %v6138 = vadd.f32 %v6121, 1.0
      %v6139 = vadd.f32 %v6123, 1.0
      %v6140 = vrcp.pop %v6124
      %v6141 = vmul.f32 1.0, %v6140
      %v6142 = vrcp.pop %v6125
      %v6143 = vmul.f32 1.0, %v6142
      %v6144 = vrcp.pop %v6126
      %v6145 = vmul.f32 1.0, %v6144
      %v6146 = vrcp.pop %v6127
      %v6147 = vmul.f32 1.0, %v6146
      %v6148 = vrcp.pop %v6128
      %v6149 = vmul.f32 1.0, %v6148
      %v6150 = vrcp.pop %v6129
      %v6151 = vmul.f32 1.0, %v6150
      %v6152 = vrcp.pop %v6130
      %v6153 = vmul.f32 1.0, %v6152
      %v6154 = vrcp.pop %v6131
      %v6155 = vmul.f32 1.0, %v6154
      %v6156 = vrcp.pop %v6132
      %v6157 = vmul.f32 1.0, %v6156
      %v6158 = vrcp.pop %v6133
      %v6159 = vmul.f32 1.0, %v6158
      %v6160 = vrcp.pop %v6134
      %v6161 = vmul.f32 1.0, %v6160
      %v6162 = vrcp.pop %v6135
      %v6163 = vmul.f32 1.0, %v6162
      %v6164 = vrcp.pop %v6136
      %v6165 = vmul.f32 1.0, %v6164
      %v6166 = vrcp.pop %v6137
      %v6167 = vmul.f32 1.0, %v6166
      %v6168 = vrcp.pop %v6138
      %v6169 = vmul.f32 1.0, %v6168
      %v6170 = vrcp.pop %v6139
      %v6171 = vmul.f32 1.0, %v6170
      %v6172 = vmul.f32 %v6014, %v6141
      %v6173 = vmul.f32 %v6017, %v6143
      %v6174 = vmul.f32 %v6022, %v6145
      %v6175 = vmul.f32 %v6025, %v6147
      %v6176 = vmul.f32 %v6030, %v6149
      %v6177 = vmul.f32 %v6033, %v6151
      %v6178 = vmul.f32 %v6038, %v6153
      %v6179 = vmul.f32 %v6041, %v6155
      %v6180 = vmul.f32 %v6046, %v6157
      %v6181 = vmul.f32 %v6049, %v6159
      %v6182 = vmul.f32 %v6054, %v6161
      %v6183 = vmul.f32 %v6057, %v6163
      %v6184 = vmul.f32 %v6062, %v6165
      %v6185 = vmul.f32 %v6065, %v6167
      %v6186 = vmul.f32 %v6070, %v6169
      %v6187 = vmul.f32 %v6073, %v6171
      %6204 = vrot.lane.b32.xlu0 %v6014, 64
      %v6205 = vpop.permute.xlu0 %6204
      %6206 = vrot.lane.b32.xlu0 %v6017, 64
      %v6207 = vpop.permute.xlu0 %6206
      %6208 = vrot.lane.b32.xlu0 %v6022, 64
      %v6209 = vpop.permute.xlu0 %6208
      %6210 = vrot.lane.b32.xlu0 %v6025, 64
      %v6211 = vpop.permute.xlu0 %6210
      %6212 = vrot.lane.b32.xlu0 %v6030, 64
      %v6213 = vpop.permute.xlu0 %6212
      %6214 = vrot.lane.b32.xlu0 %v6033, 64
      %v6215 = vpop.permute.xlu0 %6214
      %6216 = vrot.lane.b32.xlu0 %v6038, 64
      %v6217 = vpop.permute.xlu0 %6216
      %6218 = vrot.lane.b32.xlu0 %v6041, 64
      %v6219 = vpop.permute.xlu0 %6218
      %6220 = vrot.lane.b32.xlu0 %v6046, 64
      %v6221 = vpop.permute.xlu0 %6220
      %6222 = vrot.lane.b32.xlu0 %v6049, 64
      %v6223 = vpop.permute.xlu0 %6222
      %6224 = vrot.lane.b32.xlu0 %v6054, 64
      %v6225 = vpop.permute.xlu0 %6224
      %6226 = vrot.lane.b32.xlu0 %v6057, 64
      %v6227 = vpop.permute.xlu0 %6226
      %6228 = vrot.lane.b32.xlu0 %v6062, 64
      %v6229 = vpop.permute.xlu0 %6228
      %6230 = vrot.lane.b32.xlu0 %v6065, 64
      %v6231 = vpop.permute.xlu0 %6230
      %6232 = vrot.lane.b32.xlu0 %v6070, 64
      %v6233 = vpop.permute.xlu0 %6232
      %6234 = vrot.lane.b32.xlu0 %v6073, 64
      %v6235 = vpop.permute.xlu0 %6234
      %v6252 = vmul.f32 %v6172, %v6205
      %v6253 = vmul.f32 %v6173, %v6207
      %v6254 = vmul.f32 %v6174, %v6209
      %v6255 = vmul.f32 %v6175, %v6211
      %v6256 = vmul.f32 %v6176, %v6213
      %v6257 = vmul.f32 %v6177, %v6215
      %v6258 = vmul.f32 %v6178, %v6217
      %v6259 = vmul.f32 %v6179, %v6219
      %v6260 = vmul.f32 %v6180, %v6221
      %v6261 = vmul.f32 %v6181, %v6223
      %v6262 = vmul.f32 %v6182, %v6225
      %v6263 = vmul.f32 %v6183, %v6227
      %v6264 = vmul.f32 %v6184, %v6229
      %v6265 = vmul.f32 %v6185, %v6231
      %v6266 = vmul.f32 %v6186, %v6233
      %v6267 = vmul.f32 %v6187, %v6235
      %v6268 = vpack.c.bf16 %v6253, %v6252
      %v6269 = vpack.c.bf16 %v6255, %v6254
      %v6270 = vpack.c.bf16 %v6257, %v6256
      %v6271 = vpack.c.bf16 %v6259, %v6258
      %v6272 = vpack.c.bf16 %v6261, %v6260
      %v6273 = vpack.c.bf16 %v6263, %v6262
      %v6274 = vpack.c.bf16 %v6265, %v6264
      %v6275 = vpack.c.bf16 %v6267, %v6266
      %v6276 = vld [vmem:[%s5] sm:$0xf]
      %v6277 = vld [vmem:[%s5 + $0x4] sm:$0xf]
      %v6278 = vld [vmem:[%s5 + $0x8] sm:$0xf]
      %v6279 = vld [vmem:[%s5 + $0xc] sm:$0xf]
      %v6280 = vld [vmem:[%s5 + $0x10] sm:$0xf]
      %v6281 = vld [vmem:[%s5 + $0x14] sm:$0xf]
      %v6282 = vld [vmem:[%s5 + $0x18] sm:$0xf]
      %v6283 = vld [vmem:[%s5 + $0x1c] sm:$0xf]
      %v6292 = vunpack.c.l.b16 %v6276
      %v6293 = vunpack.c.l.b16 %v6277
      %v6294 = vunpack.c.l.b16 %v6278
      %v6295 = vunpack.c.l.b16 %v6279
      %v6296 = vunpack.c.l.b16 %v6280
      %v6297 = vunpack.c.l.b16 %v6281
      %v6298 = vunpack.c.l.b16 %v6282
      %v6299 = vunpack.c.l.b16 %v6283
      %v6300 = vpack.c.b16 %v6293, %v6292
      %v6301 = vpack.c.b16 %v6295, %v6294
      %v6302 = vpack.c.b16 %v6297, %v6296
      %v6303 = vpack.c.b16 %v6299, %v6298
      %v6309 = vsel %vm1565, %v6268, 0
      %v6312 = vsel %vm1565, %v6269, 0
      %v6315 = vsel %vm1565, %v6270, 0
      %v6318 = vsel %vm1565, %v6271, 0
      %v6321 = vsel %vm1565, %v6272, 0
      %v6324 = vsel %vm1565, %v6273, 0
      %v6327 = vsel %vm1565, %v6274, 0
      %v6330 = vsel %vm1565, %v6275, 0
      %6332 = vmatprep.subr.bf16.mxu0 0
      %6333 = vmatpush1.bf16.msra.mxu0 %v6300
      %6334 = vmatprep.subr.bf16.mxu0 0
      %6335 = vmatpush1.bf16.msra.mxu0 %v6301
      %6336 = vmatprep.subr.bf16.mxu0 0
      %6337 = vmatpush1.bf16.msra.mxu0 %v6302
      %6338 = vmatprep.subr.bf16.mxu0 0
      %6339 = vmatpush1.bf16.msra.mxu0 %v6303
      %6340 = vmatprep.subr.bf16.mxu0 0
      %6341 = vmatpush1.bf16.msra.mxu0 0
      %6342 = vmatprep.subr.bf16.mxu0 0
      %6343 = vmatpush1.bf16.msra.mxu0 0
      %6344 = vmatprep.subr.bf16.mxu0 0
      %6345 = vmatpush1.bf16.msra.mxu0 0
      %6346 = vmatprep.subr.bf16.mxu0 0
      %6347 = vmatpush1.bf16.msra.mxu0 0
      %6348 = vmatprep.subr.bf16.mxu0 0
      %6349 = vmatpush1.bf16.msra.mxu0 0
      %6350 = vmatprep.subr.bf16.mxu0 0
      %6351 = vmatpush1.bf16.msra.mxu0 0
      %6352 = vmatprep.subr.bf16.mxu0 0
      %6353 = vmatpush1.bf16.msra.mxu0 0
      %6354 = vmatprep.subr.bf16.mxu0 0
      %6355 = vmatpush1.bf16.msra.mxu0 0
      %6356 = vmatprep.subr.bf16.mxu0 0
      %6357 = vmatpush1.bf16.msra.mxu0 0
      %6358 = vmatprep.subr.bf16.mxu0 0
      %6359 = vmatpush1.bf16.msra.mxu0 0
      %6360 = vmatprep.subr.bf16.mxu0 0
      %6361 = vmatpush1.bf16.msra.mxu0 0
      %6362 = vmatprep.subr.bf16.mxu0 0
      %6363 = vmatpush1.bf16.msra.mxu0 0
      %6364 = vmatprep.mubr.bf16.mxu0 0
      %6365 = vmatmul.mubr.bf16.gmra.mrb[0].mxu0 %v6309
      %v6366 = vpop.f32.mrb[0].mxu0
      %v6367 = vadd.f32 0.0, %v6366
      %v6368 = vpop.f32.mrb[0].mxu0
      %v6369 = vpop.f32.mrb[0].mxu0
      %v6370 = vadd.f32 0.0, %v6369
      %v6371 = vpop.f32.mrb[0].mxu0
      %6372 = vmatprep.mubr.bf16.mxu0 0
      %6373 = vmatmul.mubr.bf16.gmra.mrb[0].mxu0 %v6312
      %v6374 = vpop.f32.mrb[0].mxu0
      %v6375 = vadd.f32 0.0, %v6374
      %v6376 = vpop.f32.mrb[0].mxu0
      %v6377 = vpop.f32.mrb[0].mxu0
      %v6378 = vadd.f32 0.0, %v6377
      %v6379 = vpop.f32.mrb[0].mxu0
      %6380 = vmatprep.mubr.bf16.mxu0 0
      %6381 = vmatmul.mubr.bf16.gmra.mrb[0].mxu0 %v6315
      %v6382 = vpop.f32.mrb[0].mxu0
      %v6383 = vadd.f32 0.0, %v6382
      %v6384 = vpop.f32.mrb[0].mxu0
      %v6385 = vpop.f32.mrb[0].mxu0
      %v6386 = vadd.f32 0.0, %v6385
      %v6387 = vpop.f32.mrb[0].mxu0
      %6388 = vmatprep.mubr.bf16.mxu0 0
      %6389 = vmatmul.mubr.bf16.gmra.mrb[0].mxu0 %v6318
      %v6390 = vpop.f32.mrb[0].mxu0
      %v6391 = vadd.f32 0.0, %v6390
      %v6392 = vpop.f32.mrb[0].mxu0
      %v6393 = vpop.f32.mrb[0].mxu0
      %v6394 = vadd.f32 0.0, %v6393
      %v6395 = vpop.f32.mrb[0].mxu0
      %6396 = vmatprep.mubr.bf16.mxu0 0
      %6397 = vmatmul.mubr.bf16.gmra.mrb[0].mxu0 %v6321
      %v6398 = vpop.f32.mrb[0].mxu0
      %v6399 = vadd.f32 0.0, %v6398
      %v6400 = vpop.f32.mrb[0].mxu0
      %v6401 = vpop.f32.mrb[0].mxu0
      %v6402 = vadd.f32 0.0, %v6401
      %v6403 = vpop.f32.mrb[0].mxu0
      %6404 = vmatprep.mubr.bf16.mxu0 0
      %6405 = vmatmul.mubr.bf16.gmra.mrb[0].mxu0 %v6324
      %v6406 = vpop.f32.mrb[0].mxu0
      %v6407 = vadd.f32 0.0, %v6406
      %v6408 = vpop.f32.mrb[0].mxu0
      %v6409 = vpop.f32.mrb[0].mxu0
      %v6410 = vadd.f32 0.0, %v6409
      %v6411 = vpop.f32.mrb[0].mxu0
      %6412 = vmatprep.mubr.bf16.mxu0 0
      %6413 = vmatmul.mubr.bf16.gmra.mrb[0].mxu0 %v6327
      %v6414 = vpop.f32.mrb[0].mxu0
      %v6415 = vadd.f32 0.0, %v6414
      %v6416 = vpop.f32.mrb[0].mxu0
      %v6417 = vpop.f32.mrb[0].mxu0
      %v6418 = vadd.f32 0.0, %v6417
      %v6419 = vpop.f32.mrb[0].mxu0
      %6420 = vmatprep.mubr.bf16.mxu0 0
      %6421 = vmatmul.mubr.bf16.gmra.mrb[0].mxu0 %v6330
      %v6422 = vpop.f32.mrb[0].mxu0
      %v6423 = vadd.f32 0.0, %v6422
      %v6424 = vpop.f32.mrb[0].mxu0
      %v6425 = vpop.f32.mrb[0].mxu0
      %v6426 = vadd.f32 0.0, %v6425
      %v6427 = vpop.f32.mrb[0].mxu0
      %6428 = vdwg.mxu0
      %v6429 = vmul.f32 %v6367, %v6367
      %v6430 = vmul.f32 %v6370, %v6370
      %v6431 = vmul.f32 %v6375, %v6375
      %v6432 = vmul.f32 %v6378, %v6378
      %v6433 = vmul.f32 %v6383, %v6383
      %v6434 = vmul.f32 %v6386, %v6386
      %v6435 = vmul.f32 %v6391, %v6391
      %v6436 = vmul.f32 %v6394, %v6394
      %v6437 = vmul.f32 %v6399, %v6399
      %v6438 = vmul.f32 %v6402, %v6402
      %v6439 = vmul.f32 %v6407, %v6407
      %v6440 = vmul.f32 %v6410, %v6410
      %v6441 = vmul.f32 %v6415, %v6415
      %v6442 = vmul.f32 %v6418, %v6418
      %v6443 = vmul.f32 %v6423, %v6423
      %v6444 = vmul.f32 %v6426, %v6426
      %v6445 = vsel %vm293, %v6429, 0.0
      %6446 = vadd.xlane.f32.xlu0 %v6445
      %v6447 = vpop.xlane.xlu0 %6446
      %v6448 = vsel %vm293, %v6430, 0.0
      %6449 = vadd.xlane.f32.xlu0 %v6448
      %v6450 = vpop.xlane.xlu0 %6449
      %v6451 = vsel %vm293, %v6431, 0.0
      %6452 = vadd.xlane.f32.xlu0 %v6451
      %v6453 = vpop.xlane.xlu0 %6452
      %v6454 = vsel %vm293, %v6432, 0.0
      %6455 = vadd.xlane.f32.xlu0 %v6454
      %v6456 = vpop.xlane.xlu0 %6455
      %v6457 = vsel %vm293, %v6433, 0.0
      %6458 = vadd.xlane.f32.xlu0 %v6457
      %v6459 = vpop.xlane.xlu0 %6458
      %v6460 = vsel %vm293, %v6434, 0.0
      %6461 = vadd.xlane.f32.xlu0 %v6460
      %v6462 = vpop.xlane.xlu0 %6461
      %v6463 = vsel %vm293, %v6435, 0.0
      %6464 = vadd.xlane.f32.xlu0 %v6463
      %v6465 = vpop.xlane.xlu0 %6464
      %v6466 = vsel %vm293, %v6436, 0.0
      %6467 = vadd.xlane.f32.xlu0 %v6466
      %v6468 = vpop.xlane.xlu0 %6467
      %v6469 = vsel %vm293, %v6437, 0.0
      %6470 = vadd.xlane.f32.xlu0 %v6469
      %v6471 = vpop.xlane.xlu0 %6470
      %v6472 = vsel %vm293, %v6438, 0.0
      %6473 = vadd.xlane.f32.xlu0 %v6472
      %v6474 = vpop.xlane.xlu0 %6473
      %v6475 = vsel %vm293, %v6439, 0.0
      %6476 = vadd.xlane.f32.xlu0 %v6475
      %v6477 = vpop.xlane.xlu0 %6476
      %v6478 = vsel %vm293, %v6440, 0.0
      %6479 = vadd.xlane.f32.xlu0 %v6478
      %v6480 = vpop.xlane.xlu0 %6479
      %v6481 = vsel %vm293, %v6441, 0.0
      %6482 = vadd.xlane.f32.xlu0 %v6481
      %v6483 = vpop.xlane.xlu0 %6482
      %v6484 = vsel %vm293, %v6442, 0.0
      %6485 = vadd.xlane.f32.xlu0 %v6484
      %v6486 = vpop.xlane.xlu0 %6485
      %v6487 = vsel %vm293, %v6443, 0.0
      %6488 = vadd.xlane.f32.xlu0 %v6487
      %v6489 = vpop.xlane.xlu0 %6488
      %v6490 = vsel %vm293, %v6444, 0.0
      %6491 = vadd.xlane.f32.xlu0 %v6490
      %v6492 = vpop.xlane.xlu0 %6491
      %v6493 = vmul.f32 %v6447, %v342
      %v6494 = vmul.f32 %v6450, %v342
      %v6495 = vmul.f32 %v6453, %v342
      %v6496 = vmul.f32 %v6456, %v342
      %v6497 = vmul.f32 %v6459, %v342
      %v6498 = vmul.f32 %v6462, %v342
      %v6499 = vmul.f32 %v6465, %v342
      %v6500 = vmul.f32 %v6468, %v342
      %v6501 = vmul.f32 %v6471, %v342
      %v6502 = vmul.f32 %v6474, %v342
      %v6503 = vmul.f32 %v6477, %v342
      %v6504 = vmul.f32 %v6480, %v342
      %v6505 = vmul.f32 %v6483, %v342
      %v6506 = vmul.f32 %v6486, %v342
      %v6507 = vmul.f32 %v6489, %v342
      %v6508 = vmul.f32 %v6492, %v342
      %v6509 = vadd.f32 %v6493, 1e-06
      %v6510 = vadd.f32 %v6494, 1e-06
      %v6511 = vadd.f32 %v6495, 1e-06
      %v6512 = vadd.f32 %v6496, 1e-06
      %v6513 = vadd.f32 %v6497, 1e-06
      %v6514 = vadd.f32 %v6498, 1e-06
      %v6515 = vadd.f32 %v6499, 1e-06
      %v6516 = vadd.f32 %v6500, 1e-06
      %v6517 = vadd.f32 %v6501, 1e-06
      %v6518 = vadd.f32 %v6502, 1e-06
      %v6519 = vadd.f32 %v6503, 1e-06
      %v6520 = vadd.f32 %v6504, 1e-06
      %v6521 = vadd.f32 %v6505, 1e-06
      %v6522 = vadd.f32 %v6506, 1e-06
      %v6523 = vadd.f32 %v6507, 1e-06
      %v6524 = vadd.f32 %v6508, 1e-06
      %v6525 = vrsqrt.pop %v6509
      %v6526 = vrsqrt.pop %v6510
      %v6527 = vrsqrt.pop %v6511
      %v6528 = vrsqrt.pop %v6512
      %v6529 = vrsqrt.pop %v6513
      %v6530 = vrsqrt.pop %v6514
      %v6531 = vrsqrt.pop %v6515
      %v6532 = vrsqrt.pop %v6516
      %v6533 = vrsqrt.pop %v6517
      %v6534 = vrsqrt.pop %v6518
      %v6535 = vrsqrt.pop %v6519
      %v6536 = vrsqrt.pop %v6520
      %v6537 = vrsqrt.pop %v6521
      %v6538 = vrsqrt.pop %v6522
      %v6539 = vrsqrt.pop %v6523
      %v6540 = vrsqrt.pop %v6524
      %v6541 = vmul.f32 %v6367, %v6525
      %v6542 = vmul.f32 %v6370, %v6526
      %v6543 = vmul.f32 %v6375, %v6527
      %v6544 = vmul.f32 %v6378, %v6528
      %v6545 = vmul.f32 %v6383, %v6529
      %v6546 = vmul.f32 %v6386, %v6530
      %v6547 = vmul.f32 %v6391, %v6531
      %v6548 = vmul.f32 %v6394, %v6532
      %v6549 = vmul.f32 %v6399, %v6533
      %v6550 = vmul.f32 %v6402, %v6534
      %v6551 = vmul.f32 %v6407, %v6535
      %v6552 = vmul.f32 %v6410, %v6536
      %v6553 = vmul.f32 %v6415, %v6537
      %v6554 = vmul.f32 %v6418, %v6538
      %v6555 = vmul.f32 %v6423, %v6539
      %v6556 = vmul.f32 %v6426, %v6540
      %6557 = vrot.lane.b32.xlu0 %v259, 32
      %v6558 = vpop.permute.xlu0 %6557
      %v6560 = vmul.f32 %v6541, %v6558
      %v6561 = vmul.f32 %v6542, %v6558
      %v6562 = vmul.f32 %v6543, %v6558
      %v6563 = vmul.f32 %v6544, %v6558
      %v6564 = vmul.f32 %v6545, %v6558
      %v6565 = vmul.f32 %v6546, %v6558
      %v6566 = vmul.f32 %v6547, %v6558
      %v6567 = vmul.f32 %v6548, %v6558
      %v6568 = vmul.f32 %v6549, %v6558
      %v6569 = vmul.f32 %v6550, %v6558
      %v6570 = vmul.f32 %v6551, %v6558
      %v6571 = vmul.f32 %v6552, %v6558
      %v6572 = vmul.f32 %v6553, %v6558
      %v6573 = vmul.f32 %v6554, %v6558
      %v6574 = vmul.f32 %v6555, %v6558
      %v6575 = vmul.f32 %v6556, %v6558
      %6592 = vrot.lane.b32.xlu0 %v5768, 32
      %v6593 = vpop.permute.xlu0 %6592
      %6594 = vrot.lane.b32.xlu0 %v5769, 32
      %v6595 = vpop.permute.xlu0 %6594
      %6596 = vrot.lane.b32.xlu0 %v5770, 32
      %v6597 = vpop.permute.xlu0 %6596
      %6598 = vrot.lane.b32.xlu0 %v5771, 32
      %v6599 = vpop.permute.xlu0 %6598
      %6600 = vrot.lane.b32.xlu0 %v5772, 32
      %v6601 = vpop.permute.xlu0 %6600
      %6602 = vrot.lane.b32.xlu0 %v5773, 32
      %v6603 = vpop.permute.xlu0 %6602
      %6604 = vrot.lane.b32.xlu0 %v5774, 32
      %v6605 = vpop.permute.xlu0 %6604
      %6606 = vrot.lane.b32.xlu0 %v5775, 32
      %v6607 = vpop.permute.xlu0 %6606
      %6608 = vrot.lane.b32.xlu0 %v5776, 32
      %v6609 = vpop.permute.xlu0 %6608
      %6610 = vrot.lane.b32.xlu0 %v5777, 32
      %v6611 = vpop.permute.xlu0 %6610
      %6612 = vrot.lane.b32.xlu0 %v5778, 32
      %v6613 = vpop.permute.xlu0 %6612
      %6614 = vrot.lane.b32.xlu0 %v5779, 32
      %v6615 = vpop.permute.xlu0 %6614
      %6616 = vrot.lane.b32.xlu0 %v5780, 32
      %v6617 = vpop.permute.xlu0 %6616
      %6618 = vrot.lane.b32.xlu0 %v5781, 32
      %v6619 = vpop.permute.xlu0 %6618
      %6620 = vrot.lane.b32.xlu0 %v5782, 32
      %v6621 = vpop.permute.xlu0 %6620
      %6622 = vrot.lane.b32.xlu0 %v5783, 32
      %v6623 = vpop.permute.xlu0 %6622
      %v6640 = vsel %vm293, %v6560, %v6593
      %v6641 = vsel %vm293, %v6561, %v6595
      %v6642 = vsel %vm293, %v6562, %v6597
      %v6643 = vsel %vm293, %v6563, %v6599
      %v6644 = vsel %vm293, %v6564, %v6601
      %v6645 = vsel %vm293, %v6565, %v6603
      %v6646 = vsel %vm293, %v6566, %v6605
      %v6647 = vsel %vm293, %v6567, %v6607
      %v6648 = vsel %vm293, %v6568, %v6609
      %v6649 = vsel %vm293, %v6569, %v6611
      %v6650 = vsel %vm293, %v6570, %v6613
      %v6651 = vsel %vm293, %v6571, %v6615
      %v6652 = vsel %vm293, %v6572, %v6617
      %v6653 = vsel %vm293, %v6573, %v6619
      %v6654 = vsel %vm293, %v6574, %v6621
      %v6655 = vsel %vm293, %v6575, %v6623
      %v6656 = vsel %vm1565, %v6640, 0.0
      %v6657 = vsel %vm1565, %v6641, 0.0
      %v6658 = vsel %vm1565, %v6642, 0.0
      %v6659 = vsel %vm1565, %v6643, 0.0
      %v6660 = vsel %vm1565, %v6644, 0.0
      %v6661 = vsel %vm1565, %v6645, 0.0
      %v6662 = vsel %vm1565, %v6646, 0.0
      %v6663 = vsel %vm1565, %v6647, 0.0
      %v6664 = vsel %vm1565, %v6648, 0.0
      %v6665 = vsel %vm1565, %v6649, 0.0
      %v6666 = vsel %vm1565, %v6650, 0.0
      %v6667 = vsel %vm1565, %v6651, 0.0
      %v6668 = vsel %vm1565, %v6652, 0.0
      %v6669 = vsel %vm1565, %v6653, 0.0
      %v6670 = vsel %vm1565, %v6654, 0.0
      %v6671 = vsel %vm1565, %v6655, 0.0
      %6672 = vst [vmem:[%s253] sm:$0xff] %v6656
      %6673 = vst [vmem:[%s253 + $0x8] sm:$0xff] %v6657
      %6674 = vst [vmem:[%s253 + $0x10] sm:$0xff] %v6658
      %6675 = vst [vmem:[%s253 + $0x18] sm:$0xff] %v6659
      %6676 = vst [vmem:[%s253 + $0x20] sm:$0xff] %v6660
      %6677 = vst [vmem:[%s253 + $0x28] sm:$0xff] %v6661
      %6678 = vst [vmem:[%s253 + $0x30] sm:$0xff] %v6662
      %6679 = vst [vmem:[%s253 + $0x38] sm:$0xff] %v6663
      %6680 = vst [vmem:[%s253 + $0x40] sm:$0xff] %v6664
      %6681 = vst [vmem:[%s253 + $0x48] sm:$0xff] %v6665
      %6682 = vst [vmem:[%s253 + $0x50] sm:$0xff] %v6666
      %6683 = vst [vmem:[%s253 + $0x58] sm:$0xff] %v6667
      %6684 = vst [vmem:[%s253 + $0x60] sm:$0xff] %v6668
      %6685 = vst [vmem:[%s253 + $0x68] sm:$0xff] %v6669
      %6686 = vst [vmem:[%s253 + $0x70] sm:$0xff] %v6670
      %6687 = vst [vmem:[%s253 + $0x78] sm:$0xff] %v6671
      %s6688 = smul.u32 16, %s17
      %p6689 = scmp.lt.s32.totalorder %s6688, 31
      %s6690 = scalar_select %p6689, %s6688, 31
      %s6691 = smul.addr %s6690, 8
      %s6692 = scalar_lea.vmem %s6, %s6691
      // Predicated region
      $region45: #{plamo2_decoder_layer.1} parent=43 // pred_check
        %p6693 = pneg %p166
      $region46: #{plamo2_decoder_layer.1} parent=43 // pred_check_branch
        %6695 = sbr.rel (%p6693) target = $region48
      $region47: #{plamo2_decoder_layer.1} parent=43 // pred_region
        %s6696 = smul.u32 16, %s17
      $region48: #{plamo2_decoder_layer.1} parent=43 // pred_fallthru
        _
    $region44: #{plamo2_decoder_layer.1} parent=5 // pred_fallthru
      _
    %p6697 = scmp.le.s32.totalorder 2, %s12
    // Predicated region
    $region49: #{plamo2_decoder_layer.1} parent=5 // pred_check
      %p6698 = pneg %p6697
    $region50: #{plamo2_decoder_layer.1} parent=5 // pred_check_branch
      %6700 = sbr.rel (%p6698) target = $region52
    $region51: #{plamo2_decoder_layer.1} parent=5 // pred_region
      %s6701 = ssub.s32 %s12, 2
      // Predicated region
      $region53: #{plamo2_decoder_layer.1} parent=51 // pred_check
        %p6702 = pneg %p172
      $region54: #{plamo2_decoder_layer.1} parent=51 // pred_check_branch
        %6704 = sbr.rel (%p6702) target = $region56
      $region55: #{plamo2_decoder_layer.1} parent=51 // pred_region
        %s6705 = smul.u32 16, %s18
        %p6706 = scmp.lt.s32.totalorder %s6705, 31
        %s6707 = scalar_select %p6706, %s6705, 31
        %s6708 = smul.addr %s6707, 8
        %s6709 = scalar_lea.vmem %s6, %s6708
      $region56: #{plamo2_decoder_layer.1} parent=51 // pred_fallthru
        _
    $region52: #{plamo2_decoder_layer.1} parent=5 // pred_fallthru
      _
  $region6: #{plamo2_decoder_layer.1} parent=0 // loop_footer
    %s16 = sadd.s32 1, %s12
  $region7: #{plamo2_decoder_layer.1} parent=0 // loop_footer_branch
    %11 = sbr.rel target = $region3
  $region8: #{plamo2_decoder_layer.1} parent=0 // loop_exit
    _

</llo_original>
